<compile_context>
chip_gen: v6e
topology: v6e:2x2x1
jax: 0.10.0
libtpu: 0.0.40
codegen_flags: <defaults>
</compile_context>

<pallas_src>
import functools

import jax
import jax.numpy as jnp
from jax.experimental import pallas as pl
from jax.experimental.pallas import tpu as pltpu


# ----------------------------------------------------------------------------
# Fused Pallas kernel (whole MultiEncoder forward in one launch)
# ----------------------------------------------------------------------------
def _make_multi_encoder_kernel(*, n_comp, batch, t_in, strides, layer_kernels,
                               activation="relu"):
    """Builds the fused kernel.

    layer_kernels: conv kernel size for every conv layer, in order:
      len(strides) EncoderBlock convs followed by the two ResConvBlock convs.
    """
    n_blocks = len(strides)
    assert len(layer_kernels) == n_blocks + 2

    # Static per-layer geometry: (t_in, t_out, K, stride, pad).
    geo = []
    t = t_in
    for li, K in enumerate(layer_kernels):
        s = strides[li] if li < n_blocks else 1
        pad = (K - 1) // 2
        t_next = (t + 2 * pad - K) // s + 1
        geo.append((t, t_next, K, s, pad))
        t = t_next
    t_out_final = t

    def kernel(*refs):
        x_ref = refs[0]        # (B, C_in, T)  -- PyTorch NCT layout, T on lanes
        o_ref = refs[-1]       # (B, n_comp, C_last, T_final)
        lrefs = refs[1:-1]     # (w, b) per conv layer, stacked over encoders

        # Hoisted constant tap-gather matrices, one set per distinct geometry.
        # H_k[j, i] = 1  iff  j == i*stride + k - pad  (implicit zero padding),
        # so (h @ H_k)[:, i] == h[:, i*stride + k - pad]  (or 0 outside [0, T)).
        hmat_cache = {}
        hmats = []
        for (ti, to, K, s, pad) in geo:
            gkey = (ti, to, K, s, pad)
            if gkey not in hmat_cache:
                j = jax.lax.broadcasted_iota(jnp.int32, (ti, to), 0)
                i = jax.lax.broadcasted_iota(jnp.int32, (ti, to), 1)
                hmat_cache[gkey] = [
                    (j == i * s + (k - pad)).astype(jnp.float32) for k in range(K)
                ]
            hmats.append(hmat_cache[gkey])

        def conv(h, li, e, act):
            # h: (C_in, T_in).  w_ref[e, k]: (C_out, C_in).  b_ref[e]: (C_out, 1).
            w_ref, b_ref = lrefs[2 * li], lrefs[2 * li + 1]
            K = geo[li][2]
            acc = None
            for k in range(K):  # K shifted matmuls on the MXU
                hk = jnp.dot(h, hmats[li][k], preferred_element_type=jnp.float32)
                yk = jnp.dot(w_ref[e, k], hk, preferred_element_type=jnp.float32)
                acc = yk if acc is None else acc + yk
            acc = acc + b_ref[e]                       # (C_out, 1) broadcast over T
            if act == "relu":
                acc = jnp.maximum(acc, 0.0)
            return acc

        for b in range(batch):                # static unroll: tiny batch
            xb = x_ref[b]                     # (C_in, T)
            for e in range(n_comp):           # both encoders fused in one body
                h = xb
                for li in range(n_blocks):
                    # EncoderBlock: conv1d -> norm(id) -> relu
                    # (attn=False, p_drop=0 in eval reduce it to conv + act)
                    h = conv(h, li, e, activation)
                # ResConvBlock: out = skip + conv2(act(conv1(skip)))
                skip = h
                h = conv(skip, n_blocks, e, activation)
                h = conv(h, n_blocks + 1, e, None)
                h = skip + h
                # EncoderAudio.out_fn='id'; MultiEncoder.out_fn=tanh fused here.
                o_ref[b, e] = jnp.tanh(h).astype(o_ref.dtype)

    return kernel, t_out_final


# ----------------------------------------------------------------------------
# Parameter init (deterministic, synthetic), stacked over the n_comp encoders
# ----------------------------------------------------------------------------
def init_multi_encoder_params(key, *, n_comp, in_dim, channels, kernel):
    """Conv weights: (n_comp, K, C_out, C_in); biases: (n_comp, C_out, 1)."""
    chans = [in_dim] + list(channels)
    layers = []
    for cin, cout in zip(chans[:-1], chans[1:]):
        key, kw, kb = jax.random.split(key, 3)
        w = jax.random.normal(kw, (n_comp, kernel, cout, cin), jnp.float32)
        w = w / jnp.sqrt(cin * kernel)
        b = 0.01 * jax.random.normal(kb, (n_comp, cout, 1), jnp.float32)
        layers.append((w, b))
    c = chans[-1]
    for _ in range(2):  # ResConvBlock: two 3-tap convs (c_in == c_mid == c_out)
        key, kw, kb = jax.random.split(key, 3)
        w = jax.random.normal(kw, (n_comp, 3, c, c), jnp.float32) / jnp.sqrt(c * 3)
        b = 0.01 * jax.random.normal(kb, (n_comp, c, 1), jnp.float32)
        layers.append((w, b))
    return {"layers": layers}


# ----------------------------------------------------------------------------
# Forward pass (one fused pallas_call)
# ----------------------------------------------------------------------------
def multi_encoder_forward(params, x_bct, *, strides):
    """x_bct: (B, C_in, T) float32 (PyTorch NCT). Returns (B, n_comp, C_last, T_out)."""
    layers = params["layers"]
    n_comp = layers[0][0].shape[0]
    c_last = layers[-1][0].shape[2]
    B, _, T = x_bct.shape
    layer_kernels = [w.shape[1] for (w, _) in layers]

    # TODO(synk): add_gru=True (nn.GRU) has no clean Pallas equivalent here;
    # the config uses add_gru=False, so the GRU branch is omitted.
    # TODO(synk): for realistic audio lengths, tile the time axis with a (K-1)
    # halo via an overlapping index_map and size tiles for v7x's 64 MiB VMEM;
    # at T=16 the whole problem fits in a single VMEM-resident block.
    kernel, t_out = _make_multi_encoder_kernel(
        n_comp=n_comp, batch=B, t_in=T, strides=list(strides),
        layer_kernels=layer_kernels)

    flat = [x_bct]
    for w, b in layers:
        flat += [w, b]

    return pl.pallas_call(
        kernel,
        out_shape=jax.ShapeDtypeStruct((B, n_comp, c_last, t_out), jnp.float32),
        compiler_params=pltpu.CompilerParams(vmem_limit_bytes=32 * 1024 * 1024),
    )(*flat)


# ----------------------------------------------------------------------------
# Pure-JAX reference (same parameter layout) for a correctness check
# ----------------------------------------------------------------------------
def _conv1d_ref(x, w, b, stride):
    # x: (B, C_in, T); w: (K, C_out, C_in); b: (C_out, 1)
    K = w.shape[0]
    pad = (K - 1) // 2
    T = x.shape[-1]
    T_out = (T + 2 * pad - K) // stride + 1
    xp = jnp.pad(x, ((0, 0), (0, 0), (pad, pad)))
    y = jnp.zeros((x.shape[0], w.shape[1], T_out), jnp.float32)
    for k in range(K):
        idx = k + stride * jnp.arange(T_out)
        y = y + jnp.einsum("oc,bct->bot", w[k], xp[:, :, idx])
    return y + b[None]


def multi_encoder_ref(params, x, *, strides):
    layers = params["layers"]
    n_comp = layers[0][0].shape[0]
    n_blocks = len(strides)
    outs = []
    for e in range(n_comp):
        h = x
        for li in range(n_blocks):
            w, b = layers[li]
            h = jax.nn.relu(_conv1d_ref(h, w[e], b[e], strides[li]))
        (w1, b1), (w2, b2) = layers[n_blocks], layers[n_blocks + 1]
        skip = h
        h = jax.nn.relu(_conv1d_ref(skip, w1[e], b1[e], 1))
        h = _conv1d_ref(h, w2[e], b2[e], 1)
        outs.append(skip + h)
    return jnp.tanh(jnp.stack(outs, axis=1))


# ----------------------------------------------------------------------------
if __name__ == "__main__":
    n_comp, in_dim, channels, kernel, strides = 2, 4, [8, 16], 3, [2, 2]
    B, T = 2, 16

    key = jax.random.PRNGKey(0)
    kp, kx = jax.random.split(key)
    params = init_multi_encoder_params(kp, n_comp=n_comp, in_dim=in_dim,
                                       channels=channels, kernel=kernel)
    x = jax.random.normal(kx, (B, in_dim, T), jnp.float32)  # NCT, like PyTorch Conv1d

    fwd = jax.jit(functools.partial(multi_encoder_forward, strides=strides))
    out = fwd(params, x)
    jax.block_until_ready(out)

    # (B, n_comp, C_latent, T_out) with T_out = 16 -> 8 -> 4 after two stride-2 convs
    assert out.shape == (B, n_comp, channels[-1], 4), out.shape
    assert bool(jnp.all(jnp.isfinite(out)))

    ref = multi_encoder_ref(params, x, strides=strides)
    err = float(jnp.max(jnp.abs(out - ref)))
    assert bool(jnp.allclose(out, ref, rtol=1e-3, atol=1e-3)), err

    print("KERNEL_OK")
</pallas_src>

<mosaic_0001>
module attributes {stable_mosaic.version = 11 : i64} {
  func.func @kernel(%arg0: memref<2x4x16xf32, #tpu.memory_space<vmem>>, %arg1: memref<2x3x8x4xf32, #tpu.memory_space<vmem>>, %arg2: memref<2x8x1xf32, #tpu.memory_space<vmem>>, %arg3: memref<2x3x16x8xf32, #tpu.memory_space<vmem>>, %arg4: memref<2x16x1xf32, #tpu.memory_space<vmem>>, %arg5: memref<2x3x16x16xf32, #tpu.memory_space<vmem>>, %arg6: memref<2x16x1xf32, #tpu.memory_space<vmem>>, %arg7: memref<2x3x16x16xf32, #tpu.memory_space<vmem>>, %arg8: memref<2x16x1xf32, #tpu.memory_space<vmem>>, %arg9: memref<2x2x16x4xf32, #tpu.memory_space<vmem>>) attributes {dimension_semantics = [], scalar_prefetch = 0 : i64, scratch_operands = 0 : i64, tpu.core_type = #tpu.core_type<tc>} {
    %0 = tpu.iota {dimensions = array<i32: 0>} : vector<16x8xi32>
    %1 = tpu.iota {dimensions = array<i32: 1>} : vector<16x8xi32>
    %c2_i32 = arith.constant 2 : i32
    %2 = vector.broadcast %c2_i32 : i32 to vector<16x8xi32>
    %3 = arith.muli %1, %2 : vector<16x8xi32>
    %c-1_i32 = arith.constant -1 : i32
    %4 = vector.broadcast %c-1_i32 : i32 to vector<16x8xi32>
    %5 = arith.addi %3, %4 : vector<16x8xi32>
    %6 = arith.cmpi eq, %0, %5 : vector<16x8xi32>
    %7 = arith.extui %6 : vector<16x8xi1> to vector<16x8xi32>
    %8 = arith.sitofp %7 : vector<16x8xi32> to vector<16x8xf32>
    %c2_i32_0 = arith.constant 2 : i32
    %9 = vector.broadcast %c2_i32_0 : i32 to vector<16x8xi32>
    %10 = arith.muli %1, %9 : vector<16x8xi32>
    %c0_i32 = arith.constant 0 : i32
    %11 = vector.broadcast %c0_i32 : i32 to vector<16x8xi32>
    %12 = arith.addi %10, %11 : vector<16x8xi32>
    %13 = arith.cmpi eq, %0, %12 : vector<16x8xi32>
    %14 = arith.extui %13 : vector<16x8xi1> to vector<16x8xi32>
    %15 = arith.sitofp %14 : vector<16x8xi32> to vector<16x8xf32>
    %c2_i32_1 = arith.constant 2 : i32
    %16 = vector.broadcast %c2_i32_1 : i32 to vector<16x8xi32>
    %17 = arith.muli %1, %16 : vector<16x8xi32>
    %c1_i32 = arith.constant 1 : i32
    %18 = vector.broadcast %c1_i32 : i32 to vector<16x8xi32>
    %19 = arith.addi %17, %18 : vector<16x8xi32>
    %20 = arith.cmpi eq, %0, %19 : vector<16x8xi32>
    %21 = arith.extui %20 : vector<16x8xi1> to vector<16x8xi32>
    %22 = arith.sitofp %21 : vector<16x8xi32> to vector<16x8xf32>
    %23 = tpu.iota {dimensions = array<i32: 0>} : vector<8x4xi32>
    %24 = tpu.iota {dimensions = array<i32: 1>} : vector<8x4xi32>
    %c2_i32_2 = arith.constant 2 : i32
    %25 = vector.broadcast %c2_i32_2 : i32 to vector<8x4xi32>
    %26 = arith.muli %24, %25 : vector<8x4xi32>
    %c-1_i32_3 = arith.constant -1 : i32
    %27 = vector.broadcast %c-1_i32_3 : i32 to vector<8x4xi32>
    %28 = arith.addi %26, %27 : vector<8x4xi32>
    %29 = arith.cmpi eq, %23, %28 : vector<8x4xi32>
    %30 = arith.extui %29 : vector<8x4xi1> to vector<8x4xi32>
    %31 = arith.sitofp %30 : vector<8x4xi32> to vector<8x4xf32>
    %c2_i32_4 = arith.constant 2 : i32
    %32 = vector.broadcast %c2_i32_4 : i32 to vector<8x4xi32>
    %33 = arith.muli %24, %32 : vector<8x4xi32>
    %c0_i32_5 = arith.constant 0 : i32
    %34 = vector.broadcast %c0_i32_5 : i32 to vector<8x4xi32>
    %35 = arith.addi %33, %34 : vector<8x4xi32>
    %36 = arith.cmpi eq, %23, %35 : vector<8x4xi32>
    %37 = arith.extui %36 : vector<8x4xi1> to vector<8x4xi32>
    %38 = arith.sitofp %37 : vector<8x4xi32> to vector<8x4xf32>
    %c2_i32_6 = arith.constant 2 : i32
    %39 = vector.broadcast %c2_i32_6 : i32 to vector<8x4xi32>
    %40 = arith.muli %24, %39 : vector<8x4xi32>
    %c1_i32_7 = arith.constant 1 : i32
    %41 = vector.broadcast %c1_i32_7 : i32 to vector<8x4xi32>
    %42 = arith.addi %40, %41 : vector<8x4xi32>
    %43 = arith.cmpi eq, %23, %42 : vector<8x4xi32>
    %44 = arith.extui %43 : vector<8x4xi1> to vector<8x4xi32>
    %45 = arith.sitofp %44 : vector<8x4xi32> to vector<8x4xf32>
    %46 = tpu.iota {dimensions = array<i32: 0>} : vector<4x4xi32>
    %47 = tpu.iota {dimensions = array<i32: 1>} : vector<4x4xi32>
    %c1_i32_8 = arith.constant 1 : i32
    %48 = vector.broadcast %c1_i32_8 : i32 to vector<4x4xi32>
    %49 = arith.muli %47, %48 : vector<4x4xi32>
    %c-1_i32_9 = arith.constant -1 : i32
    %50 = vector.broadcast %c-1_i32_9 : i32 to vector<4x4xi32>
    %51 = arith.addi %49, %50 : vector<4x4xi32>
    %52 = arith.cmpi eq, %46, %51 : vector<4x4xi32>
    %53 = arith.extui %52 : vector<4x4xi1> to vector<4x4xi32>
    %54 = arith.sitofp %53 : vector<4x4xi32> to vector<4x4xf32>
    %c1_i32_10 = arith.constant 1 : i32
    %55 = vector.broadcast %c1_i32_10 : i32 to vector<4x4xi32>
    %56 = arith.muli %47, %55 : vector<4x4xi32>
    %c0_i32_11 = arith.constant 0 : i32
    %57 = vector.broadcast %c0_i32_11 : i32 to vector<4x4xi32>
    %58 = arith.addi %56, %57 : vector<4x4xi32>
    %59 = arith.cmpi eq, %46, %58 : vector<4x4xi32>
    %60 = arith.extui %59 : vector<4x4xi1> to vector<4x4xi32>
    %61 = arith.sitofp %60 : vector<4x4xi32> to vector<4x4xf32>
    %c1_i32_12 = arith.constant 1 : i32
    %62 = vector.broadcast %c1_i32_12 : i32 to vector<4x4xi32>
    %63 = arith.muli %47, %62 : vector<4x4xi32>
    %c1_i32_13 = arith.constant 1 : i32
    %64 = vector.broadcast %c1_i32_13 : i32 to vector<4x4xi32>
    %65 = arith.addi %63, %64 : vector<4x4xi32>
    %66 = arith.cmpi eq, %46, %65 : vector<4x4xi32>
    %67 = arith.extui %66 : vector<4x4xi1> to vector<4x4xi32>
    %68 = arith.sitofp %67 : vector<4x4xi32> to vector<4x4xf32>
    %c0 = arith.constant 0 : index
    %c0_14 = arith.constant 0 : index
    %c0_15 = arith.constant 0 : index
    %69 = vector.load %arg0[%c0, %c0_14, %c0_15] : memref<2x4x16xf32, #tpu.memory_space<vmem>>, vector<1x4x16xf32>
    %70 = vector.shape_cast %69 : vector<1x4x16xf32> to vector<4x16xf32>
    %cst = arith.constant dense<0.000000e+00> : vector<4x8xf32>
    %71 = tpu.matmul %70, %8, %cst {dimension_numbers = #tpu.dot_dimension_numbers<[1], [0], [0], [1], [0, 0, 1, 1], [], []>} : vector<4x16xf32>, vector<16x8xf32>, vector<4x8xf32> -> vector<4x8xf32>
    %c0_16 = arith.constant 0 : index
    %c0_17 = arith.constant 0 : index
    %c0_18 = arith.constant 0 : index
    %c0_19 = arith.constant 0 : index
    %72 = vector.load %arg1[%c0_16, %c0_17, %c0_18, %c0_19] : memref<2x3x8x4xf32, #tpu.memory_space<vmem>>, vector<1x1x8x4xf32>
    %73 = vector.shape_cast %72 : vector<1x1x8x4xf32> to vector<8x4xf32>
    %cst_20 = arith.constant dense<0.000000e+00> : vector<8x8xf32>
    %74 = tpu.matmul %73, %71, %cst_20 {dimension_numbers = #tpu.dot_dimension_numbers<[1], [0], [0], [1], [0, 0, 1, 1], [], []>} : vector<8x4xf32>, vector<4x8xf32>, vector<8x8xf32> -> vector<8x8xf32>
    %cst_21 = arith.constant dense<0.000000e+00> : vector<4x8xf32>
    %75 = tpu.matmul %70, %15, %cst_21 {dimension_numbers = #tpu.dot_dimension_numbers<[1], [0], [0], [1], [0, 0, 1, 1], [], []>} : vector<4x16xf32>, vector<16x8xf32>, vector<4x8xf32> -> vector<4x8xf32>
    %c0_22 = arith.constant 0 : index
    %c1 = arith.constant 1 : index
    %c0_23 = arith.constant 0 : index
    %c0_24 = arith.constant 0 : index
    %76 = vector.load %arg1[%c0_22, %c1, %c0_23, %c0_24] : memref<2x3x8x4xf32, #tpu.memory_space<vmem>>, vector<1x1x8x4xf32>
    %77 = vector.shape_cast %76 : vector<1x1x8x4xf32> to vector<8x4xf32>
    %cst_25 = arith.constant dense<0.000000e+00> : vector<8x8xf32>
    %78 = tpu.matmul %77, %75, %cst_25 {dimension_numbers = #tpu.dot_dimension_numbers<[1], [0], [0], [1], [0, 0, 1, 1], [], []>} : vector<8x4xf32>, vector<4x8xf32>, vector<8x8xf32> -> vector<8x8xf32>
    %79 = arith.addf %74, %78 : vector<8x8xf32>
    %cst_26 = arith.constant dense<0.000000e+00> : vector<4x8xf32>
    %80 = tpu.matmul %70, %22, %cst_26 {dimension_numbers = #tpu.dot_dimension_numbers<[1], [0], [0], [1], [0, 0, 1, 1], [], []>} : vector<4x16xf32>, vector<16x8xf32>, vector<4x8xf32> -> vector<4x8xf32>
    %c0_27 = arith.constant 0 : index
    %c2 = arith.constant 2 : index
    %c0_28 = arith.constant 0 : index
    %c0_29 = arith.constant 0 : index
    %81 = vector.load %arg1[%c0_27, %c2, %c0_28, %c0_29] : memref<2x3x8x4xf32, #tpu.memory_space<vmem>>, vector<1x1x8x4xf32>
    %82 = vector.shape_cast %81 : vector<1x1x8x4xf32> to vector<8x4xf32>
    %cst_30 = arith.constant dense<0.000000e+00> : vector<8x8xf32>
    %83 = tpu.matmul %82, %80, %cst_30 {dimension_numbers = #tpu.dot_dimension_numbers<[1], [0], [0], [1], [0, 0, 1, 1], [], []>} : vector<8x4xf32>, vector<4x8xf32>, vector<8x8xf32> -> vector<8x8xf32>
    %84 = arith.addf %79, %83 : vector<8x8xf32>
    %c0_31 = arith.constant 0 : index
    %c0_32 = arith.constant 0 : index
    %c0_33 = arith.constant 0 : index
    %85 = vector.load %arg2[%c0_31, %c0_32, %c0_33] : memref<2x8x1xf32, #tpu.memory_space<vmem>>, vector<1x8x1xf32>
    %86 = vector.shape_cast %85 : vector<1x8x1xf32> to vector<8x1xf32>
    %87 = vector.broadcast %86 : vector<8x1xf32> to vector<8x8xf32>
    %88 = arith.addf %84, %87 : vector<8x8xf32>
    %cst_34 = arith.constant 0.000000e+00 : f32
    %89 = vector.broadcast %cst_34 : f32 to vector<8x8xf32>
    %90 = arith.maximumf %88, %89 : vector<8x8xf32>
    %cst_35 = arith.constant dense<0.000000e+00> : vector<8x4xf32>
    %91 = tpu.matmul %90, %31, %cst_35 {dimension_numbers = #tpu.dot_dimension_numbers<[1], [0], [0], [1], [0, 0, 1, 1], [], []>} : vector<8x8xf32>, vector<8x4xf32>, vector<8x4xf32> -> vector<8x4xf32>
    %c0_36 = arith.constant 0 : index
    %c0_37 = arith.constant 0 : index
    %c0_38 = arith.constant 0 : index
    %c0_39 = arith.constant 0 : index
    %92 = vector.load %arg3[%c0_36, %c0_37, %c0_38, %c0_39] : memref<2x3x16x8xf32, #tpu.memory_space<vmem>>, vector<1x1x16x8xf32>
    %93 = vector.shape_cast %92 : vector<1x1x16x8xf32> to vector<16x8xf32>
    %cst_40 = arith.constant dense<0.000000e+00> : vector<16x4xf32>
    %94 = tpu.matmul %93, %91, %cst_40 {dimension_numbers = #tpu.dot_dimension_numbers<[1], [0], [0], [1], [0, 0, 1, 1], [], []>} : vector<16x8xf32>, vector<8x4xf32>, vector<16x4xf32> -> vector<16x4xf32>
    %cst_41 = arith.constant dense<0.000000e+00> : vector<8x4xf32>
    %95 = tpu.matmul %90, %38, %cst_41 {dimension_numbers = #tpu.dot_dimension_numbers<[1], [0], [0], [1], [0, 0, 1, 1], [], []>} : vector<8x8xf32>, vector<8x4xf32>, vector<8x4xf32> -> vector<8x4xf32>
    %c0_42 = arith.constant 0 : index
    %c1_43 = arith.constant 1 : index
    %c0_44 = arith.constant 0 : index
    %c0_45 = arith.constant 0 : index
    %96 = vector.load %arg3[%c0_42, %c1_43, %c0_44, %c0_45] : memref<2x3x16x8xf32, #tpu.memory_space<vmem>>, vector<1x1x16x8xf32>
    %97 = vector.shape_cast %96 : vector<1x1x16x8xf32> to vector<16x8xf32>
    %cst_46 = arith.constant dense<0.000000e+00> : vector<16x4xf32>
    %98 = tpu.matmul %97, %95, %cst_46 {dimension_numbers = #tpu.dot_dimension_numbers<[1], [0], [0], [1], [0, 0, 1, 1], [], []>} : vector<16x8xf32>, vector<8x4xf32>, vector<16x4xf32> -> vector<16x4xf32>
    %99 = arith.addf %94, %98 : vector<16x4xf32>
    %cst_47 = arith.constant dense<0.000000e+00> : vector<8x4xf32>
    %100 = tpu.matmul %90, %45, %cst_47 {dimension_numbers = #tpu.dot_dimension_numbers<[1], [0], [0], [1], [0, 0, 1, 1], [], []>} : vector<8x8xf32>, vector<8x4xf32>, vector<8x4xf32> -> vector<8x4xf32>
    %c0_48 = arith.constant 0 : index
    %c2_49 = arith.constant 2 : index
    %c0_50 = arith.constant 0 : index
    %c0_51 = arith.constant 0 : index
    %101 = vector.load %arg3[%c0_48, %c2_49, %c0_50, %c0_51] : memref<2x3x16x8xf32, #tpu.memory_space<vmem>>, vector<1x1x16x8xf32>
    %102 = vector.shape_cast %101 : vector<1x1x16x8xf32> to vector<16x8xf32>
    %cst_52 = arith.constant dense<0.000000e+00> : vector<16x4xf32>
    %103 = tpu.matmul %102, %100, %cst_52 {dimension_numbers = #tpu.dot_dimension_numbers<[1], [0], [0], [1], [0, 0, 1, 1], [], []>} : vector<16x8xf32>, vector<8x4xf32>, vector<16x4xf32> -> vector<16x4xf32>
    %104 = arith.addf %99, %103 : vector<16x4xf32>
    %c0_53 = arith.constant 0 : index
    %c0_54 = arith.constant 0 : index
    %c0_55 = arith.constant 0 : index
    %105 = vector.load %arg4[%c0_53, %c0_54, %c0_55] : memref<2x16x1xf32, #tpu.memory_space<vmem>>, vector<1x16x1xf32>
    %106 = vector.shape_cast %105 : vector<1x16x1xf32> to vector<16x1xf32>
    %107 = vector.broadcast %106 : vector<16x1xf32> to vector<16x4xf32>
    %108 = arith.addf %104, %107 : vector<16x4xf32>
    %cst_56 = arith.constant 0.000000e+00 : f32
    %109 = vector.broadcast %cst_56 : f32 to vector<16x4xf32>
    %110 = arith.maximumf %108, %109 : vector<16x4xf32>
    %cst_57 = arith.constant dense<0.000000e+00> : vector<16x4xf32>
    %111 = tpu.matmul %110, %54, %cst_57 {dimension_numbers = #tpu.dot_dimension_numbers<[1], [0], [0], [1], [0, 0, 1, 1], [], []>} : vector<16x4xf32>, vector<4x4xf32>, vector<16x4xf32> -> vector<16x4xf32>
    %c0_58 = arith.constant 0 : index
    %c0_59 = arith.constant 0 : index
    %c0_60 = arith.constant 0 : index
    %c0_61 = arith.constant 0 : index
    %112 = vector.load %arg5[%c0_58, %c0_59, %c0_60, %c0_61] : memref<2x3x16x16xf32, #tpu.memory_space<vmem>>, vector<1x1x16x16xf32>
    %113 = vector.shape_cast %112 : vector<1x1x16x16xf32> to vector<16x16xf32>
    %cst_62 = arith.constant dense<0.000000e+00> : vector<16x4xf32>
    %114 = tpu.matmul %113, %111, %cst_62 {dimension_numbers = #tpu.dot_dimension_numbers<[1], [0], [0], [1], [0, 0, 1, 1], [], []>} : vector<16x16xf32>, vector<16x4xf32>, vector<16x4xf32> -> vector<16x4xf32>
    %cst_63 = arith.constant dense<0.000000e+00> : vector<16x4xf32>
    %115 = tpu.matmul %110, %61, %cst_63 {dimension_numbers = #tpu.dot_dimension_numbers<[1], [0], [0], [1], [0, 0, 1, 1], [], []>} : vector<16x4xf32>, vector<4x4xf32>, vector<16x4xf32> -> vector<16x4xf32>
    %c0_64 = arith.constant 0 : index
    %c1_65 = arith.constant 1 : index
    %c0_66 = arith.constant 0 : index
    %c0_67 = arith.constant 0 : index
    %116 = vector.load %arg5[%c0_64, %c1_65, %c0_66, %c0_67] : memref<2x3x16x16xf32, #tpu.memory_space<vmem>>, vector<1x1x16x16xf32>
    %117 = vector.shape_cast %116 : vector<1x1x16x16xf32> to vector<16x16xf32>
    %cst_68 = arith.constant dense<0.000000e+00> : vector<16x4xf32>
    %118 = tpu.matmul %117, %115, %cst_68 {dimension_numbers = #tpu.dot_dimension_numbers<[1], [0], [0], [1], [0, 0, 1, 1], [], []>} : vector<16x16xf32>, vector<16x4xf32>, vector<16x4xf32> -> vector<16x4xf32>
    %119 = arith.addf %114, %118 : vector<16x4xf32>
    %cst_69 = arith.constant dense<0.000000e+00> : vector<16x4xf32>
    %120 = tpu.matmul %110, %68, %cst_69 {dimension_numbers = #tpu.dot_dimension_numbers<[1], [0], [0], [1], [0, 0, 1, 1], [], []>} : vector<16x4xf32>, vector<4x4xf32>, vector<16x4xf32> -> vector<16x4xf32>
    %c0_70 = arith.constant 0 : index
    %c2_71 = arith.constant 2 : index
    %c0_72 = arith.constant 0 : index
    %c0_73 = arith.constant 0 : index
    %121 = vector.load %arg5[%c0_70, %c2_71, %c0_72, %c0_73] : memref<2x3x16x16xf32, #tpu.memory_space<vmem>>, vector<1x1x16x16xf32>
    %122 = vector.shape_cast %121 : vector<1x1x16x16xf32> to vector<16x16xf32>
    %cst_74 = arith.constant dense<0.000000e+00> : vector<16x4xf32>
    %123 = tpu.matmul %122, %120, %cst_74 {dimension_numbers = #tpu.dot_dimension_numbers<[1], [0], [0], [1], [0, 0, 1, 1], [], []>} : vector<16x16xf32>, vector<16x4xf32>, vector<16x4xf32> -> vector<16x4xf32>
    %124 = arith.addf %119, %123 : vector<16x4xf32>
    %c0_75 = arith.constant 0 : index
    %c0_76 = arith.constant 0 : index
    %c0_77 = arith.constant 0 : index
    %125 = vector.load %arg6[%c0_75, %c0_76, %c0_77] : memref<2x16x1xf32, #tpu.memory_space<vmem>>, vector<1x16x1xf32>
    %126 = vector.shape_cast %125 : vector<1x16x1xf32> to vector<16x1xf32>
    %127 = vector.broadcast %126 : vector<16x1xf32> to vector<16x4xf32>
    %128 = arith.addf %124, %127 : vector<16x4xf32>
    %cst_78 = arith.constant 0.000000e+00 : f32
    %129 = vector.broadcast %cst_78 : f32 to vector<16x4xf32>
    %130 = arith.maximumf %128, %129 : vector<16x4xf32>
    %cst_79 = arith.constant dense<0.000000e+00> : vector<16x4xf32>
    %131 = tpu.matmul %130, %54, %cst_79 {dimension_numbers = #tpu.dot_dimension_numbers<[1], [0], [0], [1], [0, 0, 1, 1], [], []>} : vector<16x4xf32>, vector<4x4xf32>, vector<16x4xf32> -> vector<16x4xf32>
    %c0_80 = arith.constant 0 : index
    %c0_81 = arith.constant 0 : index
    %c0_82 = arith.constant 0 : index
    %c0_83 = arith.constant 0 : index
    %132 = vector.load %arg7[%c0_80, %c0_81, %c0_82, %c0_83] : memref<2x3x16x16xf32, #tpu.memory_space<vmem>>, vector<1x1x16x16xf32>
    %133 = vector.shape_cast %132 : vector<1x1x16x16xf32> to vector<16x16xf32>
    %cst_84 = arith.constant dense<0.000000e+00> : vector<16x4xf32>
    %134 = tpu.matmul %133, %131, %cst_84 {dimension_numbers = #tpu.dot_dimension_numbers<[1], [0], [0], [1], [0, 0, 1, 1], [], []>} : vector<16x16xf32>, vector<16x4xf32>, vector<16x4xf32> -> vector<16x4xf32>
    %cst_85 = arith.constant dense<0.000000e+00> : vector<16x4xf32>
    %135 = tpu.matmul %130, %61, %cst_85 {dimension_numbers = #tpu.dot_dimension_numbers<[1], [0], [0], [1], [0, 0, 1, 1], [], []>} : vector<16x4xf32>, vector<4x4xf32>, vector<16x4xf32> -> vector<16x4xf32>
    %c0_86 = arith.constant 0 : index
    %c1_87 = arith.constant 1 : index
    %c0_88 = arith.constant 0 : index
    %c0_89 = arith.constant 0 : index
    %136 = vector.load %arg7[%c0_86, %c1_87, %c0_88, %c0_89] : memref<2x3x16x16xf32, #tpu.memory_space<vmem>>, vector<1x1x16x16xf32>
    %137 = vector.shape_cast %136 : vector<1x1x16x16xf32> to vector<16x16xf32>
    %cst_90 = arith.constant dense<0.000000e+00> : vector<16x4xf32>
    %138 = tpu.matmul %137, %135, %cst_90 {dimension_numbers = #tpu.dot_dimension_numbers<[1], [0], [0], [1], [0, 0, 1, 1], [], []>} : vector<16x16xf32>, vector<16x4xf32>, vector<16x4xf32> -> vector<16x4xf32>
    %139 = arith.addf %134, %138 : vector<16x4xf32>
    %cst_91 = arith.constant dense<0.000000e+00> : vector<16x4xf32>
    %140 = tpu.matmul %130, %68, %cst_91 {dimension_numbers = #tpu.dot_dimension_numbers<[1], [0], [0], [1], [0, 0, 1, 1], [], []>} : vector<16x4xf32>, vector<4x4xf32>, vector<16x4xf32> -> vector<16x4xf32>
    %c0_92 = arith.constant 0 : index
    %c2_93 = arith.constant 2 : index
    %c0_94 = arith.constant 0 : index
    %c0_95 = arith.constant 0 : index
    %141 = vector.load %arg7[%c0_92, %c2_93, %c0_94, %c0_95] : memref<2x3x16x16xf32, #tpu.memory_space<vmem>>, vector<1x1x16x16xf32>
    %142 = vector.shape_cast %141 : vector<1x1x16x16xf32> to vector<16x16xf32>
    %cst_96 = arith.constant dense<0.000000e+00> : vector<16x4xf32>
    %143 = tpu.matmul %142, %140, %cst_96 {dimension_numbers = #tpu.dot_dimension_numbers<[1], [0], [0], [1], [0, 0, 1, 1], [], []>} : vector<16x16xf32>, vector<16x4xf32>, vector<16x4xf32> -> vector<16x4xf32>
    %144 = arith.addf %139, %143 : vector<16x4xf32>
    %c0_97 = arith.constant 0 : index
    %c0_98 = arith.constant 0 : index
    %c0_99 = arith.constant 0 : index
    %145 = vector.load %arg8[%c0_97, %c0_98, %c0_99] : memref<2x16x1xf32, #tpu.memory_space<vmem>>, vector<1x16x1xf32>
    %146 = vector.shape_cast %145 : vector<1x16x1xf32> to vector<16x1xf32>
    %147 = vector.broadcast %146 : vector<16x1xf32> to vector<16x4xf32>
    %148 = arith.addf %144, %147 : vector<16x4xf32>
    %149 = arith.addf %110, %148 : vector<16x4xf32>
    %150 = math.tanh %149 : vector<16x4xf32>
    %c0_100 = arith.constant 0 : index
    %c0_101 = arith.constant 0 : index
    %c0_102 = arith.constant 0 : index
    %c0_103 = arith.constant 0 : index
    %151 = vector.load %arg9[%c0_100, %c0_101, %c0_102, %c0_103] : memref<2x2x16x4xf32, #tpu.memory_space<vmem>>, vector<1x1x16x4xf32>
    %152 = vector.shape_cast %151 : vector<1x1x16x4xf32> to vector<16x4xf32>
    %153 = vector.shape_cast %150 : vector<16x4xf32> to vector<1x1x16x4xf32>
    tpu.vector_store %arg9[%c0_100, %c0_101, %c0_102, %c0_103], %153 {strides = array<i32>} : memref<2x2x16x4xf32, #tpu.memory_space<vmem>>, vector<1x1x16x4xf32>,
    %cst_104 = arith.constant dense<0.000000e+00> : vector<4x8xf32>
    %154 = tpu.matmul %70, %8, %cst_104 {dimension_numbers = #tpu.dot_dimension_numbers<[1], [0], [0], [1], [0, 0, 1, 1], [], []>} : vector<4x16xf32>, vector<16x8xf32>, vector<4x8xf32> -> vector<4x8xf32>
    %c1_105 = arith.constant 1 : index
    %c0_106 = arith.constant 0 : index
    %c0_107 = arith.constant 0 : index
    %c0_108 = arith.constant 0 : index
    %155 = vector.load %arg1[%c1_105, %c0_106, %c0_107, %c0_108] : memref<2x3x8x4xf32, #tpu.memory_space<vmem>>, vector<1x1x8x4xf32>
    %156 = vector.shape_cast %155 : vector<1x1x8x4xf32> to vector<8x4xf32>
    %cst_109 = arith.constant dense<0.000000e+00> : vector<8x8xf32>
    %157 = tpu.matmul %156, %154, %cst_109 {dimension_numbers = #tpu.dot_dimension_numbers<[1], [0], [0], [1], [0, 0, 1, 1], [], []>} : vector<8x4xf32>, vector<4x8xf32>, vector<8x8xf32> -> vector<8x8xf32>
    %cst_110 = arith.constant dense<0.000000e+00> : vector<4x8xf32>
    %158 = tpu.matmul %70, %15, %cst_110 {dimension_numbers = #tpu.dot_dimension_numbers<[1], [0], [0], [1], [0, 0, 1, 1], [], []>} : vector<4x16xf32>, vector<16x8xf32>, vector<4x8xf32> -> vector<4x8xf32>
    %c1_111 = arith.constant 1 : index
    %c1_112 = arith.constant 1 : index
    %c0_113 = arith.constant 0 : index
    %c0_114 = arith.constant 0 : index
    %159 = vector.load %arg1[%c1_111, %c1_112, %c0_113, %c0_114] : memref<2x3x8x4xf32, #tpu.memory_space<vmem>>, vector<1x1x8x4xf32>
    %160 = vector.shape_cast %159 : vector<1x1x8x4xf32> to vector<8x4xf32>
    %cst_115 = arith.constant dense<0.000000e+00> : vector<8x8xf32>
    %161 = tpu.matmul %160, %158, %cst_115 {dimension_numbers = #tpu.dot_dimension_numbers<[1], [0], [0], [1], [0, 0, 1, 1], [], []>} : vector<8x4xf32>, vector<4x8xf32>, vector<8x8xf32> -> vector<8x8xf32>
    %162 = arith.addf %157, %161 : vector<8x8xf32>
    %cst_116 = arith.constant dense<0.000000e+00> : vector<4x8xf32>
    %163 = tpu.matmul %70, %22, %cst_116 {dimension_numbers = #tpu.dot_dimension_numbers<[1], [0], [0], [1], [0, 0, 1, 1], [], []>} : vector<4x16xf32>, vector<16x8xf32>, vector<4x8xf32> -> vector<4x8xf32>
    %c1_117 = arith.constant 1 : index
    %c2_118 = arith.constant 2 : index
    %c0_119 = arith.constant 0 : index
    %c0_120 = arith.constant 0 : index
    %164 = vector.load %arg1[%c1_117, %c2_118, %c0_119, %c0_120] : memref<2x3x8x4xf32, #tpu.memory_space<vmem>>, vector<1x1x8x4xf32>
    %165 = vector.shape_cast %164 : vector<1x1x8x4xf32> to vector<8x4xf32>
    %cst_121 = arith.constant dense<0.000000e+00> : vector<8x8xf32>
    %166 = tpu.matmul %165, %163, %cst_121 {dimension_numbers = #tpu.dot_dimension_numbers<[1], [0], [0], [1], [0, 0, 1, 1], [], []>} : vector<8x4xf32>, vector<4x8xf32>, vector<8x8xf32> -> vector<8x8xf32>
    %167 = arith.addf %162, %166 : vector<8x8xf32>
    %c1_122 = arith.constant 1 : index
    %c0_123 = arith.constant 0 : index
    %c0_124 = arith.constant 0 : index
    %168 = vector.load %arg2[%c1_122, %c0_123, %c0_124] : memref<2x8x1xf32, #tpu.memory_space<vmem>>, vector<1x8x1xf32>
    %169 = vector.shape_cast %168 : vector<1x8x1xf32> to vector<8x1xf32>
    %170 = vector.broadcast %169 : vector<8x1xf32> to vector<8x8xf32>
    %171 = arith.addf %167, %170 : vector<8x8xf32>
    %cst_125 = arith.constant 0.000000e+00 : f32
    %172 = vector.broadcast %cst_125 : f32 to vector<8x8xf32>
    %173 = arith.maximumf %171, %172 : vector<8x8xf32>
    %cst_126 = arith.constant dense<0.000000e+00> : vector<8x4xf32>
    %174 = tpu.matmul %173, %31, %cst_126 {dimension_numbers = #tpu.dot_dimension_numbers<[1], [0], [0], [1], [0, 0, 1, 1], [], []>} : vector<8x8xf32>, vector<8x4xf32>, vector<8x4xf32> -> vector<8x4xf32>
    %c1_127 = arith.constant 1 : index
    %c0_128 = arith.constant 0 : index
    %c0_129 = arith.constant 0 : index
    %c0_130 = arith.constant 0 : index
    %175 = vector.load %arg3[%c1_127, %c0_128, %c0_129, %c0_130] : memref<2x3x16x8xf32, #tpu.memory_space<vmem>>, vector<1x1x16x8xf32>
    %176 = vector.shape_cast %175 : vector<1x1x16x8xf32> to vector<16x8xf32>
    %cst_131 = arith.constant dense<0.000000e+00> : vector<16x4xf32>
    %177 = tpu.matmul %176, %174, %cst_131 {dimension_numbers = #tpu.dot_dimension_numbers<[1], [0], [0], [1], [0, 0, 1, 1], [], []>} : vector<16x8xf32>, vector<8x4xf32>, vector<16x4xf32> -> vector<16x4xf32>
    %cst_132 = arith.constant dense<0.000000e+00> : vector<8x4xf32>
    %178 = tpu.matmul %173, %38, %cst_132 {dimension_numbers = #tpu.dot_dimension_numbers<[1], [0], [0], [1], [0, 0, 1, 1], [], []>} : vector<8x8xf32>, vector<8x4xf32>, vector<8x4xf32> -> vector<8x4xf32>
    %c1_133 = arith.constant 1 : index
    %c1_134 = arith.constant 1 : index
    %c0_135 = arith.constant 0 : index
    %c0_136 = arith.constant 0 : index
    %179 = vector.load %arg3[%c1_133, %c1_134, %c0_135, %c0_136] : memref<2x3x16x8xf32, #tpu.memory_space<vmem>>, vector<1x1x16x8xf32>
    %180 = vector.shape_cast %179 : vector<1x1x16x8xf32> to vector<16x8xf32>
    %cst_137 = arith.constant dense<0.000000e+00> : vector<16x4xf32>
    %181 = tpu.matmul %180, %178, %cst_137 {dimension_numbers = #tpu.dot_dimension_numbers<[1], [0], [0], [1], [0, 0, 1, 1], [], []>} : vector<16x8xf32>, vector<8x4xf32>, vector<16x4xf32> -> vector<16x4xf32>
    %182 = arith.addf %177, %181 : vector<16x4xf32>
    %cst_138 = arith.constant dense<0.000000e+00> : vector<8x4xf32>
    %183 = tpu.matmul %173, %45, %cst_138 {dimension_numbers = #tpu.dot_dimension_numbers<[1], [0], [0], [1], [0, 0, 1, 1], [], []>} : vector<8x8xf32>, vector<8x4xf32>, vector<8x4xf32> -> vector<8x4xf32>
    %c1_139 = arith.constant 1 : index
    %c2_140 = arith.constant 2 : index
    %c0_141 = arith.constant 0 : index
    %c0_142 = arith.constant 0 : index
    %184 = vector.load %arg3[%c1_139, %c2_140, %c0_141, %c0_142] : memref<2x3x16x8xf32, #tpu.memory_space<vmem>>, vector<1x1x16x8xf32>
    %185 = vector.shape_cast %184 : vector<1x1x16x8xf32> to vector<16x8xf32>
    %cst_143 = arith.constant dense<0.000000e+00> : vector<16x4xf32>
    %186 = tpu.matmul %185, %183, %cst_143 {dimension_numbers = #tpu.dot_dimension_numbers<[1], [0], [0], [1], [0, 0, 1, 1], [], []>} : vector<16x8xf32>, vector<8x4xf32>, vector<16x4xf32> -> vector<16x4xf32>
    %187 = arith.addf %182, %186 : vector<16x4xf32>
    %c1_144 = arith.constant 1 : index
    %c0_145 = arith.constant 0 : index
    %c0_146 = arith.constant 0 : index
    %188 = vector.load %arg4[%c1_144, %c0_145, %c0_146] : memref<2x16x1xf32, #tpu.memory_space<vmem>>, vector<1x16x1xf32>
    %189 = vector.shape_cast %188 : vector<1x16x1xf32> to vector<16x1xf32>
    %190 = vector.broadcast %189 : vector<16x1xf32> to vector<16x4xf32>
    %191 = arith.addf %187, %190 : vector<16x4xf32>
    %cst_147 = arith.constant 0.000000e+00 : f32
    %192 = vector.broadcast %cst_147 : f32 to vector<16x4xf32>
    %193 = arith.maximumf %191, %192 : vector<16x4xf32>
    %cst_148 = arith.constant dense<0.000000e+00> : vector<16x4xf32>
    %194 = tpu.matmul %193, %54, %cst_148 {dimension_numbers = #tpu.dot_dimension_numbers<[1], [0], [0], [1], [0, 0, 1, 1], [], []>} : vector<16x4xf32>, vector<4x4xf32>, vector<16x4xf32> -> vector<16x4xf32>
    %c1_149 = arith.constant 1 : index
    %c0_150 = arith.constant 0 : index
    %c0_151 = arith.constant 0 : index
    %c0_152 = arith.constant 0 : index
    %195 = vector.load %arg5[%c1_149, %c0_150, %c0_151, %c0_152] : memref<2x3x16x16xf32, #tpu.memory_space<vmem>>, vector<1x1x16x16xf32>
    %196 = vector.shape_cast %195 : vector<1x1x16x16xf32> to vector<16x16xf32>
    %cst_153 = arith.constant dense<0.000000e+00> : vector<16x4xf32>
    %197 = tpu.matmul %196, %194, %cst_153 {dimension_numbers = #tpu.dot_dimension_numbers<[1], [0], [0], [1], [0, 0, 1, 1], [], []>} : vector<16x16xf32>, vector<16x4xf32>, vector<16x4xf32> -> vector<16x4xf32>
    %cst_154 = arith.constant dense<0.000000e+00> : vector<16x4xf32>
    %198 = tpu.matmul %193, %61, %cst_154 {dimension_numbers = #tpu.dot_dimension_numbers<[1], [0], [0], [1], [0, 0, 1, 1], [], []>} : vector<16x4xf32>, vector<4x4xf32>, vector<16x4xf32> -> vector<16x4xf32>
    %c1_155 = arith.constant 1 : index
    %c1_156 = arith.constant 1 : index
    %c0_157 = arith.constant 0 : index
    %c0_158 = arith.constant 0 : index
    %199 = vector.load %arg5[%c1_155, %c1_156, %c0_157, %c0_158] : memref<2x3x16x16xf32, #tpu.memory_space<vmem>>, vector<1x1x16x16xf32>
    %200 = vector.shape_cast %199 : vector<1x1x16x16xf32> to vector<16x16xf32>
    %cst_159 = arith.constant dense<0.000000e+00> : vector<16x4xf32>
    %201 = tpu.matmul %200, %198, %cst_159 {dimension_numbers = #tpu.dot_dimension_numbers<[1], [0], [0], [1], [0, 0, 1, 1], [], []>} : vector<16x16xf32>, vector<16x4xf32>, vector<16x4xf32> -> vector<16x4xf32>
    %202 = arith.addf %197, %201 : vector<16x4xf32>
    %cst_160 = arith.constant dense<0.000000e+00> : vector<16x4xf32>
    %203 = tpu.matmul %193, %68, %cst_160 {dimension_numbers = #tpu.dot_dimension_numbers<[1], [0], [0], [1], [0, 0, 1, 1], [], []>} : vector<16x4xf32>, vector<4x4xf32>, vector<16x4xf32> -> vector<16x4xf32>
    %c1_161 = arith.constant 1 : index
    %c2_162 = arith.constant 2 : index
    %c0_163 = arith.constant 0 : index
    %c0_164 = arith.constant 0 : index
    %204 = vector.load %arg5[%c1_161, %c2_162, %c0_163, %c0_164] : memref<2x3x16x16xf32, #tpu.memory_space<vmem>>, vector<1x1x16x16xf32>
    %205 = vector.shape_cast %204 : vector<1x1x16x16xf32> to vector<16x16xf32>
    %cst_165 = arith.constant dense<0.000000e+00> : vector<16x4xf32>
    %206 = tpu.matmul %205, %203, %cst_165 {dimension_numbers = #tpu.dot_dimension_numbers<[1], [0], [0], [1], [0, 0, 1, 1], [], []>} : vector<16x16xf32>, vector<16x4xf32>, vector<16x4xf32> -> vector<16x4xf32>
    %207 = arith.addf %202, %206 : vector<16x4xf32>
    %c1_166 = arith.constant 1 : index
    %c0_167 = arith.constant 0 : index
    %c0_168 = arith.constant 0 : index
    %208 = vector.load %arg6[%c1_166, %c0_167, %c0_168] : memref<2x16x1xf32, #tpu.memory_space<vmem>>, vector<1x16x1xf32>
    %209 = vector.shape_cast %208 : vector<1x16x1xf32> to vector<16x1xf32>
    %210 = vector.broadcast %209 : vector<16x1xf32> to vector<16x4xf32>
    %211 = arith.addf %207, %210 : vector<16x4xf32>
    %cst_169 = arith.constant 0.000000e+00 : f32
    %212 = vector.broadcast %cst_169 : f32 to vector<16x4xf32>
    %213 = arith.maximumf %211, %212 : vector<16x4xf32>
    %cst_170 = arith.constant dense<0.000000e+00> : vector<16x4xf32>
    %214 = tpu.matmul %213, %54, %cst_170 {dimension_numbers = #tpu.dot_dimension_numbers<[1], [0], [0], [1], [0, 0, 1, 1], [], []>} : vector<16x4xf32>, vector<4x4xf32>, vector<16x4xf32> -> vector<16x4xf32>
    %c1_171 = arith.constant 1 : index
    %c0_172 = arith.constant 0 : index
    %c0_173 = arith.constant 0 : index
    %c0_174 = arith.constant 0 : index
    %215 = vector.load %arg7[%c1_171, %c0_172, %c0_173, %c0_174] : memref<2x3x16x16xf32, #tpu.memory_space<vmem>>, vector<1x1x16x16xf32>
    %216 = vector.shape_cast %215 : vector<1x1x16x16xf32> to vector<16x16xf32>
    %cst_175 = arith.constant dense<0.000000e+00> : vector<16x4xf32>
    %217 = tpu.matmul %216, %214, %cst_175 {dimension_numbers = #tpu.dot_dimension_numbers<[1], [0], [0], [1], [0, 0, 1, 1], [], []>} : vector<16x16xf32>, vector<16x4xf32>, vector<16x4xf32> -> vector<16x4xf32>
    %cst_176 = arith.constant dense<0.000000e+00> : vector<16x4xf32>
    %218 = tpu.matmul %213, %61, %cst_176 {dimension_numbers = #tpu.dot_dimension_numbers<[1], [0], [0], [1], [0, 0, 1, 1], [], []>} : vector<16x4xf32>, vector<4x4xf32>, vector<16x4xf32> -> vector<16x4xf32>
    %c1_177 = arith.constant 1 : index
    %c1_178 = arith.constant 1 : index
    %c0_179 = arith.constant 0 : index
    %c0_180 = arith.constant 0 : index
    %219 = vector.load %arg7[%c1_177, %c1_178, %c0_179, %c0_180] : memref<2x3x16x16xf32, #tpu.memory_space<vmem>>, vector<1x1x16x16xf32>
    %220 = vector.shape_cast %219 : vector<1x1x16x16xf32> to vector<16x16xf32>
    %cst_181 = arith.constant dense<0.000000e+00> : vector<16x4xf32>
    %221 = tpu.matmul %220, %218, %cst_181 {dimension_numbers = #tpu.dot_dimension_numbers<[1], [0], [0], [1], [0, 0, 1, 1], [], []>} : vector<16x16xf32>, vector<16x4xf32>, vector<16x4xf32> -> vector<16x4xf32>
    %222 = arith.addf %217, %221 : vector<16x4xf32>
    %cst_182 = arith.constant dense<0.000000e+00> : vector<16x4xf32>
    %223 = tpu.matmul %213, %68, %cst_182 {dimension_numbers = #tpu.dot_dimension_numbers<[1], [0], [0], [1], [0, 0, 1, 1], [], []>} : vector<16x4xf32>, vector<4x4xf32>, vector<16x4xf32> -> vector<16x4xf32>
    %c1_183 = arith.constant 1 : index
    %c2_184 = arith.constant 2 : index
    %c0_185 = arith.constant 0 : index
    %c0_186 = arith.constant 0 : index
    %224 = vector.load %arg7[%c1_183, %c2_184, %c0_185, %c0_186] : memref<2x3x16x16xf32, #tpu.memory_space<vmem>>, vector<1x1x16x16xf32>
    %225 = vector.shape_cast %224 : vector<1x1x16x16xf32> to vector<16x16xf32>
    %cst_187 = arith.constant dense<0.000000e+00> : vector<16x4xf32>
    %226 = tpu.matmul %225, %223, %cst_187 {dimension_numbers = #tpu.dot_dimension_numbers<[1], [0], [0], [1], [0, 0, 1, 1], [], []>} : vector<16x16xf32>, vector<16x4xf32>, vector<16x4xf32> -> vector<16x4xf32>
    %227 = arith.addf %222, %226 : vector<16x4xf32>
    %c1_188 = arith.constant 1 : index
    %c0_189 = arith.constant 0 : index
    %c0_190 = arith.constant 0 : index
    %228 = vector.load %arg8[%c1_188, %c0_189, %c0_190] : memref<2x16x1xf32, #tpu.memory_space<vmem>>, vector<1x16x1xf32>
    %229 = vector.shape_cast %228 : vector<1x16x1xf32> to vector<16x1xf32>
    %230 = vector.broadcast %229 : vector<16x1xf32> to vector<16x4xf32>
    %231 = arith.addf %227, %230 : vector<16x4xf32>
    %232 = arith.addf %193, %231 : vector<16x4xf32>
    %233 = math.tanh %232 : vector<16x4xf32>
    %c0_191 = arith.constant 0 : index
    %c1_192 = arith.constant 1 : index
    %c0_193 = arith.constant 0 : index
    %c0_194 = arith.constant 0 : index
    %234 = vector.load %arg9[%c0_191, %c1_192, %c0_193, %c0_194] : memref<2x2x16x4xf32, #tpu.memory_space<vmem>>, vector<1x1x16x4xf32>
    %235 = vector.shape_cast %234 : vector<1x1x16x4xf32> to vector<16x4xf32>
    %236 = vector.shape_cast %233 : vector<16x4xf32> to vector<1x1x16x4xf32>
    tpu.vector_store %arg9[%c0_191, %c1_192, %c0_193, %c0_194], %236 {strides = array<i32>} : memref<2x2x16x4xf32, #tpu.memory_space<vmem>>, vector<1x1x16x4xf32>,
    %c1_195 = arith.constant 1 : index
    %c0_196 = arith.constant 0 : index
    %c0_197 = arith.constant 0 : index
    %237 = vector.load %arg0[%c1_195, %c0_196, %c0_197] : memref<2x4x16xf32, #tpu.memory_space<vmem>>, vector<1x4x16xf32>
    %238 = vector.shape_cast %237 : vector<1x4x16xf32> to vector<4x16xf32>
    %cst_198 = arith.constant dense<0.000000e+00> : vector<4x8xf32>
    %239 = tpu.matmul %238, %8, %cst_198 {dimension_numbers = #tpu.dot_dimension_numbers<[1], [0], [0], [1], [0, 0, 1, 1], [], []>} : vector<4x16xf32>, vector<16x8xf32>, vector<4x8xf32> -> vector<4x8xf32>
    %c0_199 = arith.constant 0 : index
    %c0_200 = arith.constant 0 : index
    %c0_201 = arith.constant 0 : index
    %c0_202 = arith.constant 0 : index
    %240 = vector.load %arg1[%c0_199, %c0_200, %c0_201, %c0_202] : memref<2x3x8x4xf32, #tpu.memory_space<vmem>>, vector<1x1x8x4xf32>
    %241 = vector.shape_cast %240 : vector<1x1x8x4xf32> to vector<8x4xf32>
    %cst_203 = arith.constant dense<0.000000e+00> : vector<8x8xf32>
    %242 = tpu.matmul %241, %239, %cst_203 {dimension_numbers = #tpu.dot_dimension_numbers<[1], [0], [0], [1], [0, 0, 1, 1], [], []>} : vector<8x4xf32>, vector<4x8xf32>, vector<8x8xf32> -> vector<8x8xf32>
    %cst_204 = arith.constant dense<0.000000e+00> : vector<4x8xf32>
    %243 = tpu.matmul %238, %15, %cst_204 {dimension_numbers = #tpu.dot_dimension_numbers<[1], [0], [0], [1], [0, 0, 1, 1], [], []>} : vector<4x16xf32>, vector<16x8xf32>, vector<4x8xf32> -> vector<4x8xf32>
    %c0_205 = arith.constant 0 : index
    %c1_206 = arith.constant 1 : index
    %c0_207 = arith.constant 0 : index
    %c0_208 = arith.constant 0 : index
    %244 = vector.load %arg1[%c0_205, %c1_206, %c0_207, %c0_208] : memref<2x3x8x4xf32, #tpu.memory_space<vmem>>, vector<1x1x8x4xf32>
    %245 = vector.shape_cast %244 : vector<1x1x8x4xf32> to vector<8x4xf32>
    %cst_209 = arith.constant dense<0.000000e+00> : vector<8x8xf32>
    %246 = tpu.matmul %245, %243, %cst_209 {dimension_numbers = #tpu.dot_dimension_numbers<[1], [0], [0], [1], [0, 0, 1, 1], [], []>} : vector<8x4xf32>, vector<4x8xf32>, vector<8x8xf32> -> vector<8x8xf32>
    %247 = arith.addf %242, %246 : vector<8x8xf32>
    %cst_210 = arith.constant dense<0.000000e+00> : vector<4x8xf32>
    %248 = tpu.matmul %238, %22, %cst_210 {dimension_numbers = #tpu.dot_dimension_numbers<[1], [0], [0], [1], [0, 0, 1, 1], [], []>} : vector<4x16xf32>, vector<16x8xf32>, vector<4x8xf32> -> vector<4x8xf32>
    %c0_211 = arith.constant 0 : index
    %c2_212 = arith.constant 2 : index
    %c0_213 = arith.constant 0 : index
    %c0_214 = arith.constant 0 : index
    %249 = vector.load %arg1[%c0_211, %c2_212, %c0_213, %c0_214] : memref<2x3x8x4xf32, #tpu.memory_space<vmem>>, vector<1x1x8x4xf32>
    %250 = vector.shape_cast %249 : vector<1x1x8x4xf32> to vector<8x4xf32>
    %cst_215 = arith.constant dense<0.000000e+00> : vector<8x8xf32>
    %251 = tpu.matmul %250, %248, %cst_215 {dimension_numbers = #tpu.dot_dimension_numbers<[1], [0], [0], [1], [0, 0, 1, 1], [], []>} : vector<8x4xf32>, vector<4x8xf32>, vector<8x8xf32> -> vector<8x8xf32>
    %252 = arith.addf %247, %251 : vector<8x8xf32>
    %c0_216 = arith.constant 0 : index
    %c0_217 = arith.constant 0 : index
    %c0_218 = arith.constant 0 : index
    %253 = vector.load %arg2[%c0_216, %c0_217, %c0_218] : memref<2x8x1xf32, #tpu.memory_space<vmem>>, vector<1x8x1xf32>
    %254 = vector.shape_cast %253 : vector<1x8x1xf32> to vector<8x1xf32>
    %255 = vector.broadcast %254 : vector<8x1xf32> to vector<8x8xf32>
    %256 = arith.addf %252, %255 : vector<8x8xf32>
    %cst_219 = arith.constant 0.000000e+00 : f32
    %257 = vector.broadcast %cst_219 : f32 to vector<8x8xf32>
    %258 = arith.maximumf %256, %257 : vector<8x8xf32>
    %cst_220 = arith.constant dense<0.000000e+00> : vector<8x4xf32>
    %259 = tpu.matmul %258, %31, %cst_220 {dimension_numbers = #tpu.dot_dimension_numbers<[1], [0], [0], [1], [0, 0, 1, 1], [], []>} : vector<8x8xf32>, vector<8x4xf32>, vector<8x4xf32> -> vector<8x4xf32>
    %c0_221 = arith.constant 0 : index
    %c0_222 = arith.constant 0 : index
    %c0_223 = arith.constant 0 : index
    %c0_224 = arith.constant 0 : index
    %260 = vector.load %arg3[%c0_221, %c0_222, %c0_223, %c0_224] : memref<2x3x16x8xf32, #tpu.memory_space<vmem>>, vector<1x1x16x8xf32>
    %261 = vector.shape_cast %260 : vector<1x1x16x8xf32> to vector<16x8xf32>
    %cst_225 = arith.constant dense<0.000000e+00> : vector<16x4xf32>
    %262 = tpu.matmul %261, %259, %cst_225 {dimension_numbers = #tpu.dot_dimension_numbers<[1], [0], [0], [1], [0, 0, 1, 1], [], []>} : vector<16x8xf32>, vector<8x4xf32>, vector<16x4xf32> -> vector<16x4xf32>
    %cst_226 = arith.constant dense<0.000000e+00> : vector<8x4xf32>
    %263 = tpu.matmul %258, %38, %cst_226 {dimension_numbers = #tpu.dot_dimension_numbers<[1], [0], [0], [1], [0, 0, 1, 1], [], []>} : vector<8x8xf32>, vector<8x4xf32>, vector<8x4xf32> -> vector<8x4xf32>
    %c0_227 = arith.constant 0 : index
    %c1_228 = arith.constant 1 : index
    %c0_229 = arith.constant 0 : index
    %c0_230 = arith.constant 0 : index
    %264 = vector.load %arg3[%c0_227, %c1_228, %c0_229, %c0_230] : memref<2x3x16x8xf32, #tpu.memory_space<vmem>>, vector<1x1x16x8xf32>
    %265 = vector.shape_cast %264 : vector<1x1x16x8xf32> to vector<16x8xf32>
    %cst_231 = arith.constant dense<0.000000e+00> : vector<16x4xf32>
    %266 = tpu.matmul %265, %263, %cst_231 {dimension_numbers = #tpu.dot_dimension_numbers<[1], [0], [0], [1], [0, 0, 1, 1], [], []>} : vector<16x8xf32>, vector<8x4xf32>, vector<16x4xf32> -> vector<16x4xf32>
    %267 = arith.addf %262, %266 : vector<16x4xf32>
    %cst_232 = arith.constant dense<0.000000e+00> : vector<8x4xf32>
    %268 = tpu.matmul %258, %45, %cst_232 {dimension_numbers = #tpu.dot_dimension_numbers<[1], [0], [0], [1], [0, 0, 1, 1], [], []>} : vector<8x8xf32>, vector<8x4xf32>, vector<8x4xf32> -> vector<8x4xf32>
    %c0_233 = arith.constant 0 : index
    %c2_234 = arith.constant 2 : index
    %c0_235 = arith.constant 0 : index
    %c0_236 = arith.constant 0 : index
    %269 = vector.load %arg3[%c0_233, %c2_234, %c0_235, %c0_236] : memref<2x3x16x8xf32, #tpu.memory_space<vmem>>, vector<1x1x16x8xf32>
    %270 = vector.shape_cast %269 : vector<1x1x16x8xf32> to vector<16x8xf32>
    %cst_237 = arith.constant dense<0.000000e+00> : vector<16x4xf32>
    %271 = tpu.matmul %270, %268, %cst_237 {dimension_numbers = #tpu.dot_dimension_numbers<[1], [0], [0], [1], [0, 0, 1, 1], [], []>} : vector<16x8xf32>, vector<8x4xf32>, vector<16x4xf32> -> vector<16x4xf32>
    %272 = arith.addf %267, %271 : vector<16x4xf32>
    %c0_238 = arith.constant 0 : index
    %c0_239 = arith.constant 0 : index
    %c0_240 = arith.constant 0 : index
    %273 = vector.load %arg4[%c0_238, %c0_239, %c0_240] : memref<2x16x1xf32, #tpu.memory_space<vmem>>, vector<1x16x1xf32>
    %274 = vector.shape_cast %273 : vector<1x16x1xf32> to vector<16x1xf32>
    %275 = vector.broadcast %274 : vector<16x1xf32> to vector<16x4xf32>
    %276 = arith.addf %272, %275 : vector<16x4xf32>
    %cst_241 = arith.constant 0.000000e+00 : f32
    %277 = vector.broadcast %cst_241 : f32 to vector<16x4xf32>
    %278 = arith.maximumf %276, %277 : vector<16x4xf32>
    %cst_242 = arith.constant dense<0.000000e+00> : vector<16x4xf32>
    %279 = tpu.matmul %278, %54, %cst_242 {dimension_numbers = #tpu.dot_dimension_numbers<[1], [0], [0], [1], [0, 0, 1, 1], [], []>} : vector<16x4xf32>, vector<4x4xf32>, vector<16x4xf32> -> vector<16x4xf32>
    %c0_243 = arith.constant 0 : index
    %c0_244 = arith.constant 0 : index
    %c0_245 = arith.constant 0 : index
    %c0_246 = arith.constant 0 : index
    %280 = vector.load %arg5[%c0_243, %c0_244, %c0_245, %c0_246] : memref<2x3x16x16xf32, #tpu.memory_space<vmem>>, vector<1x1x16x16xf32>
    %281 = vector.shape_cast %280 : vector<1x1x16x16xf32> to vector<16x16xf32>
    %cst_247 = arith.constant dense<0.000000e+00> : vector<16x4xf32>
    %282 = tpu.matmul %281, %279, %cst_247 {dimension_numbers = #tpu.dot_dimension_numbers<[1], [0], [0], [1], [0, 0, 1, 1], [], []>} : vector<16x16xf32>, vector<16x4xf32>, vector<16x4xf32> -> vector<16x4xf32>
    %cst_248 = arith.constant dense<0.000000e+00> : vector<16x4xf32>
    %283 = tpu.matmul %278, %61, %cst_248 {dimension_numbers = #tpu.dot_dimension_numbers<[1], [0], [0], [1], [0, 0, 1, 1], [], []>} : vector<16x4xf32>, vector<4x4xf32>, vector<16x4xf32> -> vector<16x4xf32>
    %c0_249 = arith.constant 0 : index
    %c1_250 = arith.constant 1 : index
    %c0_251 = arith.constant 0 : index
    %c0_252 = arith.constant 0 : index
    %284 = vector.load %arg5[%c0_249, %c1_250, %c0_251, %c0_252] : memref<2x3x16x16xf32, #tpu.memory_space<vmem>>, vector<1x1x16x16xf32>
    %285 = vector.shape_cast %284 : vector<1x1x16x16xf32> to vector<16x16xf32>
    %cst_253 = arith.constant dense<0.000000e+00> : vector<16x4xf32>
    %286 = tpu.matmul %285, %283, %cst_253 {dimension_numbers = #tpu.dot_dimension_numbers<[1], [0], [0], [1], [0, 0, 1, 1], [], []>} : vector<16x16xf32>, vector<16x4xf32>, vector<16x4xf32> -> vector<16x4xf32>
    %287 = arith.addf %282, %286 : vector<16x4xf32>
    %cst_254 = arith.constant dense<0.000000e+00> : vector<16x4xf32>
    %288 = tpu.matmul %278, %68, %cst_254 {dimension_numbers = #tpu.dot_dimension_numbers<[1], [0], [0], [1], [0, 0, 1, 1], [], []>} : vector<16x4xf32>, vector<4x4xf32>, vector<16x4xf32> -> vector<16x4xf32>
    %c0_255 = arith.constant 0 : index
    %c2_256 = arith.constant 2 : index
    %c0_257 = arith.constant 0 : index
    %c0_258 = arith.constant 0 : index
    %289 = vector.load %arg5[%c0_255, %c2_256, %c0_257, %c0_258] : memref<2x3x16x16xf32, #tpu.memory_space<vmem>>, vector<1x1x16x16xf32>
    %290 = vector.shape_cast %289 : vector<1x1x16x16xf32> to vector<16x16xf32>
    %cst_259 = arith.constant dense<0.000000e+00> : vector<16x4xf32>
    %291 = tpu.matmul %290, %288, %cst_259 {dimension_numbers = #tpu.dot_dimension_numbers<[1], [0], [0], [1], [0, 0, 1, 1], [], []>} : vector<16x16xf32>, vector<16x4xf32>, vector<16x4xf32> -> vector<16x4xf32>
    %292 = arith.addf %287, %291 : vector<16x4xf32>
    %c0_260 = arith.constant 0 : index
    %c0_261 = arith.constant 0 : index
    %c0_262 = arith.constant 0 : index
    %293 = vector.load %arg6[%c0_260, %c0_261, %c0_262] : memref<2x16x1xf32, #tpu.memory_space<vmem>>, vector<1x16x1xf32>
    %294 = vector.shape_cast %293 : vector<1x16x1xf32> to vector<16x1xf32>
    %295 = vector.broadcast %294 : vector<16x1xf32> to vector<16x4xf32>
    %296 = arith.addf %292, %295 : vector<16x4xf32>
    %cst_263 = arith.constant 0.000000e+00 : f32
    %297 = vector.broadcast %cst_263 : f32 to vector<16x4xf32>
    %298 = arith.maximumf %296, %297 : vector<16x4xf32>
    %cst_264 = arith.constant dense<0.000000e+00> : vector<16x4xf32>
    %299 = tpu.matmul %298, %54, %cst_264 {dimension_numbers = #tpu.dot_dimension_numbers<[1], [0], [0], [1], [0, 0, 1, 1], [], []>} : vector<16x4xf32>, vector<4x4xf32>, vector<16x4xf32> -> vector<16x4xf32>
    %c0_265 = arith.constant 0 : index
    %c0_266 = arith.constant 0 : index
    %c0_267 = arith.constant 0 : index
    %c0_268 = arith.constant 0 : index
    %300 = vector.load %arg7[%c0_265, %c0_266, %c0_267, %c0_268] : memref<2x3x16x16xf32, #tpu.memory_space<vmem>>, vector<1x1x16x16xf32>
    %301 = vector.shape_cast %300 : vector<1x1x16x16xf32> to vector<16x16xf32>
    %cst_269 = arith.constant dense<0.000000e+00> : vector<16x4xf32>
    %302 = tpu.matmul %301, %299, %cst_269 {dimension_numbers = #tpu.dot_dimension_numbers<[1], [0], [0], [1], [0, 0, 1, 1], [], []>} : vector<16x16xf32>, vector<16x4xf32>, vector<16x4xf32> -> vector<16x4xf32>
    %cst_270 = arith.constant dense<0.000000e+00> : vector<16x4xf32>
    %303 = tpu.matmul %298, %61, %cst_270 {dimension_numbers = #tpu.dot_dimension_numbers<[1], [0], [0], [1], [0, 0, 1, 1], [], []>} : vector<16x4xf32>, vector<4x4xf32>, vector<16x4xf32> -> vector<16x4xf32>
    %c0_271 = arith.constant 0 : index
    %c1_272 = arith.constant 1 : index
    %c0_273 = arith.constant 0 : index
    %c0_274 = arith.constant 0 : index
    %304 = vector.load %arg7[%c0_271, %c1_272, %c0_273, %c0_274] : memref<2x3x16x16xf32, #tpu.memory_space<vmem>>, vector<1x1x16x16xf32>
    %305 = vector.shape_cast %304 : vector<1x1x16x16xf32> to vector<16x16xf32>
    %cst_275 = arith.constant dense<0.000000e+00> : vector<16x4xf32>
    %306 = tpu.matmul %305, %303, %cst_275 {dimension_numbers = #tpu.dot_dimension_numbers<[1], [0], [0], [1], [0, 0, 1, 1], [], []>} : vector<16x16xf32>, vector<16x4xf32>, vector<16x4xf32> -> vector<16x4xf32>
    %307 = arith.addf %302, %306 : vector<16x4xf32>
    %cst_276 = arith.constant dense<0.000000e+00> : vector<16x4xf32>
    %308 = tpu.matmul %298, %68, %cst_276 {dimension_numbers = #tpu.dot_dimension_numbers<[1], [0], [0], [1], [0, 0, 1, 1], [], []>} : vector<16x4xf32>, vector<4x4xf32>, vector<16x4xf32> -> vector<16x4xf32>
    %c0_277 = arith.constant 0 : index
    %c2_278 = arith.constant 2 : index
    %c0_279 = arith.constant 0 : index
    %c0_280 = arith.constant 0 : index
    %309 = vector.load %arg7[%c0_277, %c2_278, %c0_279, %c0_280] : memref<2x3x16x16xf32, #tpu.memory_space<vmem>>, vector<1x1x16x16xf32>
    %310 = vector.shape_cast %309 : vector<1x1x16x16xf32> to vector<16x16xf32>
    %cst_281 = arith.constant dense<0.000000e+00> : vector<16x4xf32>
    %311 = tpu.matmul %310, %308, %cst_281 {dimension_numbers = #tpu.dot_dimension_numbers<[1], [0], [0], [1], [0, 0, 1, 1], [], []>} : vector<16x16xf32>, vector<16x4xf32>, vector<16x4xf32> -> vector<16x4xf32>
    %312 = arith.addf %307, %311 : vector<16x4xf32>
    %c0_282 = arith.constant 0 : index
    %c0_283 = arith.constant 0 : index
    %c0_284 = arith.constant 0 : index
    %313 = vector.load %arg8[%c0_282, %c0_283, %c0_284] : memref<2x16x1xf32, #tpu.memory_space<vmem>>, vector<1x16x1xf32>
    %314 = vector.shape_cast %313 : vector<1x16x1xf32> to vector<16x1xf32>
    %315 = vector.broadcast %314 : vector<16x1xf32> to vector<16x4xf32>
    %316 = arith.addf %312, %315 : vector<16x4xf32>
    %317 = arith.addf %278, %316 : vector<16x4xf32>
    %318 = math.tanh %317 : vector<16x4xf32>
    %c1_285 = arith.constant 1 : index
    %c0_286 = arith.constant 0 : index
    %c0_287 = arith.constant 0 : index
    %c0_288 = arith.constant 0 : index
    %319 = vector.load %arg9[%c1_285, %c0_286, %c0_287, %c0_288] : memref<2x2x16x4xf32, #tpu.memory_space<vmem>>, vector<1x1x16x4xf32>
    %320 = vector.shape_cast %319 : vector<1x1x16x4xf32> to vector<16x4xf32>
    %321 = vector.shape_cast %318 : vector<16x4xf32> to vector<1x1x16x4xf32>
    tpu.vector_store %arg9[%c1_285, %c0_286, %c0_287, %c0_288], %321 {strides = array<i32>} : memref<2x2x16x4xf32, #tpu.memory_space<vmem>>, vector<1x1x16x4xf32>,
    %cst_289 = arith.constant dense<0.000000e+00> : vector<4x8xf32>
    %322 = tpu.matmul %238, %8, %cst_289 {dimension_numbers = #tpu.dot_dimension_numbers<[1], [0], [0], [1], [0, 0, 1, 1], [], []>} : vector<4x16xf32>, vector<16x8xf32>, vector<4x8xf32> -> vector<4x8xf32>
    %c1_290 = arith.constant 1 : index
    %c0_291 = arith.constant 0 : index
    %c0_292 = arith.constant 0 : index
    %c0_293 = arith.constant 0 : index
    %323 = vector.load %arg1[%c1_290, %c0_291, %c0_292, %c0_293] : memref<2x3x8x4xf32, #tpu.memory_space<vmem>>, vector<1x1x8x4xf32>
    %324 = vector.shape_cast %323 : vector<1x1x8x4xf32> to vector<8x4xf32>
    %cst_294 = arith.constant dense<0.000000e+00> : vector<8x8xf32>
    %325 = tpu.matmul %324, %322, %cst_294 {dimension_numbers = #tpu.dot_dimension_numbers<[1], [0], [0], [1], [0, 0, 1, 1], [], []>} : vector<8x4xf32>, vector<4x8xf32>, vector<8x8xf32> -> vector<8x8xf32>
    %cst_295 = arith.constant dense<0.000000e+00> : vector<4x8xf32>
    %326 = tpu.matmul %238, %15, %cst_295 {dimension_numbers = #tpu.dot_dimension_numbers<[1], [0], [0], [1], [0, 0, 1, 1], [], []>} : vector<4x16xf32>, vector<16x8xf32>, vector<4x8xf32> -> vector<4x8xf32>
    %c1_296 = arith.constant 1 : index
    %c1_297 = arith.constant 1 : index
    %c0_298 = arith.constant 0 : index
    %c0_299 = arith.constant 0 : index
    %327 = vector.load %arg1[%c1_296, %c1_297, %c0_298, %c0_299] : memref<2x3x8x4xf32, #tpu.memory_space<vmem>>, vector<1x1x8x4xf32>
    %328 = vector.shape_cast %327 : vector<1x1x8x4xf32> to vector<8x4xf32>
    %cst_300 = arith.constant dense<0.000000e+00> : vector<8x8xf32>
    %329 = tpu.matmul %328, %326, %cst_300 {dimension_numbers = #tpu.dot_dimension_numbers<[1], [0], [0], [1], [0, 0, 1, 1], [], []>} : vector<8x4xf32>, vector<4x8xf32>, vector<8x8xf32> -> vector<8x8xf32>
    %330 = arith.addf %325, %329 : vector<8x8xf32>
    %cst_301 = arith.constant dense<0.000000e+00> : vector<4x8xf32>
    %331 = tpu.matmul %238, %22, %cst_301 {dimension_numbers = #tpu.dot_dimension_numbers<[1], [0], [0], [1], [0, 0, 1, 1], [], []>} : vector<4x16xf32>, vector<16x8xf32>, vector<4x8xf32> -> vector<4x8xf32>
    %c1_302 = arith.constant 1 : index
    %c2_303 = arith.constant 2 : index
    %c0_304 = arith.constant 0 : index
    %c0_305 = arith.constant 0 : index
    %332 = vector.load %arg1[%c1_302, %c2_303, %c0_304, %c0_305] : memref<2x3x8x4xf32, #tpu.memory_space<vmem>>, vector<1x1x8x4xf32>
    %333 = vector.shape_cast %332 : vector<1x1x8x4xf32> to vector<8x4xf32>
    %cst_306 = arith.constant dense<0.000000e+00> : vector<8x8xf32>
    %334 = tpu.matmul %333, %331, %cst_306 {dimension_numbers = #tpu.dot_dimension_numbers<[1], [0], [0], [1], [0, 0, 1, 1], [], []>} : vector<8x4xf32>, vector<4x8xf32>, vector<8x8xf32> -> vector<8x8xf32>
    %335 = arith.addf %330, %334 : vector<8x8xf32>
    %c1_307 = arith.constant 1 : index
    %c0_308 = arith.constant 0 : index
    %c0_309 = arith.constant 0 : index
    %336 = vector.load %arg2[%c1_307, %c0_308, %c0_309] : memref<2x8x1xf32, #tpu.memory_space<vmem>>, vector<1x8x1xf32>
    %337 = vector.shape_cast %336 : vector<1x8x1xf32> to vector<8x1xf32>
    %338 = vector.broadcast %337 : vector<8x1xf32> to vector<8x8xf32>
    %339 = arith.addf %335, %338 : vector<8x8xf32>
    %cst_310 = arith.constant 0.000000e+00 : f32
    %340 = vector.broadcast %cst_310 : f32 to vector<8x8xf32>
    %341 = arith.maximumf %339, %340 : vector<8x8xf32>
    %cst_311 = arith.constant dense<0.000000e+00> : vector<8x4xf32>
    %342 = tpu.matmul %341, %31, %cst_311 {dimension_numbers = #tpu.dot_dimension_numbers<[1], [0], [0], [1], [0, 0, 1, 1], [], []>} : vector<8x8xf32>, vector<8x4xf32>, vector<8x4xf32> -> vector<8x4xf32>
    %c1_312 = arith.constant 1 : index
    %c0_313 = arith.constant 0 : index
    %c0_314 = arith.constant 0 : index
    %c0_315 = arith.constant 0 : index
    %343 = vector.load %arg3[%c1_312, %c0_313, %c0_314, %c0_315] : memref<2x3x16x8xf32, #tpu.memory_space<vmem>>, vector<1x1x16x8xf32>
    %344 = vector.shape_cast %343 : vector<1x1x16x8xf32> to vector<16x8xf32>
    %cst_316 = arith.constant dense<0.000000e+00> : vector<16x4xf32>
    %345 = tpu.matmul %344, %342, %cst_316 {dimension_numbers = #tpu.dot_dimension_numbers<[1], [0], [0], [1], [0, 0, 1, 1], [], []>} : vector<16x8xf32>, vector<8x4xf32>, vector<16x4xf32> -> vector<16x4xf32>
    %cst_317 = arith.constant dense<0.000000e+00> : vector<8x4xf32>
    %346 = tpu.matmul %341, %38, %cst_317 {dimension_numbers = #tpu.dot_dimension_numbers<[1], [0], [0], [1], [0, 0, 1, 1], [], []>} : vector<8x8xf32>, vector<8x4xf32>, vector<8x4xf32> -> vector<8x4xf32>
    %c1_318 = arith.constant 1 : index
    %c1_319 = arith.constant 1 : index
    %c0_320 = arith.constant 0 : index
    %c0_321 = arith.constant 0 : index
    %347 = vector.load %arg3[%c1_318, %c1_319, %c0_320, %c0_321] : memref<2x3x16x8xf32, #tpu.memory_space<vmem>>, vector<1x1x16x8xf32>
    %348 = vector.shape_cast %347 : vector<1x1x16x8xf32> to vector<16x8xf32>
    %cst_322 = arith.constant dense<0.000000e+00> : vector<16x4xf32>
    %349 = tpu.matmul %348, %346, %cst_322 {dimension_numbers = #tpu.dot_dimension_numbers<[1], [0], [0], [1], [0, 0, 1, 1], [], []>} : vector<16x8xf32>, vector<8x4xf32>, vector<16x4xf32> -> vector<16x4xf32>
    %350 = arith.addf %345, %349 : vector<16x4xf32>
    %cst_323 = arith.constant dense<0.000000e+00> : vector<8x4xf32>
    %351 = tpu.matmul %341, %45, %cst_323 {dimension_numbers = #tpu.dot_dimension_numbers<[1], [0], [0], [1], [0, 0, 1, 1], [], []>} : vector<8x8xf32>, vector<8x4xf32>, vector<8x4xf32> -> vector<8x4xf32>
    %c1_324 = arith.constant 1 : index
    %c2_325 = arith.constant 2 : index
    %c0_326 = arith.constant 0 : index
    %c0_327 = arith.constant 0 : index
    %352 = vector.load %arg3[%c1_324, %c2_325, %c0_326, %c0_327] : memref<2x3x16x8xf32, #tpu.memory_space<vmem>>, vector<1x1x16x8xf32>
    %353 = vector.shape_cast %352 : vector<1x1x16x8xf32> to vector<16x8xf32>
    %cst_328 = arith.constant dense<0.000000e+00> : vector<16x4xf32>
    %354 = tpu.matmul %353, %351, %cst_328 {dimension_numbers = #tpu.dot_dimension_numbers<[1], [0], [0], [1], [0, 0, 1, 1], [], []>} : vector<16x8xf32>, vector<8x4xf32>, vector<16x4xf32> -> vector<16x4xf32>
    %355 = arith.addf %350, %354 : vector<16x4xf32>
    %c1_329 = arith.constant 1 : index
    %c0_330 = arith.constant 0 : index
    %c0_331 = arith.constant 0 : index
    %356 = vector.load %arg4[%c1_329, %c0_330, %c0_331] : memref<2x16x1xf32, #tpu.memory_space<vmem>>, vector<1x16x1xf32>
    %357 = vector.shape_cast %356 : vector<1x16x1xf32> to vector<16x1xf32>
    %358 = vector.broadcast %357 : vector<16x1xf32> to vector<16x4xf32>
    %359 = arith.addf %355, %358 : vector<16x4xf32>
    %cst_332 = arith.constant 0.000000e+00 : f32
    %360 = vector.broadcast %cst_332 : f32 to vector<16x4xf32>
    %361 = arith.maximumf %359, %360 : vector<16x4xf32>
    %cst_333 = arith.constant dense<0.000000e+00> : vector<16x4xf32>
    %362 = tpu.matmul %361, %54, %cst_333 {dimension_numbers = #tpu.dot_dimension_numbers<[1], [0], [0], [1], [0, 0, 1, 1], [], []>} : vector<16x4xf32>, vector<4x4xf32>, vector<16x4xf32> -> vector<16x4xf32>
    %c1_334 = arith.constant 1 : index
    %c0_335 = arith.constant 0 : index
    %c0_336 = arith.constant 0 : index
    %c0_337 = arith.constant 0 : index
    %363 = vector.load %arg5[%c1_334, %c0_335, %c0_336, %c0_337] : memref<2x3x16x16xf32, #tpu.memory_space<vmem>>, vector<1x1x16x16xf32>
    %364 = vector.shape_cast %363 : vector<1x1x16x16xf32> to vector<16x16xf32>
    %cst_338 = arith.constant dense<0.000000e+00> : vector<16x4xf32>
    %365 = tpu.matmul %364, %362, %cst_338 {dimension_numbers = #tpu.dot_dimension_numbers<[1], [0], [0], [1], [0, 0, 1, 1], [], []>} : vector<16x16xf32>, vector<16x4xf32>, vector<16x4xf32> -> vector<16x4xf32>
    %cst_339 = arith.constant dense<0.000000e+00> : vector<16x4xf32>
    %366 = tpu.matmul %361, %61, %cst_339 {dimension_numbers = #tpu.dot_dimension_numbers<[1], [0], [0], [1], [0, 0, 1, 1], [], []>} : vector<16x4xf32>, vector<4x4xf32>, vector<16x4xf32> -> vector<16x4xf32>
    %c1_340 = arith.constant 1 : index
    %c1_341 = arith.constant 1 : index
    %c0_342 = arith.constant 0 : index
    %c0_343 = arith.constant 0 : index
    %367 = vector.load %arg5[%c1_340, %c1_341, %c0_342, %c0_343] : memref<2x3x16x16xf32, #tpu.memory_space<vmem>>, vector<1x1x16x16xf32>
    %368 = vector.shape_cast %367 : vector<1x1x16x16xf32> to vector<16x16xf32>
    %cst_344 = arith.constant dense<0.000000e+00> : vector<16x4xf32>
    %369 = tpu.matmul %368, %366, %cst_344 {dimension_numbers = #tpu.dot_dimension_numbers<[1], [0], [0], [1], [0, 0, 1, 1], [], []>} : vector<16x16xf32>, vector<16x4xf32>, vector<16x4xf32> -> vector<16x4xf32>
    %370 = arith.addf %365, %369 : vector<16x4xf32>
    %cst_345 = arith.constant dense<0.000000e+00> : vector<16x4xf32>
    %371 = tpu.matmul %361, %68, %cst_345 {dimension_numbers = #tpu.dot_dimension_numbers<[1], [0], [0], [1], [0, 0, 1, 1], [], []>} : vector<16x4xf32>, vector<4x4xf32>, vector<16x4xf32> -> vector<16x4xf32>
    %c1_346 = arith.constant 1 : index
    %c2_347 = arith.constant 2 : index
    %c0_348 = arith.constant 0 : index
    %c0_349 = arith.constant 0 : index
    %372 = vector.load %arg5[%c1_346, %c2_347, %c0_348, %c0_349] : memref<2x3x16x16xf32, #tpu.memory_space<vmem>>, vector<1x1x16x16xf32>
    %373 = vector.shape_cast %372 : vector<1x1x16x16xf32> to vector<16x16xf32>
    %cst_350 = arith.constant dense<0.000000e+00> : vector<16x4xf32>
    %374 = tpu.matmul %373, %371, %cst_350 {dimension_numbers = #tpu.dot_dimension_numbers<[1], [0], [0], [1], [0, 0, 1, 1], [], []>} : vector<16x16xf32>, vector<16x4xf32>, vector<16x4xf32> -> vector<16x4xf32>
    %375 = arith.addf %370, %374 : vector<16x4xf32>
    %c1_351 = arith.constant 1 : index
    %c0_352 = arith.constant 0 : index
    %c0_353 = arith.constant 0 : index
    %376 = vector.load %arg6[%c1_351, %c0_352, %c0_353] : memref<2x16x1xf32, #tpu.memory_space<vmem>>, vector<1x16x1xf32>
    %377 = vector.shape_cast %376 : vector<1x16x1xf32> to vector<16x1xf32>
    %378 = vector.broadcast %377 : vector<16x1xf32> to vector<16x4xf32>
    %379 = arith.addf %375, %378 : vector<16x4xf32>
    %cst_354 = arith.constant 0.000000e+00 : f32
    %380 = vector.broadcast %cst_354 : f32 to vector<16x4xf32>
    %381 = arith.maximumf %379, %380 : vector<16x4xf32>
    %cst_355 = arith.constant dense<0.000000e+00> : vector<16x4xf32>
    %382 = tpu.matmul %381, %54, %cst_355 {dimension_numbers = #tpu.dot_dimension_numbers<[1], [0], [0], [1], [0, 0, 1, 1], [], []>} : vector<16x4xf32>, vector<4x4xf32>, vector<16x4xf32> -> vector<16x4xf32>
    %c1_356 = arith.constant 1 : index
    %c0_357 = arith.constant 0 : index
    %c0_358 = arith.constant 0 : index
    %c0_359 = arith.constant 0 : index
    %383 = vector.load %arg7[%c1_356, %c0_357, %c0_358, %c0_359] : memref<2x3x16x16xf32, #tpu.memory_space<vmem>>, vector<1x1x16x16xf32>
    %384 = vector.shape_cast %383 : vector<1x1x16x16xf32> to vector<16x16xf32>
    %cst_360 = arith.constant dense<0.000000e+00> : vector<16x4xf32>
    %385 = tpu.matmul %384, %382, %cst_360 {dimension_numbers = #tpu.dot_dimension_numbers<[1], [0], [0], [1], [0, 0, 1, 1], [], []>} : vector<16x16xf32>, vector<16x4xf32>, vector<16x4xf32> -> vector<16x4xf32>
    %cst_361 = arith.constant dense<0.000000e+00> : vector<16x4xf32>
    %386 = tpu.matmul %381, %61, %cst_361 {dimension_numbers = #tpu.dot_dimension_numbers<[1], [0], [0], [1], [0, 0, 1, 1], [], []>} : vector<16x4xf32>, vector<4x4xf32>, vector<16x4xf32> -> vector<16x4xf32>
    %c1_362 = arith.constant 1 : index
    %c1_363 = arith.constant 1 : index
    %c0_364 = arith.constant 0 : index
    %c0_365 = arith.constant 0 : index
    %387 = vector.load %arg7[%c1_362, %c1_363, %c0_364, %c0_365] : memref<2x3x16x16xf32, #tpu.memory_space<vmem>>, vector<1x1x16x16xf32>
    %388 = vector.shape_cast %387 : vector<1x1x16x16xf32> to vector<16x16xf32>
    %cst_366 = arith.constant dense<0.000000e+00> : vector<16x4xf32>
    %389 = tpu.matmul %388, %386, %cst_366 {dimension_numbers = #tpu.dot_dimension_numbers<[1], [0], [0], [1], [0, 0, 1, 1], [], []>} : vector<16x16xf32>, vector<16x4xf32>, vector<16x4xf32> -> vector<16x4xf32>
    %390 = arith.addf %385, %389 : vector<16x4xf32>
    %cst_367 = arith.constant dense<0.000000e+00> : vector<16x4xf32>
    %391 = tpu.matmul %381, %68, %cst_367 {dimension_numbers = #tpu.dot_dimension_numbers<[1], [0], [0], [1], [0, 0, 1, 1], [], []>} : vector<16x4xf32>, vector<4x4xf32>, vector<16x4xf32> -> vector<16x4xf32>
    %c1_368 = arith.constant 1 : index
    %c2_369 = arith.constant 2 : index
    %c0_370 = arith.constant 0 : index
    %c0_371 = arith.constant 0 : index
    %392 = vector.load %arg7[%c1_368, %c2_369, %c0_370, %c0_371] : memref<2x3x16x16xf32, #tpu.memory_space<vmem>>, vector<1x1x16x16xf32>
    %393 = vector.shape_cast %392 : vector<1x1x16x16xf32> to vector<16x16xf32>
    %cst_372 = arith.constant dense<0.000000e+00> : vector<16x4xf32>
    %394 = tpu.matmul %393, %391, %cst_372 {dimension_numbers = #tpu.dot_dimension_numbers<[1], [0], [0], [1], [0, 0, 1, 1], [], []>} : vector<16x16xf32>, vector<16x4xf32>, vector<16x4xf32> -> vector<16x4xf32>
    %395 = arith.addf %390, %394 : vector<16x4xf32>
    %c1_373 = arith.constant 1 : index
    %c0_374 = arith.constant 0 : index
    %c0_375 = arith.constant 0 : index
    %396 = vector.load %arg8[%c1_373, %c0_374, %c0_375] : memref<2x16x1xf32, #tpu.memory_space<vmem>>, vector<1x16x1xf32>
    %397 = vector.shape_cast %396 : vector<1x16x1xf32> to vector<16x1xf32>
    %398 = vector.broadcast %397 : vector<16x1xf32> to vector<16x4xf32>
    %399 = arith.addf %395, %398 : vector<16x4xf32>
    %400 = arith.addf %361, %399 : vector<16x4xf32>
    %401 = math.tanh %400 : vector<16x4xf32>
    %c1_376 = arith.constant 1 : index
    %c1_377 = arith.constant 1 : index
    %c0_378 = arith.constant 0 : index
    %c0_379 = arith.constant 0 : index
    %402 = vector.load %arg9[%c1_376, %c1_377, %c0_378, %c0_379] : memref<2x2x16x4xf32, #tpu.memory_space<vmem>>, vector<1x1x16x4xf32>
    %403 = vector.shape_cast %402 : vector<1x1x16x4xf32> to vector<16x4xf32>
    %404 = vector.shape_cast %401 : vector<16x4xf32> to vector<1x1x16x4xf32>
    tpu.vector_store %arg9[%c1_376, %c1_377, %c0_378, %c0_379], %404 {strides = array<i32>} : memref<2x2x16x4xf32, #tpu.memory_space<vmem>>, vector<1x1x16x4xf32>,
    return
  }
}

</mosaic_0001>

<llo_original>
// kernel: multi_encoder_forward.1
$region0: #{multi_encoder_forward.1}
  #allocation0 [shape = 'u32[]', space=smem, size = 0x4, offset = 0x4, fixed_abs, tag = 'smem constant byte address 0x4 - core index']
  #allocation1 [shape = 'u32[144,128]{1,0:T(1,128)}', space=vmem, size = 0x12000, scoped, tag = 'internal scratch']
  %s0 = inlined_call_operand.vmem [shape: f32[2,4,16], index: 0, kind: input, shape index: {}]
  %s1 = inlined_call_operand.vmem [shape: f32[2,3,8,4], index: 1, kind: input, shape index: {}]
  %s2 = inlined_call_operand.vmem [shape: f32[2,8,1], index: 2, kind: input, shape index: {}]
  %s3 = inlined_call_operand.vmem [shape: f32[2,3,16,8], index: 3, kind: input, shape index: {}]
  %s4 = inlined_call_operand.vmem [shape: f32[2,16,1], index: 4, kind: input, shape index: {}]
  %s5 = inlined_call_operand.vmem [shape: f32[2,3,16,16], index: 5, kind: input, shape index: {}]
  %s6 = inlined_call_operand.vmem [shape: f32[2,16,1], index: 6, kind: input, shape index: {}]
  %s7 = inlined_call_operand.vmem [shape: f32[2,3,16,16], index: 7, kind: input, shape index: {}]
  %s8 = inlined_call_operand.vmem [shape: f32[2,16,1], index: 8, kind: input, shape index: {}]
  %s9 = inlined_call_operand.vmem [shape: f32[2,2,16,4], index: 9, kind: output, shape index: {}]
  %s10 = sld [smem:[#allocation0]]
  $region46: #{multi_encoder_forward.1} parent=0
    _
  %s12 = ssub.s32 1, %s10
  %s13 = scalar_select 0, %s12, %s10
  // Predicated region
  $region2: #{multi_encoder_forward.1} parent=0 // pred_check
    _
  $region3: #{multi_encoder_forward.1} parent=0 // pred_check_branch
    %15 = sbr.rel (0) target = $region5
  $region4: #{multi_encoder_forward.1} parent=0 // pred_region
    _
  $region5: #{multi_encoder_forward.1} parent=0 // pred_fallthru
    _
  // Predicated region
  $region6: #{multi_encoder_forward.1} parent=0 // pred_check
    _
  $region7: #{multi_encoder_forward.1} parent=0 // pred_check_branch
    %17 = sbr.rel (0) target = $region9
  $region8: #{multi_encoder_forward.1} parent=0 // pred_region
    _
  $region9: #{multi_encoder_forward.1} parent=0 // pred_fallthru
    _
  // Predicated region
  $region10: #{multi_encoder_forward.1} parent=0 // pred_check
    _
  $region11: #{multi_encoder_forward.1} parent=0 // pred_check_branch
    %19 = sbr.rel (0) target = $region13
  $region12: #{multi_encoder_forward.1} parent=0 // pred_region
    _
  $region13: #{multi_encoder_forward.1} parent=0 // pred_fallthru
    _
  // Predicated region
  $region14: #{multi_encoder_forward.1} parent=0 // pred_check
    _
  $region15: #{multi_encoder_forward.1} parent=0 // pred_check_branch
    %21 = sbr.rel (0) target = $region17
  $region16: #{multi_encoder_forward.1} parent=0 // pred_region
    _
  $region17: #{multi_encoder_forward.1} parent=0 // pred_fallthru
    _
  // Predicated region
  $region18: #{multi_encoder_forward.1} parent=0 // pred_check
    _
  $region19: #{multi_encoder_forward.1} parent=0 // pred_check_branch
    %23 = sbr.rel (0) target = $region21
  $region20: #{multi_encoder_forward.1} parent=0 // pred_region
    _
  $region21: #{multi_encoder_forward.1} parent=0 // pred_fallthru
    _
  // Predicated region
  $region22: #{multi_encoder_forward.1} parent=0 // pred_check
    _
  $region23: #{multi_encoder_forward.1} parent=0 // pred_check_branch
    %25 = sbr.rel (0) target = $region25
  $region24: #{multi_encoder_forward.1} parent=0 // pred_region
    _
  $region25: #{multi_encoder_forward.1} parent=0 // pred_fallthru
    _
  // Predicated region
  $region26: #{multi_encoder_forward.1} parent=0 // pred_check
    _
  $region27: #{multi_encoder_forward.1} parent=0 // pred_check_branch
    %27 = sbr.rel (0) target = $region29
  $region28: #{multi_encoder_forward.1} parent=0 // pred_region
    _
  $region29: #{multi_encoder_forward.1} parent=0 // pred_fallthru
    _
  // Predicated region
  $region30: #{multi_encoder_forward.1} parent=0 // pred_check
    _
  $region31: #{multi_encoder_forward.1} parent=0 // pred_check_branch
    %29 = sbr.rel (0) target = $region33
  $region32: #{multi_encoder_forward.1} parent=0 // pred_region
    _
  $region33: #{multi_encoder_forward.1} parent=0 // pred_fallthru
    _
  // Predicated region
  $region34: #{multi_encoder_forward.1} parent=0 // pred_check
    _
  $region35: #{multi_encoder_forward.1} parent=0 // pred_check_branch
    %31 = sbr.rel (0) target = $region37
  $region36: #{multi_encoder_forward.1} parent=0 // pred_region
    _
  $region37: #{multi_encoder_forward.1} parent=0 // pred_fallthru
    _
  %v32 = vlaneseq
  %v33 = vshrl.u32 %v32, 7
  %v34 = vadd.s32 %v33, 8
  %v35 = vlaneseq
  %v36 = vand.u32 %v35, 127
  %v37 = vmul.u32 %v36, 2
  %v38 = vadd.s32 %v37, 4294967295
  %vm39 = vcmp.eq.s32.totalorder %v33, %v38
  %vm40 = vcmp.eq.s32.totalorder %v34, %v38
  %v41 = vsel %vm39, 1, 0
  %v42 = vsel %vm40, 1, 0
  %v43 = vcvt.s32.f32 %v41
  %v44 = vcvt.s32.f32 %v42
  %vm45 = vcmp.eq.s32.totalorder %v33, %v37
  %vm46 = vcmp.eq.s32.totalorder %v34, %v37
  %v47 = vsel %vm45, 1, 0
  %v48 = vsel %vm46, 1, 0
  %v49 = vcvt.s32.f32 %v47
  %v50 = vcvt.s32.f32 %v48
  %v51 = vadd.s32 %v37, 1
  %vm52 = vcmp.eq.s32.totalorder %v33, %v51
  %vm53 = vcmp.eq.s32.totalorder %v34, %v51
  %v54 = vsel %vm52, 1, 0
  %v55 = vsel %vm53, 1, 0
  %v56 = vcvt.s32.f32 %v54
  %v57 = vcvt.s32.f32 %v55
  %v58 = vadd.s32 %v36, 4294967295
  %vm59 = vcmp.eq.s32.totalorder %v33, %v58
  %v60 = vsel %vm59, 1, 0
  %v61 = vcvt.s32.f32 %v60
  %vm62 = vcmp.eq.s32.totalorder %v33, %v36
  %v63 = vsel %vm62, 1, 0
  %v64 = vcvt.s32.f32 %v63
  %v65 = vadd.s32 %v36, 1
  %vm66 = vcmp.eq.s32.totalorder %v33, %v65
  %v67 = vsel %vm66, 1, 0
  %v68 = vcvt.s32.f32 %v67
  %v69 = vld [vmem:[%s0] sm:$0xf]
  %vm70 = vcmask 130048
  %v72 = vsel %vm70, %v69, 0
  %74 = vmatprep.subr.mxu0 0.0
  %75 = vmatpush1.msra.mxu0 0.0
  %76 = vmatprep.subr.mxu0 0.0
  %77 = vmatpush1.msra.mxu0 0.0
  %78 = vmatprep.subr.mxu0 0.0
  %79 = vmatpush1.msra.mxu0 0.0
  %80 = vmatprep.subr.mxu0 0.0
  %81 = vmatpush1.msra.mxu0 0.0
  %82 = vmatprep.subr.mxu0 0.0
  %83 = vmatpush1.msra.mxu0 0.0
  %84 = vmatprep.subr.mxu0 0.0
  %85 = vmatpush1.msra.mxu0 0.0
  %86 = vmatprep.subr.mxu0 0.0
  %87 = vmatpush1.msra.mxu0 0.0
  %88 = vmatprep.subr.mxu0 0.0
  %89 = vmatpush1.msra.mxu0 0.0
  %90 = vmatprep.subr.mxu0 0.0
  %91 = vmatpush1.msra.mxu0 0.0
  %92 = vmatprep.subr.mxu0 0.0
  %93 = vmatpush1.msra.mxu0 0.0
  %94 = vmatprep.subr.mxu0 0.0
  %95 = vmatpush1.msra.mxu0 0.0
  %96 = vmatprep.subr.mxu0 0.0
  %97 = vmatpush1.msra.mxu0 0.0
  %98 = vmatprep.subr.mxu0 0.0
  %99 = vmatpush1.msra.mxu0 0.0
  %100 = vmatprep.subr.mxu0 0.0
  %101 = vmatpush1.msra.mxu0 0.0
  %102 = vmatprep.subr.mxu0 0.0
  %103 = vmatpush1.msra.mxu0 %v44
  %104 = vmatprep.subr.mxu0 0.0
  %105 = vmatpush1.msra.mxu0 %v43
  %106 = vmatprep.subr.mxu0 0.0
  %107 = vmatpush2.msra.mxu0 0.0
  %108 = vmatprep.subr.mxu0 0.0
  %109 = vmatpush2.msra.mxu0 0.0
  %110 = vmatprep.subr.mxu0 0.0
  %111 = vmatpush2.msra.mxu0 0.0
  %112 = vmatprep.subr.mxu0 0.0
  %113 = vmatpush2.msra.mxu0 0.0
  %114 = vmatprep.subr.mxu0 0.0
  %115 = vmatpush2.msra.mxu0 0.0
  %116 = vmatprep.subr.mxu0 0.0
  %117 = vmatpush2.msra.mxu0 0.0
  %118 = vmatprep.subr.mxu0 0.0
  %119 = vmatpush2.msra.mxu0 0.0
  %120 = vmatprep.subr.mxu0 0.0
  %121 = vmatpush2.msra.mxu0 0.0
  %122 = vmatprep.subr.mxu0 0.0
  %123 = vmatpush2.msra.mxu0 0.0
  %124 = vmatprep.subr.mxu0 0.0
  %125 = vmatpush2.msra.mxu0 0.0
  %126 = vmatprep.subr.mxu0 0.0
  %127 = vmatpush2.msra.mxu0 0.0
  %128 = vmatprep.subr.mxu0 0.0
  %129 = vmatpush2.msra.mxu0 0.0
  %130 = vmatprep.subr.mxu0 0.0
  %131 = vmatpush2.msra.mxu0 0.0
  %132 = vmatprep.subr.mxu0 0.0
  %133 = vmatpush2.msra.mxu0 0.0
  %134 = vmatprep.subr.mxu0 0.0
  %135 = vmatpush2.msra.mxu0 0.0
  %136 = vmatprep.subr.mxu0 0.0
  %137 = vmatpush2.msra.mxu0 0.0
  %138 = vmatprep.mubr.f32.mxu0 0.0
  %139 = vmatmul.mubr.f32.gmra.mxu0 %v72
  %v140 = vpop.f32.mrf.mxu0
  %v141 = vadd.f32 0.0, %v140
  %v142 = vpop.f32.mrf.mxu0
  %143 = vdwg.mxu0
  %v144 = vld [vmem:[%s1] sm:$0xff]
  %145 = vmatprep.subr.mxu0 0.0
  %146 = vmatpush1.msra.mxu0 0.0
  %147 = vmatprep.subr.mxu0 0.0
  %148 = vmatpush1.msra.mxu0 0.0
  %149 = vmatprep.subr.mxu0 0.0
  %150 = vmatpush1.msra.mxu0 0.0
  %151 = vmatprep.subr.mxu0 0.0
  %152 = vmatpush1.msra.mxu0 0.0
  %153 = vmatprep.subr.mxu0 0.0
  %154 = vmatpush1.msra.mxu0 0.0
  %155 = vmatprep.subr.mxu0 0.0
  %156 = vmatpush1.msra.mxu0 0.0
  %157 = vmatprep.subr.mxu0 0.0
  %158 = vmatpush1.msra.mxu0 0.0
  %159 = vmatprep.subr.mxu0 0.0
  %160 = vmatpush1.msra.mxu0 0.0
  %161 = vmatprep.subr.mxu0 0.0
  %162 = vmatpush1.msra.mxu0 0.0
  %163 = vmatprep.subr.mxu0 0.0
  %164 = vmatpush1.msra.mxu0 0.0
  %165 = vmatprep.subr.mxu0 0.0
  %166 = vmatpush1.msra.mxu0 0.0
  %167 = vmatprep.subr.mxu0 0.0
  %168 = vmatpush1.msra.mxu0 0.0
  %169 = vmatprep.subr.mxu0 0.0
  %170 = vmatpush1.msra.mxu0 0.0
  %171 = vmatprep.subr.mxu0 0.0
  %172 = vmatpush1.msra.mxu0 0.0
  %173 = vmatprep.subr.mxu0 0.0
  %174 = vmatpush1.msra.mxu0 %v50
  %175 = vmatprep.subr.mxu0 0.0
  %176 = vmatpush1.msra.mxu0 %v49
  %177 = vmatprep.subr.mxu0 0.0
  %178 = vmatpush2.msra.mxu0 0.0
  %179 = vmatprep.subr.mxu0 0.0
  %180 = vmatpush2.msra.mxu0 0.0
  %181 = vmatprep.subr.mxu0 0.0
  %182 = vmatpush2.msra.mxu0 0.0
  %183 = vmatprep.subr.mxu0 0.0
  %184 = vmatpush2.msra.mxu0 0.0
  %185 = vmatprep.subr.mxu0 0.0
  %186 = vmatpush2.msra.mxu0 0.0
  %187 = vmatprep.subr.mxu0 0.0
  %188 = vmatpush2.msra.mxu0 0.0
  %189 = vmatprep.subr.mxu0 0.0
  %190 = vmatpush2.msra.mxu0 0.0
  %191 = vmatprep.subr.mxu0 0.0
  %192 = vmatpush2.msra.mxu0 0.0
  %193 = vmatprep.subr.mxu0 0.0
  %194 = vmatpush2.msra.mxu0 0.0
  %195 = vmatprep.subr.mxu0 0.0
  %196 = vmatpush2.msra.mxu0 0.0
  %197 = vmatprep.subr.mxu0 0.0
  %198 = vmatpush2.msra.mxu0 0.0
  %199 = vmatprep.subr.mxu0 0.0
  %200 = vmatpush2.msra.mxu0 0.0
  %201 = vmatprep.subr.mxu0 0.0
  %202 = vmatpush2.msra.mxu0 0.0
  %203 = vmatprep.subr.mxu0 0.0
  %204 = vmatpush2.msra.mxu0 0.0
  %205 = vmatprep.subr.mxu0 0.0
  %206 = vmatpush2.msra.mxu0 0.0
  %207 = vmatprep.subr.mxu0 0.0
  %208 = vmatpush2.msra.mxu0 0.0
  %209 = vmatprep.mubr.f32.mxu0 0.0
  %210 = vmatmul.mubr.f32.gmra.mxu0 %v72
  %v211 = vpop.f32.mrf.mxu0
  %v212 = vadd.f32 0.0, %v211
  %v213 = vpop.f32.mrf.mxu0
  %214 = vdwg.mxu0
  %s215 = scalar_lea.vmem %s1, 8
  %v216 = vld [vmem:[%s215] sm:$0xff]
  %vm217 = vcmask 31744
  %v219 = vsel %vm217, %v216, 0
  %vm221 = vcmask 1043456
  %v223 = vsel %vm221, %v212, 0
  %225 = vmatprep.subr.mxu0 0.0
  %226 = vmatpush1.msra.mxu0 0.0
  %227 = vmatprep.subr.mxu0 0.0
  %228 = vmatpush1.msra.mxu0 0.0
  %229 = vmatprep.subr.mxu0 0.0
  %230 = vmatpush1.msra.mxu0 0.0
  %231 = vmatprep.subr.mxu0 0.0
  %232 = vmatpush1.msra.mxu0 0.0
  %233 = vmatprep.subr.mxu0 0.0
  %234 = vmatpush1.msra.mxu0 0.0
  %235 = vmatprep.subr.mxu0 0.0
  %236 = vmatpush1.msra.mxu0 0.0
  %237 = vmatprep.subr.mxu0 0.0
  %238 = vmatpush1.msra.mxu0 0.0
  %239 = vmatprep.subr.mxu0 0.0
  %240 = vmatpush1.msra.mxu0 0.0
  %241 = vmatprep.subr.mxu0 0.0
  %242 = vmatpush1.msra.mxu0 0.0
  %243 = vmatprep.subr.mxu0 0.0
  %244 = vmatpush1.msra.mxu0 0.0
  %245 = vmatprep.subr.mxu0 0.0
  %246 = vmatpush1.msra.mxu0 0.0
  %247 = vmatprep.subr.mxu0 0.0
  %248 = vmatpush1.msra.mxu0 0.0
  %249 = vmatprep.subr.mxu0 0.0
  %250 = vmatpush1.msra.mxu0 0.0
  %251 = vmatprep.subr.mxu0 0.0
  %252 = vmatpush1.msra.mxu0 0.0
  %253 = vmatprep.subr.mxu0 0.0
  %254 = vmatpush1.msra.mxu0 0.0
  %255 = vmatprep.subr.mxu0 0.0
  %256 = vmatpush1.msra.mxu0 %v223
  %257 = vmatprep.subr.mxu0 0.0
  %258 = vmatpush2.msra.mxu0 0.0
  %259 = vmatprep.subr.mxu0 0.0
  %260 = vmatpush2.msra.mxu0 0.0
  %261 = vmatprep.subr.mxu0 0.0
  %262 = vmatpush2.msra.mxu0 0.0
  %263 = vmatprep.subr.mxu0 0.0
  %264 = vmatpush2.msra.mxu0 0.0
  %265 = vmatprep.subr.mxu0 0.0
  %266 = vmatpush2.msra.mxu0 0.0
  %267 = vmatprep.subr.mxu0 0.0
  %268 = vmatpush2.msra.mxu0 0.0
  %269 = vmatprep.subr.mxu0 0.0
  %270 = vmatpush2.msra.mxu0 0.0
  %271 = vmatprep.subr.mxu0 0.0
  %272 = vmatpush2.msra.mxu0 0.0
  %273 = vmatprep.subr.mxu0 0.0
  %274 = vmatpush2.msra.mxu0 0.0
  %275 = vmatprep.subr.mxu0 0.0
  %276 = vmatpush2.msra.mxu0 0.0
  %277 = vmatprep.subr.mxu0 0.0
  %278 = vmatpush2.msra.mxu0 0.0
  %279 = vmatprep.subr.mxu0 0.0
  %280 = vmatpush2.msra.mxu0 0.0
  %281 = vmatprep.subr.mxu0 0.0
  %282 = vmatpush2.msra.mxu0 0.0
  %283 = vmatprep.subr.mxu0 0.0
  %284 = vmatpush2.msra.mxu0 0.0
  %285 = vmatprep.subr.mxu0 0.0
  %286 = vmatpush2.msra.mxu0 0.0
  %287 = vmatprep.subr.mxu0 0.0
  %288 = vmatpush2.msra.mxu0 0.0
  %289 = vmatprep.mubr.f32.mxu0 0.0
  %290 = vmatmul.mubr.f32.gmra.mxu0 %v219
  %v291 = vpop.f32.mrf.mxu0
  %v292 = vadd.f32 0.0, %v291
  %v293 = vpop.f32.mrf.mxu0
  %294 = vdwg.mxu0
  %v296 = vsel %vm217, %v144, 0
  %v299 = vsel %vm221, %v141, 0
  %301 = vmatprep.subr.mxu0 0.0
  %302 = vmatpush1.msra.mxu0 0.0
  %303 = vmatprep.subr.mxu0 0.0
  %304 = vmatpush1.msra.mxu0 0.0
  %305 = vmatprep.subr.mxu0 0.0
  %306 = vmatpush1.msra.mxu0 0.0
  %307 = vmatprep.subr.mxu0 0.0
  %308 = vmatpush1.msra.mxu0 0.0
  %309 = vmatprep.subr.mxu0 0.0
  %310 = vmatpush1.msra.mxu0 0.0
  %311 = vmatprep.subr.mxu0 0.0
  %312 = vmatpush1.msra.mxu0 0.0
  %313 = vmatprep.subr.mxu0 0.0
  %314 = vmatpush1.msra.mxu0 0.0
  %315 = vmatprep.subr.mxu0 0.0
  %316 = vmatpush1.msra.mxu0 0.0
  %317 = vmatprep.subr.mxu0 0.0
  %318 = vmatpush1.msra.mxu0 0.0
  %319 = vmatprep.subr.mxu0 0.0
  %320 = vmatpush1.msra.mxu0 0.0
  %321 = vmatprep.subr.mxu0 0.0
  %322 = vmatpush1.msra.mxu0 0.0
  %323 = vmatprep.subr.mxu0 0.0
  %324 = vmatpush1.msra.mxu0 0.0
  %325 = vmatprep.subr.mxu0 0.0
  %326 = vmatpush1.msra.mxu0 0.0
  %327 = vmatprep.subr.mxu0 0.0
  %328 = vmatpush1.msra.mxu0 0.0
  %329 = vmatprep.subr.mxu0 0.0
  %330 = vmatpush1.msra.mxu0 0.0
  %331 = vmatprep.subr.mxu0 0.0
  %332 = vmatpush1.msra.mxu0 %v299
  %333 = vmatprep.subr.mxu0 0.0
  %334 = vmatpush2.msra.mxu0 0.0
  %335 = vmatprep.subr.mxu0 0.0
  %336 = vmatpush2.msra.mxu0 0.0
  %337 = vmatprep.subr.mxu0 0.0
  %338 = vmatpush2.msra.mxu0 0.0
  %339 = vmatprep.subr.mxu0 0.0
  %340 = vmatpush2.msra.mxu0 0.0
  %341 = vmatprep.subr.mxu0 0.0
  %342 = vmatpush2.msra.mxu0 0.0
  %343 = vmatprep.subr.mxu0 0.0
  %344 = vmatpush2.msra.mxu0 0.0
  %345 = vmatprep.subr.mxu0 0.0
  %346 = vmatpush2.msra.mxu0 0.0
  %347 = vmatprep.subr.mxu0 0.0
  %348 = vmatpush2.msra.mxu0 0.0
  %349 = vmatprep.subr.mxu0 0.0
  %350 = vmatpush2.msra.mxu0 0.0
  %351 = vmatprep.subr.mxu0 0.0
  %352 = vmatpush2.msra.mxu0 0.0
  %353 = vmatprep.subr.mxu0 0.0
  %354 = vmatpush2.msra.mxu0 0.0
  %355 = vmatprep.subr.mxu0 0.0
  %356 = vmatpush2.msra.mxu0 0.0
  %357 = vmatprep.subr.mxu0 0.0
  %358 = vmatpush2.msra.mxu0 0.0
  %359 = vmatprep.subr.mxu0 0.0
  %360 = vmatpush2.msra.mxu0 0.0
  %361 = vmatprep.subr.mxu0 0.0
  %362 = vmatpush2.msra.mxu0 0.0
  %363 = vmatprep.subr.mxu0 0.0
  %364 = vmatpush2.msra.mxu0 0.0
  %365 = vmatprep.mubr.f32.mxu0 0.0
  %366 = vmatmul.mubr.f32.gmra.mxu0 %v296
  %v367 = vpop.f32.mrf.mxu0
  %v368 = vadd.f32 %v292, %v367
  %v369 = vpop.f32.mrf.mxu0
  %370 = vdwg.mxu0
  %371 = vmatprep.subr.mxu0 0.0
  %372 = vmatpush1.msra.mxu0 0.0
  %373 = vmatprep.subr.mxu0 0.0
  %374 = vmatpush1.msra.mxu0 0.0
  %375 = vmatprep.subr.mxu0 0.0
  %376 = vmatpush1.msra.mxu0 0.0
  %377 = vmatprep.subr.mxu0 0.0
  %378 = vmatpush1.msra.mxu0 0.0
  %379 = vmatprep.subr.mxu0 0.0
  %380 = vmatpush1.msra.mxu0 0.0
  %381 = vmatprep.subr.mxu0 0.0
  %382 = vmatpush1.msra.mxu0 0.0
  %383 = vmatprep.subr.mxu0 0.0
  %384 = vmatpush1.msra.mxu0 0.0
  %385 = vmatprep.subr.mxu0 0.0
  %386 = vmatpush1.msra.mxu0 0.0
  %387 = vmatprep.subr.mxu0 0.0
  %388 = vmatpush1.msra.mxu0 0.0
  %389 = vmatprep.subr.mxu0 0.0
  %390 = vmatpush1.msra.mxu0 0.0
  %391 = vmatprep.subr.mxu0 0.0
  %392 = vmatpush1.msra.mxu0 0.0
  %393 = vmatprep.subr.mxu0 0.0
  %394 = vmatpush1.msra.mxu0 0.0
  %395 = vmatprep.subr.mxu0 0.0
  %396 = vmatpush1.msra.mxu0 0.0
  %397 = vmatprep.subr.mxu0 0.0
  %398 = vmatpush1.msra.mxu0 0.0
  %399 = vmatprep.subr.mxu0 0.0
  %400 = vmatpush1.msra.mxu0 %v57
  %401 = vmatprep.subr.mxu0 0.0
  %402 = vmatpush1.msra.mxu0 %v56
  %403 = vmatprep.subr.mxu0 0.0
  %404 = vmatpush2.msra.mxu0 0.0
  %405 = vmatprep.subr.mxu0 0.0
  %406 = vmatpush2.msra.mxu0 0.0
  %407 = vmatprep.subr.mxu0 0.0
  %408 = vmatpush2.msra.mxu0 0.0
  %409 = vmatprep.subr.mxu0 0.0
  %410 = vmatpush2.msra.mxu0 0.0
  %411 = vmatprep.subr.mxu0 0.0
  %412 = vmatpush2.msra.mxu0 0.0
  %413 = vmatprep.subr.mxu0 0.0
  %414 = vmatpush2.msra.mxu0 0.0
  %415 = vmatprep.subr.mxu0 0.0
  %416 = vmatpush2.msra.mxu0 0.0
  %417 = vmatprep.subr.mxu0 0.0
  %418 = vmatpush2.msra.mxu0 0.0
  %419 = vmatprep.subr.mxu0 0.0
  %420 = vmatpush2.msra.mxu0 0.0
  %421 = vmatprep.subr.mxu0 0.0
  %422 = vmatpush2.msra.mxu0 0.0
  %423 = vmatprep.subr.mxu0 0.0
  %424 = vmatpush2.msra.mxu0 0.0
  %425 = vmatprep.subr.mxu0 0.0
  %426 = vmatpush2.msra.mxu0 0.0
  %427 = vmatprep.subr.mxu0 0.0
  %428 = vmatpush2.msra.mxu0 0.0
  %429 = vmatprep.subr.mxu0 0.0
  %430 = vmatpush2.msra.mxu0 0.0
  %431 = vmatprep.subr.mxu0 0.0
  %432 = vmatpush2.msra.mxu0 0.0
  %433 = vmatprep.subr.mxu0 0.0
  %434 = vmatpush2.msra.mxu0 0.0
  %435 = vmatprep.mubr.f32.mxu0 0.0
  %436 = vmatmul.mubr.f32.gmra.mxu0 %v72
  %v437 = vpop.f32.mrf.mxu0
  %v438 = vadd.f32 0.0, %v437
  %v439 = vpop.f32.mrf.mxu0
  %440 = vdwg.mxu0
  %s441 = scalar_lea.vmem %s1, 16
  %v442 = vld [vmem:[%s441] sm:$0xff]
  %v444 = vsel %vm217, %v442, 0
  %v447 = vsel %vm221, %v438, 0
  %449 = vmatprep.subr.mxu0 0.0
  %450 = vmatpush1.msra.mxu0 0.0
  %451 = vmatprep.subr.mxu0 0.0
  %452 = vmatpush1.msra.mxu0 0.0
  %453 = vmatprep.subr.mxu0 0.0
  %454 = vmatpush1.msra.mxu0 0.0
  %455 = vmatprep.subr.mxu0 0.0
  %456 = vmatpush1.msra.mxu0 0.0
  %457 = vmatprep.subr.mxu0 0.0
  %458 = vmatpush1.msra.mxu0 0.0
  %459 = vmatprep.subr.mxu0 0.0
  %460 = vmatpush1.msra.mxu0 0.0
  %461 = vmatprep.subr.mxu0 0.0
  %462 = vmatpush1.msra.mxu0 0.0
  %463 = vmatprep.subr.mxu0 0.0
  %464 = vmatpush1.msra.mxu0 0.0
  %465 = vmatprep.subr.mxu0 0.0
  %466 = vmatpush1.msra.mxu0 0.0
  %467 = vmatprep.subr.mxu0 0.0
  %468 = vmatpush1.msra.mxu0 0.0
  %469 = vmatprep.subr.mxu0 0.0
  %470 = vmatpush1.msra.mxu0 0.0
  %471 = vmatprep.subr.mxu0 0.0
  %472 = vmatpush1.msra.mxu0 0.0
  %473 = vmatprep.subr.mxu0 0.0
  %474 = vmatpush1.msra.mxu0 0.0
  %475 = vmatprep.subr.mxu0 0.0
  %476 = vmatpush1.msra.mxu0 0.0
  %477 = vmatprep.subr.mxu0 0.0
  %478 = vmatpush1.msra.mxu0 0.0
  %479 = vmatprep.subr.mxu0 0.0
  %480 = vmatpush1.msra.mxu0 %v447
  %481 = vmatprep.subr.mxu0 0.0
  %482 = vmatpush2.msra.mxu0 0.0
  %483 = vmatprep.subr.mxu0 0.0
  %484 = vmatpush2.msra.mxu0 0.0
  %485 = vmatprep.subr.mxu0 0.0
  %486 = vmatpush2.msra.mxu0 0.0
  %487 = vmatprep.subr.mxu0 0.0
  %488 = vmatpush2.msra.mxu0 0.0
  %489 = vmatprep.subr.mxu0 0.0
  %490 = vmatpush2.msra.mxu0 0.0
  %491 = vmatprep.subr.mxu0 0.0
  %492 = vmatpush2.msra.mxu0 0.0
  %493 = vmatprep.subr.mxu0 0.0
  %494 = vmatpush2.msra.mxu0 0.0
  %495 = vmatprep.subr.mxu0 0.0
  %496 = vmatpush2.msra.mxu0 0.0
  %497 = vmatprep.subr.mxu0 0.0
  %498 = vmatpush2.msra.mxu0 0.0
  %499 = vmatprep.subr.mxu0 0.0
  %500 = vmatpush2.msra.mxu0 0.0
  %501 = vmatprep.subr.mxu0 0.0
  %502 = vmatpush2.msra.mxu0 0.0
  %503 = vmatprep.subr.mxu0 0.0
  %504 = vmatpush2.msra.mxu0 0.0
  %505 = vmatprep.subr.mxu0 0.0
  %506 = vmatpush2.msra.mxu0 0.0
  %507 = vmatprep.subr.mxu0 0.0
  %508 = vmatpush2.msra.mxu0 0.0
  %509 = vmatprep.subr.mxu0 0.0
  %510 = vmatpush2.msra.mxu0 0.0
  %511 = vmatprep.subr.mxu0 0.0
  %512 = vmatpush2.msra.mxu0 0.0
  %513 = vmatprep.mubr.f32.mxu0 0.0
  %514 = vmatmul.mubr.f32.gmra.mxu0 %v444
  %v515 = vpop.f32.mrf.mxu0
  %v516 = vadd.f32 0.0, %v515
  %v517 = vpop.f32.mrf.mxu0
  %518 = vdwg.mxu0
  %v519 = vadd.f32 %v368, %v516
  %v520 = vld [vmem:[%s2] sm:$0xff]
  %522 = vset.pattern.permute.xlu0 0
  %523 = vperm.xlu0 %522, %v520
  %v524 = vpop.permute.xlu0 %523
  %v526 = vadd.f32 %v519, %v524
  %v527 = vmax.f32 %v526, 0.0
  %vm528 = vcmask 64512
  %v530 = vsel %vm528, %v527, 0
  %532 = vmatprep.subr.mxu0 0.0
  %533 = vmatpush1.msra.mxu0 0.0
  %534 = vmatprep.subr.mxu0 0.0
  %535 = vmatpush1.msra.mxu0 0.0
  %536 = vmatprep.subr.mxu0 0.0
  %537 = vmatpush1.msra.mxu0 0.0
  %538 = vmatprep.subr.mxu0 0.0
  %539 = vmatpush1.msra.mxu0 0.0
  %540 = vmatprep.subr.mxu0 0.0
  %541 = vmatpush1.msra.mxu0 0.0
  %542 = vmatprep.subr.mxu0 0.0
  %543 = vmatpush1.msra.mxu0 0.0
  %544 = vmatprep.subr.mxu0 0.0
  %545 = vmatpush1.msra.mxu0 0.0
  %546 = vmatprep.subr.mxu0 0.0
  %547 = vmatpush1.msra.mxu0 0.0
  %548 = vmatprep.subr.mxu0 0.0
  %549 = vmatpush1.msra.mxu0 0.0
  %550 = vmatprep.subr.mxu0 0.0
  %551 = vmatpush1.msra.mxu0 0.0
  %552 = vmatprep.subr.mxu0 0.0
  %553 = vmatpush1.msra.mxu0 0.0
  %554 = vmatprep.subr.mxu0 0.0
  %555 = vmatpush1.msra.mxu0 0.0
  %556 = vmatprep.subr.mxu0 0.0
  %557 = vmatpush1.msra.mxu0 0.0
  %558 = vmatprep.subr.mxu0 0.0
  %559 = vmatpush1.msra.mxu0 0.0
  %560 = vmatprep.subr.mxu0 0.0
  %561 = vmatpush1.msra.mxu0 0.0
  %562 = vmatprep.subr.mxu0 0.0
  %563 = vmatpush1.msra.mxu0 %v43
  %564 = vmatprep.subr.mxu0 0.0
  %565 = vmatpush2.msra.mxu0 0.0
  %566 = vmatprep.subr.mxu0 0.0
  %567 = vmatpush2.msra.mxu0 0.0
  %568 = vmatprep.subr.mxu0 0.0
  %569 = vmatpush2.msra.mxu0 0.0
  %570 = vmatprep.subr.mxu0 0.0
  %571 = vmatpush2.msra.mxu0 0.0
  %572 = vmatprep.subr.mxu0 0.0
  %573 = vmatpush2.msra.mxu0 0.0
  %574 = vmatprep.subr.mxu0 0.0
  %575 = vmatpush2.msra.mxu0 0.0
  %576 = vmatprep.subr.mxu0 0.0
  %577 = vmatpush2.msra.mxu0 0.0
  %578 = vmatprep.subr.mxu0 0.0
  %579 = vmatpush2.msra.mxu0 0.0
  %580 = vmatprep.subr.mxu0 0.0
  %581 = vmatpush2.msra.mxu0 0.0
  %582 = vmatprep.subr.mxu0 0.0
  %583 = vmatpush2.msra.mxu0 0.0
  %584 = vmatprep.subr.mxu0 0.0
  %585 = vmatpush2.msra.mxu0 0.0
  %586 = vmatprep.subr.mxu0 0.0
  %587 = vmatpush2.msra.mxu0 0.0
  %588 = vmatprep.subr.mxu0 0.0
  %589 = vmatpush2.msra.mxu0 0.0
  %590 = vmatprep.subr.mxu0 0.0
  %591 = vmatpush2.msra.mxu0 0.0
  %592 = vmatprep.subr.mxu0 0.0
  %593 = vmatpush2.msra.mxu0 0.0
  %594 = vmatprep.subr.mxu0 0.0
  %595 = vmatpush2.msra.mxu0 0.0
  %596 = vmatprep.mubr.f32.mxu0 0.0
  %597 = vmatmul.mubr.f32.gmra.mxu0 %v530
  %v598 = vpop.f32.mrf.mxu0
  %v599 = vadd.f32 0.0, %v598
  %v600 = vpop.f32.mrf.mxu0
  %601 = vdwg.mxu0
  %v602 = vld [vmem:[%s3] sm:$0xff]
  %v603 = vld [vmem:[%s3 + $0x8] sm:$0xff]
  %604 = vmatprep.subr.mxu0 0.0
  %605 = vmatpush1.msra.mxu0 0.0
  %606 = vmatprep.subr.mxu0 0.0
  %607 = vmatpush1.msra.mxu0 0.0
  %608 = vmatprep.subr.mxu0 0.0
  %609 = vmatpush1.msra.mxu0 0.0
  %610 = vmatprep.subr.mxu0 0.0
  %611 = vmatpush1.msra.mxu0 0.0
  %612 = vmatprep.subr.mxu0 0.0
  %613 = vmatpush1.msra.mxu0 0.0
  %614 = vmatprep.subr.mxu0 0.0
  %615 = vmatpush1.msra.mxu0 0.0
  %616 = vmatprep.subr.mxu0 0.0
  %617 = vmatpush1.msra.mxu0 0.0
  %618 = vmatprep.subr.mxu0 0.0
  %619 = vmatpush1.msra.mxu0 0.0
  %620 = vmatprep.subr.mxu0 0.0
  %621 = vmatpush1.msra.mxu0 0.0
  %622 = vmatprep.subr.mxu0 0.0
  %623 = vmatpush1.msra.mxu0 0.0
  %624 = vmatprep.subr.mxu0 0.0
  %625 = vmatpush1.msra.mxu0 0.0
  %626 = vmatprep.subr.mxu0 0.0
  %627 = vmatpush1.msra.mxu0 0.0
  %628 = vmatprep.subr.mxu0 0.0
  %629 = vmatpush1.msra.mxu0 0.0
  %630 = vmatprep.subr.mxu0 0.0
  %631 = vmatpush1.msra.mxu0 0.0
  %632 = vmatprep.subr.mxu0 0.0
  %633 = vmatpush1.msra.mxu0 0.0
  %634 = vmatprep.subr.mxu0 0.0
  %635 = vmatpush1.msra.mxu0 %v49
  %636 = vmatprep.subr.mxu0 0.0
  %637 = vmatpush2.msra.mxu0 0.0
  %638 = vmatprep.subr.mxu0 0.0
  %639 = vmatpush2.msra.mxu0 0.0
  %640 = vmatprep.subr.mxu0 0.0
  %641 = vmatpush2.msra.mxu0 0.0
  %642 = vmatprep.subr.mxu0 0.0
  %643 = vmatpush2.msra.mxu0 0.0
  %644 = vmatprep.subr.mxu0 0.0
  %645 = vmatpush2.msra.mxu0 0.0
  %646 = vmatprep.subr.mxu0 0.0
  %647 = vmatpush2.msra.mxu0 0.0
  %648 = vmatprep.subr.mxu0 0.0
  %649 = vmatpush2.msra.mxu0 0.0
  %650 = vmatprep.subr.mxu0 0.0
  %651 = vmatpush2.msra.mxu0 0.0
  %652 = vmatprep.subr.mxu0 0.0
  %653 = vmatpush2.msra.mxu0 0.0
  %654 = vmatprep.subr.mxu0 0.0
  %655 = vmatpush2.msra.mxu0 0.0
  %656 = vmatprep.subr.mxu0 0.0
  %657 = vmatpush2.msra.mxu0 0.0
  %658 = vmatprep.subr.mxu0 0.0
  %659 = vmatpush2.msra.mxu0 0.0
  %660 = vmatprep.subr.mxu0 0.0
  %661 = vmatpush2.msra.mxu0 0.0
  %662 = vmatprep.subr.mxu0 0.0
  %663 = vmatpush2.msra.mxu0 0.0
  %664 = vmatprep.subr.mxu0 0.0
  %665 = vmatpush2.msra.mxu0 0.0
  %666 = vmatprep.subr.mxu0 0.0
  %667 = vmatpush2.msra.mxu0 0.0
  %668 = vmatprep.mubr.f32.mxu0 0.0
  %669 = vmatmul.mubr.f32.gmra.mxu0 %v530
  %v670 = vpop.f32.mrf.mxu0
  %v671 = vadd.f32 0.0, %v670
  %v672 = vpop.f32.mrf.mxu0
  %673 = vdwg.mxu0
  %s674 = scalar_lea.vmem %s3, 16
  %v675 = vld [vmem:[%s674] sm:$0xff]
  %v676 = vld [vmem:[%s674 + $0x8] sm:$0xff]
  %v678 = vsel %vm528, %v675, 0
  %v681 = vsel %vm528, %v676, 0
  %683 = vmatprep.subr.mxu0 0.0
  %684 = vmatpush1.msra.mxu0 0.0
  %685 = vmatprep.subr.mxu0 0.0
  %686 = vmatpush1.msra.mxu0 0.0
  %687 = vmatprep.subr.mxu0 0.0
  %688 = vmatpush1.msra.mxu0 0.0
  %689 = vmatprep.subr.mxu0 0.0
  %690 = vmatpush1.msra.mxu0 0.0
  %691 = vmatprep.subr.mxu0 0.0
  %692 = vmatpush1.msra.mxu0 0.0
  %693 = vmatprep.subr.mxu0 0.0
  %694 = vmatpush1.msra.mxu0 0.0
  %695 = vmatprep.subr.mxu0 0.0
  %696 = vmatpush1.msra.mxu0 0.0
  %697 = vmatprep.subr.mxu0 0.0
  %698 = vmatpush1.msra.mxu0 0.0
  %699 = vmatprep.subr.mxu0 0.0
  %700 = vmatpush1.msra.mxu0 0.0
  %701 = vmatprep.subr.mxu0 0.0
  %702 = vmatpush1.msra.mxu0 0.0
  %703 = vmatprep.subr.mxu0 0.0
  %704 = vmatpush1.msra.mxu0 0.0
  %705 = vmatprep.subr.mxu0 0.0
  %706 = vmatpush1.msra.mxu0 0.0
  %707 = vmatprep.subr.mxu0 0.0
  %708 = vmatpush1.msra.mxu0 0.0
  %709 = vmatprep.subr.mxu0 0.0
  %710 = vmatpush1.msra.mxu0 0.0
  %711 = vmatprep.subr.mxu0 0.0
  %712 = vmatpush1.msra.mxu0 0.0
  %713 = vmatprep.subr.mxu0 0.0
  %714 = vmatpush1.msra.mxu0 %v671
  %715 = vmatprep.subr.mxu0 0.0
  %716 = vmatpush2.msra.mxu0 0.0
  %717 = vmatprep.subr.mxu0 0.0
  %718 = vmatpush2.msra.mxu0 0.0
  %719 = vmatprep.subr.mxu0 0.0
  %720 = vmatpush2.msra.mxu0 0.0
  %721 = vmatprep.subr.mxu0 0.0
  %722 = vmatpush2.msra.mxu0 0.0
  %723 = vmatprep.subr.mxu0 0.0
  %724 = vmatpush2.msra.mxu0 0.0
  %725 = vmatprep.subr.mxu0 0.0
  %726 = vmatpush2.msra.mxu0 0.0
  %727 = vmatprep.subr.mxu0 0.0
  %728 = vmatpush2.msra.mxu0 0.0
  %729 = vmatprep.subr.mxu0 0.0
  %730 = vmatpush2.msra.mxu0 0.0
  %731 = vmatprep.subr.mxu0 0.0
  %732 = vmatpush2.msra.mxu0 0.0
  %733 = vmatprep.subr.mxu0 0.0
  %734 = vmatpush2.msra.mxu0 0.0
  %735 = vmatprep.subr.mxu0 0.0
  %736 = vmatpush2.msra.mxu0 0.0
  %737 = vmatprep.subr.mxu0 0.0
  %738 = vmatpush2.msra.mxu0 0.0
  %739 = vmatprep.subr.mxu0 0.0
  %740 = vmatpush2.msra.mxu0 0.0
  %741 = vmatprep.subr.mxu0 0.0
  %742 = vmatpush2.msra.mxu0 0.0
  %743 = vmatprep.subr.mxu0 0.0
  %744 = vmatpush2.msra.mxu0 0.0
  %745 = vmatprep.subr.mxu0 0.0
  %746 = vmatpush2.msra.mxu0 0.0
  %747 = vmatprep.mubr.f32.mxu0 0.0
  %748 = vmatmul.mubr.f32.gmra.mxu0 %v678
  %v749 = vpop.f32.mrf.mxu0
  %v750 = vadd.f32 0.0, %v749
  %v751 = vpop.f32.mrf.mxu0
  %752 = vmatprep.mubr.f32.mxu0 0.0
  %753 = vmatmul.mubr.f32.gmra.mxu0 %v681
  %v754 = vpop.f32.mrf.mxu0
  %v755 = vadd.f32 0.0, %v754
  %v756 = vpop.f32.mrf.mxu0
  %757 = vdwg.mxu0
  %v759 = vsel %vm528, %v602, 0
  %v762 = vsel %vm528, %v603, 0
  %764 = vmatprep.subr.mxu0 0.0
  %765 = vmatpush1.msra.mxu0 0.0
  %766 = vmatprep.subr.mxu0 0.0
  %767 = vmatpush1.msra.mxu0 0.0
  %768 = vmatprep.subr.mxu0 0.0
  %769 = vmatpush1.msra.mxu0 0.0
  %770 = vmatprep.subr.mxu0 0.0
  %771 = vmatpush1.msra.mxu0 0.0
  %772 = vmatprep.subr.mxu0 0.0
  %773 = vmatpush1.msra.mxu0 0.0
  %774 = vmatprep.subr.mxu0 0.0
  %775 = vmatpush1.msra.mxu0 0.0
  %776 = vmatprep.subr.mxu0 0.0
  %777 = vmatpush1.msra.mxu0 0.0
  %778 = vmatprep.subr.mxu0 0.0
  %779 = vmatpush1.msra.mxu0 0.0
  %780 = vmatprep.subr.mxu0 0.0
  %781 = vmatpush1.msra.mxu0 0.0
  %782 = vmatprep.subr.mxu0 0.0
  %783 = vmatpush1.msra.mxu0 0.0
  %784 = vmatprep.subr.mxu0 0.0
  %785 = vmatpush1.msra.mxu0 0.0
  %786 = vmatprep.subr.mxu0 0.0
  %787 = vmatpush1.msra.mxu0 0.0
  %788 = vmatprep.subr.mxu0 0.0
  %789 = vmatpush1.msra.mxu0 0.0
  %790 = vmatprep.subr.mxu0 0.0
  %791 = vmatpush1.msra.mxu0 0.0
  %792 = vmatprep.subr.mxu0 0.0
  %793 = vmatpush1.msra.mxu0 0.0
  %794 = vmatprep.subr.mxu0 0.0
  %795 = vmatpush1.msra.mxu0 %v599
  %796 = vmatprep.subr.mxu0 0.0
  %797 = vmatpush2.msra.mxu0 0.0
  %798 = vmatprep.subr.mxu0 0.0
  %799 = vmatpush2.msra.mxu0 0.0
  %800 = vmatprep.subr.mxu0 0.0
  %801 = vmatpush2.msra.mxu0 0.0
  %802 = vmatprep.subr.mxu0 0.0
  %803 = vmatpush2.msra.mxu0 0.0
  %804 = vmatprep.subr.mxu0 0.0
  %805 = vmatpush2.msra.mxu0 0.0
  %806 = vmatprep.subr.mxu0 0.0
  %807 = vmatpush2.msra.mxu0 0.0
  %808 = vmatprep.subr.mxu0 0.0
  %809 = vmatpush2.msra.mxu0 0.0
  %810 = vmatprep.subr.mxu0 0.0
  %811 = vmatpush2.msra.mxu0 0.0
  %812 = vmatprep.subr.mxu0 0.0
  %813 = vmatpush2.msra.mxu0 0.0
  %814 = vmatprep.subr.mxu0 0.0
  %815 = vmatpush2.msra.mxu0 0.0
  %816 = vmatprep.subr.mxu0 0.0
  %817 = vmatpush2.msra.mxu0 0.0
  %818 = vmatprep.subr.mxu0 0.0
  %819 = vmatpush2.msra.mxu0 0.0
  %820 = vmatprep.subr.mxu0 0.0
  %821 = vmatpush2.msra.mxu0 0.0
  %822 = vmatprep.subr.mxu0 0.0
  %823 = vmatpush2.msra.mxu0 0.0
  %824 = vmatprep.subr.mxu0 0.0
  %825 = vmatpush2.msra.mxu0 0.0
  %826 = vmatprep.subr.mxu0 0.0
  %827 = vmatpush2.msra.mxu0 0.0
  %828 = vmatprep.mubr.f32.mxu0 0.0
  %829 = vmatmul.mubr.f32.gmra.mxu0 %v759
  %v830 = vpop.f32.mrf.mxu0
  %v831 = vadd.f32 %v750, %v830
  %v832 = vpop.f32.mrf.mxu0
  %833 = vmatprep.mubr.f32.mxu0 0.0
  %834 = vmatmul.mubr.f32.gmra.mxu0 %v762
  %v835 = vpop.f32.mrf.mxu0
  %v836 = vadd.f32 %v755, %v835
  %v837 = vpop.f32.mrf.mxu0
  %838 = vdwg.mxu0
  %839 = vmatprep.subr.mxu0 0.0
  %840 = vmatpush1.msra.mxu0 0.0
  %841 = vmatprep.subr.mxu0 0.0
  %842 = vmatpush1.msra.mxu0 0.0
  %843 = vmatprep.subr.mxu0 0.0
  %844 = vmatpush1.msra.mxu0 0.0
  %845 = vmatprep.subr.mxu0 0.0
  %846 = vmatpush1.msra.mxu0 0.0
  %847 = vmatprep.subr.mxu0 0.0
  %848 = vmatpush1.msra.mxu0 0.0
  %849 = vmatprep.subr.mxu0 0.0
  %850 = vmatpush1.msra.mxu0 0.0
  %851 = vmatprep.subr.mxu0 0.0
  %852 = vmatpush1.msra.mxu0 0.0
  %853 = vmatprep.subr.mxu0 0.0
  %854 = vmatpush1.msra.mxu0 0.0
  %855 = vmatprep.subr.mxu0 0.0
  %856 = vmatpush1.msra.mxu0 0.0
  %857 = vmatprep.subr.mxu0 0.0
  %858 = vmatpush1.msra.mxu0 0.0
  %859 = vmatprep.subr.mxu0 0.0
  %860 = vmatpush1.msra.mxu0 0.0
  %861 = vmatprep.subr.mxu0 0.0
  %862 = vmatpush1.msra.mxu0 0.0
  %863 = vmatprep.subr.mxu0 0.0
  %864 = vmatpush1.msra.mxu0 0.0
  %865 = vmatprep.subr.mxu0 0.0
  %866 = vmatpush1.msra.mxu0 0.0
  %867 = vmatprep.subr.mxu0 0.0
  %868 = vmatpush1.msra.mxu0 0.0
  %869 = vmatprep.subr.mxu0 0.0
  %870 = vmatpush1.msra.mxu0 %v56
  %871 = vmatprep.subr.mxu0 0.0
  %872 = vmatpush2.msra.mxu0 0.0
  %873 = vmatprep.subr.mxu0 0.0
  %874 = vmatpush2.msra.mxu0 0.0
  %875 = vmatprep.subr.mxu0 0.0
  %876 = vmatpush2.msra.mxu0 0.0
  %877 = vmatprep.subr.mxu0 0.0
  %878 = vmatpush2.msra.mxu0 0.0
  %879 = vmatprep.subr.mxu0 0.0
  %880 = vmatpush2.msra.mxu0 0.0
  %881 = vmatprep.subr.mxu0 0.0
  %882 = vmatpush2.msra.mxu0 0.0
  %883 = vmatprep.subr.mxu0 0.0
  %884 = vmatpush2.msra.mxu0 0.0
  %885 = vmatprep.subr.mxu0 0.0
  %886 = vmatpush2.msra.mxu0 0.0
  %887 = vmatprep.subr.mxu0 0.0
  %888 = vmatpush2.msra.mxu0 0.0
  %889 = vmatprep.subr.mxu0 0.0
  %890 = vmatpush2.msra.mxu0 0.0
  %891 = vmatprep.subr.mxu0 0.0
  %892 = vmatpush2.msra.mxu0 0.0
  %893 = vmatprep.subr.mxu0 0.0
  %894 = vmatpush2.msra.mxu0 0.0
  %895 = vmatprep.subr.mxu0 0.0
  %896 = vmatpush2.msra.mxu0 0.0
  %897 = vmatprep.subr.mxu0 0.0
  %898 = vmatpush2.msra.mxu0 0.0
  %899 = vmatprep.subr.mxu0 0.0
  %900 = vmatpush2.msra.mxu0 0.0
  %901 = vmatprep.subr.mxu0 0.0
  %902 = vmatpush2.msra.mxu0 0.0
  %903 = vmatprep.mubr.f32.mxu0 0.0
  %904 = vmatmul.mubr.f32.gmra.mxu0 %v530
  %v905 = vpop.f32.mrf.mxu0
  %v906 = vadd.f32 0.0, %v905
  %v907 = vpop.f32.mrf.mxu0
  %908 = vdwg.mxu0
  %s909 = scalar_lea.vmem %s3, 32
  %v910 = vld [vmem:[%s909] sm:$0xff]
  %v911 = vld [vmem:[%s909 + $0x8] sm:$0xff]
  %v913 = vsel %vm528, %v910, 0
  %v916 = vsel %vm528, %v911, 0
  %918 = vmatprep.subr.mxu0 0.0
  %919 = vmatpush1.msra.mxu0 0.0
  %920 = vmatprep.subr.mxu0 0.0
  %921 = vmatpush1.msra.mxu0 0.0
  %922 = vmatprep.subr.mxu0 0.0
  %923 = vmatpush1.msra.mxu0 0.0
  %924 = vmatprep.subr.mxu0 0.0
  %925 = vmatpush1.msra.mxu0 0.0
  %926 = vmatprep.subr.mxu0 0.0
  %927 = vmatpush1.msra.mxu0 0.0
  %928 = vmatprep.subr.mxu0 0.0
  %929 = vmatpush1.msra.mxu0 0.0
  %930 = vmatprep.subr.mxu0 0.0
  %931 = vmatpush1.msra.mxu0 0.0
  %932 = vmatprep.subr.mxu0 0.0
  %933 = vmatpush1.msra.mxu0 0.0
  %934 = vmatprep.subr.mxu0 0.0
  %935 = vmatpush1.msra.mxu0 0.0
  %936 = vmatprep.subr.mxu0 0.0
  %937 = vmatpush1.msra.mxu0 0.0
  %938 = vmatprep.subr.mxu0 0.0
  %939 = vmatpush1.msra.mxu0 0.0
  %940 = vmatprep.subr.mxu0 0.0
  %941 = vmatpush1.msra.mxu0 0.0
  %942 = vmatprep.subr.mxu0 0.0
  %943 = vmatpush1.msra.mxu0 0.0
  %944 = vmatprep.subr.mxu0 0.0
  %945 = vmatpush1.msra.mxu0 0.0
  %946 = vmatprep.subr.mxu0 0.0
  %947 = vmatpush1.msra.mxu0 0.0
  %948 = vmatprep.subr.mxu0 0.0
  %949 = vmatpush1.msra.mxu0 %v906
  %950 = vmatprep.subr.mxu0 0.0
  %951 = vmatpush2.msra.mxu0 0.0
  %952 = vmatprep.subr.mxu0 0.0
  %953 = vmatpush2.msra.mxu0 0.0
  %954 = vmatprep.subr.mxu0 0.0
  %955 = vmatpush2.msra.mxu0 0.0
  %956 = vmatprep.subr.mxu0 0.0
  %957 = vmatpush2.msra.mxu0 0.0
  %958 = vmatprep.subr.mxu0 0.0
  %959 = vmatpush2.msra.mxu0 0.0
  %960 = vmatprep.subr.mxu0 0.0
  %961 = vmatpush2.msra.mxu0 0.0
  %962 = vmatprep.subr.mxu0 0.0
  %963 = vmatpush2.msra.mxu0 0.0
  %964 = vmatprep.subr.mxu0 0.0
  %965 = vmatpush2.msra.mxu0 0.0
  %966 = vmatprep.subr.mxu0 0.0
  %967 = vmatpush2.msra.mxu0 0.0
  %968 = vmatprep.subr.mxu0 0.0
  %969 = vmatpush2.msra.mxu0 0.0
  %970 = vmatprep.subr.mxu0 0.0
  %971 = vmatpush2.msra.mxu0 0.0
  %972 = vmatprep.subr.mxu0 0.0
  %973 = vmatpush2.msra.mxu0 0.0
  %974 = vmatprep.subr.mxu0 0.0
  %975 = vmatpush2.msra.mxu0 0.0
  %976 = vmatprep.subr.mxu0 0.0
  %977 = vmatpush2.msra.mxu0 0.0
  %978 = vmatprep.subr.mxu0 0.0
  %979 = vmatpush2.msra.mxu0 0.0
  %980 = vmatprep.subr.mxu0 0.0
  %981 = vmatpush2.msra.mxu0 0.0
  %982 = vmatprep.mubr.f32.mxu0 0.0
  %983 = vmatmul.mubr.f32.gmra.mxu0 %v913
  %v984 = vpop.f32.mrf.mxu0
  %v985 = vadd.f32 0.0, %v984
  %v986 = vpop.f32.mrf.mxu0
  %987 = vmatprep.mubr.f32.mxu0 0.0
  %988 = vmatmul.mubr.f32.gmra.mxu0 %v916
  %v989 = vpop.f32.mrf.mxu0
  %v990 = vadd.f32 0.0, %v989
  %v991 = vpop.f32.mrf.mxu0
  %992 = vdwg.mxu0
  %v993 = vadd.f32 %v831, %v985
  %v994 = vadd.f32 %v836, %v990
  %v995 = vld [vmem:[%s4] sm:$0xff]
  %v996 = vld [vmem:[%s4 + $0x8] sm:$0xff]
  %998 = vset.pattern.permute.xlu0 0
  %999 = vperm.xlu0 %998, %v995
  %v1000 = vpop.permute.xlu0 %999
  %1003 = vset.pattern.permute.xlu0 0
  %1004 = vperm.xlu0 %1003, %v996
  %v1005 = vpop.permute.xlu0 %1004
  %v1007 = vadd.f32 %v993, %v1000
  %v1008 = vadd.f32 %v994, %v1005
  %v1009 = vmax.f32 %v1007, 0.0
  %v1010 = vmax.f32 %v1008, 0.0
  %v1012 = vsel %vm217, %v1009, 0
  %v1015 = vsel %vm217, %v1010, 0
  %v1018 = vsel %vm221, %v61, 0
  %1020 = vmatprep.subr.mxu0 0.0
  %1021 = vmatpush1.msra.mxu0 0.0
  %1022 = vmatprep.subr.mxu0 0.0
  %1023 = vmatpush1.msra.mxu0 0.0
  %1024 = vmatprep.subr.mxu0 0.0
  %1025 = vmatpush1.msra.mxu0 0.0
  %1026 = vmatprep.subr.mxu0 0.0
  %1027 = vmatpush1.msra.mxu0 0.0
  %1028 = vmatprep.subr.mxu0 0.0
  %1029 = vmatpush1.msra.mxu0 0.0
  %1030 = vmatprep.subr.mxu0 0.0
  %1031 = vmatpush1.msra.mxu0 0.0
  %1032 = vmatprep.subr.mxu0 0.0
  %1033 = vmatpush1.msra.mxu0 0.0
  %1034 = vmatprep.subr.mxu0 0.0
  %1035 = vmatpush1.msra.mxu0 0.0
  %1036 = vmatprep.subr.mxu0 0.0
  %1037 = vmatpush1.msra.mxu0 0.0
  %1038 = vmatprep.subr.mxu0 0.0
  %1039 = vmatpush1.msra.mxu0 0.0
  %1040 = vmatprep.subr.mxu0 0.0
  %1041 = vmatpush1.msra.mxu0 0.0
  %1042 = vmatprep.subr.mxu0 0.0
  %1043 = vmatpush1.msra.mxu0 0.0
  %1044 = vmatprep.subr.mxu0 0.0
  %1045 = vmatpush1.msra.mxu0 0.0
  %1046 = vmatprep.subr.mxu0 0.0
  %1047 = vmatpush1.msra.mxu0 0.0
  %1048 = vmatprep.subr.mxu0 0.0
  %1049 = vmatpush1.msra.mxu0 0.0
  %1050 = vmatprep.subr.mxu0 0.0
  %1051 = vmatpush1.msra.mxu0 %v1018
  %1052 = vmatprep.subr.mxu0 0.0
  %1053 = vmatpush2.msra.mxu0 0.0
  %1054 = vmatprep.subr.mxu0 0.0
  %1055 = vmatpush2.msra.mxu0 0.0
  %1056 = vmatprep.subr.mxu0 0.0
  %1057 = vmatpush2.msra.mxu0 0.0
  %1058 = vmatprep.subr.mxu0 0.0
  %1059 = vmatpush2.msra.mxu0 0.0
  %1060 = vmatprep.subr.mxu0 0.0
  %1061 = vmatpush2.msra.mxu0 0.0
  %1062 = vmatprep.subr.mxu0 0.0
  %1063 = vmatpush2.msra.mxu0 0.0
  %1064 = vmatprep.subr.mxu0 0.0
  %1065 = vmatpush2.msra.mxu0 0.0
  %1066 = vmatprep.subr.mxu0 0.0
  %1067 = vmatpush2.msra.mxu0 0.0
  %1068 = vmatprep.subr.mxu0 0.0
  %1069 = vmatpush2.msra.mxu0 0.0
  %1070 = vmatprep.subr.mxu0 0.0
  %1071 = vmatpush2.msra.mxu0 0.0
  %1072 = vmatprep.subr.mxu0 0.0
  %1073 = vmatpush2.msra.mxu0 0.0
  %1074 = vmatprep.subr.mxu0 0.0
  %1075 = vmatpush2.msra.mxu0 0.0
  %1076 = vmatprep.subr.mxu0 0.0
  %1077 = vmatpush2.msra.mxu0 0.0
  %1078 = vmatprep.subr.mxu0 0.0
  %1079 = vmatpush2.msra.mxu0 0.0
  %1080 = vmatprep.subr.mxu0 0.0
  %1081 = vmatpush2.msra.mxu0 0.0
  %1082 = vmatprep.subr.mxu0 0.0
  %1083 = vmatpush2.msra.mxu0 0.0
  %1084 = vmatprep.mubr.f32.mxu0 0.0
  %1085 = vmatmul.mubr.f32.gmra.mxu0 %v1012
  %v1086 = vpop.f32.mrf.mxu0
  %v1087 = vadd.f32 0.0, %v1086
  %v1088 = vpop.f32.mrf.mxu0
  %1089 = vmatprep.mubr.f32.mxu0 0.0
  %1090 = vmatmul.mubr.f32.gmra.mxu0 %v1015
  %v1091 = vpop.f32.mrf.mxu0
  %v1092 = vadd.f32 0.0, %v1091
  %v1093 = vpop.f32.mrf.mxu0
  %1094 = vdwg.mxu0
  %v1095 = vld [vmem:[%s5] sm:$0xff]
  %v1096 = vld [vmem:[%s5 + $0x8] sm:$0xff]
  %v1098 = vsel %vm221, %v64, 0
  %1100 = vmatprep.subr.mxu0 0.0
  %1101 = vmatpush1.msra.mxu0 0.0
  %1102 = vmatprep.subr.mxu0 0.0
  %1103 = vmatpush1.msra.mxu0 0.0
  %1104 = vmatprep.subr.mxu0 0.0
  %1105 = vmatpush1.msra.mxu0 0.0
  %1106 = vmatprep.subr.mxu0 0.0
  %1107 = vmatpush1.msra.mxu0 0.0
  %1108 = vmatprep.subr.mxu0 0.0
  %1109 = vmatpush1.msra.mxu0 0.0
  %1110 = vmatprep.subr.mxu0 0.0
  %1111 = vmatpush1.msra.mxu0 0.0
  %1112 = vmatprep.subr.mxu0 0.0
  %1113 = vmatpush1.msra.mxu0 0.0
  %1114 = vmatprep.subr.mxu0 0.0
  %1115 = vmatpush1.msra.mxu0 0.0
  %1116 = vmatprep.subr.mxu0 0.0
  %1117 = vmatpush1.msra.mxu0 0.0
  %1118 = vmatprep.subr.mxu0 0.0
  %1119 = vmatpush1.msra.mxu0 0.0
  %1120 = vmatprep.subr.mxu0 0.0
  %1121 = vmatpush1.msra.mxu0 0.0
  %1122 = vmatprep.subr.mxu0 0.0
  %1123 = vmatpush1.msra.mxu0 0.0
  %1124 = vmatprep.subr.mxu0 0.0
  %1125 = vmatpush1.msra.mxu0 0.0
  %1126 = vmatprep.subr.mxu0 0.0
  %1127 = vmatpush1.msra.mxu0 0.0
  %1128 = vmatprep.subr.mxu0 0.0
  %1129 = vmatpush1.msra.mxu0 0.0
  %1130 = vmatprep.subr.mxu0 0.0
  %1131 = vmatpush1.msra.mxu0 %v1098
  %1132 = vmatprep.subr.mxu0 0.0
  %1133 = vmatpush2.msra.mxu0 0.0
  %1134 = vmatprep.subr.mxu0 0.0
  %1135 = vmatpush2.msra.mxu0 0.0
  %1136 = vmatprep.subr.mxu0 0.0
  %1137 = vmatpush2.msra.mxu0 0.0
  %1138 = vmatprep.subr.mxu0 0.0
  %1139 = vmatpush2.msra.mxu0 0.0
  %1140 = vmatprep.subr.mxu0 0.0
  %1141 = vmatpush2.msra.mxu0 0.0
  %1142 = vmatprep.subr.mxu0 0.0
  %1143 = vmatpush2.msra.mxu0 0.0
  %1144 = vmatprep.subr.mxu0 0.0
  %1145 = vmatpush2.msra.mxu0 0.0
  %1146 = vmatprep.subr.mxu0 0.0
  %1147 = vmatpush2.msra.mxu0 0.0
  %1148 = vmatprep.subr.mxu0 0.0
  %1149 = vmatpush2.msra.mxu0 0.0
  %1150 = vmatprep.subr.mxu0 0.0
  %1151 = vmatpush2.msra.mxu0 0.0
  %1152 = vmatprep.subr.mxu0 0.0
  %1153 = vmatpush2.msra.mxu0 0.0
  %1154 = vmatprep.subr.mxu0 0.0
  %1155 = vmatpush2.msra.mxu0 0.0
  %1156 = vmatprep.subr.mxu0 0.0
  %1157 = vmatpush2.msra.mxu0 0.0
  %1158 = vmatprep.subr.mxu0 0.0
  %1159 = vmatpush2.msra.mxu0 0.0
  %1160 = vmatprep.subr.mxu0 0.0
  %1161 = vmatpush2.msra.mxu0 0.0
  %1162 = vmatprep.subr.mxu0 0.0
  %1163 = vmatpush2.msra.mxu0 0.0
  %1164 = vmatprep.mubr.f32.mxu0 0.0
  %1165 = vmatmul.mubr.f32.gmra.mxu0 %v1012
  %v1166 = vpop.f32.mrf.mxu0
  %v1167 = vadd.f32 0.0, %v1166
  %v1168 = vpop.f32.mrf.mxu0
  %1169 = vmatprep.mubr.f32.mxu0 0.0
  %1170 = vmatmul.mubr.f32.gmra.mxu0 %v1015
  %v1171 = vpop.f32.mrf.mxu0
  %v1172 = vadd.f32 0.0, %v1171
  %v1173 = vpop.f32.mrf.mxu0
  %1174 = vdwg.mxu0
  %s1175 = scalar_lea.vmem %s5, 16
  %v1176 = vld [vmem:[%s1175] sm:$0xff]
  %v1177 = vld [vmem:[%s1175 + $0x8] sm:$0xff]
  %v1179 = vsel %vm70, %v1176, 0
  %v1182 = vsel %vm70, %v1177, 0
  %1184 = vmatprep.subr.mxu0 0.0
  %1185 = vmatpush1.msra.mxu0 0.0
  %1186 = vmatprep.subr.mxu0 0.0
  %1187 = vmatpush1.msra.mxu0 0.0
  %1188 = vmatprep.subr.mxu0 0.0
  %1189 = vmatpush1.msra.mxu0 0.0
  %1190 = vmatprep.subr.mxu0 0.0
  %1191 = vmatpush1.msra.mxu0 0.0
  %1192 = vmatprep.subr.mxu0 0.0
  %1193 = vmatpush1.msra.mxu0 0.0
  %1194 = vmatprep.subr.mxu0 0.0
  %1195 = vmatpush1.msra.mxu0 0.0
  %1196 = vmatprep.subr.mxu0 0.0
  %1197 = vmatpush1.msra.mxu0 0.0
  %1198 = vmatprep.subr.mxu0 0.0
  %1199 = vmatpush1.msra.mxu0 0.0
  %1200 = vmatprep.subr.mxu0 0.0
  %1201 = vmatpush1.msra.mxu0 0.0
  %1202 = vmatprep.subr.mxu0 0.0
  %1203 = vmatpush1.msra.mxu0 0.0
  %1204 = vmatprep.subr.mxu0 0.0
  %1205 = vmatpush1.msra.mxu0 0.0
  %1206 = vmatprep.subr.mxu0 0.0
  %1207 = vmatpush1.msra.mxu0 0.0
  %1208 = vmatprep.subr.mxu0 0.0
  %1209 = vmatpush1.msra.mxu0 0.0
  %1210 = vmatprep.subr.mxu0 0.0
  %1211 = vmatpush1.msra.mxu0 0.0
  %1212 = vmatprep.subr.mxu0 0.0
  %1213 = vmatpush1.msra.mxu0 %v1172
  %1214 = vmatprep.subr.mxu0 0.0
  %1215 = vmatpush1.msra.mxu0 %v1167
  %1216 = vmatprep.subr.mxu0 0.0
  %1217 = vmatpush2.msra.mxu0 0.0
  %1218 = vmatprep.subr.mxu0 0.0
  %1219 = vmatpush2.msra.mxu0 0.0
  %1220 = vmatprep.subr.mxu0 0.0
  %1221 = vmatpush2.msra.mxu0 0.0
  %1222 = vmatprep.subr.mxu0 0.0
  %1223 = vmatpush2.msra.mxu0 0.0
  %1224 = vmatprep.subr.mxu0 0.0
  %1225 = vmatpush2.msra.mxu0 0.0
  %1226 = vmatprep.subr.mxu0 0.0
  %1227 = vmatpush2.msra.mxu0 0.0
  %1228 = vmatprep.subr.mxu0 0.0
  %1229 = vmatpush2.msra.mxu0 0.0
  %1230 = vmatprep.subr.mxu0 0.0
  %1231 = vmatpush2.msra.mxu0 0.0
  %1232 = vmatprep.subr.mxu0 0.0
  %1233 = vmatpush2.msra.mxu0 0.0
  %1234 = vmatprep.subr.mxu0 0.0
  %1235 = vmatpush2.msra.mxu0 0.0
  %1236 = vmatprep.subr.mxu0 0.0
  %1237 = vmatpush2.msra.mxu0 0.0
  %1238 = vmatprep.subr.mxu0 0.0
  %1239 = vmatpush2.msra.mxu0 0.0
  %1240 = vmatprep.subr.mxu0 0.0
  %1241 = vmatpush2.msra.mxu0 0.0
  %1242 = vmatprep.subr.mxu0 0.0
  %1243 = vmatpush2.msra.mxu0 0.0
  %1244 = vmatprep.subr.mxu0 0.0
  %1245 = vmatpush2.msra.mxu0 0.0
  %1246 = vmatprep.subr.mxu0 0.0
  %1247 = vmatpush2.msra.mxu0 0.0
  %1248 = vmatprep.mubr.f32.mxu0 0.0
  %1249 = vmatmul.mubr.f32.gmra.mxu0 %v1179
  %v1250 = vpop.f32.mrf.mxu0
  %v1251 = vadd.f32 0.0, %v1250
  %v1252 = vpop.f32.mrf.mxu0
  %1253 = vmatprep.mubr.f32.mxu0 0.0
  %1254 = vmatmul.mubr.f32.gmra.mxu0 %v1182
  %v1255 = vpop.f32.mrf.mxu0
  %v1256 = vadd.f32 0.0, %v1255
  %v1257 = vpop.f32.mrf.mxu0
  %1258 = vdwg.mxu0
  %v1260 = vsel %vm70, %v1095, 0
  %v1263 = vsel %vm70, %v1096, 0
  %1265 = vmatprep.subr.mxu0 0.0
  %1266 = vmatpush1.msra.mxu0 0.0
  %1267 = vmatprep.subr.mxu0 0.0
  %1268 = vmatpush1.msra.mxu0 0.0
  %1269 = vmatprep.subr.mxu0 0.0
  %1270 = vmatpush1.msra.mxu0 0.0
  %1271 = vmatprep.subr.mxu0 0.0
  %1272 = vmatpush1.msra.mxu0 0.0
  %1273 = vmatprep.subr.mxu0 0.0
  %1274 = vmatpush1.msra.mxu0 0.0
  %1275 = vmatprep.subr.mxu0 0.0
  %1276 = vmatpush1.msra.mxu0 0.0
  %1277 = vmatprep.subr.mxu0 0.0
  %1278 = vmatpush1.msra.mxu0 0.0
  %1279 = vmatprep.subr.mxu0 0.0
  %1280 = vmatpush1.msra.mxu0 0.0
  %1281 = vmatprep.subr.mxu0 0.0
  %1282 = vmatpush1.msra.mxu0 0.0
  %1283 = vmatprep.subr.mxu0 0.0
  %1284 = vmatpush1.msra.mxu0 0.0
  %1285 = vmatprep.subr.mxu0 0.0
  %1286 = vmatpush1.msra.mxu0 0.0
  %1287 = vmatprep.subr.mxu0 0.0
  %1288 = vmatpush1.msra.mxu0 0.0
  %1289 = vmatprep.subr.mxu0 0.0
  %1290 = vmatpush1.msra.mxu0 0.0
  %1291 = vmatprep.subr.mxu0 0.0
  %1292 = vmatpush1.msra.mxu0 0.0
  %1293 = vmatprep.subr.mxu0 0.0
  %1294 = vmatpush1.msra.mxu0 %v1092
  %1295 = vmatprep.subr.mxu0 0.0
  %1296 = vmatpush1.msra.mxu0 %v1087
  %1297 = vmatprep.subr.mxu0 0.0
  %1298 = vmatpush2.msra.mxu0 0.0
  %1299 = vmatprep.subr.mxu0 0.0
  %1300 = vmatpush2.msra.mxu0 0.0
  %1301 = vmatprep.subr.mxu0 0.0
  %1302 = vmatpush2.msra.mxu0 0.0
  %1303 = vmatprep.subr.mxu0 0.0
  %1304 = vmatpush2.msra.mxu0 0.0
  %1305 = vmatprep.subr.mxu0 0.0
  %1306 = vmatpush2.msra.mxu0 0.0
  %1307 = vmatprep.subr.mxu0 0.0
  %1308 = vmatpush2.msra.mxu0 0.0
  %1309 = vmatprep.subr.mxu0 0.0
  %1310 = vmatpush2.msra.mxu0 0.0
  %1311 = vmatprep.subr.mxu0 0.0
  %1312 = vmatpush2.msra.mxu0 0.0
  %1313 = vmatprep.subr.mxu0 0.0
  %1314 = vmatpush2.msra.mxu0 0.0
  %1315 = vmatprep.subr.mxu0 0.0
  %1316 = vmatpush2.msra.mxu0 0.0
  %1317 = vmatprep.subr.mxu0 0.0
  %1318 = vmatpush2.msra.mxu0 0.0
  %1319 = vmatprep.subr.mxu0 0.0
  %1320 = vmatpush2.msra.mxu0 0.0
  %1321 = vmatprep.subr.mxu0 0.0
  %1322 = vmatpush2.msra.mxu0 0.0
  %1323 = vmatprep.subr.mxu0 0.0
  %1324 = vmatpush2.msra.mxu0 0.0
  %1325 = vmatprep.subr.mxu0 0.0
  %1326 = vmatpush2.msra.mxu0 0.0
  %1327 = vmatprep.subr.mxu0 0.0
  %1328 = vmatpush2.msra.mxu0 0.0
  %1329 = vmatprep.mubr.f32.mxu0 0.0
  %1330 = vmatmul.mubr.f32.gmra.mxu0 %v1260
  %v1331 = vpop.f32.mrf.mxu0
  %v1332 = vadd.f32 %v1251, %v1331
  %v1333 = vpop.f32.mrf.mxu0
  %1334 = vmatprep.mubr.f32.mxu0 0.0
  %1335 = vmatmul.mubr.f32.gmra.mxu0 %v1263
  %v1336 = vpop.f32.mrf.mxu0
  %v1337 = vadd.f32 %v1256, %v1336
  %v1338 = vpop.f32.mrf.mxu0
  %1339 = vdwg.mxu0
  %v1341 = vsel %vm221, %v68, 0
  %1343 = vmatprep.subr.mxu0 0.0
  %1344 = vmatpush1.msra.mxu0 0.0
  %1345 = vmatprep.subr.mxu0 0.0
  %1346 = vmatpush1.msra.mxu0 0.0
  %1347 = vmatprep.subr.mxu0 0.0
  %1348 = vmatpush1.msra.mxu0 0.0
  %1349 = vmatprep.subr.mxu0 0.0
  %1350 = vmatpush1.msra.mxu0 0.0
  %1351 = vmatprep.subr.mxu0 0.0
  %1352 = vmatpush1.msra.mxu0 0.0
  %1353 = vmatprep.subr.mxu0 0.0
  %1354 = vmatpush1.msra.mxu0 0.0
  %1355 = vmatprep.subr.mxu0 0.0
  %1356 = vmatpush1.msra.mxu0 0.0
  %1357 = vmatprep.subr.mxu0 0.0
  %1358 = vmatpush1.msra.mxu0 0.0
  %1359 = vmatprep.subr.mxu0 0.0
  %1360 = vmatpush1.msra.mxu0 0.0
  %1361 = vmatprep.subr.mxu0 0.0
  %1362 = vmatpush1.msra.mxu0 0.0
  %1363 = vmatprep.subr.mxu0 0.0
  %1364 = vmatpush1.msra.mxu0 0.0
  %1365 = vmatprep.subr.mxu0 0.0
  %1366 = vmatpush1.msra.mxu0 0.0
  %1367 = vmatprep.subr.mxu0 0.0
  %1368 = vmatpush1.msra.mxu0 0.0
  %1369 = vmatprep.subr.mxu0 0.0
  %1370 = vmatpush1.msra.mxu0 0.0
  %1371 = vmatprep.subr.mxu0 0.0
  %1372 = vmatpush1.msra.mxu0 0.0
  %1373 = vmatprep.subr.mxu0 0.0
  %1374 = vmatpush1.msra.mxu0 %v1341
  %1375 = vmatprep.subr.mxu0 0.0
  %1376 = vmatpush2.msra.mxu0 0.0
  %1377 = vmatprep.subr.mxu0 0.0
  %1378 = vmatpush2.msra.mxu0 0.0
  %1379 = vmatprep.subr.mxu0 0.0
  %1380 = vmatpush2.msra.mxu0 0.0
  %1381 = vmatprep.subr.mxu0 0.0
  %1382 = vmatpush2.msra.mxu0 0.0
  %1383 = vmatprep.subr.mxu0 0.0
  %1384 = vmatpush2.msra.mxu0 0.0
  %1385 = vmatprep.subr.mxu0 0.0
  %1386 = vmatpush2.msra.mxu0 0.0
  %1387 = vmatprep.subr.mxu0 0.0
  %1388 = vmatpush2.msra.mxu0 0.0
  %1389 = vmatprep.subr.mxu0 0.0
  %1390 = vmatpush2.msra.mxu0 0.0
  %1391 = vmatprep.subr.mxu0 0.0
  %1392 = vmatpush2.msra.mxu0 0.0
  %1393 = vmatprep.subr.mxu0 0.0
  %1394 = vmatpush2.msra.mxu0 0.0
  %1395 = vmatprep.subr.mxu0 0.0
  %1396 = vmatpush2.msra.mxu0 0.0
  %1397 = vmatprep.subr.mxu0 0.0
  %1398 = vmatpush2.msra.mxu0 0.0
  %1399 = vmatprep.subr.mxu0 0.0
  %1400 = vmatpush2.msra.mxu0 0.0
  %1401 = vmatprep.subr.mxu0 0.0
  %1402 = vmatpush2.msra.mxu0 0.0
  %1403 = vmatprep.subr.mxu0 0.0
  %1404 = vmatpush2.msra.mxu0 0.0
  %1405 = vmatprep.subr.mxu0 0.0
  %1406 = vmatpush2.msra.mxu0 0.0
  %1407 = vmatprep.mubr.f32.mxu0 0.0
  %1408 = vmatmul.mubr.f32.gmra.mxu0 %v1012
  %v1409 = vpop.f32.mrf.mxu0
  %v1410 = vadd.f32 0.0, %v1409
  %v1411 = vpop.f32.mrf.mxu0
  %1412 = vmatprep.mubr.f32.mxu0 0.0
  %1413 = vmatmul.mubr.f32.gmra.mxu0 %v1015
  %v1414 = vpop.f32.mrf.mxu0
  %v1415 = vadd.f32 0.0, %v1414
  %v1416 = vpop.f32.mrf.mxu0
  %1417 = vdwg.mxu0
  %s1418 = scalar_lea.vmem %s5, 32
  %v1419 = vld [vmem:[%s1418] sm:$0xff]
  %v1420 = vld [vmem:[%s1418 + $0x8] sm:$0xff]
  %v1422 = vsel %vm70, %v1419, 0
  %v1425 = vsel %vm70, %v1420, 0
  %1427 = vmatprep.subr.mxu0 0.0
  %1428 = vmatpush1.msra.mxu0 0.0
  %1429 = vmatprep.subr.mxu0 0.0
  %1430 = vmatpush1.msra.mxu0 0.0
  %1431 = vmatprep.subr.mxu0 0.0
  %1432 = vmatpush1.msra.mxu0 0.0
  %1433 = vmatprep.subr.mxu0 0.0
  %1434 = vmatpush1.msra.mxu0 0.0
  %1435 = vmatprep.subr.mxu0 0.0
  %1436 = vmatpush1.msra.mxu0 0.0
  %1437 = vmatprep.subr.mxu0 0.0
  %1438 = vmatpush1.msra.mxu0 0.0
  %1439 = vmatprep.subr.mxu0 0.0
  %1440 = vmatpush1.msra.mxu0 0.0
  %1441 = vmatprep.subr.mxu0 0.0
  %1442 = vmatpush1.msra.mxu0 0.0
  %1443 = vmatprep.subr.mxu0 0.0
  %1444 = vmatpush1.msra.mxu0 0.0
  %1445 = vmatprep.subr.mxu0 0.0
  %1446 = vmatpush1.msra.mxu0 0.0
  %1447 = vmatprep.subr.mxu0 0.0
  %1448 = vmatpush1.msra.mxu0 0.0
  %1449 = vmatprep.subr.mxu0 0.0
  %1450 = vmatpush1.msra.mxu0 0.0
  %1451 = vmatprep.subr.mxu0 0.0
  %1452 = vmatpush1.msra.mxu0 0.0
  %1453 = vmatprep.subr.mxu0 0.0
  %1454 = vmatpush1.msra.mxu0 0.0
  %1455 = vmatprep.subr.mxu0 0.0
  %1456 = vmatpush1.msra.mxu0 %v1415
  %1457 = vmatprep.subr.mxu0 0.0
  %1458 = vmatpush1.msra.mxu0 %v1410
  %1459 = vmatprep.subr.mxu0 0.0
  %1460 = vmatpush2.msra.mxu0 0.0
  %1461 = vmatprep.subr.mxu0 0.0
  %1462 = vmatpush2.msra.mxu0 0.0
  %1463 = vmatprep.subr.mxu0 0.0
  %1464 = vmatpush2.msra.mxu0 0.0
  %1465 = vmatprep.subr.mxu0 0.0
  %1466 = vmatpush2.msra.mxu0 0.0
  %1467 = vmatprep.subr.mxu0 0.0
  %1468 = vmatpush2.msra.mxu0 0.0
  %1469 = vmatprep.subr.mxu0 0.0
  %1470 = vmatpush2.msra.mxu0 0.0
  %1471 = vmatprep.subr.mxu0 0.0
  %1472 = vmatpush2.msra.mxu0 0.0
  %1473 = vmatprep.subr.mxu0 0.0
  %1474 = vmatpush2.msra.mxu0 0.0
  %1475 = vmatprep.subr.mxu0 0.0
  %1476 = vmatpush2.msra.mxu0 0.0
  %1477 = vmatprep.subr.mxu0 0.0
  %1478 = vmatpush2.msra.mxu0 0.0
  %1479 = vmatprep.subr.mxu0 0.0
  %1480 = vmatpush2.msra.mxu0 0.0
  %1481 = vmatprep.subr.mxu0 0.0
  %1482 = vmatpush2.msra.mxu0 0.0
  %1483 = vmatprep.subr.mxu0 0.0
  %1484 = vmatpush2.msra.mxu0 0.0
  %1485 = vmatprep.subr.mxu0 0.0
  %1486 = vmatpush2.msra.mxu0 0.0
  %1487 = vmatprep.subr.mxu0 0.0
  %1488 = vmatpush2.msra.mxu0 0.0
  %1489 = vmatprep.subr.mxu0 0.0
  %1490 = vmatpush2.msra.mxu0 0.0
  %1491 = vmatprep.mubr.f32.mxu0 0.0
  %1492 = vmatmul.mubr.f32.gmra.mxu0 %v1422
  %v1493 = vpop.f32.mrf.mxu0
  %v1494 = vadd.f32 0.0, %v1493
  %v1495 = vpop.f32.mrf.mxu0
  %1496 = vmatprep.mubr.f32.mxu0 0.0
  %1497 = vmatmul.mubr.f32.gmra.mxu0 %v1425
  %v1498 = vpop.f32.mrf.mxu0
  %v1499 = vadd.f32 0.0, %v1498
  %v1500 = vpop.f32.mrf.mxu0
  %1501 = vdwg.mxu0
  %v1502 = vadd.f32 %v1332, %v1494
  %v1503 = vadd.f32 %v1337, %v1499
  %v1504 = vld [vmem:[%s6] sm:$0xff]
  %v1505 = vld [vmem:[%s6 + $0x8] sm:$0xff]
  %1507 = vset.pattern.permute.xlu0 0
  %1508 = vperm.xlu0 %1507, %v1504
  %v1509 = vpop.permute.xlu0 %1508
  %1512 = vset.pattern.permute.xlu0 0
  %1513 = vperm.xlu0 %1512, %v1505
  %v1514 = vpop.permute.xlu0 %1513
  %v1516 = vadd.f32 %v1502, %v1509
  %v1517 = vadd.f32 %v1503, %v1514
  %v1518 = vmax.f32 %v1516, 0.0
  %v1519 = vmax.f32 %v1517, 0.0
  %v1521 = vsel %vm217, %v1518, 0
  %v1524 = vsel %vm217, %v1519, 0
  %1526 = vmatprep.subr.mxu0 0.0
  %1527 = vmatpush1.msra.mxu0 0.0
  %1528 = vmatprep.subr.mxu0 0.0
  %1529 = vmatpush1.msra.mxu0 0.0
  %1530 = vmatprep.subr.mxu0 0.0
  %1531 = vmatpush1.msra.mxu0 0.0
  %1532 = vmatprep.subr.mxu0 0.0
  %1533 = vmatpush1.msra.mxu0 0.0
  %1534 = vmatprep.subr.mxu0 0.0
  %1535 = vmatpush1.msra.mxu0 0.0
  %1536 = vmatprep.subr.mxu0 0.0
  %1537 = vmatpush1.msra.mxu0 0.0
  %1538 = vmatprep.subr.mxu0 0.0
  %1539 = vmatpush1.msra.mxu0 0.0
  %1540 = vmatprep.subr.mxu0 0.0
  %1541 = vmatpush1.msra.mxu0 0.0
  %1542 = vmatprep.subr.mxu0 0.0
  %1543 = vmatpush1.msra.mxu0 0.0
  %1544 = vmatprep.subr.mxu0 0.0
  %1545 = vmatpush1.msra.mxu0 0.0
  %1546 = vmatprep.subr.mxu0 0.0
  %1547 = vmatpush1.msra.mxu0 0.0
  %1548 = vmatprep.subr.mxu0 0.0
  %1549 = vmatpush1.msra.mxu0 0.0
  %1550 = vmatprep.subr.mxu0 0.0
  %1551 = vmatpush1.msra.mxu0 0.0
  %1552 = vmatprep.subr.mxu0 0.0
  %1553 = vmatpush1.msra.mxu0 0.0
  %1554 = vmatprep.subr.mxu0 0.0
  %1555 = vmatpush1.msra.mxu0 0.0
  %1556 = vmatprep.subr.mxu0 0.0
  %1557 = vmatpush1.msra.mxu0 %v1018
  %1558 = vmatprep.subr.mxu0 0.0
  %1559 = vmatpush2.msra.mxu0 0.0
  %1560 = vmatprep.subr.mxu0 0.0
  %1561 = vmatpush2.msra.mxu0 0.0
  %1562 = vmatprep.subr.mxu0 0.0
  %1563 = vmatpush2.msra.mxu0 0.0
  %1564 = vmatprep.subr.mxu0 0.0
  %1565 = vmatpush2.msra.mxu0 0.0
  %1566 = vmatprep.subr.mxu0 0.0
  %1567 = vmatpush2.msra.mxu0 0.0
  %1568 = vmatprep.subr.mxu0 0.0
  %1569 = vmatpush2.msra.mxu0 0.0
  %1570 = vmatprep.subr.mxu0 0.0
  %1571 = vmatpush2.msra.mxu0 0.0
  %1572 = vmatprep.subr.mxu0 0.0
  %1573 = vmatpush2.msra.mxu0 0.0
  %1574 = vmatprep.subr.mxu0 0.0
  %1575 = vmatpush2.msra.mxu0 0.0
  %1576 = vmatprep.subr.mxu0 0.0
  %1577 = vmatpush2.msra.mxu0 0.0
  %1578 = vmatprep.subr.mxu0 0.0
  %1579 = vmatpush2.msra.mxu0 0.0
  %1580 = vmatprep.subr.mxu0 0.0
  %1581 = vmatpush2.msra.mxu0 0.0
  %1582 = vmatprep.subr.mxu0 0.0
  %1583 = vmatpush2.msra.mxu0 0.0
  %1584 = vmatprep.subr.mxu0 0.0
  %1585 = vmatpush2.msra.mxu0 0.0
  %1586 = vmatprep.subr.mxu0 0.0
  %1587 = vmatpush2.msra.mxu0 0.0
  %1588 = vmatprep.subr.mxu0 0.0
  %1589 = vmatpush2.msra.mxu0 0.0
  %1590 = vmatprep.mubr.f32.mxu0 0.0
  %1591 = vmatmul.mubr.f32.gmra.mxu0 %v1521
  %v1592 = vpop.f32.mrf.mxu0
  %v1593 = vadd.f32 0.0, %v1592
  %v1594 = vpop.f32.mrf.mxu0
  %1595 = vmatprep.mubr.f32.mxu0 0.0
  %1596 = vmatmul.mubr.f32.gmra.mxu0 %v1524
  %v1597 = vpop.f32.mrf.mxu0
  %v1598 = vadd.f32 0.0, %v1597
  %v1599 = vpop.f32.mrf.mxu0
  %1600 = vdwg.mxu0
  %v1601 = vld [vmem:[%s7] sm:$0xff]
  %v1602 = vld [vmem:[%s7 + $0x8] sm:$0xff]
  %1603 = vmatprep.subr.mxu0 0.0
  %1604 = vmatpush1.msra.mxu0 0.0
  %1605 = vmatprep.subr.mxu0 0.0
  %1606 = vmatpush1.msra.mxu0 0.0
  %1607 = vmatprep.subr.mxu0 0.0
  %1608 = vmatpush1.msra.mxu0 0.0
  %1609 = vmatprep.subr.mxu0 0.0
  %1610 = vmatpush1.msra.mxu0 0.0
  %1611 = vmatprep.subr.mxu0 0.0
  %1612 = vmatpush1.msra.mxu0 0.0
  %1613 = vmatprep.subr.mxu0 0.0
  %1614 = vmatpush1.msra.mxu0 0.0
  %1615 = vmatprep.subr.mxu0 0.0
  %1616 = vmatpush1.msra.mxu0 0.0
  %1617 = vmatprep.subr.mxu0 0.0
  %1618 = vmatpush1.msra.mxu0 0.0
  %1619 = vmatprep.subr.mxu0 0.0
  %1620 = vmatpush1.msra.mxu0 0.0
  %1621 = vmatprep.subr.mxu0 0.0
  %1622 = vmatpush1.msra.mxu0 0.0
  %1623 = vmatprep.subr.mxu0 0.0
  %1624 = vmatpush1.msra.mxu0 0.0
  %1625 = vmatprep.subr.mxu0 0.0
  %1626 = vmatpush1.msra.mxu0 0.0
  %1627 = vmatprep.subr.mxu0 0.0
  %1628 = vmatpush1.msra.mxu0 0.0
  %1629 = vmatprep.subr.mxu0 0.0
  %1630 = vmatpush1.msra.mxu0 0.0
  %1631 = vmatprep.subr.mxu0 0.0
  %1632 = vmatpush1.msra.mxu0 0.0
  %1633 = vmatprep.subr.mxu0 0.0
  %1634 = vmatpush1.msra.mxu0 %v1098
  %1635 = vmatprep.subr.mxu0 0.0
  %1636 = vmatpush2.msra.mxu0 0.0
  %1637 = vmatprep.subr.mxu0 0.0
  %1638 = vmatpush2.msra.mxu0 0.0
  %1639 = vmatprep.subr.mxu0 0.0
  %1640 = vmatpush2.msra.mxu0 0.0
  %1641 = vmatprep.subr.mxu0 0.0
  %1642 = vmatpush2.msra.mxu0 0.0
  %1643 = vmatprep.subr.mxu0 0.0
  %1644 = vmatpush2.msra.mxu0 0.0
  %1645 = vmatprep.subr.mxu0 0.0
  %1646 = vmatpush2.msra.mxu0 0.0
  %1647 = vmatprep.subr.mxu0 0.0
  %1648 = vmatpush2.msra.mxu0 0.0
  %1649 = vmatprep.subr.mxu0 0.0
  %1650 = vmatpush2.msra.mxu0 0.0
  %1651 = vmatprep.subr.mxu0 0.0
  %1652 = vmatpush2.msra.mxu0 0.0
  %1653 = vmatprep.subr.mxu0 0.0
  %1654 = vmatpush2.msra.mxu0 0.0
  %1655 = vmatprep.subr.mxu0 0.0
  %1656 = vmatpush2.msra.mxu0 0.0
  %1657 = vmatprep.subr.mxu0 0.0
  %1658 = vmatpush2.msra.mxu0 0.0
  %1659 = vmatprep.subr.mxu0 0.0
  %1660 = vmatpush2.msra.mxu0 0.0
  %1661 = vmatprep.subr.mxu0 0.0
  %1662 = vmatpush2.msra.mxu0 0.0
  %1663 = vmatprep.subr.mxu0 0.0
  %1664 = vmatpush2.msra.mxu0 0.0
  %1665 = vmatprep.subr.mxu0 0.0
  %1666 = vmatpush2.msra.mxu0 0.0
  %1667 = vmatprep.mubr.f32.mxu0 0.0
  %1668 = vmatmul.mubr.f32.gmra.mxu0 %v1521
  %v1669 = vpop.f32.mrf.mxu0
  %v1670 = vadd.f32 0.0, %v1669
  %v1671 = vpop.f32.mrf.mxu0
  %1672 = vmatprep.mubr.f32.mxu0 0.0
  %1673 = vmatmul.mubr.f32.gmra.mxu0 %v1524
  %v1674 = vpop.f32.mrf.mxu0
  %v1675 = vadd.f32 0.0, %v1674
  %v1676 = vpop.f32.mrf.mxu0
  %1677 = vdwg.mxu0
  %s1678 = scalar_lea.vmem %s7, 16
  %v1679 = vld [vmem:[%s1678] sm:$0xff]
  %v1680 = vld [vmem:[%s1678 + $0x8] sm:$0xff]
  %v1682 = vsel %vm70, %v1679, 0
  %v1685 = vsel %vm70, %v1680, 0
  %1687 = vmatprep.subr.mxu0 0.0
  %1688 = vmatpush1.msra.mxu0 0.0
  %1689 = vmatprep.subr.mxu0 0.0
  %1690 = vmatpush1.msra.mxu0 0.0
  %1691 = vmatprep.subr.mxu0 0.0
  %1692 = vmatpush1.msra.mxu0 0.0
  %1693 = vmatprep.subr.mxu0 0.0
  %1694 = vmatpush1.msra.mxu0 0.0
  %1695 = vmatprep.subr.mxu0 0.0
  %1696 = vmatpush1.msra.mxu0 0.0
  %1697 = vmatprep.subr.mxu0 0.0
  %1698 = vmatpush1.msra.mxu0 0.0
  %1699 = vmatprep.subr.mxu0 0.0
  %1700 = vmatpush1.msra.mxu0 0.0
  %1701 = vmatprep.subr.mxu0 0.0
  %1702 = vmatpush1.msra.mxu0 0.0
  %1703 = vmatprep.subr.mxu0 0.0
  %1704 = vmatpush1.msra.mxu0 0.0
  %1705 = vmatprep.subr.mxu0 0.0
  %1706 = vmatpush1.msra.mxu0 0.0
  %1707 = vmatprep.subr.mxu0 0.0
  %1708 = vmatpush1.msra.mxu0 0.0
  %1709 = vmatprep.subr.mxu0 0.0
  %1710 = vmatpush1.msra.mxu0 0.0
  %1711 = vmatprep.subr.mxu0 0.0
  %1712 = vmatpush1.msra.mxu0 0.0
  %1713 = vmatprep.subr.mxu0 0.0
  %1714 = vmatpush1.msra.mxu0 0.0
  %1715 = vmatprep.subr.mxu0 0.0
  %1716 = vmatpush1.msra.mxu0 %v1675
  %1717 = vmatprep.subr.mxu0 0.0
  %1718 = vmatpush1.msra.mxu0 %v1670
  %1719 = vmatprep.subr.mxu0 0.0
  %1720 = vmatpush2.msra.mxu0 0.0
  %1721 = vmatprep.subr.mxu0 0.0
  %1722 = vmatpush2.msra.mxu0 0.0
  %1723 = vmatprep.subr.mxu0 0.0
  %1724 = vmatpush2.msra.mxu0 0.0
  %1725 = vmatprep.subr.mxu0 0.0
  %1726 = vmatpush2.msra.mxu0 0.0
  %1727 = vmatprep.subr.mxu0 0.0
  %1728 = vmatpush2.msra.mxu0 0.0
  %1729 = vmatprep.subr.mxu0 0.0
  %1730 = vmatpush2.msra.mxu0 0.0
  %1731 = vmatprep.subr.mxu0 0.0
  %1732 = vmatpush2.msra.mxu0 0.0
  %1733 = vmatprep.subr.mxu0 0.0
  %1734 = vmatpush2.msra.mxu0 0.0
  %1735 = vmatprep.subr.mxu0 0.0
  %1736 = vmatpush2.msra.mxu0 0.0
  %1737 = vmatprep.subr.mxu0 0.0
  %1738 = vmatpush2.msra.mxu0 0.0
  %1739 = vmatprep.subr.mxu0 0.0
  %1740 = vmatpush2.msra.mxu0 0.0
  %1741 = vmatprep.subr.mxu0 0.0
  %1742 = vmatpush2.msra.mxu0 0.0
  %1743 = vmatprep.subr.mxu0 0.0
  %1744 = vmatpush2.msra.mxu0 0.0
  %1745 = vmatprep.subr.mxu0 0.0
  %1746 = vmatpush2.msra.mxu0 0.0
  %1747 = vmatprep.subr.mxu0 0.0
  %1748 = vmatpush2.msra.mxu0 0.0
  %1749 = vmatprep.subr.mxu0 0.0
  %1750 = vmatpush2.msra.mxu0 0.0
  %1751 = vmatprep.mubr.f32.mxu0 0.0
  %1752 = vmatmul.mubr.f32.gmra.mxu0 %v1682
  %v1753 = vpop.f32.mrf.mxu0
  %v1754 = vadd.f32 0.0, %v1753
  %v1755 = vpop.f32.mrf.mxu0
  %1756 = vmatprep.mubr.f32.mxu0 0.0
  %1757 = vmatmul.mubr.f32.gmra.mxu0 %v1685
  %v1758 = vpop.f32.mrf.mxu0
  %v1759 = vadd.f32 0.0, %v1758
  %v1760 = vpop.f32.mrf.mxu0
  %1761 = vdwg.mxu0
  %v1763 = vsel %vm70, %v1601, 0
  %v1766 = vsel %vm70, %v1602, 0
  %1768 = vmatprep.subr.mxu0 0.0
  %1769 = vmatpush1.msra.mxu0 0.0
  %1770 = vmatprep.subr.mxu0 0.0
  %1771 = vmatpush1.msra.mxu0 0.0
  %1772 = vmatprep.subr.mxu0 0.0
  %1773 = vmatpush1.msra.mxu0 0.0
  %1774 = vmatprep.subr.mxu0 0.0
  %1775 = vmatpush1.msra.mxu0 0.0
  %1776 = vmatprep.subr.mxu0 0.0
  %1777 = vmatpush1.msra.mxu0 0.0
  %1778 = vmatprep.subr.mxu0 0.0
  %1779 = vmatpush1.msra.mxu0 0.0
  %1780 = vmatprep.subr.mxu0 0.0
  %1781 = vmatpush1.msra.mxu0 0.0
  %1782 = vmatprep.subr.mxu0 0.0
  %1783 = vmatpush1.msra.mxu0 0.0
  %1784 = vmatprep.subr.mxu0 0.0
  %1785 = vmatpush1.msra.mxu0 0.0
  %1786 = vmatprep.subr.mxu0 0.0
  %1787 = vmatpush1.msra.mxu0 0.0
  %1788 = vmatprep.subr.mxu0 0.0
  %1789 = vmatpush1.msra.mxu0 0.0
  %1790 = vmatprep.subr.mxu0 0.0
  %1791 = vmatpush1.msra.mxu0 0.0
  %1792 = vmatprep.subr.mxu0 0.0
  %1793 = vmatpush1.msra.mxu0 0.0
  %1794 = vmatprep.subr.mxu0 0.0
  %1795 = vmatpush1.msra.mxu0 0.0
  %1796 = vmatprep.subr.mxu0 0.0
  %1797 = vmatpush1.msra.mxu0 %v1598
  %1798 = vmatprep.subr.mxu0 0.0
  %1799 = vmatpush1.msra.mxu0 %v1593
  %1800 = vmatprep.subr.mxu0 0.0
  %1801 = vmatpush2.msra.mxu0 0.0
  %1802 = vmatprep.subr.mxu0 0.0
  %1803 = vmatpush2.msra.mxu0 0.0
  %1804 = vmatprep.subr.mxu0 0.0
  %1805 = vmatpush2.msra.mxu0 0.0
  %1806 = vmatprep.subr.mxu0 0.0
  %1807 = vmatpush2.msra.mxu0 0.0
  %1808 = vmatprep.subr.mxu0 0.0
  %1809 = vmatpush2.msra.mxu0 0.0
  %1810 = vmatprep.subr.mxu0 0.0
  %1811 = vmatpush2.msra.mxu0 0.0
  %1812 = vmatprep.subr.mxu0 0.0
  %1813 = vmatpush2.msra.mxu0 0.0
  %1814 = vmatprep.subr.mxu0 0.0
  %1815 = vmatpush2.msra.mxu0 0.0
  %1816 = vmatprep.subr.mxu0 0.0
  %1817 = vmatpush2.msra.mxu0 0.0
  %1818 = vmatprep.subr.mxu0 0.0
  %1819 = vmatpush2.msra.mxu0 0.0
  %1820 = vmatprep.subr.mxu0 0.0
  %1821 = vmatpush2.msra.mxu0 0.0
  %1822 = vmatprep.subr.mxu0 0.0
  %1823 = vmatpush2.msra.mxu0 0.0
  %1824 = vmatprep.subr.mxu0 0.0
  %1825 = vmatpush2.msra.mxu0 0.0
  %1826 = vmatprep.subr.mxu0 0.0
  %1827 = vmatpush2.msra.mxu0 0.0
  %1828 = vmatprep.subr.mxu0 0.0
  %1829 = vmatpush2.msra.mxu0 0.0
  %1830 = vmatprep.subr.mxu0 0.0
  %1831 = vmatpush2.msra.mxu0 0.0
  %1832 = vmatprep.mubr.f32.mxu0 0.0
  %1833 = vmatmul.mubr.f32.gmra.mxu0 %v1763
  %v1834 = vpop.f32.mrf.mxu0
  %v1835 = vadd.f32 %v1754, %v1834
  %v1836 = vpop.f32.mrf.mxu0
  %1837 = vmatprep.mubr.f32.mxu0 0.0
  %1838 = vmatmul.mubr.f32.gmra.mxu0 %v1766
  %v1839 = vpop.f32.mrf.mxu0
  %v1840 = vadd.f32 %v1759, %v1839
  %v1841 = vpop.f32.mrf.mxu0
  %1842 = vdwg.mxu0
  %1843 = vmatprep.subr.mxu0 0.0
  %1844 = vmatpush1.msra.mxu0 0.0
  %1845 = vmatprep.subr.mxu0 0.0
  %1846 = vmatpush1.msra.mxu0 0.0
  %1847 = vmatprep.subr.mxu0 0.0
  %1848 = vmatpush1.msra.mxu0 0.0
  %1849 = vmatprep.subr.mxu0 0.0
  %1850 = vmatpush1.msra.mxu0 0.0
  %1851 = vmatprep.subr.mxu0 0.0
  %1852 = vmatpush1.msra.mxu0 0.0
  %1853 = vmatprep.subr.mxu0 0.0
  %1854 = vmatpush1.msra.mxu0 0.0
  %1855 = vmatprep.subr.mxu0 0.0
  %1856 = vmatpush1.msra.mxu0 0.0
  %1857 = vmatprep.subr.mxu0 0.0
  %1858 = vmatpush1.msra.mxu0 0.0
  %1859 = vmatprep.subr.mxu0 0.0
  %1860 = vmatpush1.msra.mxu0 0.0
  %1861 = vmatprep.subr.mxu0 0.0
  %1862 = vmatpush1.msra.mxu0 0.0
  %1863 = vmatprep.subr.mxu0 0.0
  %1864 = vmatpush1.msra.mxu0 0.0
  %1865 = vmatprep.subr.mxu0 0.0
  %1866 = vmatpush1.msra.mxu0 0.0
  %1867 = vmatprep.subr.mxu0 0.0
  %1868 = vmatpush1.msra.mxu0 0.0
  %1869 = vmatprep.subr.mxu0 0.0
  %1870 = vmatpush1.msra.mxu0 0.0
  %1871 = vmatprep.subr.mxu0 0.0
  %1872 = vmatpush1.msra.mxu0 0.0
  %1873 = vmatprep.subr.mxu0 0.0
  %1874 = vmatpush1.msra.mxu0 %v1341
  %1875 = vmatprep.subr.mxu0 0.0
  %1876 = vmatpush2.msra.mxu0 0.0
  %1877 = vmatprep.subr.mxu0 0.0
  %1878 = vmatpush2.msra.mxu0 0.0
  %1879 = vmatprep.subr.mxu0 0.0
  %1880 = vmatpush2.msra.mxu0 0.0
  %1881 = vmatprep.subr.mxu0 0.0
  %1882 = vmatpush2.msra.mxu0 0.0
  %1883 = vmatprep.subr.mxu0 0.0
  %1884 = vmatpush2.msra.mxu0 0.0
  %1885 = vmatprep.subr.mxu0 0.0
  %1886 = vmatpush2.msra.mxu0 0.0
  %1887 = vmatprep.subr.mxu0 0.0
  %1888 = vmatpush2.msra.mxu0 0.0
  %1889 = vmatprep.subr.mxu0 0.0
  %1890 = vmatpush2.msra.mxu0 0.0
  %1891 = vmatprep.subr.mxu0 0.0
  %1892 = vmatpush2.msra.mxu0 0.0
  %1893 = vmatprep.subr.mxu0 0.0
  %1894 = vmatpush2.msra.mxu0 0.0
  %1895 = vmatprep.subr.mxu0 0.0
  %1896 = vmatpush2.msra.mxu0 0.0
  %1897 = vmatprep.subr.mxu0 0.0
  %1898 = vmatpush2.msra.mxu0 0.0
  %1899 = vmatprep.subr.mxu0 0.0
  %1900 = vmatpush2.msra.mxu0 0.0
  %1901 = vmatprep.subr.mxu0 0.0
  %1902 = vmatpush2.msra.mxu0 0.0
  %1903 = vmatprep.subr.mxu0 0.0
  %1904 = vmatpush2.msra.mxu0 0.0
  %1905 = vmatprep.subr.mxu0 0.0
  %1906 = vmatpush2.msra.mxu0 0.0
  %1907 = vmatprep.mubr.f32.mxu0 0.0
  %1908 = vmatmul.mubr.f32.gmra.mxu0 %v1521
  %v1909 = vpop.f32.mrf.mxu0
  %v1910 = vadd.f32 0.0, %v1909
  %v1911 = vpop.f32.mrf.mxu0
  %1912 = vmatprep.mubr.f32.mxu0 0.0
  %1913 = vmatmul.mubr.f32.gmra.mxu0 %v1524
  %v1914 = vpop.f32.mrf.mxu0
  %v1915 = vadd.f32 0.0, %v1914
  %v1916 = vpop.f32.mrf.mxu0
  %1917 = vdwg.mxu0
  %s1918 = scalar_lea.vmem %s7, 32
  %v1919 = vld [vmem:[%s1918] sm:$0xff]
  %v1920 = vld [vmem:[%s1918 + $0x8] sm:$0xff]
  %v1922 = vsel %vm70, %v1919, 0
  %v1925 = vsel %vm70, %v1920, 0
  %1927 = vmatprep.subr.mxu0 0.0
  %1928 = vmatpush1.msra.mxu0 0.0
  %1929 = vmatprep.subr.mxu0 0.0
  %1930 = vmatpush1.msra.mxu0 0.0
  %1931 = vmatprep.subr.mxu0 0.0
  %1932 = vmatpush1.msra.mxu0 0.0
  %1933 = vmatprep.subr.mxu0 0.0
  %1934 = vmatpush1.msra.mxu0 0.0
  %1935 = vmatprep.subr.mxu0 0.0
  %1936 = vmatpush1.msra.mxu0 0.0
  %1937 = vmatprep.subr.mxu0 0.0
  %1938 = vmatpush1.msra.mxu0 0.0
  %1939 = vmatprep.subr.mxu0 0.0
  %1940 = vmatpush1.msra.mxu0 0.0
  %1941 = vmatprep.subr.mxu0 0.0
  %1942 = vmatpush1.msra.mxu0 0.0
  %1943 = vmatprep.subr.mxu0 0.0
  %1944 = vmatpush1.msra.mxu0 0.0
  %1945 = vmatprep.subr.mxu0 0.0
  %1946 = vmatpush1.msra.mxu0 0.0
  %1947 = vmatprep.subr.mxu0 0.0
  %1948 = vmatpush1.msra.mxu0 0.0
  %1949 = vmatprep.subr.mxu0 0.0
  %1950 = vmatpush1.msra.mxu0 0.0
  %1951 = vmatprep.subr.mxu0 0.0
  %1952 = vmatpush1.msra.mxu0 0.0
  %1953 = vmatprep.subr.mxu0 0.0
  %1954 = vmatpush1.msra.mxu0 0.0
  %1955 = vmatprep.subr.mxu0 0.0
  %1956 = vmatpush1.msra.mxu0 %v1915
  %1957 = vmatprep.subr.mxu0 0.0
  %1958 = vmatpush1.msra.mxu0 %v1910
  %1959 = vmatprep.subr.mxu0 0.0
  %1960 = vmatpush2.msra.mxu0 0.0
  %1961 = vmatprep.subr.mxu0 0.0
  %1962 = vmatpush2.msra.mxu0 0.0
  %1963 = vmatprep.subr.mxu0 0.0
  %1964 = vmatpush2.msra.mxu0 0.0
  %1965 = vmatprep.subr.mxu0 0.0
  %1966 = vmatpush2.msra.mxu0 0.0
  %1967 = vmatprep.subr.mxu0 0.0
  %1968 = vmatpush2.msra.mxu0 0.0
  %1969 = vmatprep.subr.mxu0 0.0
  %1970 = vmatpush2.msra.mxu0 0.0
  %1971 = vmatprep.subr.mxu0 0.0
  %1972 = vmatpush2.msra.mxu0 0.0
  %1973 = vmatprep.subr.mxu0 0.0
  %1974 = vmatpush2.msra.mxu0 0.0
  %1975 = vmatprep.subr.mxu0 0.0
  %1976 = vmatpush2.msra.mxu0 0.0
  %1977 = vmatprep.subr.mxu0 0.0
  %1978 = vmatpush2.msra.mxu0 0.0
  %1979 = vmatprep.subr.mxu0 0.0
  %1980 = vmatpush2.msra.mxu0 0.0
  %1981 = vmatprep.subr.mxu0 0.0
  %1982 = vmatpush2.msra.mxu0 0.0
  %1983 = vmatprep.subr.mxu0 0.0
  %1984 = vmatpush2.msra.mxu0 0.0
  %1985 = vmatprep.subr.mxu0 0.0
  %1986 = vmatpush2.msra.mxu0 0.0
  %1987 = vmatprep.subr.mxu0 0.0
  %1988 = vmatpush2.msra.mxu0 0.0
  %1989 = vmatprep.subr.mxu0 0.0
  %1990 = vmatpush2.msra.mxu0 0.0
  %1991 = vmatprep.mubr.f32.mxu0 0.0
  %1992 = vmatmul.mubr.f32.gmra.mxu0 %v1922
  %v1993 = vpop.f32.mrf.mxu0
  %v1994 = vadd.f32 0.0, %v1993
  %v1995 = vpop.f32.mrf.mxu0
  %1996 = vmatprep.mubr.f32.mxu0 0.0
  %1997 = vmatmul.mubr.f32.gmra.mxu0 %v1925
  %v1998 = vpop.f32.mrf.mxu0
  %v1999 = vadd.f32 0.0, %v1998
  %v2000 = vpop.f32.mrf.mxu0
  %2001 = vdwg.mxu0
  %v2002 = vadd.f32 %v1835, %v1994
  %v2003 = vadd.f32 %v1840, %v1999
  %v2004 = vld [vmem:[%s8] sm:$0xff]
  %v2005 = vld [vmem:[%s8 + $0x8] sm:$0xff]
  %2007 = vset.pattern.permute.xlu0 0
  %2008 = vperm.xlu0 %2007, %v2004
  %v2009 = vpop.permute.xlu0 %2008
  %2012 = vset.pattern.permute.xlu0 0
  %2013 = vperm.xlu0 %2012, %v2005
  %v2014 = vpop.permute.xlu0 %2013
  %v2016 = vadd.f32 %v2002, %v2009
  %v2017 = vadd.f32 %v2003, %v2014
  %v2018 = vadd.f32 %v1009, %v2016
  %v2019 = vadd.f32 %v1010, %v2017
  %v2020 = vtanh.pop %v2018
  %v2021 = vtanh.pop %v2019
  %2022 = vst.msk [vmem:[%s9] sm:$0xff] %vm217, %v2020
  %2023 = vst.msk [vmem:[%s9 + $0x8] sm:$0xff] %vm217, %v2021
  %s2024 = scalar_lea.vmem %s1, 24
  %v2025 = vld [vmem:[%s2024] sm:$0xff]
  %s2026 = scalar_lea.vmem %s1, 32
  %v2027 = vld [vmem:[%s2026] sm:$0xff]
  %v2029 = vsel %vm217, %v2027, 0
  %2031 = vmatprep.subr.mxu0 0.0
  %2032 = vmatpush1.msra.mxu0 0.0
  %2033 = vmatprep.subr.mxu0 0.0
  %2034 = vmatpush1.msra.mxu0 0.0
  %2035 = vmatprep.subr.mxu0 0.0
  %2036 = vmatpush1.msra.mxu0 0.0
  %2037 = vmatprep.subr.mxu0 0.0
  %2038 = vmatpush1.msra.mxu0 0.0
  %2039 = vmatprep.subr.mxu0 0.0
  %2040 = vmatpush1.msra.mxu0 0.0
  %2041 = vmatprep.subr.mxu0 0.0
  %2042 = vmatpush1.msra.mxu0 0.0
  %2043 = vmatprep.subr.mxu0 0.0
  %2044 = vmatpush1.msra.mxu0 0.0
  %2045 = vmatprep.subr.mxu0 0.0
  %2046 = vmatpush1.msra.mxu0 0.0
  %2047 = vmatprep.subr.mxu0 0.0
  %2048 = vmatpush1.msra.mxu0 0.0
  %2049 = vmatprep.subr.mxu0 0.0
  %2050 = vmatpush1.msra.mxu0 0.0
  %2051 = vmatprep.subr.mxu0 0.0
  %2052 = vmatpush1.msra.mxu0 0.0
  %2053 = vmatprep.subr.mxu0 0.0
  %2054 = vmatpush1.msra.mxu0 0.0
  %2055 = vmatprep.subr.mxu0 0.0
  %2056 = vmatpush1.msra.mxu0 0.0
  %2057 = vmatprep.subr.mxu0 0.0
  %2058 = vmatpush1.msra.mxu0 0.0
  %2059 = vmatprep.subr.mxu0 0.0
  %2060 = vmatpush1.msra.mxu0 0.0
  %2061 = vmatprep.subr.mxu0 0.0
  %2062 = vmatpush1.msra.mxu0 %v223
  %2063 = vmatprep.subr.mxu0 0.0
  %2064 = vmatpush2.msra.mxu0 0.0
  %2065 = vmatprep.subr.mxu0 0.0
  %2066 = vmatpush2.msra.mxu0 0.0
  %2067 = vmatprep.subr.mxu0 0.0
  %2068 = vmatpush2.msra.mxu0 0.0
  %2069 = vmatprep.subr.mxu0 0.0
  %2070 = vmatpush2.msra.mxu0 0.0
  %2071 = vmatprep.subr.mxu0 0.0
  %2072 = vmatpush2.msra.mxu0 0.0
  %2073 = vmatprep.subr.mxu0 0.0
  %2074 = vmatpush2.msra.mxu0 0.0
  %2075 = vmatprep.subr.mxu0 0.0
  %2076 = vmatpush2.msra.mxu0 0.0
  %2077 = vmatprep.subr.mxu0 0.0
  %2078 = vmatpush2.msra.mxu0 0.0
  %2079 = vmatprep.subr.mxu0 0.0
  %2080 = vmatpush2.msra.mxu0 0.0
  %2081 = vmatprep.subr.mxu0 0.0
  %2082 = vmatpush2.msra.mxu0 0.0
  %2083 = vmatprep.subr.mxu0 0.0
  %2084 = vmatpush2.msra.mxu0 0.0
  %2085 = vmatprep.subr.mxu0 0.0
  %2086 = vmatpush2.msra.mxu0 0.0
  %2087 = vmatprep.subr.mxu0 0.0
  %2088 = vmatpush2.msra.mxu0 0.0
  %2089 = vmatprep.subr.mxu0 0.0
  %2090 = vmatpush2.msra.mxu0 0.0
  %2091 = vmatprep.subr.mxu0 0.0
  %2092 = vmatpush2.msra.mxu0 0.0
  %2093 = vmatprep.subr.mxu0 0.0
  %2094 = vmatpush2.msra.mxu0 0.0
  %2095 = vmatprep.mubr.f32.mxu0 0.0
  %2096 = vmatmul.mubr.f32.gmra.mxu0 %v2029
  %v2097 = vpop.f32.mrf.mxu0
  %v2098 = vadd.f32 0.0, %v2097
  %v2099 = vpop.f32.mrf.mxu0
  %2100 = vdwg.mxu0
  %v2102 = vsel %vm217, %v2025, 0
  %2104 = vmatprep.subr.mxu0 0.0
  %2105 = vmatpush1.msra.mxu0 0.0
  %2106 = vmatprep.subr.mxu0 0.0
  %2107 = vmatpush1.msra.mxu0 0.0
  %2108 = vmatprep.subr.mxu0 0.0
  %2109 = vmatpush1.msra.mxu0 0.0
  %2110 = vmatprep.subr.mxu0 0.0
  %2111 = vmatpush1.msra.mxu0 0.0
  %2112 = vmatprep.subr.mxu0 0.0
  %2113 = vmatpush1.msra.mxu0 0.0
  %2114 = vmatprep.subr.mxu0 0.0
  %2115 = vmatpush1.msra.mxu0 0.0
  %2116 = vmatprep.subr.mxu0 0.0
  %2117 = vmatpush1.msra.mxu0 0.0
  %2118 = vmatprep.subr.mxu0 0.0
  %2119 = vmatpush1.msra.mxu0 0.0
  %2120 = vmatprep.subr.mxu0 0.0
  %2121 = vmatpush1.msra.mxu0 0.0
  %2122 = vmatprep.subr.mxu0 0.0
  %2123 = vmatpush1.msra.mxu0 0.0
  %2124 = vmatprep.subr.mxu0 0.0
  %2125 = vmatpush1.msra.mxu0 0.0
  %2126 = vmatprep.subr.mxu0 0.0
  %2127 = vmatpush1.msra.mxu0 0.0
  %2128 = vmatprep.subr.mxu0 0.0
  %2129 = vmatpush1.msra.mxu0 0.0
  %2130 = vmatprep.subr.mxu0 0.0
  %2131 = vmatpush1.msra.mxu0 0.0
  %2132 = vmatprep.subr.mxu0 0.0
  %2133 = vmatpush1.msra.mxu0 0.0
  %2134 = vmatprep.subr.mxu0 0.0
  %2135 = vmatpush1.msra.mxu0 %v299
  %2136 = vmatprep.subr.mxu0 0.0
  %2137 = vmatpush2.msra.mxu0 0.0
  %2138 = vmatprep.subr.mxu0 0.0
  %2139 = vmatpush2.msra.mxu0 0.0
  %2140 = vmatprep.subr.mxu0 0.0
  %2141 = vmatpush2.msra.mxu0 0.0
  %2142 = vmatprep.subr.mxu0 0.0
  %2143 = vmatpush2.msra.mxu0 0.0
  %2144 = vmatprep.subr.mxu0 0.0
  %2145 = vmatpush2.msra.mxu0 0.0
  %2146 = vmatprep.subr.mxu0 0.0
  %2147 = vmatpush2.msra.mxu0 0.0
  %2148 = vmatprep.subr.mxu0 0.0
  %2149 = vmatpush2.msra.mxu0 0.0
  %2150 = vmatprep.subr.mxu0 0.0
  %2151 = vmatpush2.msra.mxu0 0.0
  %2152 = vmatprep.subr.mxu0 0.0
  %2153 = vmatpush2.msra.mxu0 0.0
  %2154 = vmatprep.subr.mxu0 0.0
  %2155 = vmatpush2.msra.mxu0 0.0
  %2156 = vmatprep.subr.mxu0 0.0
  %2157 = vmatpush2.msra.mxu0 0.0
  %2158 = vmatprep.subr.mxu0 0.0
  %2159 = vmatpush2.msra.mxu0 0.0
  %2160 = vmatprep.subr.mxu0 0.0
  %2161 = vmatpush2.msra.mxu0 0.0
  %2162 = vmatprep.subr.mxu0 0.0
  %2163 = vmatpush2.msra.mxu0 0.0
  %2164 = vmatprep.subr.mxu0 0.0
  %2165 = vmatpush2.msra.mxu0 0.0
  %2166 = vmatprep.subr.mxu0 0.0
  %2167 = vmatpush2.msra.mxu0 0.0
  %2168 = vmatprep.mubr.f32.mxu0 0.0
  %2169 = vmatmul.mubr.f32.gmra.mxu0 %v2102
  %v2170 = vpop.f32.mrf.mxu0
  %v2171 = vadd.f32 %v2098, %v2170
  %v2172 = vpop.f32.mrf.mxu0
  %2173 = vdwg.mxu0
  %s2174 = scalar_lea.vmem %s1, 40
  %v2175 = vld [vmem:[%s2174] sm:$0xff]
  %v2177 = vsel %vm217, %v2175, 0
  %2179 = vmatprep.subr.mxu0 0.0
  %2180 = vmatpush1.msra.mxu0 0.0
  %2181 = vmatprep.subr.mxu0 0.0
  %2182 = vmatpush1.msra.mxu0 0.0
  %2183 = vmatprep.subr.mxu0 0.0
  %2184 = vmatpush1.msra.mxu0 0.0
  %2185 = vmatprep.subr.mxu0 0.0
  %2186 = vmatpush1.msra.mxu0 0.0
  %2187 = vmatprep.subr.mxu0 0.0
  %2188 = vmatpush1.msra.mxu0 0.0
  %2189 = vmatprep.subr.mxu0 0.0
  %2190 = vmatpush1.msra.mxu0 0.0
  %2191 = vmatprep.subr.mxu0 0.0
  %2192 = vmatpush1.msra.mxu0 0.0
  %2193 = vmatprep.subr.mxu0 0.0
  %2194 = vmatpush1.msra.mxu0 0.0
  %2195 = vmatprep.subr.mxu0 0.0
  %2196 = vmatpush1.msra.mxu0 0.0
  %2197 = vmatprep.subr.mxu0 0.0
  %2198 = vmatpush1.msra.mxu0 0.0
  %2199 = vmatprep.subr.mxu0 0.0
  %2200 = vmatpush1.msra.mxu0 0.0
  %2201 = vmatprep.subr.mxu0 0.0
  %2202 = vmatpush1.msra.mxu0 0.0
  %2203 = vmatprep.subr.mxu0 0.0
  %2204 = vmatpush1.msra.mxu0 0.0
  %2205 = vmatprep.subr.mxu0 0.0
  %2206 = vmatpush1.msra.mxu0 0.0
  %2207 = vmatprep.subr.mxu0 0.0
  %2208 = vmatpush1.msra.mxu0 0.0
  %2209 = vmatprep.subr.mxu0 0.0
  %2210 = vmatpush1.msra.mxu0 %v447
  %2211 = vmatprep.subr.mxu0 0.0
  %2212 = vmatpush2.msra.mxu0 0.0
  %2213 = vmatprep.subr.mxu0 0.0
  %2214 = vmatpush2.msra.mxu0 0.0
  %2215 = vmatprep.subr.mxu0 0.0
  %2216 = vmatpush2.msra.mxu0 0.0
  %2217 = vmatprep.subr.mxu0 0.0
  %2218 = vmatpush2.msra.mxu0 0.0
  %2219 = vmatprep.subr.mxu0 0.0
  %2220 = vmatpush2.msra.mxu0 0.0
  %2221 = vmatprep.subr.mxu0 0.0
  %2222 = vmatpush2.msra.mxu0 0.0
  %2223 = vmatprep.subr.mxu0 0.0
  %2224 = vmatpush2.msra.mxu0 0.0
  %2225 = vmatprep.subr.mxu0 0.0
  %2226 = vmatpush2.msra.mxu0 0.0
  %2227 = vmatprep.subr.mxu0 0.0
  %2228 = vmatpush2.msra.mxu0 0.0
  %2229 = vmatprep.subr.mxu0 0.0
  %2230 = vmatpush2.msra.mxu0 0.0
  %2231 = vmatprep.subr.mxu0 0.0
  %2232 = vmatpush2.msra.mxu0 0.0
  %2233 = vmatprep.subr.mxu0 0.0
  %2234 = vmatpush2.msra.mxu0 0.0
  %2235 = vmatprep.subr.mxu0 0.0
  %2236 = vmatpush2.msra.mxu0 0.0
  %2237 = vmatprep.subr.mxu0 0.0
  %2238 = vmatpush2.msra.mxu0 0.0
  %2239 = vmatprep.subr.mxu0 0.0
  %2240 = vmatpush2.msra.mxu0 0.0
  %2241 = vmatprep.subr.mxu0 0.0
  %2242 = vmatpush2.msra.mxu0 0.0
  %2243 = vmatprep.mubr.f32.mxu0 0.0
  %2244 = vmatmul.mubr.f32.gmra.mxu0 %v2177
  %v2245 = vpop.f32.mrf.mxu0
  %v2246 = vadd.f32 0.0, %v2245
  %v2247 = vpop.f32.mrf.mxu0
  %2248 = vdwg.mxu0
  %v2249 = vadd.f32 %v2171, %v2246
  %s2250 = scalar_lea.vmem %s2, 8
  %v2251 = vld [vmem:[%s2250] sm:$0xff]
  %2253 = vset.pattern.permute.xlu0 0
  %2254 = vperm.xlu0 %2253, %v2251
  %v2255 = vpop.permute.xlu0 %2254
  %v2257 = vadd.f32 %v2249, %v2255
  %v2258 = vmax.f32 %v2257, 0.0
  %v2260 = vsel %vm528, %v2258, 0
  %2262 = vmatprep.subr.mxu0 0.0
  %2263 = vmatpush1.msra.mxu0 0.0
  %2264 = vmatprep.subr.mxu0 0.0
  %2265 = vmatpush1.msra.mxu0 0.0
  %2266 = vmatprep.subr.mxu0 0.0
  %2267 = vmatpush1.msra.mxu0 0.0
  %2268 = vmatprep.subr.mxu0 0.0
  %2269 = vmatpush1.msra.mxu0 0.0
  %2270 = vmatprep.subr.mxu0 0.0
  %2271 = vmatpush1.msra.mxu0 0.0
  %2272 = vmatprep.subr.mxu0 0.0
  %2273 = vmatpush1.msra.mxu0 0.0
  %2274 = vmatprep.subr.mxu0 0.0
  %2275 = vmatpush1.msra.mxu0 0.0
  %2276 = vmatprep.subr.mxu0 0.0
  %2277 = vmatpush1.msra.mxu0 0.0
  %2278 = vmatprep.subr.mxu0 0.0
  %2279 = vmatpush1.msra.mxu0 0.0
  %2280 = vmatprep.subr.mxu0 0.0
  %2281 = vmatpush1.msra.mxu0 0.0
  %2282 = vmatprep.subr.mxu0 0.0
  %2283 = vmatpush1.msra.mxu0 0.0
  %2284 = vmatprep.subr.mxu0 0.0
  %2285 = vmatpush1.msra.mxu0 0.0
  %2286 = vmatprep.subr.mxu0 0.0
  %2287 = vmatpush1.msra.mxu0 0.0
  %2288 = vmatprep.subr.mxu0 0.0
  %2289 = vmatpush1.msra.mxu0 0.0
  %2290 = vmatprep.subr.mxu0 0.0
  %2291 = vmatpush1.msra.mxu0 0.0
  %2292 = vmatprep.subr.mxu0 0.0
  %2293 = vmatpush1.msra.mxu0 %v43
  %2294 = vmatprep.subr.mxu0 0.0
  %2295 = vmatpush2.msra.mxu0 0.0
  %2296 = vmatprep.subr.mxu0 0.0
  %2297 = vmatpush2.msra.mxu0 0.0
  %2298 = vmatprep.subr.mxu0 0.0
  %2299 = vmatpush2.msra.mxu0 0.0
  %2300 = vmatprep.subr.mxu0 0.0
  %2301 = vmatpush2.msra.mxu0 0.0
  %2302 = vmatprep.subr.mxu0 0.0
  %2303 = vmatpush2.msra.mxu0 0.0
  %2304 = vmatprep.subr.mxu0 0.0
  %2305 = vmatpush2.msra.mxu0 0.0
  %2306 = vmatprep.subr.mxu0 0.0
  %2307 = vmatpush2.msra.mxu0 0.0
  %2308 = vmatprep.subr.mxu0 0.0
  %2309 = vmatpush2.msra.mxu0 0.0
  %2310 = vmatprep.subr.mxu0 0.0
  %2311 = vmatpush2.msra.mxu0 0.0
  %2312 = vmatprep.subr.mxu0 0.0
  %2313 = vmatpush2.msra.mxu0 0.0
  %2314 = vmatprep.subr.mxu0 0.0
  %2315 = vmatpush2.msra.mxu0 0.0
  %2316 = vmatprep.subr.mxu0 0.0
  %2317 = vmatpush2.msra.mxu0 0.0
  %2318 = vmatprep.subr.mxu0 0.0
  %2319 = vmatpush2.msra.mxu0 0.0
  %2320 = vmatprep.subr.mxu0 0.0
  %2321 = vmatpush2.msra.mxu0 0.0
  %2322 = vmatprep.subr.mxu0 0.0
  %2323 = vmatpush2.msra.mxu0 0.0
  %2324 = vmatprep.subr.mxu0 0.0
  %2325 = vmatpush2.msra.mxu0 0.0
  %2326 = vmatprep.mubr.f32.mxu0 0.0
  %2327 = vmatmul.mubr.f32.gmra.mxu0 %v2260
  %v2328 = vpop.f32.mrf.mxu0
  %v2329 = vadd.f32 0.0, %v2328
  %v2330 = vpop.f32.mrf.mxu0
  %2331 = vdwg.mxu0
  %s2332 = scalar_lea.vmem %s3, 48
  %v2333 = vld [vmem:[%s2332] sm:$0xff]
  %v2334 = vld [vmem:[%s2332 + $0x8] sm:$0xff]
  %2335 = vmatprep.subr.mxu0 0.0
  %2336 = vmatpush1.msra.mxu0 0.0
  %2337 = vmatprep.subr.mxu0 0.0
  %2338 = vmatpush1.msra.mxu0 0.0
  %2339 = vmatprep.subr.mxu0 0.0
  %2340 = vmatpush1.msra.mxu0 0.0
  %2341 = vmatprep.subr.mxu0 0.0
  %2342 = vmatpush1.msra.mxu0 0.0
  %2343 = vmatprep.subr.mxu0 0.0
  %2344 = vmatpush1.msra.mxu0 0.0
  %2345 = vmatprep.subr.mxu0 0.0
  %2346 = vmatpush1.msra.mxu0 0.0
  %2347 = vmatprep.subr.mxu0 0.0
  %2348 = vmatpush1.msra.mxu0 0.0
  %2349 = vmatprep.subr.mxu0 0.0
  %2350 = vmatpush1.msra.mxu0 0.0
  %2351 = vmatprep.subr.mxu0 0.0
  %2352 = vmatpush1.msra.mxu0 0.0
  %2353 = vmatprep.subr.mxu0 0.0
  %2354 = vmatpush1.msra.mxu0 0.0
  %2355 = vmatprep.subr.mxu0 0.0
  %2356 = vmatpush1.msra.mxu0 0.0
  %2357 = vmatprep.subr.mxu0 0.0
  %2358 = vmatpush1.msra.mxu0 0.0
  %2359 = vmatprep.subr.mxu0 0.0
  %2360 = vmatpush1.msra.mxu0 0.0
  %2361 = vmatprep.subr.mxu0 0.0
  %2362 = vmatpush1.msra.mxu0 0.0
  %2363 = vmatprep.subr.mxu0 0.0
  %2364 = vmatpush1.msra.mxu0 0.0
  %2365 = vmatprep.subr.mxu0 0.0
  %2366 = vmatpush1.msra.mxu0 %v49
  %2367 = vmatprep.subr.mxu0 0.0
  %2368 = vmatpush2.msra.mxu0 0.0
  %2369 = vmatprep.subr.mxu0 0.0
  %2370 = vmatpush2.msra.mxu0 0.0
  %2371 = vmatprep.subr.mxu0 0.0
  %2372 = vmatpush2.msra.mxu0 0.0
  %2373 = vmatprep.subr.mxu0 0.0
  %2374 = vmatpush2.msra.mxu0 0.0
  %2375 = vmatprep.subr.mxu0 0.0
  %2376 = vmatpush2.msra.mxu0 0.0
  %2377 = vmatprep.subr.mxu0 0.0
  %2378 = vmatpush2.msra.mxu0 0.0
  %2379 = vmatprep.subr.mxu0 0.0
  %2380 = vmatpush2.msra.mxu0 0.0
  %2381 = vmatprep.subr.mxu0 0.0
  %2382 = vmatpush2.msra.mxu0 0.0
  %2383 = vmatprep.subr.mxu0 0.0
  %2384 = vmatpush2.msra.mxu0 0.0
  %2385 = vmatprep.subr.mxu0 0.0
  %2386 = vmatpush2.msra.mxu0 0.0
  %2387 = vmatprep.subr.mxu0 0.0
  %2388 = vmatpush2.msra.mxu0 0.0
  %2389 = vmatprep.subr.mxu0 0.0
  %2390 = vmatpush2.msra.mxu0 0.0
  %2391 = vmatprep.subr.mxu0 0.0
  %2392 = vmatpush2.msra.mxu0 0.0
  %2393 = vmatprep.subr.mxu0 0.0
  %2394 = vmatpush2.msra.mxu0 0.0
  %2395 = vmatprep.subr.mxu0 0.0
  %2396 = vmatpush2.msra.mxu0 0.0
  %2397 = vmatprep.subr.mxu0 0.0
  %2398 = vmatpush2.msra.mxu0 0.0
  %2399 = vmatprep.mubr.f32.mxu0 0.0
  %2400 = vmatmul.mubr.f32.gmra.mxu0 %v2260
  %v2401 = vpop.f32.mrf.mxu0
  %v2402 = vadd.f32 0.0, %v2401
  %v2403 = vpop.f32.mrf.mxu0
  %2404 = vdwg.mxu0
  %s2405 = scalar_lea.vmem %s3, 64
  %v2406 = vld [vmem:[%s2405] sm:$0xff]
  %v2407 = vld [vmem:[%s2405 + $0x8] sm:$0xff]
  %v2409 = vsel %vm528, %v2406, 0
  %v2412 = vsel %vm528, %v2407, 0
  %2414 = vmatprep.subr.mxu0 0.0
  %2415 = vmatpush1.msra.mxu0 0.0
  %2416 = vmatprep.subr.mxu0 0.0
  %2417 = vmatpush1.msra.mxu0 0.0
  %2418 = vmatprep.subr.mxu0 0.0
  %2419 = vmatpush1.msra.mxu0 0.0
  %2420 = vmatprep.subr.mxu0 0.0
  %2421 = vmatpush1.msra.mxu0 0.0
  %2422 = vmatprep.subr.mxu0 0.0
  %2423 = vmatpush1.msra.mxu0 0.0
  %2424 = vmatprep.subr.mxu0 0.0
  %2425 = vmatpush1.msra.mxu0 0.0
  %2426 = vmatprep.subr.mxu0 0.0
  %2427 = vmatpush1.msra.mxu0 0.0
  %2428 = vmatprep.subr.mxu0 0.0
  %2429 = vmatpush1.msra.mxu0 0.0
  %2430 = vmatprep.subr.mxu0 0.0
  %2431 = vmatpush1.msra.mxu0 0.0
  %2432 = vmatprep.subr.mxu0 0.0
  %2433 = vmatpush1.msra.mxu0 0.0
  %2434 = vmatprep.subr.mxu0 0.0
  %2435 = vmatpush1.msra.mxu0 0.0
  %2436 = vmatprep.subr.mxu0 0.0
  %2437 = vmatpush1.msra.mxu0 0.0
  %2438 = vmatprep.subr.mxu0 0.0
  %2439 = vmatpush1.msra.mxu0 0.0
  %2440 = vmatprep.subr.mxu0 0.0
  %2441 = vmatpush1.msra.mxu0 0.0
  %2442 = vmatprep.subr.mxu0 0.0
  %2443 = vmatpush1.msra.mxu0 0.0
  %2444 = vmatprep.subr.mxu0 0.0
  %2445 = vmatpush1.msra.mxu0 %v2402
  %2446 = vmatprep.subr.mxu0 0.0
  %2447 = vmatpush2.msra.mxu0 0.0
  %2448 = vmatprep.subr.mxu0 0.0
  %2449 = vmatpush2.msra.mxu0 0.0
  %2450 = vmatprep.subr.mxu0 0.0
  %2451 = vmatpush2.msra.mxu0 0.0
  %2452 = vmatprep.subr.mxu0 0.0
  %2453 = vmatpush2.msra.mxu0 0.0
  %2454 = vmatprep.subr.mxu0 0.0
  %2455 = vmatpush2.msra.mxu0 0.0
  %2456 = vmatprep.subr.mxu0 0.0
  %2457 = vmatpush2.msra.mxu0 0.0
  %2458 = vmatprep.subr.mxu0 0.0
  %2459 = vmatpush2.msra.mxu0 0.0
  %2460 = vmatprep.subr.mxu0 0.0
  %2461 = vmatpush2.msra.mxu0 0.0
  %2462 = vmatprep.subr.mxu0 0.0
  %2463 = vmatpush2.msra.mxu0 0.0
  %2464 = vmatprep.subr.mxu0 0.0
  %2465 = vmatpush2.msra.mxu0 0.0
  %2466 = vmatprep.subr.mxu0 0.0
  %2467 = vmatpush2.msra.mxu0 0.0
  %2468 = vmatprep.subr.mxu0 0.0
  %2469 = vmatpush2.msra.mxu0 0.0
  %2470 = vmatprep.subr.mxu0 0.0
  %2471 = vmatpush2.msra.mxu0 0.0
  %2472 = vmatprep.subr.mxu0 0.0
  %2473 = vmatpush2.msra.mxu0 0.0
  %2474 = vmatprep.subr.mxu0 0.0
  %2475 = vmatpush2.msra.mxu0 0.0
  %2476 = vmatprep.subr.mxu0 0.0
  %2477 = vmatpush2.msra.mxu0 0.0
  %2478 = vmatprep.mubr.f32.mxu0 0.0
  %2479 = vmatmul.mubr.f32.gmra.mxu0 %v2409
  %v2480 = vpop.f32.mrf.mxu0
  %v2481 = vadd.f32 0.0, %v2480
  %v2482 = vpop.f32.mrf.mxu0
  %2483 = vmatprep.mubr.f32.mxu0 0.0
  %2484 = vmatmul.mubr.f32.gmra.mxu0 %v2412
  %v2485 = vpop.f32.mrf.mxu0
  %v2486 = vadd.f32 0.0, %v2485
  %v2487 = vpop.f32.mrf.mxu0
  %2488 = vdwg.mxu0
  %v2490 = vsel %vm528, %v2333, 0
  %v2493 = vsel %vm528, %v2334, 0
  %2495 = vmatprep.subr.mxu0 0.0
  %2496 = vmatpush1.msra.mxu0 0.0
  %2497 = vmatprep.subr.mxu0 0.0
  %2498 = vmatpush1.msra.mxu0 0.0
  %2499 = vmatprep.subr.mxu0 0.0
  %2500 = vmatpush1.msra.mxu0 0.0
  %2501 = vmatprep.subr.mxu0 0.0
  %2502 = vmatpush1.msra.mxu0 0.0
  %2503 = vmatprep.subr.mxu0 0.0
  %2504 = vmatpush1.msra.mxu0 0.0
  %2505 = vmatprep.subr.mxu0 0.0
  %2506 = vmatpush1.msra.mxu0 0.0
  %2507 = vmatprep.subr.mxu0 0.0
  %2508 = vmatpush1.msra.mxu0 0.0
  %2509 = vmatprep.subr.mxu0 0.0
  %2510 = vmatpush1.msra.mxu0 0.0
  %2511 = vmatprep.subr.mxu0 0.0
  %2512 = vmatpush1.msra.mxu0 0.0
  %2513 = vmatprep.subr.mxu0 0.0
  %2514 = vmatpush1.msra.mxu0 0.0
  %2515 = vmatprep.subr.mxu0 0.0
  %2516 = vmatpush1.msra.mxu0 0.0
  %2517 = vmatprep.subr.mxu0 0.0
  %2518 = vmatpush1.msra.mxu0 0.0
  %2519 = vmatprep.subr.mxu0 0.0
  %2520 = vmatpush1.msra.mxu0 0.0
  %2521 = vmatprep.subr.mxu0 0.0
  %2522 = vmatpush1.msra.mxu0 0.0
  %2523 = vmatprep.subr.mxu0 0.0
  %2524 = vmatpush1.msra.mxu0 0.0
  %2525 = vmatprep.subr.mxu0 0.0
  %2526 = vmatpush1.msra.mxu0 %v2329
  %2527 = vmatprep.subr.mxu0 0.0
  %2528 = vmatpush2.msra.mxu0 0.0
  %2529 = vmatprep.subr.mxu0 0.0
  %2530 = vmatpush2.msra.mxu0 0.0
  %2531 = vmatprep.subr.mxu0 0.0
  %2532 = vmatpush2.msra.mxu0 0.0
  %2533 = vmatprep.subr.mxu0 0.0
  %2534 = vmatpush2.msra.mxu0 0.0
  %2535 = vmatprep.subr.mxu0 0.0
  %2536 = vmatpush2.msra.mxu0 0.0
  %2537 = vmatprep.subr.mxu0 0.0
  %2538 = vmatpush2.msra.mxu0 0.0
  %2539 = vmatprep.subr.mxu0 0.0
  %2540 = vmatpush2.msra.mxu0 0.0
  %2541 = vmatprep.subr.mxu0 0.0
  %2542 = vmatpush2.msra.mxu0 0.0
  %2543 = vmatprep.subr.mxu0 0.0
  %2544 = vmatpush2.msra.mxu0 0.0
  %2545 = vmatprep.subr.mxu0 0.0
  %2546 = vmatpush2.msra.mxu0 0.0
  %2547 = vmatprep.subr.mxu0 0.0
  %2548 = vmatpush2.msra.mxu0 0.0
  %2549 = vmatprep.subr.mxu0 0.0
  %2550 = vmatpush2.msra.mxu0 0.0
  %2551 = vmatprep.subr.mxu0 0.0
  %2552 = vmatpush2.msra.mxu0 0.0
  %2553 = vmatprep.subr.mxu0 0.0
  %2554 = vmatpush2.msra.mxu0 0.0
  %2555 = vmatprep.subr.mxu0 0.0
  %2556 = vmatpush2.msra.mxu0 0.0
  %2557 = vmatprep.subr.mxu0 0.0
  %2558 = vmatpush2.msra.mxu0 0.0
  %2559 = vmatprep.mubr.f32.mxu0 0.0
  %2560 = vmatmul.mubr.f32.gmra.mxu0 %v2490
  %v2561 = vpop.f32.mrf.mxu0
  %v2562 = vadd.f32 %v2481, %v2561
  %v2563 = vpop.f32.mrf.mxu0
  %2564 = vmatprep.mubr.f32.mxu0 0.0
  %2565 = vmatmul.mubr.f32.gmra.mxu0 %v2493
  %v2566 = vpop.f32.mrf.mxu0
  %v2567 = vadd.f32 %v2486, %v2566
  %v2568 = vpop.f32.mrf.mxu0
  %2569 = vdwg.mxu0
  %2570 = vmatprep.subr.mxu0 0.0
  %2571 = vmatpush1.msra.mxu0 0.0
  %2572 = vmatprep.subr.mxu0 0.0
  %2573 = vmatpush1.msra.mxu0 0.0
  %2574 = vmatprep.subr.mxu0 0.0
  %2575 = vmatpush1.msra.mxu0 0.0
  %2576 = vmatprep.subr.mxu0 0.0
  %2577 = vmatpush1.msra.mxu0 0.0
  %2578 = vmatprep.subr.mxu0 0.0
  %2579 = vmatpush1.msra.mxu0 0.0
  %2580 = vmatprep.subr.mxu0 0.0
  %2581 = vmatpush1.msra.mxu0 0.0
  %2582 = vmatprep.subr.mxu0 0.0
  %2583 = vmatpush1.msra.mxu0 0.0
  %2584 = vmatprep.subr.mxu0 0.0
  %2585 = vmatpush1.msra.mxu0 0.0
  %2586 = vmatprep.subr.mxu0 0.0
  %2587 = vmatpush1.msra.mxu0 0.0
  %2588 = vmatprep.subr.mxu0 0.0
  %2589 = vmatpush1.msra.mxu0 0.0
  %2590 = vmatprep.subr.mxu0 0.0
  %2591 = vmatpush1.msra.mxu0 0.0
  %2592 = vmatprep.subr.mxu0 0.0
  %2593 = vmatpush1.msra.mxu0 0.0
  %2594 = vmatprep.subr.mxu0 0.0
  %2595 = vmatpush1.msra.mxu0 0.0
  %2596 = vmatprep.subr.mxu0 0.0
  %2597 = vmatpush1.msra.mxu0 0.0
  %2598 = vmatprep.subr.mxu0 0.0
  %2599 = vmatpush1.msra.mxu0 0.0
  %2600 = vmatprep.subr.mxu0 0.0
  %2601 = vmatpush1.msra.mxu0 %v56
  %2602 = vmatprep.subr.mxu0 0.0
  %2603 = vmatpush2.msra.mxu0 0.0
  %2604 = vmatprep.subr.mxu0 0.0
  %2605 = vmatpush2.msra.mxu0 0.0
  %2606 = vmatprep.subr.mxu0 0.0
  %2607 = vmatpush2.msra.mxu0 0.0
  %2608 = vmatprep.subr.mxu0 0.0
  %2609 = vmatpush2.msra.mxu0 0.0
  %2610 = vmatprep.subr.mxu0 0.0
  %2611 = vmatpush2.msra.mxu0 0.0
  %2612 = vmatprep.subr.mxu0 0.0
  %2613 = vmatpush2.msra.mxu0 0.0
  %2614 = vmatprep.subr.mxu0 0.0
  %2615 = vmatpush2.msra.mxu0 0.0
  %2616 = vmatprep.subr.mxu0 0.0
  %2617 = vmatpush2.msra.mxu0 0.0
  %2618 = vmatprep.subr.mxu0 0.0
  %2619 = vmatpush2.msra.mxu0 0.0
  %2620 = vmatprep.subr.mxu0 0.0
  %2621 = vmatpush2.msra.mxu0 0.0
  %2622 = vmatprep.subr.mxu0 0.0
  %2623 = vmatpush2.msra.mxu0 0.0
  %2624 = vmatprep.subr.mxu0 0.0
  %2625 = vmatpush2.msra.mxu0 0.0
  %2626 = vmatprep.subr.mxu0 0.0
  %2627 = vmatpush2.msra.mxu0 0.0
  %2628 = vmatprep.subr.mxu0 0.0
  %2629 = vmatpush2.msra.mxu0 0.0
  %2630 = vmatprep.subr.mxu0 0.0
  %2631 = vmatpush2.msra.mxu0 0.0
  %2632 = vmatprep.subr.mxu0 0.0
  %2633 = vmatpush2.msra.mxu0 0.0
  %2634 = vmatprep.mubr.f32.mxu0 0.0
  %2635 = vmatmul.mubr.f32.gmra.mxu0 %v2260
  %v2636 = vpop.f32.mrf.mxu0
  %v2637 = vadd.f32 0.0, %v2636
  %v2638 = vpop.f32.mrf.mxu0
  %2639 = vdwg.mxu0
  %s2640 = scalar_lea.vmem %s3, 80
  %v2641 = vld [vmem:[%s2640] sm:$0xff]
  %v2642 = vld [vmem:[%s2640 + $0x8] sm:$0xff]
  %v2644 = vsel %vm528, %v2641, 0
  %v2647 = vsel %vm528, %v2642, 0
  %2649 = vmatprep.subr.mxu0 0.0
  %2650 = vmatpush1.msra.mxu0 0.0
  %2651 = vmatprep.subr.mxu0 0.0
  %2652 = vmatpush1.msra.mxu0 0.0
  %2653 = vmatprep.subr.mxu0 0.0
  %2654 = vmatpush1.msra.mxu0 0.0
  %2655 = vmatprep.subr.mxu0 0.0
  %2656 = vmatpush1.msra.mxu0 0.0
  %2657 = vmatprep.subr.mxu0 0.0
  %2658 = vmatpush1.msra.mxu0 0.0
  %2659 = vmatprep.subr.mxu0 0.0
  %2660 = vmatpush1.msra.mxu0 0.0
  %2661 = vmatprep.subr.mxu0 0.0
  %2662 = vmatpush1.msra.mxu0 0.0
  %2663 = vmatprep.subr.mxu0 0.0
  %2664 = vmatpush1.msra.mxu0 0.0
  %2665 = vmatprep.subr.mxu0 0.0
  %2666 = vmatpush1.msra.mxu0 0.0
  %2667 = vmatprep.subr.mxu0 0.0
  %2668 = vmatpush1.msra.mxu0 0.0
  %2669 = vmatprep.subr.mxu0 0.0
  %2670 = vmatpush1.msra.mxu0 0.0
  %2671 = vmatprep.subr.mxu0 0.0
  %2672 = vmatpush1.msra.mxu0 0.0
  %2673 = vmatprep.subr.mxu0 0.0
  %2674 = vmatpush1.msra.mxu0 0.0
  %2675 = vmatprep.subr.mxu0 0.0
  %2676 = vmatpush1.msra.mxu0 0.0
  %2677 = vmatprep.subr.mxu0 0.0
  %2678 = vmatpush1.msra.mxu0 0.0
  %2679 = vmatprep.subr.mxu0 0.0
  %2680 = vmatpush1.msra.mxu0 %v2637
  %2681 = vmatprep.subr.mxu0 0.0
  %2682 = vmatpush2.msra.mxu0 0.0
  %2683 = vmatprep.subr.mxu0 0.0
  %2684 = vmatpush2.msra.mxu0 0.0
  %2685 = vmatprep.subr.mxu0 0.0
  %2686 = vmatpush2.msra.mxu0 0.0
  %2687 = vmatprep.subr.mxu0 0.0
  %2688 = vmatpush2.msra.mxu0 0.0
  %2689 = vmatprep.subr.mxu0 0.0
  %2690 = vmatpush2.msra.mxu0 0.0
  %2691 = vmatprep.subr.mxu0 0.0
  %2692 = vmatpush2.msra.mxu0 0.0
  %2693 = vmatprep.subr.mxu0 0.0
  %2694 = vmatpush2.msra.mxu0 0.0
  %2695 = vmatprep.subr.mxu0 0.0
  %2696 = vmatpush2.msra.mxu0 0.0
  %2697 = vmatprep.subr.mxu0 0.0
  %2698 = vmatpush2.msra.mxu0 0.0
  %2699 = vmatprep.subr.mxu0 0.0
  %2700 = vmatpush2.msra.mxu0 0.0
  %2701 = vmatprep.subr.mxu0 0.0
  %2702 = vmatpush2.msra.mxu0 0.0
  %2703 = vmatprep.subr.mxu0 0.0
  %2704 = vmatpush2.msra.mxu0 0.0
  %2705 = vmatprep.subr.mxu0 0.0
  %2706 = vmatpush2.msra.mxu0 0.0
  %2707 = vmatprep.subr.mxu0 0.0
  %2708 = vmatpush2.msra.mxu0 0.0
  %2709 = vmatprep.subr.mxu0 0.0
  %2710 = vmatpush2.msra.mxu0 0.0
  %2711 = vmatprep.subr.mxu0 0.0
  %2712 = vmatpush2.msra.mxu0 0.0
  %2713 = vmatprep.mubr.f32.mxu0 0.0
  %2714 = vmatmul.mubr.f32.gmra.mxu0 %v2644
  %v2715 = vpop.f32.mrf.mxu0
  %v2716 = vadd.f32 0.0, %v2715
  %v2717 = vpop.f32.mrf.mxu0
  %2718 = vmatprep.mubr.f32.mxu0 0.0
  %2719 = vmatmul.mubr.f32.gmra.mxu0 %v2647
  %v2720 = vpop.f32.mrf.mxu0
  %v2721 = vadd.f32 0.0, %v2720
  %v2722 = vpop.f32.mrf.mxu0
  %2723 = vdwg.mxu0
  %v2724 = vadd.f32 %v2562, %v2716
  %v2725 = vadd.f32 %v2567, %v2721
  %s2726 = scalar_lea.vmem %s4, 16
  %v2727 = vld [vmem:[%s2726] sm:$0xff]
  %v2728 = vld [vmem:[%s2726 + $0x8] sm:$0xff]
  %2730 = vset.pattern.permute.xlu0 0
  %2731 = vperm.xlu0 %2730, %v2727
  %v2732 = vpop.permute.xlu0 %2731
  %2735 = vset.pattern.permute.xlu0 0
  %2736 = vperm.xlu0 %2735, %v2728
  %v2737 = vpop.permute.xlu0 %2736
  %v2739 = vadd.f32 %v2724, %v2732
  %v2740 = vadd.f32 %v2725, %v2737
  %v2741 = vmax.f32 %v2739, 0.0
  %v2742 = vmax.f32 %v2740, 0.0
  %v2744 = vsel %vm217, %v2741, 0
  %v2747 = vsel %vm217, %v2742, 0
  %2749 = vmatprep.subr.mxu0 0.0
  %2750 = vmatpush1.msra.mxu0 0.0
  %2751 = vmatprep.subr.mxu0 0.0
  %2752 = vmatpush1.msra.mxu0 0.0
  %2753 = vmatprep.subr.mxu0 0.0
  %2754 = vmatpush1.msra.mxu0 0.0
  %2755 = vmatprep.subr.mxu0 0.0
  %2756 = vmatpush1.msra.mxu0 0.0
  %2757 = vmatprep.subr.mxu0 0.0
  %2758 = vmatpush1.msra.mxu0 0.0
  %2759 = vmatprep.subr.mxu0 0.0
  %2760 = vmatpush1.msra.mxu0 0.0
  %2761 = vmatprep.subr.mxu0 0.0
  %2762 = vmatpush1.msra.mxu0 0.0
  %2763 = vmatprep.subr.mxu0 0.0
  %2764 = vmatpush1.msra.mxu0 0.0
  %2765 = vmatprep.subr.mxu0 0.0
  %2766 = vmatpush1.msra.mxu0 0.0
  %2767 = vmatprep.subr.mxu0 0.0
  %2768 = vmatpush1.msra.mxu0 0.0
  %2769 = vmatprep.subr.mxu0 0.0
  %2770 = vmatpush1.msra.mxu0 0.0
  %2771 = vmatprep.subr.mxu0 0.0
  %2772 = vmatpush1.msra.mxu0 0.0
  %2773 = vmatprep.subr.mxu0 0.0
  %2774 = vmatpush1.msra.mxu0 0.0
  %2775 = vmatprep.subr.mxu0 0.0
  %2776 = vmatpush1.msra.mxu0 0.0
  %2777 = vmatprep.subr.mxu0 0.0
  %2778 = vmatpush1.msra.mxu0 0.0
  %2779 = vmatprep.subr.mxu0 0.0
  %2780 = vmatpush1.msra.mxu0 %v1018
  %2781 = vmatprep.subr.mxu0 0.0
  %2782 = vmatpush2.msra.mxu0 0.0
  %2783 = vmatprep.subr.mxu0 0.0
  %2784 = vmatpush2.msra.mxu0 0.0
  %2785 = vmatprep.subr.mxu0 0.0
  %2786 = vmatpush2.msra.mxu0 0.0
  %2787 = vmatprep.subr.mxu0 0.0
  %2788 = vmatpush2.msra.mxu0 0.0
  %2789 = vmatprep.subr.mxu0 0.0
  %2790 = vmatpush2.msra.mxu0 0.0
  %2791 = vmatprep.subr.mxu0 0.0
  %2792 = vmatpush2.msra.mxu0 0.0
  %2793 = vmatprep.subr.mxu0 0.0
  %2794 = vmatpush2.msra.mxu0 0.0
  %2795 = vmatprep.subr.mxu0 0.0
  %2796 = vmatpush2.msra.mxu0 0.0
  %2797 = vmatprep.subr.mxu0 0.0
  %2798 = vmatpush2.msra.mxu0 0.0
  %2799 = vmatprep.subr.mxu0 0.0
  %2800 = vmatpush2.msra.mxu0 0.0
  %2801 = vmatprep.subr.mxu0 0.0
  %2802 = vmatpush2.msra.mxu0 0.0
  %2803 = vmatprep.subr.mxu0 0.0
  %2804 = vmatpush2.msra.mxu0 0.0
  %2805 = vmatprep.subr.mxu0 0.0
  %2806 = vmatpush2.msra.mxu0 0.0
  %2807 = vmatprep.subr.mxu0 0.0
  %2808 = vmatpush2.msra.mxu0 0.0
  %2809 = vmatprep.subr.mxu0 0.0
  %2810 = vmatpush2.msra.mxu0 0.0
  %2811 = vmatprep.subr.mxu0 0.0
  %2812 = vmatpush2.msra.mxu0 0.0
  %2813 = vmatprep.mubr.f32.mxu0 0.0
  %2814 = vmatmul.mubr.f32.gmra.mxu0 %v2744
  %v2815 = vpop.f32.mrf.mxu0
  %v2816 = vadd.f32 0.0, %v2815
  %v2817 = vpop.f32.mrf.mxu0
  %2818 = vmatprep.mubr.f32.mxu0 0.0
  %2819 = vmatmul.mubr.f32.gmra.mxu0 %v2747
  %v2820 = vpop.f32.mrf.mxu0
  %v2821 = vadd.f32 0.0, %v2820
  %v2822 = vpop.f32.mrf.mxu0
  %2823 = vdwg.mxu0
  %s2824 = scalar_lea.vmem %s5, 48
  %v2825 = vld [vmem:[%s2824] sm:$0xff]
  %v2826 = vld [vmem:[%s2824 + $0x8] sm:$0xff]
  %2827 = vmatprep.subr.mxu0 0.0
  %2828 = vmatpush1.msra.mxu0 0.0
  %2829 = vmatprep.subr.mxu0 0.0
  %2830 = vmatpush1.msra.mxu0 0.0
  %2831 = vmatprep.subr.mxu0 0.0
  %2832 = vmatpush1.msra.mxu0 0.0
  %2833 = vmatprep.subr.mxu0 0.0
  %2834 = vmatpush1.msra.mxu0 0.0
  %2835 = vmatprep.subr.mxu0 0.0
  %2836 = vmatpush1.msra.mxu0 0.0
  %2837 = vmatprep.subr.mxu0 0.0
  %2838 = vmatpush1.msra.mxu0 0.0
  %2839 = vmatprep.subr.mxu0 0.0
  %2840 = vmatpush1.msra.mxu0 0.0
  %2841 = vmatprep.subr.mxu0 0.0
  %2842 = vmatpush1.msra.mxu0 0.0
  %2843 = vmatprep.subr.mxu0 0.0
  %2844 = vmatpush1.msra.mxu0 0.0
  %2845 = vmatprep.subr.mxu0 0.0
  %2846 = vmatpush1.msra.mxu0 0.0
  %2847 = vmatprep.subr.mxu0 0.0
  %2848 = vmatpush1.msra.mxu0 0.0
  %2849 = vmatprep.subr.mxu0 0.0
  %2850 = vmatpush1.msra.mxu0 0.0
  %2851 = vmatprep.subr.mxu0 0.0
  %2852 = vmatpush1.msra.mxu0 0.0
  %2853 = vmatprep.subr.mxu0 0.0
  %2854 = vmatpush1.msra.mxu0 0.0
  %2855 = vmatprep.subr.mxu0 0.0
  %2856 = vmatpush1.msra.mxu0 0.0
  %2857 = vmatprep.subr.mxu0 0.0
  %2858 = vmatpush1.msra.mxu0 %v1098
  %2859 = vmatprep.subr.mxu0 0.0
  %2860 = vmatpush2.msra.mxu0 0.0
  %2861 = vmatprep.subr.mxu0 0.0
  %2862 = vmatpush2.msra.mxu0 0.0
  %2863 = vmatprep.subr.mxu0 0.0
  %2864 = vmatpush2.msra.mxu0 0.0
  %2865 = vmatprep.subr.mxu0 0.0
  %2866 = vmatpush2.msra.mxu0 0.0
  %2867 = vmatprep.subr.mxu0 0.0
  %2868 = vmatpush2.msra.mxu0 0.0
  %2869 = vmatprep.subr.mxu0 0.0
  %2870 = vmatpush2.msra.mxu0 0.0
  %2871 = vmatprep.subr.mxu0 0.0
  %2872 = vmatpush2.msra.mxu0 0.0
  %2873 = vmatprep.subr.mxu0 0.0
  %2874 = vmatpush2.msra.mxu0 0.0
  %2875 = vmatprep.subr.mxu0 0.0
  %2876 = vmatpush2.msra.mxu0 0.0
  %2877 = vmatprep.subr.mxu0 0.0
  %2878 = vmatpush2.msra.mxu0 0.0
  %2879 = vmatprep.subr.mxu0 0.0
  %2880 = vmatpush2.msra.mxu0 0.0
  %2881 = vmatprep.subr.mxu0 0.0
  %2882 = vmatpush2.msra.mxu0 0.0
  %2883 = vmatprep.subr.mxu0 0.0
  %2884 = vmatpush2.msra.mxu0 0.0
  %2885 = vmatprep.subr.mxu0 0.0
  %2886 = vmatpush2.msra.mxu0 0.0
  %2887 = vmatprep.subr.mxu0 0.0
  %2888 = vmatpush2.msra.mxu0 0.0
  %2889 = vmatprep.subr.mxu0 0.0
  %2890 = vmatpush2.msra.mxu0 0.0
  %2891 = vmatprep.mubr.f32.mxu0 0.0
  %2892 = vmatmul.mubr.f32.gmra.mxu0 %v2744
  %v2893 = vpop.f32.mrf.mxu0
  %v2894 = vadd.f32 0.0, %v2893
  %v2895 = vpop.f32.mrf.mxu0
  %2896 = vmatprep.mubr.f32.mxu0 0.0
  %2897 = vmatmul.mubr.f32.gmra.mxu0 %v2747
  %v2898 = vpop.f32.mrf.mxu0
  %v2899 = vadd.f32 0.0, %v2898
  %v2900 = vpop.f32.mrf.mxu0
  %2901 = vdwg.mxu0
  %s2902 = scalar_lea.vmem %s5, 64
  %v2903 = vld [vmem:[%s2902] sm:$0xff]
  %v2904 = vld [vmem:[%s2902 + $0x8] sm:$0xff]
  %v2906 = vsel %vm70, %v2903, 0
  %v2909 = vsel %vm70, %v2904, 0
  %2911 = vmatprep.subr.mxu0 0.0
  %2912 = vmatpush1.msra.mxu0 0.0
  %2913 = vmatprep.subr.mxu0 0.0
  %2914 = vmatpush1.msra.mxu0 0.0
  %2915 = vmatprep.subr.mxu0 0.0
  %2916 = vmatpush1.msra.mxu0 0.0
  %2917 = vmatprep.subr.mxu0 0.0
  %2918 = vmatpush1.msra.mxu0 0.0
  %2919 = vmatprep.subr.mxu0 0.0
  %2920 = vmatpush1.msra.mxu0 0.0
  %2921 = vmatprep.subr.mxu0 0.0
  %2922 = vmatpush1.msra.mxu0 0.0
  %2923 = vmatprep.subr.mxu0 0.0
  %2924 = vmatpush1.msra.mxu0 0.0
  %2925 = vmatprep.subr.mxu0 0.0
  %2926 = vmatpush1.msra.mxu0 0.0
  %2927 = vmatprep.subr.mxu0 0.0
  %2928 = vmatpush1.msra.mxu0 0.0
  %2929 = vmatprep.subr.mxu0 0.0
  %2930 = vmatpush1.msra.mxu0 0.0
  %2931 = vmatprep.subr.mxu0 0.0
  %2932 = vmatpush1.msra.mxu0 0.0
  %2933 = vmatprep.subr.mxu0 0.0
  %2934 = vmatpush1.msra.mxu0 0.0
  %2935 = vmatprep.subr.mxu0 0.0
  %2936 = vmatpush1.msra.mxu0 0.0
  %2937 = vmatprep.subr.mxu0 0.0
  %2938 = vmatpush1.msra.mxu0 0.0
  %2939 = vmatprep.subr.mxu0 0.0
  %2940 = vmatpush1.msra.mxu0 %v2899
  %2941 = vmatprep.subr.mxu0 0.0
  %2942 = vmatpush1.msra.mxu0 %v2894
  %2943 = vmatprep.subr.mxu0 0.0
  %2944 = vmatpush2.msra.mxu0 0.0
  %2945 = vmatprep.subr.mxu0 0.0
  %2946 = vmatpush2.msra.mxu0 0.0
  %2947 = vmatprep.subr.mxu0 0.0
  %2948 = vmatpush2.msra.mxu0 0.0
  %2949 = vmatprep.subr.mxu0 0.0
  %2950 = vmatpush2.msra.mxu0 0.0
  %2951 = vmatprep.subr.mxu0 0.0
  %2952 = vmatpush2.msra.mxu0 0.0
  %2953 = vmatprep.subr.mxu0 0.0
  %2954 = vmatpush2.msra.mxu0 0.0
  %2955 = vmatprep.subr.mxu0 0.0
  %2956 = vmatpush2.msra.mxu0 0.0
  %2957 = vmatprep.subr.mxu0 0.0
  %2958 = vmatpush2.msra.mxu0 0.0
  %2959 = vmatprep.subr.mxu0 0.0
  %2960 = vmatpush2.msra.mxu0 0.0
  %2961 = vmatprep.subr.mxu0 0.0
  %2962 = vmatpush2.msra.mxu0 0.0
  %2963 = vmatprep.subr.mxu0 0.0
  %2964 = vmatpush2.msra.mxu0 0.0
  %2965 = vmatprep.subr.mxu0 0.0
  %2966 = vmatpush2.msra.mxu0 0.0
  %2967 = vmatprep.subr.mxu0 0.0
  %2968 = vmatpush2.msra.mxu0 0.0
  %2969 = vmatprep.subr.mxu0 0.0
  %2970 = vmatpush2.msra.mxu0 0.0
  %2971 = vmatprep.subr.mxu0 0.0
  %2972 = vmatpush2.msra.mxu0 0.0
  %2973 = vmatprep.subr.mxu0 0.0
  %2974 = vmatpush2.msra.mxu0 0.0
  %2975 = vmatprep.mubr.f32.mxu0 0.0
  %2976 = vmatmul.mubr.f32.gmra.mxu0 %v2906
  %v2977 = vpop.f32.mrf.mxu0
  %v2978 = vadd.f32 0.0, %v2977
  %v2979 = vpop.f32.mrf.mxu0
  %2980 = vmatprep.mubr.f32.mxu0 0.0
  %2981 = vmatmul.mubr.f32.gmra.mxu0 %v2909
  %v2982 = vpop.f32.mrf.mxu0
  %v2983 = vadd.f32 0.0, %v2982
  %v2984 = vpop.f32.mrf.mxu0
  %2985 = vdwg.mxu0
  %v2987 = vsel %vm70, %v2825, 0
  %v2990 = vsel %vm70, %v2826, 0
  %2992 = vmatprep.subr.mxu0 0.0
  %2993 = vmatpush1.msra.mxu0 0.0
  %2994 = vmatprep.subr.mxu0 0.0
  %2995 = vmatpush1.msra.mxu0 0.0
  %2996 = vmatprep.subr.mxu0 0.0
  %2997 = vmatpush1.msra.mxu0 0.0
  %2998 = vmatprep.subr.mxu0 0.0
  %2999 = vmatpush1.msra.mxu0 0.0
  %3000 = vmatprep.subr.mxu0 0.0
  %3001 = vmatpush1.msra.mxu0 0.0
  %3002 = vmatprep.subr.mxu0 0.0
  %3003 = vmatpush1.msra.mxu0 0.0
  %3004 = vmatprep.subr.mxu0 0.0
  %3005 = vmatpush1.msra.mxu0 0.0
  %3006 = vmatprep.subr.mxu0 0.0
  %3007 = vmatpush1.msra.mxu0 0.0
  %3008 = vmatprep.subr.mxu0 0.0
  %3009 = vmatpush1.msra.mxu0 0.0
  %3010 = vmatprep.subr.mxu0 0.0
  %3011 = vmatpush1.msra.mxu0 0.0
  %3012 = vmatprep.subr.mxu0 0.0
  %3013 = vmatpush1.msra.mxu0 0.0
  %3014 = vmatprep.subr.mxu0 0.0
  %3015 = vmatpush1.msra.mxu0 0.0
  %3016 = vmatprep.subr.mxu0 0.0
  %3017 = vmatpush1.msra.mxu0 0.0
  %3018 = vmatprep.subr.mxu0 0.0
  %3019 = vmatpush1.msra.mxu0 0.0
  %3020 = vmatprep.subr.mxu0 0.0
  %3021 = vmatpush1.msra.mxu0 %v2821
  %3022 = vmatprep.subr.mxu0 0.0
  %3023 = vmatpush1.msra.mxu0 %v2816
  %3024 = vmatprep.subr.mxu0 0.0
  %3025 = vmatpush2.msra.mxu0 0.0
  %3026 = vmatprep.subr.mxu0 0.0
  %3027 = vmatpush2.msra.mxu0 0.0
  %3028 = vmatprep.subr.mxu0 0.0
  %3029 = vmatpush2.msra.mxu0 0.0
  %3030 = vmatprep.subr.mxu0 0.0
  %3031 = vmatpush2.msra.mxu0 0.0
  %3032 = vmatprep.subr.mxu0 0.0
  %3033 = vmatpush2.msra.mxu0 0.0
  %3034 = vmatprep.subr.mxu0 0.0
  %3035 = vmatpush2.msra.mxu0 0.0
  %3036 = vmatprep.subr.mxu0 0.0
  %3037 = vmatpush2.msra.mxu0 0.0
  %3038 = vmatprep.subr.mxu0 0.0
  %3039 = vmatpush2.msra.mxu0 0.0
  %3040 = vmatprep.subr.mxu0 0.0
  %3041 = vmatpush2.msra.mxu0 0.0
  %3042 = vmatprep.subr.mxu0 0.0
  %3043 = vmatpush2.msra.mxu0 0.0
  %3044 = vmatprep.subr.mxu0 0.0
  %3045 = vmatpush2.msra.mxu0 0.0
  %3046 = vmatprep.subr.mxu0 0.0
  %3047 = vmatpush2.msra.mxu0 0.0
  %3048 = vmatprep.subr.mxu0 0.0
  %3049 = vmatpush2.msra.mxu0 0.0
  %3050 = vmatprep.subr.mxu0 0.0
  %3051 = vmatpush2.msra.mxu0 0.0
  %3052 = vmatprep.subr.mxu0 0.0
  %3053 = vmatpush2.msra.mxu0 0.0
  %3054 = vmatprep.subr.mxu0 0.0
  %3055 = vmatpush2.msra.mxu0 0.0
  %3056 = vmatprep.mubr.f32.mxu0 0.0
  %3057 = vmatmul.mubr.f32.gmra.mxu0 %v2987
  %v3058 = vpop.f32.mrf.mxu0
  %v3059 = vadd.f32 %v2978, %v3058
  %v3060 = vpop.f32.mrf.mxu0
  %3061 = vmatprep.mubr.f32.mxu0 0.0
  %3062 = vmatmul.mubr.f32.gmra.mxu0 %v2990
  %v3063 = vpop.f32.mrf.mxu0
  %v3064 = vadd.f32 %v2983, %v3063
  %v3065 = vpop.f32.mrf.mxu0
  %3066 = vdwg.mxu0
  %3067 = vmatprep.subr.mxu0 0.0
  %3068 = vmatpush1.msra.mxu0 0.0
  %3069 = vmatprep.subr.mxu0 0.0
  %3070 = vmatpush1.msra.mxu0 0.0
  %3071 = vmatprep.subr.mxu0 0.0
  %3072 = vmatpush1.msra.mxu0 0.0
  %3073 = vmatprep.subr.mxu0 0.0
  %3074 = vmatpush1.msra.mxu0 0.0
  %3075 = vmatprep.subr.mxu0 0.0
  %3076 = vmatpush1.msra.mxu0 0.0
  %3077 = vmatprep.subr.mxu0 0.0
  %3078 = vmatpush1.msra.mxu0 0.0
  %3079 = vmatprep.subr.mxu0 0.0
  %3080 = vmatpush1.msra.mxu0 0.0
  %3081 = vmatprep.subr.mxu0 0.0
  %3082 = vmatpush1.msra.mxu0 0.0
  %3083 = vmatprep.subr.mxu0 0.0
  %3084 = vmatpush1.msra.mxu0 0.0
  %3085 = vmatprep.subr.mxu0 0.0
  %3086 = vmatpush1.msra.mxu0 0.0
  %3087 = vmatprep.subr.mxu0 0.0
  %3088 = vmatpush1.msra.mxu0 0.0
  %3089 = vmatprep.subr.mxu0 0.0
  %3090 = vmatpush1.msra.mxu0 0.0
  %3091 = vmatprep.subr.mxu0 0.0
  %3092 = vmatpush1.msra.mxu0 0.0
  %3093 = vmatprep.subr.mxu0 0.0
  %3094 = vmatpush1.msra.mxu0 0.0
  %3095 = vmatprep.subr.mxu0 0.0
  %3096 = vmatpush1.msra.mxu0 0.0
  %3097 = vmatprep.subr.mxu0 0.0
  %3098 = vmatpush1.msra.mxu0 %v1341
  %3099 = vmatprep.subr.mxu0 0.0
  %3100 = vmatpush2.msra.mxu0 0.0
  %3101 = vmatprep.subr.mxu0 0.0
  %3102 = vmatpush2.msra.mxu0 0.0
  %3103 = vmatprep.subr.mxu0 0.0
  %3104 = vmatpush2.msra.mxu0 0.0
  %3105 = vmatprep.subr.mxu0 0.0
  %3106 = vmatpush2.msra.mxu0 0.0
  %3107 = vmatprep.subr.mxu0 0.0
  %3108 = vmatpush2.msra.mxu0 0.0
  %3109 = vmatprep.subr.mxu0 0.0
  %3110 = vmatpush2.msra.mxu0 0.0
  %3111 = vmatprep.subr.mxu0 0.0
  %3112 = vmatpush2.msra.mxu0 0.0
  %3113 = vmatprep.subr.mxu0 0.0
  %3114 = vmatpush2.msra.mxu0 0.0
  %3115 = vmatprep.subr.mxu0 0.0
  %3116 = vmatpush2.msra.mxu0 0.0
  %3117 = vmatprep.subr.mxu0 0.0
  %3118 = vmatpush2.msra.mxu0 0.0
  %3119 = vmatprep.subr.mxu0 0.0
  %3120 = vmatpush2.msra.mxu0 0.0
  %3121 = vmatprep.subr.mxu0 0.0
  %3122 = vmatpush2.msra.mxu0 0.0
  %3123 = vmatprep.subr.mxu0 0.0
  %3124 = vmatpush2.msra.mxu0 0.0
  %3125 = vmatprep.subr.mxu0 0.0
  %3126 = vmatpush2.msra.mxu0 0.0
  %3127 = vmatprep.subr.mxu0 0.0
  %3128 = vmatpush2.msra.mxu0 0.0
  %3129 = vmatprep.subr.mxu0 0.0
  %3130 = vmatpush2.msra.mxu0 0.0
  %3131 = vmatprep.mubr.f32.mxu0 0.0
  %3132 = vmatmul.mubr.f32.gmra.mxu0 %v2744
  %v3133 = vpop.f32.mrf.mxu0
  %v3134 = vadd.f32 0.0, %v3133
  %v3135 = vpop.f32.mrf.mxu0
  %3136 = vmatprep.mubr.f32.mxu0 0.0
  %3137 = vmatmul.mubr.f32.gmra.mxu0 %v2747
  %v3138 = vpop.f32.mrf.mxu0
  %v3139 = vadd.f32 0.0, %v3138
  %v3140 = vpop.f32.mrf.mxu0
  %3141 = vdwg.mxu0
  %s3142 = scalar_lea.vmem %s5, 80
  %v3143 = vld [vmem:[%s3142] sm:$0xff]
  %v3144 = vld [vmem:[%s3142 + $0x8] sm:$0xff]
  %v3146 = vsel %vm70, %v3143, 0
  %v3149 = vsel %vm70, %v3144, 0
  %3151 = vmatprep.subr.mxu0 0.0
  %3152 = vmatpush1.msra.mxu0 0.0
  %3153 = vmatprep.subr.mxu0 0.0
  %3154 = vmatpush1.msra.mxu0 0.0
  %3155 = vmatprep.subr.mxu0 0.0
  %3156 = vmatpush1.msra.mxu0 0.0
  %3157 = vmatprep.subr.mxu0 0.0
  %3158 = vmatpush1.msra.mxu0 0.0
  %3159 = vmatprep.subr.mxu0 0.0
  %3160 = vmatpush1.msra.mxu0 0.0
  %3161 = vmatprep.subr.mxu0 0.0
  %3162 = vmatpush1.msra.mxu0 0.0
  %3163 = vmatprep.subr.mxu0 0.0
  %3164 = vmatpush1.msra.mxu0 0.0
  %3165 = vmatprep.subr.mxu0 0.0
  %3166 = vmatpush1.msra.mxu0 0.0
  %3167 = vmatprep.subr.mxu0 0.0
  %3168 = vmatpush1.msra.mxu0 0.0
  %3169 = vmatprep.subr.mxu0 0.0
  %3170 = vmatpush1.msra.mxu0 0.0
  %3171 = vmatprep.subr.mxu0 0.0
  %3172 = vmatpush1.msra.mxu0 0.0
  %3173 = vmatprep.subr.mxu0 0.0
  %3174 = vmatpush1.msra.mxu0 0.0
  %3175 = vmatprep.subr.mxu0 0.0
  %3176 = vmatpush1.msra.mxu0 0.0
  %3177 = vmatprep.subr.mxu0 0.0
  %3178 = vmatpush1.msra.mxu0 0.0
  %3179 = vmatprep.subr.mxu0 0.0
  %3180 = vmatpush1.msra.mxu0 %v3139
  %3181 = vmatprep.subr.mxu0 0.0
  %3182 = vmatpush1.msra.mxu0 %v3134
  %3183 = vmatprep.subr.mxu0 0.0
  %3184 = vmatpush2.msra.mxu0 0.0
  %3185 = vmatprep.subr.mxu0 0.0
  %3186 = vmatpush2.msra.mxu0 0.0
  %3187 = vmatprep.subr.mxu0 0.0
  %3188 = vmatpush2.msra.mxu0 0.0
  %3189 = vmatprep.subr.mxu0 0.0
  %3190 = vmatpush2.msra.mxu0 0.0
  %3191 = vmatprep.subr.mxu0 0.0
  %3192 = vmatpush2.msra.mxu0 0.0
  %3193 = vmatprep.subr.mxu0 0.0
  %3194 = vmatpush2.msra.mxu0 0.0
  %3195 = vmatprep.subr.mxu0 0.0
  %3196 = vmatpush2.msra.mxu0 0.0
  %3197 = vmatprep.subr.mxu0 0.0
  %3198 = vmatpush2.msra.mxu0 0.0
  %3199 = vmatprep.subr.mxu0 0.0
  %3200 = vmatpush2.msra.mxu0 0.0
  %3201 = vmatprep.subr.mxu0 0.0
  %3202 = vmatpush2.msra.mxu0 0.0
  %3203 = vmatprep.subr.mxu0 0.0
  %3204 = vmatpush2.msra.mxu0 0.0
  %3205 = vmatprep.subr.mxu0 0.0
  %3206 = vmatpush2.msra.mxu0 0.0
  %3207 = vmatprep.subr.mxu0 0.0
  %3208 = vmatpush2.msra.mxu0 0.0
  %3209 = vmatprep.subr.mxu0 0.0
  %3210 = vmatpush2.msra.mxu0 0.0
  %3211 = vmatprep.subr.mxu0 0.0
  %3212 = vmatpush2.msra.mxu0 0.0
  %3213 = vmatprep.subr.mxu0 0.0
  %3214 = vmatpush2.msra.mxu0 0.0
  %3215 = vmatprep.mubr.f32.mxu0 0.0
  %3216 = vmatmul.mubr.f32.gmra.mxu0 %v3146
  %v3217 = vpop.f32.mrf.mxu0
  %v3218 = vadd.f32 0.0, %v3217
  %v3219 = vpop.f32.mrf.mxu0
  %3220 = vmatprep.mubr.f32.mxu0 0.0
  %3221 = vmatmul.mubr.f32.gmra.mxu0 %v3149
  %v3222 = vpop.f32.mrf.mxu0
  %v3223 = vadd.f32 0.0, %v3222
  %v3224 = vpop.f32.mrf.mxu0
  %3225 = vdwg.mxu0
  %v3226 = vadd.f32 %v3059, %v3218
  %v3227 = vadd.f32 %v3064, %v3223
  %s3228 = scalar_lea.vmem %s6, 16
  %v3229 = vld [vmem:[%s3228] sm:$0xff]
  %v3230 = vld [vmem:[%s3228 + $0x8] sm:$0xff]
  %3232 = vset.pattern.permute.xlu0 0
  %3233 = vperm.xlu0 %3232, %v3229
  %v3234 = vpop.permute.xlu0 %3233
  %3237 = vset.pattern.permute.xlu0 0
  %3238 = vperm.xlu0 %3237, %v3230
  %v3239 = vpop.permute.xlu0 %3238
  %v3241 = vadd.f32 %v3226, %v3234
  %v3242 = vadd.f32 %v3227, %v3239
  %v3243 = vmax.f32 %v3241, 0.0
  %v3244 = vmax.f32 %v3242, 0.0
  %v3246 = vsel %vm217, %v3243, 0
  %v3249 = vsel %vm217, %v3244, 0
  %3251 = vmatprep.subr.mxu0 0.0
  %3252 = vmatpush1.msra.mxu0 0.0
  %3253 = vmatprep.subr.mxu0 0.0
  %3254 = vmatpush1.msra.mxu0 0.0
  %3255 = vmatprep.subr.mxu0 0.0
  %3256 = vmatpush1.msra.mxu0 0.0
  %3257 = vmatprep.subr.mxu0 0.0
  %3258 = vmatpush1.msra.mxu0 0.0
  %3259 = vmatprep.subr.mxu0 0.0
  %3260 = vmatpush1.msra.mxu0 0.0
  %3261 = vmatprep.subr.mxu0 0.0
  %3262 = vmatpush1.msra.mxu0 0.0
  %3263 = vmatprep.subr.mxu0 0.0
  %3264 = vmatpush1.msra.mxu0 0.0
  %3265 = vmatprep.subr.mxu0 0.0
  %3266 = vmatpush1.msra.mxu0 0.0
  %3267 = vmatprep.subr.mxu0 0.0
  %3268 = vmatpush1.msra.mxu0 0.0
  %3269 = vmatprep.subr.mxu0 0.0
  %3270 = vmatpush1.msra.mxu0 0.0
  %3271 = vmatprep.subr.mxu0 0.0
  %3272 = vmatpush1.msra.mxu0 0.0
  %3273 = vmatprep.subr.mxu0 0.0
  %3274 = vmatpush1.msra.mxu0 0.0
  %3275 = vmatprep.subr.mxu0 0.0
  %3276 = vmatpush1.msra.mxu0 0.0
  %3277 = vmatprep.subr.mxu0 0.0
  %3278 = vmatpush1.msra.mxu0 0.0
  %3279 = vmatprep.subr.mxu0 0.0
  %3280 = vmatpush1.msra.mxu0 0.0
  %3281 = vmatprep.subr.mxu0 0.0
  %3282 = vmatpush1.msra.mxu0 %v1018
  %3283 = vmatprep.subr.mxu0 0.0
  %3284 = vmatpush2.msra.mxu0 0.0
  %3285 = vmatprep.subr.mxu0 0.0
  %3286 = vmatpush2.msra.mxu0 0.0
  %3287 = vmatprep.subr.mxu0 0.0
  %3288 = vmatpush2.msra.mxu0 0.0
  %3289 = vmatprep.subr.mxu0 0.0
  %3290 = vmatpush2.msra.mxu0 0.0
  %3291 = vmatprep.subr.mxu0 0.0
  %3292 = vmatpush2.msra.mxu0 0.0
  %3293 = vmatprep.subr.mxu0 0.0
  %3294 = vmatpush2.msra.mxu0 0.0
  %3295 = vmatprep.subr.mxu0 0.0
  %3296 = vmatpush2.msra.mxu0 0.0
  %3297 = vmatprep.subr.mxu0 0.0
  %3298 = vmatpush2.msra.mxu0 0.0
  %3299 = vmatprep.subr.mxu0 0.0
  %3300 = vmatpush2.msra.mxu0 0.0
  %3301 = vmatprep.subr.mxu0 0.0
  %3302 = vmatpush2.msra.mxu0 0.0
  %3303 = vmatprep.subr.mxu0 0.0
  %3304 = vmatpush2.msra.mxu0 0.0
  %3305 = vmatprep.subr.mxu0 0.0
  %3306 = vmatpush2.msra.mxu0 0.0
  %3307 = vmatprep.subr.mxu0 0.0
  %3308 = vmatpush2.msra.mxu0 0.0
  %3309 = vmatprep.subr.mxu0 0.0
  %3310 = vmatpush2.msra.mxu0 0.0
  %3311 = vmatprep.subr.mxu0 0.0
  %3312 = vmatpush2.msra.mxu0 0.0
  %3313 = vmatprep.subr.mxu0 0.0
  %3314 = vmatpush2.msra.mxu0 0.0
  %3315 = vmatprep.mubr.f32.mxu0 0.0
  %3316 = vmatmul.mubr.f32.gmra.mxu0 %v3246
  %v3317 = vpop.f32.mrf.mxu0
  %v3318 = vadd.f32 0.0, %v3317
  %v3319 = vpop.f32.mrf.mxu0
  %3320 = vmatprep.mubr.f32.mxu0 0.0
  %3321 = vmatmul.mubr.f32.gmra.mxu0 %v3249
  %v3322 = vpop.f32.mrf.mxu0
  %v3323 = vadd.f32 0.0, %v3322
  %v3324 = vpop.f32.mrf.mxu0
  %3325 = vdwg.mxu0
  %s3326 = scalar_lea.vmem %s7, 48
  %v3327 = vld [vmem:[%s3326] sm:$0xff]
  %v3328 = vld [vmem:[%s3326 + $0x8] sm:$0xff]
  %3329 = vmatprep.subr.mxu0 0.0
  %3330 = vmatpush1.msra.mxu0 0.0
  %3331 = vmatprep.subr.mxu0 0.0
  %3332 = vmatpush1.msra.mxu0 0.0
  %3333 = vmatprep.subr.mxu0 0.0
  %3334 = vmatpush1.msra.mxu0 0.0
  %3335 = vmatprep.subr.mxu0 0.0
  %3336 = vmatpush1.msra.mxu0 0.0
  %3337 = vmatprep.subr.mxu0 0.0
  %3338 = vmatpush1.msra.mxu0 0.0
  %3339 = vmatprep.subr.mxu0 0.0
  %3340 = vmatpush1.msra.mxu0 0.0
  %3341 = vmatprep.subr.mxu0 0.0
  %3342 = vmatpush1.msra.mxu0 0.0
  %3343 = vmatprep.subr.mxu0 0.0
  %3344 = vmatpush1.msra.mxu0 0.0
  %3345 = vmatprep.subr.mxu0 0.0
  %3346 = vmatpush1.msra.mxu0 0.0
  %3347 = vmatprep.subr.mxu0 0.0
  %3348 = vmatpush1.msra.mxu0 0.0
  %3349 = vmatprep.subr.mxu0 0.0
  %3350 = vmatpush1.msra.mxu0 0.0
  %3351 = vmatprep.subr.mxu0 0.0
  %3352 = vmatpush1.msra.mxu0 0.0
  %3353 = vmatprep.subr.mxu0 0.0
  %3354 = vmatpush1.msra.mxu0 0.0
  %3355 = vmatprep.subr.mxu0 0.0
  %3356 = vmatpush1.msra.mxu0 0.0
  %3357 = vmatprep.subr.mxu0 0.0
  %3358 = vmatpush1.msra.mxu0 0.0
  %3359 = vmatprep.subr.mxu0 0.0
  %3360 = vmatpush1.msra.mxu0 %v1098
  %3361 = vmatprep.subr.mxu0 0.0
  %3362 = vmatpush2.msra.mxu0 0.0
  %3363 = vmatprep.subr.mxu0 0.0
  %3364 = vmatpush2.msra.mxu0 0.0
  %3365 = vmatprep.subr.mxu0 0.0
  %3366 = vmatpush2.msra.mxu0 0.0
  %3367 = vmatprep.subr.mxu0 0.0
  %3368 = vmatpush2.msra.mxu0 0.0
  %3369 = vmatprep.subr.mxu0 0.0
  %3370 = vmatpush2.msra.mxu0 0.0
  %3371 = vmatprep.subr.mxu0 0.0
  %3372 = vmatpush2.msra.mxu0 0.0
  %3373 = vmatprep.subr.mxu0 0.0
  %3374 = vmatpush2.msra.mxu0 0.0
  %3375 = vmatprep.subr.mxu0 0.0
  %3376 = vmatpush2.msra.mxu0 0.0
  %3377 = vmatprep.subr.mxu0 0.0
  %3378 = vmatpush2.msra.mxu0 0.0
  %3379 = vmatprep.subr.mxu0 0.0
  %3380 = vmatpush2.msra.mxu0 0.0
  %3381 = vmatprep.subr.mxu0 0.0
  %3382 = vmatpush2.msra.mxu0 0.0
  %3383 = vmatprep.subr.mxu0 0.0
  %3384 = vmatpush2.msra.mxu0 0.0
  %3385 = vmatprep.subr.mxu0 0.0
  %3386 = vmatpush2.msra.mxu0 0.0
  %3387 = vmatprep.subr.mxu0 0.0
  %3388 = vmatpush2.msra.mxu0 0.0
  %3389 = vmatprep.subr.mxu0 0.0
  %3390 = vmatpush2.msra.mxu0 0.0
  %3391 = vmatprep.subr.mxu0 0.0
  %3392 = vmatpush2.msra.mxu0 0.0
  %3393 = vmatprep.mubr.f32.mxu0 0.0
  %3394 = vmatmul.mubr.f32.gmra.mxu0 %v3246
  %v3395 = vpop.f32.mrf.mxu0
  %v3396 = vadd.f32 0.0, %v3395
  %v3397 = vpop.f32.mrf.mxu0
  %3398 = vmatprep.mubr.f32.mxu0 0.0
  %3399 = vmatmul.mubr.f32.gmra.mxu0 %v3249
  %v3400 = vpop.f32.mrf.mxu0
  %v3401 = vadd.f32 0.0, %v3400
  %v3402 = vpop.f32.mrf.mxu0
  %3403 = vdwg.mxu0
  %s3404 = scalar_lea.vmem %s7, 64
  %v3405 = vld [vmem:[%s3404] sm:$0xff]
  %v3406 = vld [vmem:[%s3404 + $0x8] sm:$0xff]
  %v3408 = vsel %vm70, %v3405, 0
  %v3411 = vsel %vm70, %v3406, 0
  %3413 = vmatprep.subr.mxu0 0.0
  %3414 = vmatpush1.msra.mxu0 0.0
  %3415 = vmatprep.subr.mxu0 0.0
  %3416 = vmatpush1.msra.mxu0 0.0
  %3417 = vmatprep.subr.mxu0 0.0
  %3418 = vmatpush1.msra.mxu0 0.0
  %3419 = vmatprep.subr.mxu0 0.0
  %3420 = vmatpush1.msra.mxu0 0.0
  %3421 = vmatprep.subr.mxu0 0.0
  %3422 = vmatpush1.msra.mxu0 0.0
  %3423 = vmatprep.subr.mxu0 0.0
  %3424 = vmatpush1.msra.mxu0 0.0
  %3425 = vmatprep.subr.mxu0 0.0
  %3426 = vmatpush1.msra.mxu0 0.0
  %3427 = vmatprep.subr.mxu0 0.0
  %3428 = vmatpush1.msra.mxu0 0.0
  %3429 = vmatprep.subr.mxu0 0.0
  %3430 = vmatpush1.msra.mxu0 0.0
  %3431 = vmatprep.subr.mxu0 0.0
  %3432 = vmatpush1.msra.mxu0 0.0
  %3433 = vmatprep.subr.mxu0 0.0
  %3434 = vmatpush1.msra.mxu0 0.0
  %3435 = vmatprep.subr.mxu0 0.0
  %3436 = vmatpush1.msra.mxu0 0.0
  %3437 = vmatprep.subr.mxu0 0.0
  %3438 = vmatpush1.msra.mxu0 0.0
  %3439 = vmatprep.subr.mxu0 0.0
  %3440 = vmatpush1.msra.mxu0 0.0
  %3441 = vmatprep.subr.mxu0 0.0
  %3442 = vmatpush1.msra.mxu0 %v3401
  %3443 = vmatprep.subr.mxu0 0.0
  %3444 = vmatpush1.msra.mxu0 %v3396
  %3445 = vmatprep.subr.mxu0 0.0
  %3446 = vmatpush2.msra.mxu0 0.0
  %3447 = vmatprep.subr.mxu0 0.0
  %3448 = vmatpush2.msra.mxu0 0.0
  %3449 = vmatprep.subr.mxu0 0.0
  %3450 = vmatpush2.msra.mxu0 0.0
  %3451 = vmatprep.subr.mxu0 0.0
  %3452 = vmatpush2.msra.mxu0 0.0
  %3453 = vmatprep.subr.mxu0 0.0
  %3454 = vmatpush2.msra.mxu0 0.0
  %3455 = vmatprep.subr.mxu0 0.0
  %3456 = vmatpush2.msra.mxu0 0.0
  %3457 = vmatprep.subr.mxu0 0.0
  %3458 = vmatpush2.msra.mxu0 0.0
  %3459 = vmatprep.subr.mxu0 0.0
  %3460 = vmatpush2.msra.mxu0 0.0
  %3461 = vmatprep.subr.mxu0 0.0
  %3462 = vmatpush2.msra.mxu0 0.0
  %3463 = vmatprep.subr.mxu0 0.0
  %3464 = vmatpush2.msra.mxu0 0.0
  %3465 = vmatprep.subr.mxu0 0.0
  %3466 = vmatpush2.msra.mxu0 0.0
  %3467 = vmatprep.subr.mxu0 0.0
  %3468 = vmatpush2.msra.mxu0 0.0
  %3469 = vmatprep.subr.mxu0 0.0
  %3470 = vmatpush2.msra.mxu0 0.0
  %3471 = vmatprep.subr.mxu0 0.0
  %3472 = vmatpush2.msra.mxu0 0.0
  %3473 = vmatprep.subr.mxu0 0.0
  %3474 = vmatpush2.msra.mxu0 0.0
  %3475 = vmatprep.subr.mxu0 0.0
  %3476 = vmatpush2.msra.mxu0 0.0
  %3477 = vmatprep.mubr.f32.mxu0 0.0
  %3478 = vmatmul.mubr.f32.gmra.mxu0 %v3408
  %v3479 = vpop.f32.mrf.mxu0
  %v3480 = vadd.f32 0.0, %v3479
  %v3481 = vpop.f32.mrf.mxu0
  %3482 = vmatprep.mubr.f32.mxu0 0.0
  %3483 = vmatmul.mubr.f32.gmra.mxu0 %v3411
  %v3484 = vpop.f32.mrf.mxu0
  %v3485 = vadd.f32 0.0, %v3484
  %v3486 = vpop.f32.mrf.mxu0
  %3487 = vdwg.mxu0
  %v3489 = vsel %vm70, %v3327, 0
  %v3492 = vsel %vm70, %v3328, 0
  %3494 = vmatprep.subr.mxu0 0.0
  %3495 = vmatpush1.msra.mxu0 0.0
  %3496 = vmatprep.subr.mxu0 0.0
  %3497 = vmatpush1.msra.mxu0 0.0
  %3498 = vmatprep.subr.mxu0 0.0
  %3499 = vmatpush1.msra.mxu0 0.0
  %3500 = vmatprep.subr.mxu0 0.0
  %3501 = vmatpush1.msra.mxu0 0.0
  %3502 = vmatprep.subr.mxu0 0.0
  %3503 = vmatpush1.msra.mxu0 0.0
  %3504 = vmatprep.subr.mxu0 0.0
  %3505 = vmatpush1.msra.mxu0 0.0
  %3506 = vmatprep.subr.mxu0 0.0
  %3507 = vmatpush1.msra.mxu0 0.0
  %3508 = vmatprep.subr.mxu0 0.0
  %3509 = vmatpush1.msra.mxu0 0.0
  %3510 = vmatprep.subr.mxu0 0.0
  %3511 = vmatpush1.msra.mxu0 0.0
  %3512 = vmatprep.subr.mxu0 0.0
  %3513 = vmatpush1.msra.mxu0 0.0
  %3514 = vmatprep.subr.mxu0 0.0
  %3515 = vmatpush1.msra.mxu0 0.0
  %3516 = vmatprep.subr.mxu0 0.0
  %3517 = vmatpush1.msra.mxu0 0.0
  %3518 = vmatprep.subr.mxu0 0.0
  %3519 = vmatpush1.msra.mxu0 0.0
  %3520 = vmatprep.subr.mxu0 0.0
  %3521 = vmatpush1.msra.mxu0 0.0
  %3522 = vmatprep.subr.mxu0 0.0
  %3523 = vmatpush1.msra.mxu0 %v3323
  %3524 = vmatprep.subr.mxu0 0.0
  %3525 = vmatpush1.msra.mxu0 %v3318
  %3526 = vmatprep.subr.mxu0 0.0
  %3527 = vmatpush2.msra.mxu0 0.0
  %3528 = vmatprep.subr.mxu0 0.0
  %3529 = vmatpush2.msra.mxu0 0.0
  %3530 = vmatprep.subr.mxu0 0.0
  %3531 = vmatpush2.msra.mxu0 0.0
  %3532 = vmatprep.subr.mxu0 0.0
  %3533 = vmatpush2.msra.mxu0 0.0
  %3534 = vmatprep.subr.mxu0 0.0
  %3535 = vmatpush2.msra.mxu0 0.0
  %3536 = vmatprep.subr.mxu0 0.0
  %3537 = vmatpush2.msra.mxu0 0.0
  %3538 = vmatprep.subr.mxu0 0.0
  %3539 = vmatpush2.msra.mxu0 0.0
  %3540 = vmatprep.subr.mxu0 0.0
  %3541 = vmatpush2.msra.mxu0 0.0
  %3542 = vmatprep.subr.mxu0 0.0
  %3543 = vmatpush2.msra.mxu0 0.0
  %3544 = vmatprep.subr.mxu0 0.0
  %3545 = vmatpush2.msra.mxu0 0.0
  %3546 = vmatprep.subr.mxu0 0.0
  %3547 = vmatpush2.msra.mxu0 0.0
  %3548 = vmatprep.subr.mxu0 0.0
  %3549 = vmatpush2.msra.mxu0 0.0
  %3550 = vmatprep.subr.mxu0 0.0
  %3551 = vmatpush2.msra.mxu0 0.0
  %3552 = vmatprep.subr.mxu0 0.0
  %3553 = vmatpush2.msra.mxu0 0.0
  %3554 = vmatprep.subr.mxu0 0.0
  %3555 = vmatpush2.msra.mxu0 0.0
  %3556 = vmatprep.subr.mxu0 0.0
  %3557 = vmatpush2.msra.mxu0 0.0
  %3558 = vmatprep.mubr.f32.mxu0 0.0
  %3559 = vmatmul.mubr.f32.gmra.mxu0 %v3489
  %v3560 = vpop.f32.mrf.mxu0
  %v3561 = vadd.f32 %v3480, %v3560
  %v3562 = vpop.f32.mrf.mxu0
  %3563 = vmatprep.mubr.f32.mxu0 0.0
  %3564 = vmatmul.mubr.f32.gmra.mxu0 %v3492
  %v3565 = vpop.f32.mrf.mxu0
  %v3566 = vadd.f32 %v3485, %v3565
  %v3567 = vpop.f32.mrf.mxu0
  %3568 = vdwg.mxu0
  %3569 = vmatprep.subr.mxu0 0.0
  %3570 = vmatpush1.msra.mxu0 0.0
  %3571 = vmatprep.subr.mxu0 0.0
  %3572 = vmatpush1.msra.mxu0 0.0
  %3573 = vmatprep.subr.mxu0 0.0
  %3574 = vmatpush1.msra.mxu0 0.0
  %3575 = vmatprep.subr.mxu0 0.0
  %3576 = vmatpush1.msra.mxu0 0.0
  %3577 = vmatprep.subr.mxu0 0.0
  %3578 = vmatpush1.msra.mxu0 0.0
  %3579 = vmatprep.subr.mxu0 0.0
  %3580 = vmatpush1.msra.mxu0 0.0
  %3581 = vmatprep.subr.mxu0 0.0
  %3582 = vmatpush1.msra.mxu0 0.0
  %3583 = vmatprep.subr.mxu0 0.0
  %3584 = vmatpush1.msra.mxu0 0.0
  %3585 = vmatprep.subr.mxu0 0.0
  %3586 = vmatpush1.msra.mxu0 0.0
  %3587 = vmatprep.subr.mxu0 0.0
  %3588 = vmatpush1.msra.mxu0 0.0
  %3589 = vmatprep.subr.mxu0 0.0
  %3590 = vmatpush1.msra.mxu0 0.0
  %3591 = vmatprep.subr.mxu0 0.0
  %3592 = vmatpush1.msra.mxu0 0.0
  %3593 = vmatprep.subr.mxu0 0.0
  %3594 = vmatpush1.msra.mxu0 0.0
  %3595 = vmatprep.subr.mxu0 0.0
  %3596 = vmatpush1.msra.mxu0 0.0
  %3597 = vmatprep.subr.mxu0 0.0
  %3598 = vmatpush1.msra.mxu0 0.0
  %3599 = vmatprep.subr.mxu0 0.0
  %3600 = vmatpush1.msra.mxu0 %v1341
  %3601 = vmatprep.subr.mxu0 0.0
  %3602 = vmatpush2.msra.mxu0 0.0
  %3603 = vmatprep.subr.mxu0 0.0
  %3604 = vmatpush2.msra.mxu0 0.0
  %3605 = vmatprep.subr.mxu0 0.0
  %3606 = vmatpush2.msra.mxu0 0.0
  %3607 = vmatprep.subr.mxu0 0.0
  %3608 = vmatpush2.msra.mxu0 0.0
  %3609 = vmatprep.subr.mxu0 0.0
  %3610 = vmatpush2.msra.mxu0 0.0
  %3611 = vmatprep.subr.mxu0 0.0
  %3612 = vmatpush2.msra.mxu0 0.0
  %3613 = vmatprep.subr.mxu0 0.0
  %3614 = vmatpush2.msra.mxu0 0.0
  %3615 = vmatprep.subr.mxu0 0.0
  %3616 = vmatpush2.msra.mxu0 0.0
  %3617 = vmatprep.subr.mxu0 0.0
  %3618 = vmatpush2.msra.mxu0 0.0
  %3619 = vmatprep.subr.mxu0 0.0
  %3620 = vmatpush2.msra.mxu0 0.0
  %3621 = vmatprep.subr.mxu0 0.0
  %3622 = vmatpush2.msra.mxu0 0.0
  %3623 = vmatprep.subr.mxu0 0.0
  %3624 = vmatpush2.msra.mxu0 0.0
  %3625 = vmatprep.subr.mxu0 0.0
  %3626 = vmatpush2.msra.mxu0 0.0
  %3627 = vmatprep.subr.mxu0 0.0
  %3628 = vmatpush2.msra.mxu0 0.0
  %3629 = vmatprep.subr.mxu0 0.0
  %3630 = vmatpush2.msra.mxu0 0.0
  %3631 = vmatprep.subr.mxu0 0.0
  %3632 = vmatpush2.msra.mxu0 0.0
  %3633 = vmatprep.mubr.f32.mxu0 0.0
  %3634 = vmatmul.mubr.f32.gmra.mxu0 %v3246
  %v3635 = vpop.f32.mrf.mxu0
  %v3636 = vadd.f32 0.0, %v3635
  %v3637 = vpop.f32.mrf.mxu0
  %3638 = vmatprep.mubr.f32.mxu0 0.0
  %3639 = vmatmul.mubr.f32.gmra.mxu0 %v3249
  %v3640 = vpop.f32.mrf.mxu0
  %v3641 = vadd.f32 0.0, %v3640
  %v3642 = vpop.f32.mrf.mxu0
  %3643 = vdwg.mxu0
  %s3644 = scalar_lea.vmem %s7, 80
  %v3645 = vld [vmem:[%s3644] sm:$0xff]
  %v3646 = vld [vmem:[%s3644 + $0x8] sm:$0xff]
  %v3648 = vsel %vm70, %v3645, 0
  %v3651 = vsel %vm70, %v3646, 0
  %3653 = vmatprep.subr.mxu0 0.0
  %3654 = vmatpush1.msra.mxu0 0.0
  %3655 = vmatprep.subr.mxu0 0.0
  %3656 = vmatpush1.msra.mxu0 0.0
  %3657 = vmatprep.subr.mxu0 0.0
  %3658 = vmatpush1.msra.mxu0 0.0
  %3659 = vmatprep.subr.mxu0 0.0
  %3660 = vmatpush1.msra.mxu0 0.0
  %3661 = vmatprep.subr.mxu0 0.0
  %3662 = vmatpush1.msra.mxu0 0.0
  %3663 = vmatprep.subr.mxu0 0.0
  %3664 = vmatpush1.msra.mxu0 0.0
  %3665 = vmatprep.subr.mxu0 0.0
  %3666 = vmatpush1.msra.mxu0 0.0
  %3667 = vmatprep.subr.mxu0 0.0
  %3668 = vmatpush1.msra.mxu0 0.0
  %3669 = vmatprep.subr.mxu0 0.0
  %3670 = vmatpush1.msra.mxu0 0.0
  %3671 = vmatprep.subr.mxu0 0.0
  %3672 = vmatpush1.msra.mxu0 0.0
  %3673 = vmatprep.subr.mxu0 0.0
  %3674 = vmatpush1.msra.mxu0 0.0
  %3675 = vmatprep.subr.mxu0 0.0
  %3676 = vmatpush1.msra.mxu0 0.0
  %3677 = vmatprep.subr.mxu0 0.0
  %3678 = vmatpush1.msra.mxu0 0.0
  %3679 = vmatprep.subr.mxu0 0.0
  %3680 = vmatpush1.msra.mxu0 0.0
  %3681 = vmatprep.subr.mxu0 0.0
  %3682 = vmatpush1.msra.mxu0 %v3641
  %3683 = vmatprep.subr.mxu0 0.0
  %3684 = vmatpush1.msra.mxu0 %v3636
  %3685 = vmatprep.subr.mxu0 0.0
  %3686 = vmatpush2.msra.mxu0 0.0
  %3687 = vmatprep.subr.mxu0 0.0
  %3688 = vmatpush2.msra.mxu0 0.0
  %3689 = vmatprep.subr.mxu0 0.0
  %3690 = vmatpush2.msra.mxu0 0.0
  %3691 = vmatprep.subr.mxu0 0.0
  %3692 = vmatpush2.msra.mxu0 0.0
  %3693 = vmatprep.subr.mxu0 0.0
  %3694 = vmatpush2.msra.mxu0 0.0
  %3695 = vmatprep.subr.mxu0 0.0
  %3696 = vmatpush2.msra.mxu0 0.0
  %3697 = vmatprep.subr.mxu0 0.0
  %3698 = vmatpush2.msra.mxu0 0.0
  %3699 = vmatprep.subr.mxu0 0.0
  %3700 = vmatpush2.msra.mxu0 0.0
  %3701 = vmatprep.subr.mxu0 0.0
  %3702 = vmatpush2.msra.mxu0 0.0
  %3703 = vmatprep.subr.mxu0 0.0
  %3704 = vmatpush2.msra.mxu0 0.0
  %3705 = vmatprep.subr.mxu0 0.0
  %3706 = vmatpush2.msra.mxu0 0.0
  %3707 = vmatprep.subr.mxu0 0.0
  %3708 = vmatpush2.msra.mxu0 0.0
  %3709 = vmatprep.subr.mxu0 0.0
  %3710 = vmatpush2.msra.mxu0 0.0
  %3711 = vmatprep.subr.mxu0 0.0
  %3712 = vmatpush2.msra.mxu0 0.0
  %3713 = vmatprep.subr.mxu0 0.0
  %3714 = vmatpush2.msra.mxu0 0.0
  %3715 = vmatprep.subr.mxu0 0.0
  %3716 = vmatpush2.msra.mxu0 0.0
  %3717 = vmatprep.mubr.f32.mxu0 0.0
  %3718 = vmatmul.mubr.f32.gmra.mxu0 %v3648
  %v3719 = vpop.f32.mrf.mxu0
  %v3720 = vadd.f32 0.0, %v3719
  %v3721 = vpop.f32.mrf.mxu0
  %3722 = vmatprep.mubr.f32.mxu0 0.0
  %3723 = vmatmul.mubr.f32.gmra.mxu0 %v3651
  %v3724 = vpop.f32.mrf.mxu0
  %v3725 = vadd.f32 0.0, %v3724
  %v3726 = vpop.f32.mrf.mxu0
  %3727 = vdwg.mxu0
  %v3728 = vadd.f32 %v3561, %v3720
  %v3729 = vadd.f32 %v3566, %v3725
  %s3730 = scalar_lea.vmem %s8, 16
  %v3731 = vld [vmem:[%s3730] sm:$0xff]
  %v3732 = vld [vmem:[%s3730 + $0x8] sm:$0xff]
  %3734 = vset.pattern.permute.xlu0 0
  %3735 = vperm.xlu0 %3734, %v3731
  %v3736 = vpop.permute.xlu0 %3735
  %3739 = vset.pattern.permute.xlu0 0
  %3740 = vperm.xlu0 %3739, %v3732
  %v3741 = vpop.permute.xlu0 %3740
  %v3743 = vadd.f32 %v3728, %v3736
  %v3744 = vadd.f32 %v3729, %v3741
  %v3745 = vadd.f32 %v2741, %v3743
  %v3746 = vadd.f32 %v2742, %v3744
  %v3747 = vtanh.pop %v3745
  %v3748 = vtanh.pop %v3746
  %s3749 = scalar_lea.vmem %s9, 16
  %3750 = vst.msk [vmem:[%s3749] sm:$0xff] %vm217, %v3747
  %3751 = vst.msk [vmem:[%s3749 + $0x8] sm:$0xff] %vm217, %v3748
  %s3752 = scalar_lea.vmem %s0, 4
  %v3753 = vld [vmem:[%s3752] sm:$0xf]
  %v3755 = vsel %vm70, %v3753, 0
  %3757 = vmatprep.subr.mxu0 0.0
  %3758 = vmatpush1.msra.mxu0 0.0
  %3759 = vmatprep.subr.mxu0 0.0
  %3760 = vmatpush1.msra.mxu0 0.0
  %3761 = vmatprep.subr.mxu0 0.0
  %3762 = vmatpush1.msra.mxu0 0.0
  %3763 = vmatprep.subr.mxu0 0.0
  %3764 = vmatpush1.msra.mxu0 0.0
  %3765 = vmatprep.subr.mxu0 0.0
  %3766 = vmatpush1.msra.mxu0 0.0
  %3767 = vmatprep.subr.mxu0 0.0
  %3768 = vmatpush1.msra.mxu0 0.0
  %3769 = vmatprep.subr.mxu0 0.0
  %3770 = vmatpush1.msra.mxu0 0.0
  %3771 = vmatprep.subr.mxu0 0.0
  %3772 = vmatpush1.msra.mxu0 0.0
  %3773 = vmatprep.subr.mxu0 0.0
  %3774 = vmatpush1.msra.mxu0 0.0
  %3775 = vmatprep.subr.mxu0 0.0
  %3776 = vmatpush1.msra.mxu0 0.0
  %3777 = vmatprep.subr.mxu0 0.0
  %3778 = vmatpush1.msra.mxu0 0.0
  %3779 = vmatprep.subr.mxu0 0.0
  %3780 = vmatpush1.msra.mxu0 0.0
  %3781 = vmatprep.subr.mxu0 0.0
  %3782 = vmatpush1.msra.mxu0 0.0
  %3783 = vmatprep.subr.mxu0 0.0
  %3784 = vmatpush1.msra.mxu0 0.0
  %3785 = vmatprep.subr.mxu0 0.0
  %3786 = vmatpush1.msra.mxu0 %v44
  %3787 = vmatprep.subr.mxu0 0.0
  %3788 = vmatpush1.msra.mxu0 %v43
  %3789 = vmatprep.subr.mxu0 0.0
  %3790 = vmatpush2.msra.mxu0 0.0
  %3791 = vmatprep.subr.mxu0 0.0
  %3792 = vmatpush2.msra.mxu0 0.0
  %3793 = vmatprep.subr.mxu0 0.0
  %3794 = vmatpush2.msra.mxu0 0.0
  %3795 = vmatprep.subr.mxu0 0.0
  %3796 = vmatpush2.msra.mxu0 0.0
  %3797 = vmatprep.subr.mxu0 0.0
  %3798 = vmatpush2.msra.mxu0 0.0
  %3799 = vmatprep.subr.mxu0 0.0
  %3800 = vmatpush2.msra.mxu0 0.0
  %3801 = vmatprep.subr.mxu0 0.0
  %3802 = vmatpush2.msra.mxu0 0.0
  %3803 = vmatprep.subr.mxu0 0.0
  %3804 = vmatpush2.msra.mxu0 0.0
  %3805 = vmatprep.subr.mxu0 0.0
  %3806 = vmatpush2.msra.mxu0 0.0
  %3807 = vmatprep.subr.mxu0 0.0
  %3808 = vmatpush2.msra.mxu0 0.0
  %3809 = vmatprep.subr.mxu0 0.0
  %3810 = vmatpush2.msra.mxu0 0.0
  %3811 = vmatprep.subr.mxu0 0.0
  %3812 = vmatpush2.msra.mxu0 0.0
  %3813 = vmatprep.subr.mxu0 0.0
  %3814 = vmatpush2.msra.mxu0 0.0
  %3815 = vmatprep.subr.mxu0 0.0
  %3816 = vmatpush2.msra.mxu0 0.0
  %3817 = vmatprep.subr.mxu0 0.0
  %3818 = vmatpush2.msra.mxu0 0.0
  %3819 = vmatprep.subr.mxu0 0.0
  %3820 = vmatpush2.msra.mxu0 0.0
  %3821 = vmatprep.mubr.f32.mxu0 0.0
  %3822 = vmatmul.mubr.f32.gmra.mxu0 %v3755
  %v3823 = vpop.f32.mrf.mxu0
  %v3824 = vadd.f32 0.0, %v3823
  %v3825 = vpop.f32.mrf.mxu0
  %3826 = vdwg.mxu0
  %v3827 = vld [vmem:[%s1] sm:$0xff]
  %3828 = vmatprep.subr.mxu0 0.0
  %3829 = vmatpush1.msra.mxu0 0.0
  %3830 = vmatprep.subr.mxu0 0.0
  %3831 = vmatpush1.msra.mxu0 0.0
  %3832 = vmatprep.subr.mxu0 0.0
  %3833 = vmatpush1.msra.mxu0 0.0
  %3834 = vmatprep.subr.mxu0 0.0
  %3835 = vmatpush1.msra.mxu0 0.0
  %3836 = vmatprep.subr.mxu0 0.0
  %3837 = vmatpush1.msra.mxu0 0.0
  %3838 = vmatprep.subr.mxu0 0.0
  %3839 = vmatpush1.msra.mxu0 0.0
  %3840 = vmatprep.subr.mxu0 0.0
  %3841 = vmatpush1.msra.mxu0 0.0
  %3842 = vmatprep.subr.mxu0 0.0
  %3843 = vmatpush1.msra.mxu0 0.0
  %3844 = vmatprep.subr.mxu0 0.0
  %3845 = vmatpush1.msra.mxu0 0.0
  %3846 = vmatprep.subr.mxu0 0.0
  %3847 = vmatpush1.msra.mxu0 0.0
  %3848 = vmatprep.subr.mxu0 0.0
  %3849 = vmatpush1.msra.mxu0 0.0
  %3850 = vmatprep.subr.mxu0 0.0
  %3851 = vmatpush1.msra.mxu0 0.0
  %3852 = vmatprep.subr.mxu0 0.0
  %3853 = vmatpush1.msra.mxu0 0.0
  %3854 = vmatprep.subr.mxu0 0.0
  %3855 = vmatpush1.msra.mxu0 0.0
  %3856 = vmatprep.subr.mxu0 0.0
  %3857 = vmatpush1.msra.mxu0 %v50
  %3858 = vmatprep.subr.mxu0 0.0
  %3859 = vmatpush1.msra.mxu0 %v49
  %3860 = vmatprep.subr.mxu0 0.0
  %3861 = vmatpush2.msra.mxu0 0.0
  %3862 = vmatprep.subr.mxu0 0.0
  %3863 = vmatpush2.msra.mxu0 0.0
  %3864 = vmatprep.subr.mxu0 0.0
  %3865 = vmatpush2.msra.mxu0 0.0
  %3866 = vmatprep.subr.mxu0 0.0
  %3867 = vmatpush2.msra.mxu0 0.0
  %3868 = vmatprep.subr.mxu0 0.0
  %3869 = vmatpush2.msra.mxu0 0.0
  %3870 = vmatprep.subr.mxu0 0.0
  %3871 = vmatpush2.msra.mxu0 0.0
  %3872 = vmatprep.subr.mxu0 0.0
  %3873 = vmatpush2.msra.mxu0 0.0
  %3874 = vmatprep.subr.mxu0 0.0
  %3875 = vmatpush2.msra.mxu0 0.0
  %3876 = vmatprep.subr.mxu0 0.0
  %3877 = vmatpush2.msra.mxu0 0.0
  %3878 = vmatprep.subr.mxu0 0.0
  %3879 = vmatpush2.msra.mxu0 0.0
  %3880 = vmatprep.subr.mxu0 0.0
  %3881 = vmatpush2.msra.mxu0 0.0
  %3882 = vmatprep.subr.mxu0 0.0
  %3883 = vmatpush2.msra.mxu0 0.0
  %3884 = vmatprep.subr.mxu0 0.0
  %3885 = vmatpush2.msra.mxu0 0.0
  %3886 = vmatprep.subr.mxu0 0.0
  %3887 = vmatpush2.msra.mxu0 0.0
  %3888 = vmatprep.subr.mxu0 0.0
  %3889 = vmatpush2.msra.mxu0 0.0
  %3890 = vmatprep.subr.mxu0 0.0
  %3891 = vmatpush2.msra.mxu0 0.0
  %3892 = vmatprep.mubr.f32.mxu0 0.0
  %3893 = vmatmul.mubr.f32.gmra.mxu0 %v3755
  %v3894 = vpop.f32.mrf.mxu0
  %v3895 = vadd.f32 0.0, %v3894
  %v3896 = vpop.f32.mrf.mxu0
  %3897 = vdwg.mxu0
  %v3898 = vld [vmem:[%s215] sm:$0xff]
  %v3900 = vsel %vm217, %v3898, 0
  %v3903 = vsel %vm221, %v3895, 0
  %3905 = vmatprep.subr.mxu0 0.0
  %3906 = vmatpush1.msra.mxu0 0.0
  %3907 = vmatprep.subr.mxu0 0.0
  %3908 = vmatpush1.msra.mxu0 0.0
  %3909 = vmatprep.subr.mxu0 0.0
  %3910 = vmatpush1.msra.mxu0 0.0
  %3911 = vmatprep.subr.mxu0 0.0
  %3912 = vmatpush1.msra.mxu0 0.0
  %3913 = vmatprep.subr.mxu0 0.0
  %3914 = vmatpush1.msra.mxu0 0.0
  %3915 = vmatprep.subr.mxu0 0.0
  %3916 = vmatpush1.msra.mxu0 0.0
  %3917 = vmatprep.subr.mxu0 0.0
  %3918 = vmatpush1.msra.mxu0 0.0
  %3919 = vmatprep.subr.mxu0 0.0
  %3920 = vmatpush1.msra.mxu0 0.0
  %3921 = vmatprep.subr.mxu0 0.0
  %3922 = vmatpush1.msra.mxu0 0.0
  %3923 = vmatprep.subr.mxu0 0.0
  %3924 = vmatpush1.msra.mxu0 0.0
  %3925 = vmatprep.subr.mxu0 0.0
  %3926 = vmatpush1.msra.mxu0 0.0
  %3927 = vmatprep.subr.mxu0 0.0
  %3928 = vmatpush1.msra.mxu0 0.0
  %3929 = vmatprep.subr.mxu0 0.0
  %3930 = vmatpush1.msra.mxu0 0.0
  %3931 = vmatprep.subr.mxu0 0.0
  %3932 = vmatpush1.msra.mxu0 0.0
  %3933 = vmatprep.subr.mxu0 0.0
  %3934 = vmatpush1.msra.mxu0 0.0
  %3935 = vmatprep.subr.mxu0 0.0
  %3936 = vmatpush1.msra.mxu0 %v3903
  %3937 = vmatprep.subr.mxu0 0.0
  %3938 = vmatpush2.msra.mxu0 0.0
  %3939 = vmatprep.subr.mxu0 0.0
  %3940 = vmatpush2.msra.mxu0 0.0
  %3941 = vmatprep.subr.mxu0 0.0
  %3942 = vmatpush2.msra.mxu0 0.0
  %3943 = vmatprep.subr.mxu0 0.0
  %3944 = vmatpush2.msra.mxu0 0.0
  %3945 = vmatprep.subr.mxu0 0.0
  %3946 = vmatpush2.msra.mxu0 0.0
  %3947 = vmatprep.subr.mxu0 0.0
  %3948 = vmatpush2.msra.mxu0 0.0
  %3949 = vmatprep.subr.mxu0 0.0
  %3950 = vmatpush2.msra.mxu0 0.0
  %3951 = vmatprep.subr.mxu0 0.0
  %3952 = vmatpush2.msra.mxu0 0.0
  %3953 = vmatprep.subr.mxu0 0.0
  %3954 = vmatpush2.msra.mxu0 0.0
  %3955 = vmatprep.subr.mxu0 0.0
  %3956 = vmatpush2.msra.mxu0 0.0
  %3957 = vmatprep.subr.mxu0 0.0
  %3958 = vmatpush2.msra.mxu0 0.0
  %3959 = vmatprep.subr.mxu0 0.0
  %3960 = vmatpush2.msra.mxu0 0.0
  %3961 = vmatprep.subr.mxu0 0.0
  %3962 = vmatpush2.msra.mxu0 0.0
  %3963 = vmatprep.subr.mxu0 0.0
  %3964 = vmatpush2.msra.mxu0 0.0
  %3965 = vmatprep.subr.mxu0 0.0
  %3966 = vmatpush2.msra.mxu0 0.0
  %3967 = vmatprep.subr.mxu0 0.0
  %3968 = vmatpush2.msra.mxu0 0.0
  %3969 = vmatprep.mubr.f32.mxu0 0.0
  %3970 = vmatmul.mubr.f32.gmra.mxu0 %v3900
  %v3971 = vpop.f32.mrf.mxu0
  %v3972 = vadd.f32 0.0, %v3971
  %v3973 = vpop.f32.mrf.mxu0
  %3974 = vdwg.mxu0
  %v3976 = vsel %vm217, %v3827, 0
  %v3979 = vsel %vm221, %v3824, 0
  %3981 = vmatprep.subr.mxu0 0.0
  %3982 = vmatpush1.msra.mxu0 0.0
  %3983 = vmatprep.subr.mxu0 0.0
  %3984 = vmatpush1.msra.mxu0 0.0
  %3985 = vmatprep.subr.mxu0 0.0
  %3986 = vmatpush1.msra.mxu0 0.0
  %3987 = vmatprep.subr.mxu0 0.0
  %3988 = vmatpush1.msra.mxu0 0.0
  %3989 = vmatprep.subr.mxu0 0.0
  %3990 = vmatpush1.msra.mxu0 0.0
  %3991 = vmatprep.subr.mxu0 0.0
  %3992 = vmatpush1.msra.mxu0 0.0
  %3993 = vmatprep.subr.mxu0 0.0
  %3994 = vmatpush1.msra.mxu0 0.0
  %3995 = vmatprep.subr.mxu0 0.0
  %3996 = vmatpush1.msra.mxu0 0.0
  %3997 = vmatprep.subr.mxu0 0.0
  %3998 = vmatpush1.msra.mxu0 0.0
  %3999 = vmatprep.subr.mxu0 0.0
  %4000 = vmatpush1.msra.mxu0 0.0
  %4001 = vmatprep.subr.mxu0 0.0
  %4002 = vmatpush1.msra.mxu0 0.0
  %4003 = vmatprep.subr.mxu0 0.0
  %4004 = vmatpush1.msra.mxu0 0.0
  %4005 = vmatprep.subr.mxu0 0.0
  %4006 = vmatpush1.msra.mxu0 0.0
  %4007 = vmatprep.subr.mxu0 0.0
  %4008 = vmatpush1.msra.mxu0 0.0
  %4009 = vmatprep.subr.mxu0 0.0
  %4010 = vmatpush1.msra.mxu0 0.0
  %4011 = vmatprep.subr.mxu0 0.0
  %4012 = vmatpush1.msra.mxu0 %v3979
  %4013 = vmatprep.subr.mxu0 0.0
  %4014 = vmatpush2.msra.mxu0 0.0
  %4015 = vmatprep.subr.mxu0 0.0
  %4016 = vmatpush2.msra.mxu0 0.0
  %4017 = vmatprep.subr.mxu0 0.0
  %4018 = vmatpush2.msra.mxu0 0.0
  %4019 = vmatprep.subr.mxu0 0.0
  %4020 = vmatpush2.msra.mxu0 0.0
  %4021 = vmatprep.subr.mxu0 0.0
  %4022 = vmatpush2.msra.mxu0 0.0
  %4023 = vmatprep.subr.mxu0 0.0
  %4024 = vmatpush2.msra.mxu0 0.0
  %4025 = vmatprep.subr.mxu0 0.0
  %4026 = vmatpush2.msra.mxu0 0.0
  %4027 = vmatprep.subr.mxu0 0.0
  %4028 = vmatpush2.msra.mxu0 0.0
  %4029 = vmatprep.subr.mxu0 0.0
  %4030 = vmatpush2.msra.mxu0 0.0
  %4031 = vmatprep.subr.mxu0 0.0
  %4032 = vmatpush2.msra.mxu0 0.0
  %4033 = vmatprep.subr.mxu0 0.0
  %4034 = vmatpush2.msra.mxu0 0.0
  %4035 = vmatprep.subr.mxu0 0.0
  %4036 = vmatpush2.msra.mxu0 0.0
  %4037 = vmatprep.subr.mxu0 0.0
  %4038 = vmatpush2.msra.mxu0 0.0
  %4039 = vmatprep.subr.mxu0 0.0
  %4040 = vmatpush2.msra.mxu0 0.0
  %4041 = vmatprep.subr.mxu0 0.0
  %4042 = vmatpush2.msra.mxu0 0.0
  %4043 = vmatprep.subr.mxu0 0.0
  %4044 = vmatpush2.msra.mxu0 0.0
  %4045 = vmatprep.mubr.f32.mxu0 0.0
  %4046 = vmatmul.mubr.f32.gmra.mxu0 %v3976
  %v4047 = vpop.f32.mrf.mxu0
  %v4048 = vadd.f32 %v3972, %v4047
  %v4049 = vpop.f32.mrf.mxu0
  %4050 = vdwg.mxu0
  %4051 = vmatprep.subr.mxu0 0.0
  %4052 = vmatpush1.msra.mxu0 0.0
  %4053 = vmatprep.subr.mxu0 0.0
  %4054 = vmatpush1.msra.mxu0 0.0
  %4055 = vmatprep.subr.mxu0 0.0
  %4056 = vmatpush1.msra.mxu0 0.0
  %4057 = vmatprep.subr.mxu0 0.0
  %4058 = vmatpush1.msra.mxu0 0.0
  %4059 = vmatprep.subr.mxu0 0.0
  %4060 = vmatpush1.msra.mxu0 0.0
  %4061 = vmatprep.subr.mxu0 0.0
  %4062 = vmatpush1.msra.mxu0 0.0
  %4063 = vmatprep.subr.mxu0 0.0
  %4064 = vmatpush1.msra.mxu0 0.0
  %4065 = vmatprep.subr.mxu0 0.0
  %4066 = vmatpush1.msra.mxu0 0.0
  %4067 = vmatprep.subr.mxu0 0.0
  %4068 = vmatpush1.msra.mxu0 0.0
  %4069 = vmatprep.subr.mxu0 0.0
  %4070 = vmatpush1.msra.mxu0 0.0
  %4071 = vmatprep.subr.mxu0 0.0
  %4072 = vmatpush1.msra.mxu0 0.0
  %4073 = vmatprep.subr.mxu0 0.0
  %4074 = vmatpush1.msra.mxu0 0.0
  %4075 = vmatprep.subr.mxu0 0.0
  %4076 = vmatpush1.msra.mxu0 0.0
  %4077 = vmatprep.subr.mxu0 0.0
  %4078 = vmatpush1.msra.mxu0 0.0
  %4079 = vmatprep.subr.mxu0 0.0
  %4080 = vmatpush1.msra.mxu0 %v57
  %4081 = vmatprep.subr.mxu0 0.0
  %4082 = vmatpush1.msra.mxu0 %v56
  %4083 = vmatprep.subr.mxu0 0.0
  %4084 = vmatpush2.msra.mxu0 0.0
  %4085 = vmatprep.subr.mxu0 0.0
  %4086 = vmatpush2.msra.mxu0 0.0
  %4087 = vmatprep.subr.mxu0 0.0
  %4088 = vmatpush2.msra.mxu0 0.0
  %4089 = vmatprep.subr.mxu0 0.0
  %4090 = vmatpush2.msra.mxu0 0.0
  %4091 = vmatprep.subr.mxu0 0.0
  %4092 = vmatpush2.msra.mxu0 0.0
  %4093 = vmatprep.subr.mxu0 0.0
  %4094 = vmatpush2.msra.mxu0 0.0
  %4095 = vmatprep.subr.mxu0 0.0
  %4096 = vmatpush2.msra.mxu0 0.0
  %4097 = vmatprep.subr.mxu0 0.0
  %4098 = vmatpush2.msra.mxu0 0.0
  %4099 = vmatprep.subr.mxu0 0.0
  %4100 = vmatpush2.msra.mxu0 0.0
  %4101 = vmatprep.subr.mxu0 0.0
  %4102 = vmatpush2.msra.mxu0 0.0
  %4103 = vmatprep.subr.mxu0 0.0
  %4104 = vmatpush2.msra.mxu0 0.0
  %4105 = vmatprep.subr.mxu0 0.0
  %4106 = vmatpush2.msra.mxu0 0.0
  %4107 = vmatprep.subr.mxu0 0.0
  %4108 = vmatpush2.msra.mxu0 0.0
  %4109 = vmatprep.subr.mxu0 0.0
  %4110 = vmatpush2.msra.mxu0 0.0
  %4111 = vmatprep.subr.mxu0 0.0
  %4112 = vmatpush2.msra.mxu0 0.0
  %4113 = vmatprep.subr.mxu0 0.0
  %4114 = vmatpush2.msra.mxu0 0.0
  %4115 = vmatprep.mubr.f32.mxu0 0.0
  %4116 = vmatmul.mubr.f32.gmra.mxu0 %v3755
  %v4117 = vpop.f32.mrf.mxu0
  %v4118 = vadd.f32 0.0, %v4117
  %v4119 = vpop.f32.mrf.mxu0
  %4120 = vdwg.mxu0
  %v4121 = vld [vmem:[%s441] sm:$0xff]
  %v4123 = vsel %vm217, %v4121, 0
  %v4126 = vsel %vm221, %v4118, 0
  %4128 = vmatprep.subr.mxu0 0.0
  %4129 = vmatpush1.msra.mxu0 0.0
  %4130 = vmatprep.subr.mxu0 0.0
  %4131 = vmatpush1.msra.mxu0 0.0
  %4132 = vmatprep.subr.mxu0 0.0
  %4133 = vmatpush1.msra.mxu0 0.0
  %4134 = vmatprep.subr.mxu0 0.0
  %4135 = vmatpush1.msra.mxu0 0.0
  %4136 = vmatprep.subr.mxu0 0.0
  %4137 = vmatpush1.msra.mxu0 0.0
  %4138 = vmatprep.subr.mxu0 0.0
  %4139 = vmatpush1.msra.mxu0 0.0
  %4140 = vmatprep.subr.mxu0 0.0
  %4141 = vmatpush1.msra.mxu0 0.0
  %4142 = vmatprep.subr.mxu0 0.0
  %4143 = vmatpush1.msra.mxu0 0.0
  %4144 = vmatprep.subr.mxu0 0.0
  %4145 = vmatpush1.msra.mxu0 0.0
  %4146 = vmatprep.subr.mxu0 0.0
  %4147 = vmatpush1.msra.mxu0 0.0
  %4148 = vmatprep.subr.mxu0 0.0
  %4149 = vmatpush1.msra.mxu0 0.0
  %4150 = vmatprep.subr.mxu0 0.0
  %4151 = vmatpush1.msra.mxu0 0.0
  %4152 = vmatprep.subr.mxu0 0.0
  %4153 = vmatpush1.msra.mxu0 0.0
  %4154 = vmatprep.subr.mxu0 0.0
  %4155 = vmatpush1.msra.mxu0 0.0
  %4156 = vmatprep.subr.mxu0 0.0
  %4157 = vmatpush1.msra.mxu0 0.0
  %4158 = vmatprep.subr.mxu0 0.0
  %4159 = vmatpush1.msra.mxu0 %v4126
  %4160 = vmatprep.subr.mxu0 0.0
  %4161 = vmatpush2.msra.mxu0 0.0
  %4162 = vmatprep.subr.mxu0 0.0
  %4163 = vmatpush2.msra.mxu0 0.0
  %4164 = vmatprep.subr.mxu0 0.0
  %4165 = vmatpush2.msra.mxu0 0.0
  %4166 = vmatprep.subr.mxu0 0.0
  %4167 = vmatpush2.msra.mxu0 0.0
  %4168 = vmatprep.subr.mxu0 0.0
  %4169 = vmatpush2.msra.mxu0 0.0
  %4170 = vmatprep.subr.mxu0 0.0
  %4171 = vmatpush2.msra.mxu0 0.0
  %4172 = vmatprep.subr.mxu0 0.0
  %4173 = vmatpush2.msra.mxu0 0.0
  %4174 = vmatprep.subr.mxu0 0.0
  %4175 = vmatpush2.msra.mxu0 0.0
  %4176 = vmatprep.subr.mxu0 0.0
  %4177 = vmatpush2.msra.mxu0 0.0
  %4178 = vmatprep.subr.mxu0 0.0
  %4179 = vmatpush2.msra.mxu0 0.0
  %4180 = vmatprep.subr.mxu0 0.0
  %4181 = vmatpush2.msra.mxu0 0.0
  %4182 = vmatprep.subr.mxu0 0.0
  %4183 = vmatpush2.msra.mxu0 0.0
  %4184 = vmatprep.subr.mxu0 0.0
  %4185 = vmatpush2.msra.mxu0 0.0
  %4186 = vmatprep.subr.mxu0 0.0
  %4187 = vmatpush2.msra.mxu0 0.0
  %4188 = vmatprep.subr.mxu0 0.0
  %4189 = vmatpush2.msra.mxu0 0.0
  %4190 = vmatprep.subr.mxu0 0.0
  %4191 = vmatpush2.msra.mxu0 0.0
  %4192 = vmatprep.mubr.f32.mxu0 0.0
  %4193 = vmatmul.mubr.f32.gmra.mxu0 %v4123
  %v4194 = vpop.f32.mrf.mxu0
  %v4195 = vadd.f32 0.0, %v4194
  %v4196 = vpop.f32.mrf.mxu0
  %4197 = vdwg.mxu0
  %v4198 = vadd.f32 %v4048, %v4195
  %v4199 = vld [vmem:[%s2] sm:$0xff]
  %4201 = vset.pattern.permute.xlu0 0
  %4202 = vperm.xlu0 %4201, %v4199
  %v4203 = vpop.permute.xlu0 %4202
  %v4205 = vadd.f32 %v4198, %v4203
  %v4206 = vmax.f32 %v4205, 0.0
  %v4208 = vsel %vm528, %v4206, 0
  %4210 = vmatprep.subr.mxu0 0.0
  %4211 = vmatpush1.msra.mxu0 0.0
  %4212 = vmatprep.subr.mxu0 0.0
  %4213 = vmatpush1.msra.mxu0 0.0
  %4214 = vmatprep.subr.mxu0 0.0
  %4215 = vmatpush1.msra.mxu0 0.0
  %4216 = vmatprep.subr.mxu0 0.0
  %4217 = vmatpush1.msra.mxu0 0.0
  %4218 = vmatprep.subr.mxu0 0.0
  %4219 = vmatpush1.msra.mxu0 0.0
  %4220 = vmatprep.subr.mxu0 0.0
  %4221 = vmatpush1.msra.mxu0 0.0
  %4222 = vmatprep.subr.mxu0 0.0
  %4223 = vmatpush1.msra.mxu0 0.0
  %4224 = vmatprep.subr.mxu0 0.0
  %4225 = vmatpush1.msra.mxu0 0.0
  %4226 = vmatprep.subr.mxu0 0.0
  %4227 = vmatpush1.msra.mxu0 0.0
  %4228 = vmatprep.subr.mxu0 0.0
  %4229 = vmatpush1.msra.mxu0 0.0
  %4230 = vmatprep.subr.mxu0 0.0
  %4231 = vmatpush1.msra.mxu0 0.0
  %4232 = vmatprep.subr.mxu0 0.0
  %4233 = vmatpush1.msra.mxu0 0.0
  %4234 = vmatprep.subr.mxu0 0.0
  %4235 = vmatpush1.msra.mxu0 0.0
  %4236 = vmatprep.subr.mxu0 0.0
  %4237 = vmatpush1.msra.mxu0 0.0
  %4238 = vmatprep.subr.mxu0 0.0
  %4239 = vmatpush1.msra.mxu0 0.0
  %4240 = vmatprep.subr.mxu0 0.0
  %4241 = vmatpush1.msra.mxu0 %v43
  %4242 = vmatprep.subr.mxu0 0.0
  %4243 = vmatpush2.msra.mxu0 0.0
  %4244 = vmatprep.subr.mxu0 0.0
  %4245 = vmatpush2.msra.mxu0 0.0
  %4246 = vmatprep.subr.mxu0 0.0
  %4247 = vmatpush2.msra.mxu0 0.0
  %4248 = vmatprep.subr.mxu0 0.0
  %4249 = vmatpush2.msra.mxu0 0.0
  %4250 = vmatprep.subr.mxu0 0.0
  %4251 = vmatpush2.msra.mxu0 0.0
  %4252 = vmatprep.subr.mxu0 0.0
  %4253 = vmatpush2.msra.mxu0 0.0
  %4254 = vmatprep.subr.mxu0 0.0
  %4255 = vmatpush2.msra.mxu0 0.0
  %4256 = vmatprep.subr.mxu0 0.0
  %4257 = vmatpush2.msra.mxu0 0.0
  %4258 = vmatprep.subr.mxu0 0.0
  %4259 = vmatpush2.msra.mxu0 0.0
  %4260 = vmatprep.subr.mxu0 0.0
  %4261 = vmatpush2.msra.mxu0 0.0
  %4262 = vmatprep.subr.mxu0 0.0
  %4263 = vmatpush2.msra.mxu0 0.0
  %4264 = vmatprep.subr.mxu0 0.0
  %4265 = vmatpush2.msra.mxu0 0.0
  %4266 = vmatprep.subr.mxu0 0.0
  %4267 = vmatpush2.msra.mxu0 0.0
  %4268 = vmatprep.subr.mxu0 0.0
  %4269 = vmatpush2.msra.mxu0 0.0
  %4270 = vmatprep.subr.mxu0 0.0
  %4271 = vmatpush2.msra.mxu0 0.0
  %4272 = vmatprep.subr.mxu0 0.0
  %4273 = vmatpush2.msra.mxu0 0.0
  %4274 = vmatprep.mubr.f32.mxu0 0.0
  %4275 = vmatmul.mubr.f32.gmra.mxu0 %v4208
  %v4276 = vpop.f32.mrf.mxu0
  %v4277 = vadd.f32 0.0, %v4276
  %v4278 = vpop.f32.mrf.mxu0
  %4279 = vdwg.mxu0
  %v4280 = vld [vmem:[%s3] sm:$0xff]
  %v4281 = vld [vmem:[%s3 + $0x8] sm:$0xff]
  %4282 = vmatprep.subr.mxu0 0.0
  %4283 = vmatpush1.msra.mxu0 0.0
  %4284 = vmatprep.subr.mxu0 0.0
  %4285 = vmatpush1.msra.mxu0 0.0
  %4286 = vmatprep.subr.mxu0 0.0
  %4287 = vmatpush1.msra.mxu0 0.0
  %4288 = vmatprep.subr.mxu0 0.0
  %4289 = vmatpush1.msra.mxu0 0.0
  %4290 = vmatprep.subr.mxu0 0.0
  %4291 = vmatpush1.msra.mxu0 0.0
  %4292 = vmatprep.subr.mxu0 0.0
  %4293 = vmatpush1.msra.mxu0 0.0
  %4294 = vmatprep.subr.mxu0 0.0
  %4295 = vmatpush1.msra.mxu0 0.0
  %4296 = vmatprep.subr.mxu0 0.0
  %4297 = vmatpush1.msra.mxu0 0.0
  %4298 = vmatprep.subr.mxu0 0.0
  %4299 = vmatpush1.msra.mxu0 0.0
  %4300 = vmatprep.subr.mxu0 0.0
  %4301 = vmatpush1.msra.mxu0 0.0
  %4302 = vmatprep.subr.mxu0 0.0
  %4303 = vmatpush1.msra.mxu0 0.0
  %4304 = vmatprep.subr.mxu0 0.0
  %4305 = vmatpush1.msra.mxu0 0.0
  %4306 = vmatprep.subr.mxu0 0.0
  %4307 = vmatpush1.msra.mxu0 0.0
  %4308 = vmatprep.subr.mxu0 0.0
  %4309 = vmatpush1.msra.mxu0 0.0
  %4310 = vmatprep.subr.mxu0 0.0
  %4311 = vmatpush1.msra.mxu0 0.0
  %4312 = vmatprep.subr.mxu0 0.0
  %4313 = vmatpush1.msra.mxu0 %v49
  %4314 = vmatprep.subr.mxu0 0.0
  %4315 = vmatpush2.msra.mxu0 0.0
  %4316 = vmatprep.subr.mxu0 0.0
  %4317 = vmatpush2.msra.mxu0 0.0
  %4318 = vmatprep.subr.mxu0 0.0
  %4319 = vmatpush2.msra.mxu0 0.0
  %4320 = vmatprep.subr.mxu0 0.0
  %4321 = vmatpush2.msra.mxu0 0.0
  %4322 = vmatprep.subr.mxu0 0.0
  %4323 = vmatpush2.msra.mxu0 0.0
  %4324 = vmatprep.subr.mxu0 0.0
  %4325 = vmatpush2.msra.mxu0 0.0
  %4326 = vmatprep.subr.mxu0 0.0
  %4327 = vmatpush2.msra.mxu0 0.0
  %4328 = vmatprep.subr.mxu0 0.0
  %4329 = vmatpush2.msra.mxu0 0.0
  %4330 = vmatprep.subr.mxu0 0.0
  %4331 = vmatpush2.msra.mxu0 0.0
  %4332 = vmatprep.subr.mxu0 0.0
  %4333 = vmatpush2.msra.mxu0 0.0
  %4334 = vmatprep.subr.mxu0 0.0
  %4335 = vmatpush2.msra.mxu0 0.0
  %4336 = vmatprep.subr.mxu0 0.0
  %4337 = vmatpush2.msra.mxu0 0.0
  %4338 = vmatprep.subr.mxu0 0.0
  %4339 = vmatpush2.msra.mxu0 0.0
  %4340 = vmatprep.subr.mxu0 0.0
  %4341 = vmatpush2.msra.mxu0 0.0
  %4342 = vmatprep.subr.mxu0 0.0
  %4343 = vmatpush2.msra.mxu0 0.0
  %4344 = vmatprep.subr.mxu0 0.0
  %4345 = vmatpush2.msra.mxu0 0.0
  %4346 = vmatprep.mubr.f32.mxu0 0.0
  %4347 = vmatmul.mubr.f32.gmra.mxu0 %v4208
  %v4348 = vpop.f32.mrf.mxu0
  %v4349 = vadd.f32 0.0, %v4348
  %v4350 = vpop.f32.mrf.mxu0
  %4351 = vdwg.mxu0
  %v4352 = vld [vmem:[%s674] sm:$0xff]
  %v4353 = vld [vmem:[%s674 + $0x8] sm:$0xff]
  %v4355 = vsel %vm528, %v4352, 0
  %v4358 = vsel %vm528, %v4353, 0
  %4360 = vmatprep.subr.mxu0 0.0
  %4361 = vmatpush1.msra.mxu0 0.0
  %4362 = vmatprep.subr.mxu0 0.0
  %4363 = vmatpush1.msra.mxu0 0.0
  %4364 = vmatprep.subr.mxu0 0.0
  %4365 = vmatpush1.msra.mxu0 0.0
  %4366 = vmatprep.subr.mxu0 0.0
  %4367 = vmatpush1.msra.mxu0 0.0
  %4368 = vmatprep.subr.mxu0 0.0
  %4369 = vmatpush1.msra.mxu0 0.0
  %4370 = vmatprep.subr.mxu0 0.0
  %4371 = vmatpush1.msra.mxu0 0.0
  %4372 = vmatprep.subr.mxu0 0.0
  %4373 = vmatpush1.msra.mxu0 0.0
  %4374 = vmatprep.subr.mxu0 0.0
  %4375 = vmatpush1.msra.mxu0 0.0
  %4376 = vmatprep.subr.mxu0 0.0
  %4377 = vmatpush1.msra.mxu0 0.0
  %4378 = vmatprep.subr.mxu0 0.0
  %4379 = vmatpush1.msra.mxu0 0.0
  %4380 = vmatprep.subr.mxu0 0.0
  %4381 = vmatpush1.msra.mxu0 0.0
  %4382 = vmatprep.subr.mxu0 0.0
  %4383 = vmatpush1.msra.mxu0 0.0
  %4384 = vmatprep.subr.mxu0 0.0
  %4385 = vmatpush1.msra.mxu0 0.0
  %4386 = vmatprep.subr.mxu0 0.0
  %4387 = vmatpush1.msra.mxu0 0.0
  %4388 = vmatprep.subr.mxu0 0.0
  %4389 = vmatpush1.msra.mxu0 0.0
  %4390 = vmatprep.subr.mxu0 0.0
  %4391 = vmatpush1.msra.mxu0 %v4349
  %4392 = vmatprep.subr.mxu0 0.0
  %4393 = vmatpush2.msra.mxu0 0.0
  %4394 = vmatprep.subr.mxu0 0.0
  %4395 = vmatpush2.msra.mxu0 0.0
  %4396 = vmatprep.subr.mxu0 0.0
  %4397 = vmatpush2.msra.mxu0 0.0
  %4398 = vmatprep.subr.mxu0 0.0
  %4399 = vmatpush2.msra.mxu0 0.0
  %4400 = vmatprep.subr.mxu0 0.0
  %4401 = vmatpush2.msra.mxu0 0.0
  %4402 = vmatprep.subr.mxu0 0.0
  %4403 = vmatpush2.msra.mxu0 0.0
  %4404 = vmatprep.subr.mxu0 0.0
  %4405 = vmatpush2.msra.mxu0 0.0
  %4406 = vmatprep.subr.mxu0 0.0
  %4407 = vmatpush2.msra.mxu0 0.0
  %4408 = vmatprep.subr.mxu0 0.0
  %4409 = vmatpush2.msra.mxu0 0.0
  %4410 = vmatprep.subr.mxu0 0.0
  %4411 = vmatpush2.msra.mxu0 0.0
  %4412 = vmatprep.subr.mxu0 0.0
  %4413 = vmatpush2.msra.mxu0 0.0
  %4414 = vmatprep.subr.mxu0 0.0
  %4415 = vmatpush2.msra.mxu0 0.0
  %4416 = vmatprep.subr.mxu0 0.0
  %4417 = vmatpush2.msra.mxu0 0.0
  %4418 = vmatprep.subr.mxu0 0.0
  %4419 = vmatpush2.msra.mxu0 0.0
  %4420 = vmatprep.subr.mxu0 0.0
  %4421 = vmatpush2.msra.mxu0 0.0
  %4422 = vmatprep.subr.mxu0 0.0
  %4423 = vmatpush2.msra.mxu0 0.0
  %4424 = vmatprep.mubr.f32.mxu0 0.0
  %4425 = vmatmul.mubr.f32.gmra.mxu0 %v4355
  %v4426 = vpop.f32.mrf.mxu0
  %v4427 = vadd.f32 0.0, %v4426
  %v4428 = vpop.f32.mrf.mxu0
  %4429 = vmatprep.mubr.f32.mxu0 0.0
  %4430 = vmatmul.mubr.f32.gmra.mxu0 %v4358
  %v4431 = vpop.f32.mrf.mxu0
  %v4432 = vadd.f32 0.0, %v4431
  %v4433 = vpop.f32.mrf.mxu0
  %4434 = vdwg.mxu0
  %v4436 = vsel %vm528, %v4280, 0
  %v4439 = vsel %vm528, %v4281, 0
  %4441 = vmatprep.subr.mxu0 0.0
  %4442 = vmatpush1.msra.mxu0 0.0
  %4443 = vmatprep.subr.mxu0 0.0
  %4444 = vmatpush1.msra.mxu0 0.0
  %4445 = vmatprep.subr.mxu0 0.0
  %4446 = vmatpush1.msra.mxu0 0.0
  %4447 = vmatprep.subr.mxu0 0.0
  %4448 = vmatpush1.msra.mxu0 0.0
  %4449 = vmatprep.subr.mxu0 0.0
  %4450 = vmatpush1.msra.mxu0 0.0
  %4451 = vmatprep.subr.mxu0 0.0
  %4452 = vmatpush1.msra.mxu0 0.0
  %4453 = vmatprep.subr.mxu0 0.0
  %4454 = vmatpush1.msra.mxu0 0.0
  %4455 = vmatprep.subr.mxu0 0.0
  %4456 = vmatpush1.msra.mxu0 0.0
  %4457 = vmatprep.subr.mxu0 0.0
  %4458 = vmatpush1.msra.mxu0 0.0
  %4459 = vmatprep.subr.mxu0 0.0
  %4460 = vmatpush1.msra.mxu0 0.0
  %4461 = vmatprep.subr.mxu0 0.0
  %4462 = vmatpush1.msra.mxu0 0.0
  %4463 = vmatprep.subr.mxu0 0.0
  %4464 = vmatpush1.msra.mxu0 0.0
  %4465 = vmatprep.subr.mxu0 0.0
  %4466 = vmatpush1.msra.mxu0 0.0
  %4467 = vmatprep.subr.mxu0 0.0
  %4468 = vmatpush1.msra.mxu0 0.0
  %4469 = vmatprep.subr.mxu0 0.0
  %4470 = vmatpush1.msra.mxu0 0.0
  %4471 = vmatprep.subr.mxu0 0.0
  %4472 = vmatpush1.msra.mxu0 %v4277
  %4473 = vmatprep.subr.mxu0 0.0
  %4474 = vmatpush2.msra.mxu0 0.0
  %4475 = vmatprep.subr.mxu0 0.0
  %4476 = vmatpush2.msra.mxu0 0.0
  %4477 = vmatprep.subr.mxu0 0.0
  %4478 = vmatpush2.msra.mxu0 0.0
  %4479 = vmatprep.subr.mxu0 0.0
  %4480 = vmatpush2.msra.mxu0 0.0
  %4481 = vmatprep.subr.mxu0 0.0
  %4482 = vmatpush2.msra.mxu0 0.0
  %4483 = vmatprep.subr.mxu0 0.0
  %4484 = vmatpush2.msra.mxu0 0.0
  %4485 = vmatprep.subr.mxu0 0.0
  %4486 = vmatpush2.msra.mxu0 0.0
  %4487 = vmatprep.subr.mxu0 0.0
  %4488 = vmatpush2.msra.mxu0 0.0
  %4489 = vmatprep.subr.mxu0 0.0
  %4490 = vmatpush2.msra.mxu0 0.0
  %4491 = vmatprep.subr.mxu0 0.0
  %4492 = vmatpush2.msra.mxu0 0.0
  %4493 = vmatprep.subr.mxu0 0.0
  %4494 = vmatpush2.msra.mxu0 0.0
  %4495 = vmatprep.subr.mxu0 0.0
  %4496 = vmatpush2.msra.mxu0 0.0
  %4497 = vmatprep.subr.mxu0 0.0
  %4498 = vmatpush2.msra.mxu0 0.0
  %4499 = vmatprep.subr.mxu0 0.0
  %4500 = vmatpush2.msra.mxu0 0.0
  %4501 = vmatprep.subr.mxu0 0.0
  %4502 = vmatpush2.msra.mxu0 0.0
  %4503 = vmatprep.subr.mxu0 0.0
  %4504 = vmatpush2.msra.mxu0 0.0
  %4505 = vmatprep.mubr.f32.mxu0 0.0
  %4506 = vmatmul.mubr.f32.gmra.mxu0 %v4436
  %v4507 = vpop.f32.mrf.mxu0
  %v4508 = vadd.f32 %v4427, %v4507
  %v4509 = vpop.f32.mrf.mxu0
  %4510 = vmatprep.mubr.f32.mxu0 0.0
  %4511 = vmatmul.mubr.f32.gmra.mxu0 %v4439
  %v4512 = vpop.f32.mrf.mxu0
  %v4513 = vadd.f32 %v4432, %v4512
  %v4514 = vpop.f32.mrf.mxu0
  %4515 = vdwg.mxu0
  %4516 = vmatprep.subr.mxu0 0.0
  %4517 = vmatpush1.msra.mxu0 0.0
  %4518 = vmatprep.subr.mxu0 0.0
  %4519 = vmatpush1.msra.mxu0 0.0
  %4520 = vmatprep.subr.mxu0 0.0
  %4521 = vmatpush1.msra.mxu0 0.0
  %4522 = vmatprep.subr.mxu0 0.0
  %4523 = vmatpush1.msra.mxu0 0.0
  %4524 = vmatprep.subr.mxu0 0.0
  %4525 = vmatpush1.msra.mxu0 0.0
  %4526 = vmatprep.subr.mxu0 0.0
  %4527 = vmatpush1.msra.mxu0 0.0
  %4528 = vmatprep.subr.mxu0 0.0
  %4529 = vmatpush1.msra.mxu0 0.0
  %4530 = vmatprep.subr.mxu0 0.0
  %4531 = vmatpush1.msra.mxu0 0.0
  %4532 = vmatprep.subr.mxu0 0.0
  %4533 = vmatpush1.msra.mxu0 0.0
  %4534 = vmatprep.subr.mxu0 0.0
  %4535 = vmatpush1.msra.mxu0 0.0
  %4536 = vmatprep.subr.mxu0 0.0
  %4537 = vmatpush1.msra.mxu0 0.0
  %4538 = vmatprep.subr.mxu0 0.0
  %4539 = vmatpush1.msra.mxu0 0.0
  %4540 = vmatprep.subr.mxu0 0.0
  %4541 = vmatpush1.msra.mxu0 0.0
  %4542 = vmatprep.subr.mxu0 0.0
  %4543 = vmatpush1.msra.mxu0 0.0
  %4544 = vmatprep.subr.mxu0 0.0
  %4545 = vmatpush1.msra.mxu0 0.0
  %4546 = vmatprep.subr.mxu0 0.0
  %4547 = vmatpush1.msra.mxu0 %v56
  %4548 = vmatprep.subr.mxu0 0.0
  %4549 = vmatpush2.msra.mxu0 0.0
  %4550 = vmatprep.subr.mxu0 0.0
  %4551 = vmatpush2.msra.mxu0 0.0
  %4552 = vmatprep.subr.mxu0 0.0
  %4553 = vmatpush2.msra.mxu0 0.0
  %4554 = vmatprep.subr.mxu0 0.0
  %4555 = vmatpush2.msra.mxu0 0.0
  %4556 = vmatprep.subr.mxu0 0.0
  %4557 = vmatpush2.msra.mxu0 0.0
  %4558 = vmatprep.subr.mxu0 0.0
  %4559 = vmatpush2.msra.mxu0 0.0
  %4560 = vmatprep.subr.mxu0 0.0
  %4561 = vmatpush2.msra.mxu0 0.0
  %4562 = vmatprep.subr.mxu0 0.0
  %4563 = vmatpush2.msra.mxu0 0.0
  %4564 = vmatprep.subr.mxu0 0.0
  %4565 = vmatpush2.msra.mxu0 0.0
  %4566 = vmatprep.subr.mxu0 0.0
  %4567 = vmatpush2.msra.mxu0 0.0
  %4568 = vmatprep.subr.mxu0 0.0
  %4569 = vmatpush2.msra.mxu0 0.0
  %4570 = vmatprep.subr.mxu0 0.0
  %4571 = vmatpush2.msra.mxu0 0.0
  %4572 = vmatprep.subr.mxu0 0.0
  %4573 = vmatpush2.msra.mxu0 0.0
  %4574 = vmatprep.subr.mxu0 0.0
  %4575 = vmatpush2.msra.mxu0 0.0
  %4576 = vmatprep.subr.mxu0 0.0
  %4577 = vmatpush2.msra.mxu0 0.0
  %4578 = vmatprep.subr.mxu0 0.0
  %4579 = vmatpush2.msra.mxu0 0.0
  %4580 = vmatprep.mubr.f32.mxu0 0.0
  %4581 = vmatmul.mubr.f32.gmra.mxu0 %v4208
  %v4582 = vpop.f32.mrf.mxu0
  %v4583 = vadd.f32 0.0, %v4582
  %v4584 = vpop.f32.mrf.mxu0
  %4585 = vdwg.mxu0
  %v4586 = vld [vmem:[%s909] sm:$0xff]
  %v4587 = vld [vmem:[%s909 + $0x8] sm:$0xff]
  %v4589 = vsel %vm528, %v4586, 0
  %v4592 = vsel %vm528, %v4587, 0
  %4594 = vmatprep.subr.mxu0 0.0
  %4595 = vmatpush1.msra.mxu0 0.0
  %4596 = vmatprep.subr.mxu0 0.0
  %4597 = vmatpush1.msra.mxu0 0.0
  %4598 = vmatprep.subr.mxu0 0.0
  %4599 = vmatpush1.msra.mxu0 0.0
  %4600 = vmatprep.subr.mxu0 0.0
  %4601 = vmatpush1.msra.mxu0 0.0
  %4602 = vmatprep.subr.mxu0 0.0
  %4603 = vmatpush1.msra.mxu0 0.0
  %4604 = vmatprep.subr.mxu0 0.0
  %4605 = vmatpush1.msra.mxu0 0.0
  %4606 = vmatprep.subr.mxu0 0.0
  %4607 = vmatpush1.msra.mxu0 0.0
  %4608 = vmatprep.subr.mxu0 0.0
  %4609 = vmatpush1.msra.mxu0 0.0
  %4610 = vmatprep.subr.mxu0 0.0
  %4611 = vmatpush1.msra.mxu0 0.0
  %4612 = vmatprep.subr.mxu0 0.0
  %4613 = vmatpush1.msra.mxu0 0.0
  %4614 = vmatprep.subr.mxu0 0.0
  %4615 = vmatpush1.msra.mxu0 0.0
  %4616 = vmatprep.subr.mxu0 0.0
  %4617 = vmatpush1.msra.mxu0 0.0
  %4618 = vmatprep.subr.mxu0 0.0
  %4619 = vmatpush1.msra.mxu0 0.0
  %4620 = vmatprep.subr.mxu0 0.0
  %4621 = vmatpush1.msra.mxu0 0.0
  %4622 = vmatprep.subr.mxu0 0.0
  %4623 = vmatpush1.msra.mxu0 0.0
  %4624 = vmatprep.subr.mxu0 0.0
  %4625 = vmatpush1.msra.mxu0 %v4583
  %4626 = vmatprep.subr.mxu0 0.0
  %4627 = vmatpush2.msra.mxu0 0.0
  %4628 = vmatprep.subr.mxu0 0.0
  %4629 = vmatpush2.msra.mxu0 0.0
  %4630 = vmatprep.subr.mxu0 0.0
  %4631 = vmatpush2.msra.mxu0 0.0
  %4632 = vmatprep.subr.mxu0 0.0
  %4633 = vmatpush2.msra.mxu0 0.0
  %4634 = vmatprep.subr.mxu0 0.0
  %4635 = vmatpush2.msra.mxu0 0.0
  %4636 = vmatprep.subr.mxu0 0.0
  %4637 = vmatpush2.msra.mxu0 0.0
  %4638 = vmatprep.subr.mxu0 0.0
  %4639 = vmatpush2.msra.mxu0 0.0
  %4640 = vmatprep.subr.mxu0 0.0
  %4641 = vmatpush2.msra.mxu0 0.0
  %4642 = vmatprep.subr.mxu0 0.0
  %4643 = vmatpush2.msra.mxu0 0.0
  %4644 = vmatprep.subr.mxu0 0.0
  %4645 = vmatpush2.msra.mxu0 0.0
  %4646 = vmatprep.subr.mxu0 0.0
  %4647 = vmatpush2.msra.mxu0 0.0
  %4648 = vmatprep.subr.mxu0 0.0
  %4649 = vmatpush2.msra.mxu0 0.0
  %4650 = vmatprep.subr.mxu0 0.0
  %4651 = vmatpush2.msra.mxu0 0.0
  %4652 = vmatprep.subr.mxu0 0.0
  %4653 = vmatpush2.msra.mxu0 0.0
  %4654 = vmatprep.subr.mxu0 0.0
  %4655 = vmatpush2.msra.mxu0 0.0
  %4656 = vmatprep.subr.mxu0 0.0
  %4657 = vmatpush2.msra.mxu0 0.0
  %4658 = vmatprep.mubr.f32.mxu0 0.0
  %4659 = vmatmul.mubr.f32.gmra.mxu0 %v4589
  %v4660 = vpop.f32.mrf.mxu0
  %v4661 = vadd.f32 0.0, %v4660
  %v4662 = vpop.f32.mrf.mxu0
  %4663 = vmatprep.mubr.f32.mxu0 0.0
  %4664 = vmatmul.mubr.f32.gmra.mxu0 %v4592
  %v4665 = vpop.f32.mrf.mxu0
  %v4666 = vadd.f32 0.0, %v4665
  %v4667 = vpop.f32.mrf.mxu0
  %4668 = vdwg.mxu0
  %v4669 = vadd.f32 %v4508, %v4661
  %v4670 = vadd.f32 %v4513, %v4666
  %v4671 = vld [vmem:[%s4] sm:$0xff]
  %v4672 = vld [vmem:[%s4 + $0x8] sm:$0xff]
  %4674 = vset.pattern.permute.xlu0 0
  %4675 = vperm.xlu0 %4674, %v4671
  %v4676 = vpop.permute.xlu0 %4675
  %4679 = vset.pattern.permute.xlu0 0
  %4680 = vperm.xlu0 %4679, %v4672
  %v4681 = vpop.permute.xlu0 %4680
  %v4683 = vadd.f32 %v4669, %v4676
  %v4684 = vadd.f32 %v4670, %v4681
  %v4685 = vmax.f32 %v4683, 0.0
  %v4686 = vmax.f32 %v4684, 0.0
  %v4688 = vsel %vm217, %v4685, 0
  %v4691 = vsel %vm217, %v4686, 0
  %4693 = vmatprep.subr.mxu0 0.0
  %4694 = vmatpush1.msra.mxu0 0.0
  %4695 = vmatprep.subr.mxu0 0.0
  %4696 = vmatpush1.msra.mxu0 0.0
  %4697 = vmatprep.subr.mxu0 0.0
  %4698 = vmatpush1.msra.mxu0 0.0
  %4699 = vmatprep.subr.mxu0 0.0
  %4700 = vmatpush1.msra.mxu0 0.0
  %4701 = vmatprep.subr.mxu0 0.0
  %4702 = vmatpush1.msra.mxu0 0.0
  %4703 = vmatprep.subr.mxu0 0.0
  %4704 = vmatpush1.msra.mxu0 0.0
  %4705 = vmatprep.subr.mxu0 0.0
  %4706 = vmatpush1.msra.mxu0 0.0
  %4707 = vmatprep.subr.mxu0 0.0
  %4708 = vmatpush1.msra.mxu0 0.0
  %4709 = vmatprep.subr.mxu0 0.0
  %4710 = vmatpush1.msra.mxu0 0.0
  %4711 = vmatprep.subr.mxu0 0.0
  %4712 = vmatpush1.msra.mxu0 0.0
  %4713 = vmatprep.subr.mxu0 0.0
  %4714 = vmatpush1.msra.mxu0 0.0
  %4715 = vmatprep.subr.mxu0 0.0
  %4716 = vmatpush1.msra.mxu0 0.0
  %4717 = vmatprep.subr.mxu0 0.0
  %4718 = vmatpush1.msra.mxu0 0.0
  %4719 = vmatprep.subr.mxu0 0.0
  %4720 = vmatpush1.msra.mxu0 0.0
  %4721 = vmatprep.subr.mxu0 0.0
  %4722 = vmatpush1.msra.mxu0 0.0
  %4723 = vmatprep.subr.mxu0 0.0
  %4724 = vmatpush1.msra.mxu0 %v1018
  %4725 = vmatprep.subr.mxu0 0.0
  %4726 = vmatpush2.msra.mxu0 0.0
  %4727 = vmatprep.subr.mxu0 0.0
  %4728 = vmatpush2.msra.mxu0 0.0
  %4729 = vmatprep.subr.mxu0 0.0
  %4730 = vmatpush2.msra.mxu0 0.0
  %4731 = vmatprep.subr.mxu0 0.0
  %4732 = vmatpush2.msra.mxu0 0.0
  %4733 = vmatprep.subr.mxu0 0.0
  %4734 = vmatpush2.msra.mxu0 0.0
  %4735 = vmatprep.subr.mxu0 0.0
  %4736 = vmatpush2.msra.mxu0 0.0
  %4737 = vmatprep.subr.mxu0 0.0
  %4738 = vmatpush2.msra.mxu0 0.0
  %4739 = vmatprep.subr.mxu0 0.0
  %4740 = vmatpush2.msra.mxu0 0.0
  %4741 = vmatprep.subr.mxu0 0.0
  %4742 = vmatpush2.msra.mxu0 0.0
  %4743 = vmatprep.subr.mxu0 0.0
  %4744 = vmatpush2.msra.mxu0 0.0
  %4745 = vmatprep.subr.mxu0 0.0
  %4746 = vmatpush2.msra.mxu0 0.0
  %4747 = vmatprep.subr.mxu0 0.0
  %4748 = vmatpush2.msra.mxu0 0.0
  %4749 = vmatprep.subr.mxu0 0.0
  %4750 = vmatpush2.msra.mxu0 0.0
  %4751 = vmatprep.subr.mxu0 0.0
  %4752 = vmatpush2.msra.mxu0 0.0
  %4753 = vmatprep.subr.mxu0 0.0
  %4754 = vmatpush2.msra.mxu0 0.0
  %4755 = vmatprep.subr.mxu0 0.0
  %4756 = vmatpush2.msra.mxu0 0.0
  %4757 = vmatprep.mubr.f32.mxu0 0.0
  %4758 = vmatmul.mubr.f32.gmra.mxu0 %v4688
  %v4759 = vpop.f32.mrf.mxu0
  %v4760 = vadd.f32 0.0, %v4759
  %v4761 = vpop.f32.mrf.mxu0
  %4762 = vmatprep.mubr.f32.mxu0 0.0
  %4763 = vmatmul.mubr.f32.gmra.mxu0 %v4691
  %v4764 = vpop.f32.mrf.mxu0
  %v4765 = vadd.f32 0.0, %v4764
  %v4766 = vpop.f32.mrf.mxu0
  %4767 = vdwg.mxu0
  %v4768 = vld [vmem:[%s5] sm:$0xff]
  %v4769 = vld [vmem:[%s5 + $0x8] sm:$0xff]
  %4770 = vmatprep.subr.mxu0 0.0
  %4771 = vmatpush1.msra.mxu0 0.0
  %4772 = vmatprep.subr.mxu0 0.0
  %4773 = vmatpush1.msra.mxu0 0.0
  %4774 = vmatprep.subr.mxu0 0.0
  %4775 = vmatpush1.msra.mxu0 0.0
  %4776 = vmatprep.subr.mxu0 0.0
  %4777 = vmatpush1.msra.mxu0 0.0
  %4778 = vmatprep.subr.mxu0 0.0
  %4779 = vmatpush1.msra.mxu0 0.0
  %4780 = vmatprep.subr.mxu0 0.0
  %4781 = vmatpush1.msra.mxu0 0.0
  %4782 = vmatprep.subr.mxu0 0.0
  %4783 = vmatpush1.msra.mxu0 0.0
  %4784 = vmatprep.subr.mxu0 0.0
  %4785 = vmatpush1.msra.mxu0 0.0
  %4786 = vmatprep.subr.mxu0 0.0
  %4787 = vmatpush1.msra.mxu0 0.0
  %4788 = vmatprep.subr.mxu0 0.0
  %4789 = vmatpush1.msra.mxu0 0.0
  %4790 = vmatprep.subr.mxu0 0.0
  %4791 = vmatpush1.msra.mxu0 0.0
  %4792 = vmatprep.subr.mxu0 0.0
  %4793 = vmatpush1.msra.mxu0 0.0
  %4794 = vmatprep.subr.mxu0 0.0
  %4795 = vmatpush1.msra.mxu0 0.0
  %4796 = vmatprep.subr.mxu0 0.0
  %4797 = vmatpush1.msra.mxu0 0.0
  %4798 = vmatprep.subr.mxu0 0.0
  %4799 = vmatpush1.msra.mxu0 0.0
  %4800 = vmatprep.subr.mxu0 0.0
  %4801 = vmatpush1.msra.mxu0 %v1098
  %4802 = vmatprep.subr.mxu0 0.0
  %4803 = vmatpush2.msra.mxu0 0.0
  %4804 = vmatprep.subr.mxu0 0.0
  %4805 = vmatpush2.msra.mxu0 0.0
  %4806 = vmatprep.subr.mxu0 0.0
  %4807 = vmatpush2.msra.mxu0 0.0
  %4808 = vmatprep.subr.mxu0 0.0
  %4809 = vmatpush2.msra.mxu0 0.0
  %4810 = vmatprep.subr.mxu0 0.0
  %4811 = vmatpush2.msra.mxu0 0.0
  %4812 = vmatprep.subr.mxu0 0.0
  %4813 = vmatpush2.msra.mxu0 0.0
  %4814 = vmatprep.subr.mxu0 0.0
  %4815 = vmatpush2.msra.mxu0 0.0
  %4816 = vmatprep.subr.mxu0 0.0
  %4817 = vmatpush2.msra.mxu0 0.0
  %4818 = vmatprep.subr.mxu0 0.0
  %4819 = vmatpush2.msra.mxu0 0.0
  %4820 = vmatprep.subr.mxu0 0.0
  %4821 = vmatpush2.msra.mxu0 0.0
  %4822 = vmatprep.subr.mxu0 0.0
  %4823 = vmatpush2.msra.mxu0 0.0
  %4824 = vmatprep.subr.mxu0 0.0
  %4825 = vmatpush2.msra.mxu0 0.0
  %4826 = vmatprep.subr.mxu0 0.0
  %4827 = vmatpush2.msra.mxu0 0.0
  %4828 = vmatprep.subr.mxu0 0.0
  %4829 = vmatpush2.msra.mxu0 0.0
  %4830 = vmatprep.subr.mxu0 0.0
  %4831 = vmatpush2.msra.mxu0 0.0
  %4832 = vmatprep.subr.mxu0 0.0
  %4833 = vmatpush2.msra.mxu0 0.0
  %4834 = vmatprep.mubr.f32.mxu0 0.0
  %4835 = vmatmul.mubr.f32.gmra.mxu0 %v4688
  %v4836 = vpop.f32.mrf.mxu0
  %v4837 = vadd.f32 0.0, %v4836
  %v4838 = vpop.f32.mrf.mxu0
  %4839 = vmatprep.mubr.f32.mxu0 0.0
  %4840 = vmatmul.mubr.f32.gmra.mxu0 %v4691
  %v4841 = vpop.f32.mrf.mxu0
  %v4842 = vadd.f32 0.0, %v4841
  %v4843 = vpop.f32.mrf.mxu0
  %4844 = vdwg.mxu0
  %v4845 = vld [vmem:[%s1175] sm:$0xff]
  %v4846 = vld [vmem:[%s1175 + $0x8] sm:$0xff]
  %v4848 = vsel %vm70, %v4845, 0
  %v4851 = vsel %vm70, %v4846, 0
  %4853 = vmatprep.subr.mxu0 0.0
  %4854 = vmatpush1.msra.mxu0 0.0
  %4855 = vmatprep.subr.mxu0 0.0
  %4856 = vmatpush1.msra.mxu0 0.0
  %4857 = vmatprep.subr.mxu0 0.0
  %4858 = vmatpush1.msra.mxu0 0.0
  %4859 = vmatprep.subr.mxu0 0.0
  %4860 = vmatpush1.msra.mxu0 0.0
  %4861 = vmatprep.subr.mxu0 0.0
  %4862 = vmatpush1.msra.mxu0 0.0
  %4863 = vmatprep.subr.mxu0 0.0
  %4864 = vmatpush1.msra.mxu0 0.0
  %4865 = vmatprep.subr.mxu0 0.0
  %4866 = vmatpush1.msra.mxu0 0.0
  %4867 = vmatprep.subr.mxu0 0.0
  %4868 = vmatpush1.msra.mxu0 0.0
  %4869 = vmatprep.subr.mxu0 0.0
  %4870 = vmatpush1.msra.mxu0 0.0
  %4871 = vmatprep.subr.mxu0 0.0
  %4872 = vmatpush1.msra.mxu0 0.0
  %4873 = vmatprep.subr.mxu0 0.0
  %4874 = vmatpush1.msra.mxu0 0.0
  %4875 = vmatprep.subr.mxu0 0.0
  %4876 = vmatpush1.msra.mxu0 0.0
  %4877 = vmatprep.subr.mxu0 0.0
  %4878 = vmatpush1.msra.mxu0 0.0
  %4879 = vmatprep.subr.mxu0 0.0
  %4880 = vmatpush1.msra.mxu0 0.0
  %4881 = vmatprep.subr.mxu0 0.0
  %4882 = vmatpush1.msra.mxu0 %v4842
  %4883 = vmatprep.subr.mxu0 0.0
  %4884 = vmatpush1.msra.mxu0 %v4837
  %4885 = vmatprep.subr.mxu0 0.0
  %4886 = vmatpush2.msra.mxu0 0.0
  %4887 = vmatprep.subr.mxu0 0.0
  %4888 = vmatpush2.msra.mxu0 0.0
  %4889 = vmatprep.subr.mxu0 0.0
  %4890 = vmatpush2.msra.mxu0 0.0
  %4891 = vmatprep.subr.mxu0 0.0
  %4892 = vmatpush2.msra.mxu0 0.0
  %4893 = vmatprep.subr.mxu0 0.0
  %4894 = vmatpush2.msra.mxu0 0.0
  %4895 = vmatprep.subr.mxu0 0.0
  %4896 = vmatpush2.msra.mxu0 0.0
  %4897 = vmatprep.subr.mxu0 0.0
  %4898 = vmatpush2.msra.mxu0 0.0
  %4899 = vmatprep.subr.mxu0 0.0
  %4900 = vmatpush2.msra.mxu0 0.0
  %4901 = vmatprep.subr.mxu0 0.0
  %4902 = vmatpush2.msra.mxu0 0.0
  %4903 = vmatprep.subr.mxu0 0.0
  %4904 = vmatpush2.msra.mxu0 0.0
  %4905 = vmatprep.subr.mxu0 0.0
  %4906 = vmatpush2.msra.mxu0 0.0
  %4907 = vmatprep.subr.mxu0 0.0
  %4908 = vmatpush2.msra.mxu0 0.0
  %4909 = vmatprep.subr.mxu0 0.0
  %4910 = vmatpush2.msra.mxu0 0.0
  %4911 = vmatprep.subr.mxu0 0.0
  %4912 = vmatpush2.msra.mxu0 0.0
  %4913 = vmatprep.subr.mxu0 0.0
  %4914 = vmatpush2.msra.mxu0 0.0
  %4915 = vmatprep.subr.mxu0 0.0
  %4916 = vmatpush2.msra.mxu0 0.0
  %4917 = vmatprep.mubr.f32.mxu0 0.0
  %4918 = vmatmul.mubr.f32.gmra.mxu0 %v4848
  %v4919 = vpop.f32.mrf.mxu0
  %v4920 = vadd.f32 0.0, %v4919
  %v4921 = vpop.f32.mrf.mxu0
  %4922 = vmatprep.mubr.f32.mxu0 0.0
  %4923 = vmatmul.mubr.f32.gmra.mxu0 %v4851
  %v4924 = vpop.f32.mrf.mxu0
  %v4925 = vadd.f32 0.0, %v4924
  %v4926 = vpop.f32.mrf.mxu0
  %4927 = vdwg.mxu0
  %v4929 = vsel %vm70, %v4768, 0
  %v4932 = vsel %vm70, %v4769, 0
  %4934 = vmatprep.subr.mxu0 0.0
  %4935 = vmatpush1.msra.mxu0 0.0
  %4936 = vmatprep.subr.mxu0 0.0
  %4937 = vmatpush1.msra.mxu0 0.0
  %4938 = vmatprep.subr.mxu0 0.0
  %4939 = vmatpush1.msra.mxu0 0.0
  %4940 = vmatprep.subr.mxu0 0.0
  %4941 = vmatpush1.msra.mxu0 0.0
  %4942 = vmatprep.subr.mxu0 0.0
  %4943 = vmatpush1.msra.mxu0 0.0
  %4944 = vmatprep.subr.mxu0 0.0
  %4945 = vmatpush1.msra.mxu0 0.0
  %4946 = vmatprep.subr.mxu0 0.0
  %4947 = vmatpush1.msra.mxu0 0.0
  %4948 = vmatprep.subr.mxu0 0.0
  %4949 = vmatpush1.msra.mxu0 0.0
  %4950 = vmatprep.subr.mxu0 0.0
  %4951 = vmatpush1.msra.mxu0 0.0
  %4952 = vmatprep.subr.mxu0 0.0
  %4953 = vmatpush1.msra.mxu0 0.0
  %4954 = vmatprep.subr.mxu0 0.0
  %4955 = vmatpush1.msra.mxu0 0.0
  %4956 = vmatprep.subr.mxu0 0.0
  %4957 = vmatpush1.msra.mxu0 0.0
  %4958 = vmatprep.subr.mxu0 0.0
  %4959 = vmatpush1.msra.mxu0 0.0
  %4960 = vmatprep.subr.mxu0 0.0
  %4961 = vmatpush1.msra.mxu0 0.0
  %4962 = vmatprep.subr.mxu0 0.0
  %4963 = vmatpush1.msra.mxu0 %v4765
  %4964 = vmatprep.subr.mxu0 0.0
  %4965 = vmatpush1.msra.mxu0 %v4760
  %4966 = vmatprep.subr.mxu0 0.0
  %4967 = vmatpush2.msra.mxu0 0.0
  %4968 = vmatprep.subr.mxu0 0.0
  %4969 = vmatpush2.msra.mxu0 0.0
  %4970 = vmatprep.subr.mxu0 0.0
  %4971 = vmatpush2.msra.mxu0 0.0
  %4972 = vmatprep.subr.mxu0 0.0
  %4973 = vmatpush2.msra.mxu0 0.0
  %4974 = vmatprep.subr.mxu0 0.0
  %4975 = vmatpush2.msra.mxu0 0.0
  %4976 = vmatprep.subr.mxu0 0.0
  %4977 = vmatpush2.msra.mxu0 0.0
  %4978 = vmatprep.subr.mxu0 0.0
  %4979 = vmatpush2.msra.mxu0 0.0
  %4980 = vmatprep.subr.mxu0 0.0
  %4981 = vmatpush2.msra.mxu0 0.0
  %4982 = vmatprep.subr.mxu0 0.0
  %4983 = vmatpush2.msra.mxu0 0.0
  %4984 = vmatprep.subr.mxu0 0.0
  %4985 = vmatpush2.msra.mxu0 0.0
  %4986 = vmatprep.subr.mxu0 0.0
  %4987 = vmatpush2.msra.mxu0 0.0
  %4988 = vmatprep.subr.mxu0 0.0
  %4989 = vmatpush2.msra.mxu0 0.0
  %4990 = vmatprep.subr.mxu0 0.0
  %4991 = vmatpush2.msra.mxu0 0.0
  %4992 = vmatprep.subr.mxu0 0.0
  %4993 = vmatpush2.msra.mxu0 0.0
  %4994 = vmatprep.subr.mxu0 0.0
  %4995 = vmatpush2.msra.mxu0 0.0
  %4996 = vmatprep.subr.mxu0 0.0
  %4997 = vmatpush2.msra.mxu0 0.0
  %4998 = vmatprep.mubr.f32.mxu0 0.0
  %4999 = vmatmul.mubr.f32.gmra.mxu0 %v4929
  %v5000 = vpop.f32.mrf.mxu0
  %v5001 = vadd.f32 %v4920, %v5000
  %v5002 = vpop.f32.mrf.mxu0
  %5003 = vmatprep.mubr.f32.mxu0 0.0
  %5004 = vmatmul.mubr.f32.gmra.mxu0 %v4932
  %v5005 = vpop.f32.mrf.mxu0
  %v5006 = vadd.f32 %v4925, %v5005
  %v5007 = vpop.f32.mrf.mxu0
  %5008 = vdwg.mxu0
  %5009 = vmatprep.subr.mxu0 0.0
  %5010 = vmatpush1.msra.mxu0 0.0
  %5011 = vmatprep.subr.mxu0 0.0
  %5012 = vmatpush1.msra.mxu0 0.0
  %5013 = vmatprep.subr.mxu0 0.0
  %5014 = vmatpush1.msra.mxu0 0.0
  %5015 = vmatprep.subr.mxu0 0.0
  %5016 = vmatpush1.msra.mxu0 0.0
  %5017 = vmatprep.subr.mxu0 0.0
  %5018 = vmatpush1.msra.mxu0 0.0
  %5019 = vmatprep.subr.mxu0 0.0
  %5020 = vmatpush1.msra.mxu0 0.0
  %5021 = vmatprep.subr.mxu0 0.0
  %5022 = vmatpush1.msra.mxu0 0.0
  %5023 = vmatprep.subr.mxu0 0.0
  %5024 = vmatpush1.msra.mxu0 0.0
  %5025 = vmatprep.subr.mxu0 0.0
  %5026 = vmatpush1.msra.mxu0 0.0
  %5027 = vmatprep.subr.mxu0 0.0
  %5028 = vmatpush1.msra.mxu0 0.0
  %5029 = vmatprep.subr.mxu0 0.0
  %5030 = vmatpush1.msra.mxu0 0.0
  %5031 = vmatprep.subr.mxu0 0.0
  %5032 = vmatpush1.msra.mxu0 0.0
  %5033 = vmatprep.subr.mxu0 0.0
  %5034 = vmatpush1.msra.mxu0 0.0
  %5035 = vmatprep.subr.mxu0 0.0
  %5036 = vmatpush1.msra.mxu0 0.0
  %5037 = vmatprep.subr.mxu0 0.0
  %5038 = vmatpush1.msra.mxu0 0.0
  %5039 = vmatprep.subr.mxu0 0.0
  %5040 = vmatpush1.msra.mxu0 %v1341
  %5041 = vmatprep.subr.mxu0 0.0
  %5042 = vmatpush2.msra.mxu0 0.0
  %5043 = vmatprep.subr.mxu0 0.0
  %5044 = vmatpush2.msra.mxu0 0.0
  %5045 = vmatprep.subr.mxu0 0.0
  %5046 = vmatpush2.msra.mxu0 0.0
  %5047 = vmatprep.subr.mxu0 0.0
  %5048 = vmatpush2.msra.mxu0 0.0
  %5049 = vmatprep.subr.mxu0 0.0
  %5050 = vmatpush2.msra.mxu0 0.0
  %5051 = vmatprep.subr.mxu0 0.0
  %5052 = vmatpush2.msra.mxu0 0.0
  %5053 = vmatprep.subr.mxu0 0.0
  %5054 = vmatpush2.msra.mxu0 0.0
  %5055 = vmatprep.subr.mxu0 0.0
  %5056 = vmatpush2.msra.mxu0 0.0
  %5057 = vmatprep.subr.mxu0 0.0
  %5058 = vmatpush2.msra.mxu0 0.0
  %5059 = vmatprep.subr.mxu0 0.0
  %5060 = vmatpush2.msra.mxu0 0.0
  %5061 = vmatprep.subr.mxu0 0.0
  %5062 = vmatpush2.msra.mxu0 0.0
  %5063 = vmatprep.subr.mxu0 0.0
  %5064 = vmatpush2.msra.mxu0 0.0
  %5065 = vmatprep.subr.mxu0 0.0
  %5066 = vmatpush2.msra.mxu0 0.0
  %5067 = vmatprep.subr.mxu0 0.0
  %5068 = vmatpush2.msra.mxu0 0.0
  %5069 = vmatprep.subr.mxu0 0.0
  %5070 = vmatpush2.msra.mxu0 0.0
  %5071 = vmatprep.subr.mxu0 0.0
  %5072 = vmatpush2.msra.mxu0 0.0
  %5073 = vmatprep.mubr.f32.mxu0 0.0
  %5074 = vmatmul.mubr.f32.gmra.mxu0 %v4688
  %v5075 = vpop.f32.mrf.mxu0
  %v5076 = vadd.f32 0.0, %v5075
  %v5077 = vpop.f32.mrf.mxu0
  %5078 = vmatprep.mubr.f32.mxu0 0.0
  %5079 = vmatmul.mubr.f32.gmra.mxu0 %v4691
  %v5080 = vpop.f32.mrf.mxu0
  %v5081 = vadd.f32 0.0, %v5080
  %v5082 = vpop.f32.mrf.mxu0
  %5083 = vdwg.mxu0
  %v5084 = vld [vmem:[%s1418] sm:$0xff]
  %v5085 = vld [vmem:[%s1418 + $0x8] sm:$0xff]
  %v5087 = vsel %vm70, %v5084, 0
  %v5090 = vsel %vm70, %v5085, 0
  %5092 = vmatprep.subr.mxu0 0.0
  %5093 = vmatpush1.msra.mxu0 0.0
  %5094 = vmatprep.subr.mxu0 0.0
  %5095 = vmatpush1.msra.mxu0 0.0
  %5096 = vmatprep.subr.mxu0 0.0
  %5097 = vmatpush1.msra.mxu0 0.0
  %5098 = vmatprep.subr.mxu0 0.0
  %5099 = vmatpush1.msra.mxu0 0.0
  %5100 = vmatprep.subr.mxu0 0.0
  %5101 = vmatpush1.msra.mxu0 0.0
  %5102 = vmatprep.subr.mxu0 0.0
  %5103 = vmatpush1.msra.mxu0 0.0
  %5104 = vmatprep.subr.mxu0 0.0
  %5105 = vmatpush1.msra.mxu0 0.0
  %5106 = vmatprep.subr.mxu0 0.0
  %5107 = vmatpush1.msra.mxu0 0.0
  %5108 = vmatprep.subr.mxu0 0.0
  %5109 = vmatpush1.msra.mxu0 0.0
  %5110 = vmatprep.subr.mxu0 0.0
  %5111 = vmatpush1.msra.mxu0 0.0
  %5112 = vmatprep.subr.mxu0 0.0
  %5113 = vmatpush1.msra.mxu0 0.0
  %5114 = vmatprep.subr.mxu0 0.0
  %5115 = vmatpush1.msra.mxu0 0.0
  %5116 = vmatprep.subr.mxu0 0.0
  %5117 = vmatpush1.msra.mxu0 0.0
  %5118 = vmatprep.subr.mxu0 0.0
  %5119 = vmatpush1.msra.mxu0 0.0
  %5120 = vmatprep.subr.mxu0 0.0
  %5121 = vmatpush1.msra.mxu0 %v5081
  %5122 = vmatprep.subr.mxu0 0.0
  %5123 = vmatpush1.msra.mxu0 %v5076
  %5124 = vmatprep.subr.mxu0 0.0
  %5125 = vmatpush2.msra.mxu0 0.0
  %5126 = vmatprep.subr.mxu0 0.0
  %5127 = vmatpush2.msra.mxu0 0.0
  %5128 = vmatprep.subr.mxu0 0.0
  %5129 = vmatpush2.msra.mxu0 0.0
  %5130 = vmatprep.subr.mxu0 0.0
  %5131 = vmatpush2.msra.mxu0 0.0
  %5132 = vmatprep.subr.mxu0 0.0
  %5133 = vmatpush2.msra.mxu0 0.0
  %5134 = vmatprep.subr.mxu0 0.0
  %5135 = vmatpush2.msra.mxu0 0.0
  %5136 = vmatprep.subr.mxu0 0.0
  %5137 = vmatpush2.msra.mxu0 0.0
  %5138 = vmatprep.subr.mxu0 0.0
  %5139 = vmatpush2.msra.mxu0 0.0
  %5140 = vmatprep.subr.mxu0 0.0
  %5141 = vmatpush2.msra.mxu0 0.0
  %5142 = vmatprep.subr.mxu0 0.0
  %5143 = vmatpush2.msra.mxu0 0.0
  %5144 = vmatprep.subr.mxu0 0.0
  %5145 = vmatpush2.msra.mxu0 0.0
  %5146 = vmatprep.subr.mxu0 0.0
  %5147 = vmatpush2.msra.mxu0 0.0
  %5148 = vmatprep.subr.mxu0 0.0
  %5149 = vmatpush2.msra.mxu0 0.0
  %5150 = vmatprep.subr.mxu0 0.0
  %5151 = vmatpush2.msra.mxu0 0.0
  %5152 = vmatprep.subr.mxu0 0.0
  %5153 = vmatpush2.msra.mxu0 0.0
  %5154 = vmatprep.subr.mxu0 0.0
  %5155 = vmatpush2.msra.mxu0 0.0
  %5156 = vmatprep.mubr.f32.mxu0 0.0
  %5157 = vmatmul.mubr.f32.gmra.mxu0 %v5087
  %v5158 = vpop.f32.mrf.mxu0
  %v5159 = vadd.f32 0.0, %v5158
  %v5160 = vpop.f32.mrf.mxu0
  %5161 = vmatprep.mubr.f32.mxu0 0.0
  %5162 = vmatmul.mubr.f32.gmra.mxu0 %v5090
  %v5163 = vpop.f32.mrf.mxu0
  %v5164 = vadd.f32 0.0, %v5163
  %v5165 = vpop.f32.mrf.mxu0
  %5166 = vdwg.mxu0
  %v5167 = vadd.f32 %v5001, %v5159
  %v5168 = vadd.f32 %v5006, %v5164
  %v5169 = vld [vmem:[%s6] sm:$0xff]
  %v5170 = vld [vmem:[%s6 + $0x8] sm:$0xff]
  %5172 = vset.pattern.permute.xlu0 0
  %5173 = vperm.xlu0 %5172, %v5169
  %v5174 = vpop.permute.xlu0 %5173
  %5177 = vset.pattern.permute.xlu0 0
  %5178 = vperm.xlu0 %5177, %v5170
  %v5179 = vpop.permute.xlu0 %5178
  %v5181 = vadd.f32 %v5167, %v5174
  %v5182 = vadd.f32 %v5168, %v5179
  %v5183 = vmax.f32 %v5181, 0.0
  %v5184 = vmax.f32 %v5182, 0.0
  %v5186 = vsel %vm217, %v5183, 0
  %v5189 = vsel %vm217, %v5184, 0
  %5191 = vmatprep.subr.mxu0 0.0
  %5192 = vmatpush1.msra.mxu0 0.0
  %5193 = vmatprep.subr.mxu0 0.0
  %5194 = vmatpush1.msra.mxu0 0.0
  %5195 = vmatprep.subr.mxu0 0.0
  %5196 = vmatpush1.msra.mxu0 0.0
  %5197 = vmatprep.subr.mxu0 0.0
  %5198 = vmatpush1.msra.mxu0 0.0
  %5199 = vmatprep.subr.mxu0 0.0
  %5200 = vmatpush1.msra.mxu0 0.0
  %5201 = vmatprep.subr.mxu0 0.0
  %5202 = vmatpush1.msra.mxu0 0.0
  %5203 = vmatprep.subr.mxu0 0.0
  %5204 = vmatpush1.msra.mxu0 0.0
  %5205 = vmatprep.subr.mxu0 0.0
  %5206 = vmatpush1.msra.mxu0 0.0
  %5207 = vmatprep.subr.mxu0 0.0
  %5208 = vmatpush1.msra.mxu0 0.0
  %5209 = vmatprep.subr.mxu0 0.0
  %5210 = vmatpush1.msra.mxu0 0.0
  %5211 = vmatprep.subr.mxu0 0.0
  %5212 = vmatpush1.msra.mxu0 0.0
  %5213 = vmatprep.subr.mxu0 0.0
  %5214 = vmatpush1.msra.mxu0 0.0
  %5215 = vmatprep.subr.mxu0 0.0
  %5216 = vmatpush1.msra.mxu0 0.0
  %5217 = vmatprep.subr.mxu0 0.0
  %5218 = vmatpush1.msra.mxu0 0.0
  %5219 = vmatprep.subr.mxu0 0.0
  %5220 = vmatpush1.msra.mxu0 0.0
  %5221 = vmatprep.subr.mxu0 0.0
  %5222 = vmatpush1.msra.mxu0 %v1018
  %5223 = vmatprep.subr.mxu0 0.0
  %5224 = vmatpush2.msra.mxu0 0.0
  %5225 = vmatprep.subr.mxu0 0.0
  %5226 = vmatpush2.msra.mxu0 0.0
  %5227 = vmatprep.subr.mxu0 0.0
  %5228 = vmatpush2.msra.mxu0 0.0
  %5229 = vmatprep.subr.mxu0 0.0
  %5230 = vmatpush2.msra.mxu0 0.0
  %5231 = vmatprep.subr.mxu0 0.0
  %5232 = vmatpush2.msra.mxu0 0.0
  %5233 = vmatprep.subr.mxu0 0.0
  %5234 = vmatpush2.msra.mxu0 0.0
  %5235 = vmatprep.subr.mxu0 0.0
  %5236 = vmatpush2.msra.mxu0 0.0
  %5237 = vmatprep.subr.mxu0 0.0
  %5238 = vmatpush2.msra.mxu0 0.0
  %5239 = vmatprep.subr.mxu0 0.0
  %5240 = vmatpush2.msra.mxu0 0.0
  %5241 = vmatprep.subr.mxu0 0.0
  %5242 = vmatpush2.msra.mxu0 0.0
  %5243 = vmatprep.subr.mxu0 0.0
  %5244 = vmatpush2.msra.mxu0 0.0
  %5245 = vmatprep.subr.mxu0 0.0
  %5246 = vmatpush2.msra.mxu0 0.0
  %5247 = vmatprep.subr.mxu0 0.0
  %5248 = vmatpush2.msra.mxu0 0.0
  %5249 = vmatprep.subr.mxu0 0.0
  %5250 = vmatpush2.msra.mxu0 0.0
  %5251 = vmatprep.subr.mxu0 0.0
  %5252 = vmatpush2.msra.mxu0 0.0
  %5253 = vmatprep.subr.mxu0 0.0
  %5254 = vmatpush2.msra.mxu0 0.0
  %5255 = vmatprep.mubr.f32.mxu0 0.0
  %5256 = vmatmul.mubr.f32.gmra.mxu0 %v5186
  %v5257 = vpop.f32.mrf.mxu0
  %v5258 = vadd.f32 0.0, %v5257
  %v5259 = vpop.f32.mrf.mxu0
  %5260 = vmatprep.mubr.f32.mxu0 0.0
  %5261 = vmatmul.mubr.f32.gmra.mxu0 %v5189
  %v5262 = vpop.f32.mrf.mxu0
  %v5263 = vadd.f32 0.0, %v5262
  %v5264 = vpop.f32.mrf.mxu0
  %5265 = vdwg.mxu0
  %v5266 = vld [vmem:[%s7] sm:$0xff]
  %v5267 = vld [vmem:[%s7 + $0x8] sm:$0xff]
  %5268 = vmatprep.subr.mxu0 0.0
  %5269 = vmatpush1.msra.mxu0 0.0
  %5270 = vmatprep.subr.mxu0 0.0
  %5271 = vmatpush1.msra.mxu0 0.0
  %5272 = vmatprep.subr.mxu0 0.0
  %5273 = vmatpush1.msra.mxu0 0.0
  %5274 = vmatprep.subr.mxu0 0.0
  %5275 = vmatpush1.msra.mxu0 0.0
  %5276 = vmatprep.subr.mxu0 0.0
  %5277 = vmatpush1.msra.mxu0 0.0
  %5278 = vmatprep.subr.mxu0 0.0
  %5279 = vmatpush1.msra.mxu0 0.0
  %5280 = vmatprep.subr.mxu0 0.0
  %5281 = vmatpush1.msra.mxu0 0.0
  %5282 = vmatprep.subr.mxu0 0.0
  %5283 = vmatpush1.msra.mxu0 0.0
  %5284 = vmatprep.subr.mxu0 0.0
  %5285 = vmatpush1.msra.mxu0 0.0
  %5286 = vmatprep.subr.mxu0 0.0
  %5287 = vmatpush1.msra.mxu0 0.0
  %5288 = vmatprep.subr.mxu0 0.0
  %5289 = vmatpush1.msra.mxu0 0.0
  %5290 = vmatprep.subr.mxu0 0.0
  %5291 = vmatpush1.msra.mxu0 0.0
  %5292 = vmatprep.subr.mxu0 0.0
  %5293 = vmatpush1.msra.mxu0 0.0
  %5294 = vmatprep.subr.mxu0 0.0
  %5295 = vmatpush1.msra.mxu0 0.0
  %5296 = vmatprep.subr.mxu0 0.0
  %5297 = vmatpush1.msra.mxu0 0.0
  %5298 = vmatprep.subr.mxu0 0.0
  %5299 = vmatpush1.msra.mxu0 %v1098
  %5300 = vmatprep.subr.mxu0 0.0
  %5301 = vmatpush2.msra.mxu0 0.0
  %5302 = vmatprep.subr.mxu0 0.0
  %5303 = vmatpush2.msra.mxu0 0.0
  %5304 = vmatprep.subr.mxu0 0.0
  %5305 = vmatpush2.msra.mxu0 0.0
  %5306 = vmatprep.subr.mxu0 0.0
  %5307 = vmatpush2.msra.mxu0 0.0
  %5308 = vmatprep.subr.mxu0 0.0
  %5309 = vmatpush2.msra.mxu0 0.0
  %5310 = vmatprep.subr.mxu0 0.0
  %5311 = vmatpush2.msra.mxu0 0.0
  %5312 = vmatprep.subr.mxu0 0.0
  %5313 = vmatpush2.msra.mxu0 0.0
  %5314 = vmatprep.subr.mxu0 0.0
  %5315 = vmatpush2.msra.mxu0 0.0
  %5316 = vmatprep.subr.mxu0 0.0
  %5317 = vmatpush2.msra.mxu0 0.0
  %5318 = vmatprep.subr.mxu0 0.0
  %5319 = vmatpush2.msra.mxu0 0.0
  %5320 = vmatprep.subr.mxu0 0.0
  %5321 = vmatpush2.msra.mxu0 0.0
  %5322 = vmatprep.subr.mxu0 0.0
  %5323 = vmatpush2.msra.mxu0 0.0
  %5324 = vmatprep.subr.mxu0 0.0
  %5325 = vmatpush2.msra.mxu0 0.0
  %5326 = vmatprep.subr.mxu0 0.0
  %5327 = vmatpush2.msra.mxu0 0.0
  %5328 = vmatprep.subr.mxu0 0.0
  %5329 = vmatpush2.msra.mxu0 0.0
  %5330 = vmatprep.subr.mxu0 0.0
  %5331 = vmatpush2.msra.mxu0 0.0
  %5332 = vmatprep.mubr.f32.mxu0 0.0
  %5333 = vmatmul.mubr.f32.gmra.mxu0 %v5186
  %v5334 = vpop.f32.mrf.mxu0
  %v5335 = vadd.f32 0.0, %v5334
  %v5336 = vpop.f32.mrf.mxu0
  %5337 = vmatprep.mubr.f32.mxu0 0.0
  %5338 = vmatmul.mubr.f32.gmra.mxu0 %v5189
  %v5339 = vpop.f32.mrf.mxu0
  %v5340 = vadd.f32 0.0, %v5339
  %v5341 = vpop.f32.mrf.mxu0
  %5342 = vdwg.mxu0
  %v5343 = vld [vmem:[%s1678] sm:$0xff]
  %v5344 = vld [vmem:[%s1678 + $0x8] sm:$0xff]
  %v5346 = vsel %vm70, %v5343, 0
  %v5349 = vsel %vm70, %v5344, 0
  %5351 = vmatprep.subr.mxu0 0.0
  %5352 = vmatpush1.msra.mxu0 0.0
  %5353 = vmatprep.subr.mxu0 0.0
  %5354 = vmatpush1.msra.mxu0 0.0
  %5355 = vmatprep.subr.mxu0 0.0
  %5356 = vmatpush1.msra.mxu0 0.0
  %5357 = vmatprep.subr.mxu0 0.0
  %5358 = vmatpush1.msra.mxu0 0.0
  %5359 = vmatprep.subr.mxu0 0.0
  %5360 = vmatpush1.msra.mxu0 0.0
  %5361 = vmatprep.subr.mxu0 0.0
  %5362 = vmatpush1.msra.mxu0 0.0
  %5363 = vmatprep.subr.mxu0 0.0
  %5364 = vmatpush1.msra.mxu0 0.0
  %5365 = vmatprep.subr.mxu0 0.0
  %5366 = vmatpush1.msra.mxu0 0.0
  %5367 = vmatprep.subr.mxu0 0.0
  %5368 = vmatpush1.msra.mxu0 0.0
  %5369 = vmatprep.subr.mxu0 0.0
  %5370 = vmatpush1.msra.mxu0 0.0
  %5371 = vmatprep.subr.mxu0 0.0
  %5372 = vmatpush1.msra.mxu0 0.0
  %5373 = vmatprep.subr.mxu0 0.0
  %5374 = vmatpush1.msra.mxu0 0.0
  %5375 = vmatprep.subr.mxu0 0.0
  %5376 = vmatpush1.msra.mxu0 0.0
  %5377 = vmatprep.subr.mxu0 0.0
  %5378 = vmatpush1.msra.mxu0 0.0
  %5379 = vmatprep.subr.mxu0 0.0
  %5380 = vmatpush1.msra.mxu0 %v5340
  %5381 = vmatprep.subr.mxu0 0.0
  %5382 = vmatpush1.msra.mxu0 %v5335
  %5383 = vmatprep.subr.mxu0 0.0
  %5384 = vmatpush2.msra.mxu0 0.0
  %5385 = vmatprep.subr.mxu0 0.0
  %5386 = vmatpush2.msra.mxu0 0.0
  %5387 = vmatprep.subr.mxu0 0.0
  %5388 = vmatpush2.msra.mxu0 0.0
  %5389 = vmatprep.subr.mxu0 0.0
  %5390 = vmatpush2.msra.mxu0 0.0
  %5391 = vmatprep.subr.mxu0 0.0
  %5392 = vmatpush2.msra.mxu0 0.0
  %5393 = vmatprep.subr.mxu0 0.0
  %5394 = vmatpush2.msra.mxu0 0.0
  %5395 = vmatprep.subr.mxu0 0.0
  %5396 = vmatpush2.msra.mxu0 0.0
  %5397 = vmatprep.subr.mxu0 0.0
  %5398 = vmatpush2.msra.mxu0 0.0
  %5399 = vmatprep.subr.mxu0 0.0
  %5400 = vmatpush2.msra.mxu0 0.0
  %5401 = vmatprep.subr.mxu0 0.0
  %5402 = vmatpush2.msra.mxu0 0.0
  %5403 = vmatprep.subr.mxu0 0.0
  %5404 = vmatpush2.msra.mxu0 0.0
  %5405 = vmatprep.subr.mxu0 0.0
  %5406 = vmatpush2.msra.mxu0 0.0
  %5407 = vmatprep.subr.mxu0 0.0
  %5408 = vmatpush2.msra.mxu0 0.0
  %5409 = vmatprep.subr.mxu0 0.0
  %5410 = vmatpush2.msra.mxu0 0.0
  %5411 = vmatprep.subr.mxu0 0.0
  %5412 = vmatpush2.msra.mxu0 0.0
  %5413 = vmatprep.subr.mxu0 0.0
  %5414 = vmatpush2.msra.mxu0 0.0
  %5415 = vmatprep.mubr.f32.mxu0 0.0
  %5416 = vmatmul.mubr.f32.gmra.mxu0 %v5346
  %v5417 = vpop.f32.mrf.mxu0
  %v5418 = vadd.f32 0.0, %v5417
  %v5419 = vpop.f32.mrf.mxu0
  %5420 = vmatprep.mubr.f32.mxu0 0.0
  %5421 = vmatmul.mubr.f32.gmra.mxu0 %v5349
  %v5422 = vpop.f32.mrf.mxu0
  %v5423 = vadd.f32 0.0, %v5422
  %v5424 = vpop.f32.mrf.mxu0
  %5425 = vdwg.mxu0
  %v5427 = vsel %vm70, %v5266, 0
  %v5430 = vsel %vm70, %v5267, 0
  %5432 = vmatprep.subr.mxu0 0.0
  %5433 = vmatpush1.msra.mxu0 0.0
  %5434 = vmatprep.subr.mxu0 0.0
  %5435 = vmatpush1.msra.mxu0 0.0
  %5436 = vmatprep.subr.mxu0 0.0
  %5437 = vmatpush1.msra.mxu0 0.0
  %5438 = vmatprep.subr.mxu0 0.0
  %5439 = vmatpush1.msra.mxu0 0.0
  %5440 = vmatprep.subr.mxu0 0.0
  %5441 = vmatpush1.msra.mxu0 0.0
  %5442 = vmatprep.subr.mxu0 0.0
  %5443 = vmatpush1.msra.mxu0 0.0
  %5444 = vmatprep.subr.mxu0 0.0
  %5445 = vmatpush1.msra.mxu0 0.0
  %5446 = vmatprep.subr.mxu0 0.0
  %5447 = vmatpush1.msra.mxu0 0.0
  %5448 = vmatprep.subr.mxu0 0.0
  %5449 = vmatpush1.msra.mxu0 0.0
  %5450 = vmatprep.subr.mxu0 0.0
  %5451 = vmatpush1.msra.mxu0 0.0
  %5452 = vmatprep.subr.mxu0 0.0
  %5453 = vmatpush1.msra.mxu0 0.0
  %5454 = vmatprep.subr.mxu0 0.0
  %5455 = vmatpush1.msra.mxu0 0.0
  %5456 = vmatprep.subr.mxu0 0.0
  %5457 = vmatpush1.msra.mxu0 0.0
  %5458 = vmatprep.subr.mxu0 0.0
  %5459 = vmatpush1.msra.mxu0 0.0
  %5460 = vmatprep.subr.mxu0 0.0
  %5461 = vmatpush1.msra.mxu0 %v5263
  %5462 = vmatprep.subr.mxu0 0.0
  %5463 = vmatpush1.msra.mxu0 %v5258
  %5464 = vmatprep.subr.mxu0 0.0
  %5465 = vmatpush2.msra.mxu0 0.0
  %5466 = vmatprep.subr.mxu0 0.0
  %5467 = vmatpush2.msra.mxu0 0.0
  %5468 = vmatprep.subr.mxu0 0.0
  %5469 = vmatpush2.msra.mxu0 0.0
  %5470 = vmatprep.subr.mxu0 0.0
  %5471 = vmatpush2.msra.mxu0 0.0
  %5472 = vmatprep.subr.mxu0 0.0
  %5473 = vmatpush2.msra.mxu0 0.0
  %5474 = vmatprep.subr.mxu0 0.0
  %5475 = vmatpush2.msra.mxu0 0.0
  %5476 = vmatprep.subr.mxu0 0.0
  %5477 = vmatpush2.msra.mxu0 0.0
  %5478 = vmatprep.subr.mxu0 0.0
  %5479 = vmatpush2.msra.mxu0 0.0
  %5480 = vmatprep.subr.mxu0 0.0
  %5481 = vmatpush2.msra.mxu0 0.0
  %5482 = vmatprep.subr.mxu0 0.0
  %5483 = vmatpush2.msra.mxu0 0.0
  %5484 = vmatprep.subr.mxu0 0.0
  %5485 = vmatpush2.msra.mxu0 0.0
  %5486 = vmatprep.subr.mxu0 0.0
  %5487 = vmatpush2.msra.mxu0 0.0
  %5488 = vmatprep.subr.mxu0 0.0
  %5489 = vmatpush2.msra.mxu0 0.0
  %5490 = vmatprep.subr.mxu0 0.0
  %5491 = vmatpush2.msra.mxu0 0.0
  %5492 = vmatprep.subr.mxu0 0.0
  %5493 = vmatpush2.msra.mxu0 0.0
  %5494 = vmatprep.subr.mxu0 0.0
  %5495 = vmatpush2.msra.mxu0 0.0
  %5496 = vmatprep.mubr.f32.mxu0 0.0
  %5497 = vmatmul.mubr.f32.gmra.mxu0 %v5427
  %v5498 = vpop.f32.mrf.mxu0
  %v5499 = vadd.f32 %v5418, %v5498
  %v5500 = vpop.f32.mrf.mxu0
  %5501 = vmatprep.mubr.f32.mxu0 0.0
  %5502 = vmatmul.mubr.f32.gmra.mxu0 %v5430
  %v5503 = vpop.f32.mrf.mxu0
  %v5504 = vadd.f32 %v5423, %v5503
  %v5505 = vpop.f32.mrf.mxu0
  %5506 = vdwg.mxu0
  %5507 = vmatprep.subr.mxu0 0.0
  %5508 = vmatpush1.msra.mxu0 0.0
  %5509 = vmatprep.subr.mxu0 0.0
  %5510 = vmatpush1.msra.mxu0 0.0
  %5511 = vmatprep.subr.mxu0 0.0
  %5512 = vmatpush1.msra.mxu0 0.0
  %5513 = vmatprep.subr.mxu0 0.0
  %5514 = vmatpush1.msra.mxu0 0.0
  %5515 = vmatprep.subr.mxu0 0.0
  %5516 = vmatpush1.msra.mxu0 0.0
  %5517 = vmatprep.subr.mxu0 0.0
  %5518 = vmatpush1.msra.mxu0 0.0
  %5519 = vmatprep.subr.mxu0 0.0
  %5520 = vmatpush1.msra.mxu0 0.0
  %5521 = vmatprep.subr.mxu0 0.0
  %5522 = vmatpush1.msra.mxu0 0.0
  %5523 = vmatprep.subr.mxu0 0.0
  %5524 = vmatpush1.msra.mxu0 0.0
  %5525 = vmatprep.subr.mxu0 0.0
  %5526 = vmatpush1.msra.mxu0 0.0
  %5527 = vmatprep.subr.mxu0 0.0
  %5528 = vmatpush1.msra.mxu0 0.0
  %5529 = vmatprep.subr.mxu0 0.0
  %5530 = vmatpush1.msra.mxu0 0.0
  %5531 = vmatprep.subr.mxu0 0.0
  %5532 = vmatpush1.msra.mxu0 0.0
  %5533 = vmatprep.subr.mxu0 0.0
  %5534 = vmatpush1.msra.mxu0 0.0
  %5535 = vmatprep.subr.mxu0 0.0
  %5536 = vmatpush1.msra.mxu0 0.0
  %5537 = vmatprep.subr.mxu0 0.0
  %5538 = vmatpush1.msra.mxu0 %v1341
  %5539 = vmatprep.subr.mxu0 0.0
  %5540 = vmatpush2.msra.mxu0 0.0
  %5541 = vmatprep.subr.mxu0 0.0
  %5542 = vmatpush2.msra.mxu0 0.0
  %5543 = vmatprep.subr.mxu0 0.0
  %5544 = vmatpush2.msra.mxu0 0.0
  %5545 = vmatprep.subr.mxu0 0.0
  %5546 = vmatpush2.msra.mxu0 0.0
  %5547 = vmatprep.subr.mxu0 0.0
  %5548 = vmatpush2.msra.mxu0 0.0
  %5549 = vmatprep.subr.mxu0 0.0
  %5550 = vmatpush2.msra.mxu0 0.0
  %5551 = vmatprep.subr.mxu0 0.0
  %5552 = vmatpush2.msra.mxu0 0.0
  %5553 = vmatprep.subr.mxu0 0.0
  %5554 = vmatpush2.msra.mxu0 0.0
  %5555 = vmatprep.subr.mxu0 0.0
  %5556 = vmatpush2.msra.mxu0 0.0
  %5557 = vmatprep.subr.mxu0 0.0
  %5558 = vmatpush2.msra.mxu0 0.0
  %5559 = vmatprep.subr.mxu0 0.0
  %5560 = vmatpush2.msra.mxu0 0.0
  %5561 = vmatprep.subr.mxu0 0.0
  %5562 = vmatpush2.msra.mxu0 0.0
  %5563 = vmatprep.subr.mxu0 0.0
  %5564 = vmatpush2.msra.mxu0 0.0
  %5565 = vmatprep.subr.mxu0 0.0
  %5566 = vmatpush2.msra.mxu0 0.0
  %5567 = vmatprep.subr.mxu0 0.0
  %5568 = vmatpush2.msra.mxu0 0.0
  %5569 = vmatprep.subr.mxu0 0.0
  %5570 = vmatpush2.msra.mxu0 0.0
  %5571 = vmatprep.mubr.f32.mxu0 0.0
  %5572 = vmatmul.mubr.f32.gmra.mxu0 %v5186
  %v5573 = vpop.f32.mrf.mxu0
  %v5574 = vadd.f32 0.0, %v5573
  %v5575 = vpop.f32.mrf.mxu0
  %5576 = vmatprep.mubr.f32.mxu0 0.0
  %5577 = vmatmul.mubr.f32.gmra.mxu0 %v5189
  %v5578 = vpop.f32.mrf.mxu0
  %v5579 = vadd.f32 0.0, %v5578
  %v5580 = vpop.f32.mrf.mxu0
  %5581 = vdwg.mxu0
  %v5582 = vld [vmem:[%s1918] sm:$0xff]
  %v5583 = vld [vmem:[%s1918 + $0x8] sm:$0xff]
  %v5585 = vsel %vm70, %v5582, 0
  %v5588 = vsel %vm70, %v5583, 0
  %5590 = vmatprep.subr.mxu0 0.0
  %5591 = vmatpush1.msra.mxu0 0.0
  %5592 = vmatprep.subr.mxu0 0.0
  %5593 = vmatpush1.msra.mxu0 0.0
  %5594 = vmatprep.subr.mxu0 0.0
  %5595 = vmatpush1.msra.mxu0 0.0
  %5596 = vmatprep.subr.mxu0 0.0
  %5597 = vmatpush1.msra.mxu0 0.0
  %5598 = vmatprep.subr.mxu0 0.0
  %5599 = vmatpush1.msra.mxu0 0.0
  %5600 = vmatprep.subr.mxu0 0.0
  %5601 = vmatpush1.msra.mxu0 0.0
  %5602 = vmatprep.subr.mxu0 0.0
  %5603 = vmatpush1.msra.mxu0 0.0
  %5604 = vmatprep.subr.mxu0 0.0
  %5605 = vmatpush1.msra.mxu0 0.0
  %5606 = vmatprep.subr.mxu0 0.0
  %5607 = vmatpush1.msra.mxu0 0.0
  %5608 = vmatprep.subr.mxu0 0.0
  %5609 = vmatpush1.msra.mxu0 0.0
  %5610 = vmatprep.subr.mxu0 0.0
  %5611 = vmatpush1.msra.mxu0 0.0
  %5612 = vmatprep.subr.mxu0 0.0
  %5613 = vmatpush1.msra.mxu0 0.0
  %5614 = vmatprep.subr.mxu0 0.0
  %5615 = vmatpush1.msra.mxu0 0.0
  %5616 = vmatprep.subr.mxu0 0.0
  %5617 = vmatpush1.msra.mxu0 0.0
  %5618 = vmatprep.subr.mxu0 0.0
  %5619 = vmatpush1.msra.mxu0 %v5579
  %5620 = vmatprep.subr.mxu0 0.0
  %5621 = vmatpush1.msra.mxu0 %v5574
  %5622 = vmatprep.subr.mxu0 0.0
  %5623 = vmatpush2.msra.mxu0 0.0
  %5624 = vmatprep.subr.mxu0 0.0
  %5625 = vmatpush2.msra.mxu0 0.0
  %5626 = vmatprep.subr.mxu0 0.0
  %5627 = vmatpush2.msra.mxu0 0.0
  %5628 = vmatprep.subr.mxu0 0.0
  %5629 = vmatpush2.msra.mxu0 0.0
  %5630 = vmatprep.subr.mxu0 0.0
  %5631 = vmatpush2.msra.mxu0 0.0
  %5632 = vmatprep.subr.mxu0 0.0
  %5633 = vmatpush2.msra.mxu0 0.0
  %5634 = vmatprep.subr.mxu0 0.0
  %5635 = vmatpush2.msra.mxu0 0.0
  %5636 = vmatprep.subr.mxu0 0.0
  %5637 = vmatpush2.msra.mxu0 0.0
  %5638 = vmatprep.subr.mxu0 0.0
  %5639 = vmatpush2.msra.mxu0 0.0
  %5640 = vmatprep.subr.mxu0 0.0
  %5641 = vmatpush2.msra.mxu0 0.0
  %5642 = vmatprep.subr.mxu0 0.0
  %5643 = vmatpush2.msra.mxu0 0.0
  %5644 = vmatprep.subr.mxu0 0.0
  %5645 = vmatpush2.msra.mxu0 0.0
  %5646 = vmatprep.subr.mxu0 0.0
  %5647 = vmatpush2.msra.mxu0 0.0
  %5648 = vmatprep.subr.mxu0 0.0
  %5649 = vmatpush2.msra.mxu0 0.0
  %5650 = vmatprep.subr.mxu0 0.0
  %5651 = vmatpush2.msra.mxu0 0.0
  %5652 = vmatprep.subr.mxu0 0.0
  %5653 = vmatpush2.msra.mxu0 0.0
  %5654 = vmatprep.mubr.f32.mxu0 0.0
  %5655 = vmatmul.mubr.f32.gmra.mxu0 %v5585
  %v5656 = vpop.f32.mrf.mxu0
  %v5657 = vadd.f32 0.0, %v5656
  %v5658 = vpop.f32.mrf.mxu0
  %5659 = vmatprep.mubr.f32.mxu0 0.0
  %5660 = vmatmul.mubr.f32.gmra.mxu0 %v5588
  %v5661 = vpop.f32.mrf.mxu0
  %v5662 = vadd.f32 0.0, %v5661
  %v5663 = vpop.f32.mrf.mxu0
  %5664 = vdwg.mxu0
  %v5665 = vadd.f32 %v5499, %v5657
  %v5666 = vadd.f32 %v5504, %v5662
  %v5667 = vld [vmem:[%s8] sm:$0xff]
  %v5668 = vld [vmem:[%s8 + $0x8] sm:$0xff]
  %5670 = vset.pattern.permute.xlu0 0
  %5671 = vperm.xlu0 %5670, %v5667
  %v5672 = vpop.permute.xlu0 %5671
  %5675 = vset.pattern.permute.xlu0 0
  %5676 = vperm.xlu0 %5675, %v5668
  %v5677 = vpop.permute.xlu0 %5676
  %v5679 = vadd.f32 %v5665, %v5672
  %v5680 = vadd.f32 %v5666, %v5677
  %v5681 = vadd.f32 %v4685, %v5679
  %v5682 = vadd.f32 %v4686, %v5680
  %v5683 = vtanh.pop %v5681
  %v5684 = vtanh.pop %v5682
  %s5685 = scalar_lea.vmem %s9, 32
  %5686 = vst.msk [vmem:[%s5685] sm:$0xff] %vm217, %v5683
  %5687 = vst.msk [vmem:[%s5685 + $0x8] sm:$0xff] %vm217, %v5684
  %v5688 = vld [vmem:[%s2024] sm:$0xff]
  %v5689 = vld [vmem:[%s2026] sm:$0xff]
  %v5691 = vsel %vm217, %v5689, 0
  %5693 = vmatprep.subr.mxu0 0.0
  %5694 = vmatpush1.msra.mxu0 0.0
  %5695 = vmatprep.subr.mxu0 0.0
  %5696 = vmatpush1.msra.mxu0 0.0
  %5697 = vmatprep.subr.mxu0 0.0
  %5698 = vmatpush1.msra.mxu0 0.0
  %5699 = vmatprep.subr.mxu0 0.0
  %5700 = vmatpush1.msra.mxu0 0.0
  %5701 = vmatprep.subr.mxu0 0.0
  %5702 = vmatpush1.msra.mxu0 0.0
  %5703 = vmatprep.subr.mxu0 0.0
  %5704 = vmatpush1.msra.mxu0 0.0
  %5705 = vmatprep.subr.mxu0 0.0
  %5706 = vmatpush1.msra.mxu0 0.0
  %5707 = vmatprep.subr.mxu0 0.0
  %5708 = vmatpush1.msra.mxu0 0.0
  %5709 = vmatprep.subr.mxu0 0.0
  %5710 = vmatpush1.msra.mxu0 0.0
  %5711 = vmatprep.subr.mxu0 0.0
  %5712 = vmatpush1.msra.mxu0 0.0
  %5713 = vmatprep.subr.mxu0 0.0
  %5714 = vmatpush1.msra.mxu0 0.0
  %5715 = vmatprep.subr.mxu0 0.0
  %5716 = vmatpush1.msra.mxu0 0.0
  %5717 = vmatprep.subr.mxu0 0.0
  %5718 = vmatpush1.msra.mxu0 0.0
  %5719 = vmatprep.subr.mxu0 0.0
  %5720 = vmatpush1.msra.mxu0 0.0
  %5721 = vmatprep.subr.mxu0 0.0
  %5722 = vmatpush1.msra.mxu0 0.0
  %5723 = vmatprep.subr.mxu0 0.0
  %5724 = vmatpush1.msra.mxu0 %v3903
  %5725 = vmatprep.subr.mxu0 0.0
  %5726 = vmatpush2.msra.mxu0 0.0
  %5727 = vmatprep.subr.mxu0 0.0
  %5728 = vmatpush2.msra.mxu0 0.0
  %5729 = vmatprep.subr.mxu0 0.0
  %5730 = vmatpush2.msra.mxu0 0.0
  %5731 = vmatprep.subr.mxu0 0.0
  %5732 = vmatpush2.msra.mxu0 0.0
  %5733 = vmatprep.subr.mxu0 0.0
  %5734 = vmatpush2.msra.mxu0 0.0
  %5735 = vmatprep.subr.mxu0 0.0
  %5736 = vmatpush2.msra.mxu0 0.0
  %5737 = vmatprep.subr.mxu0 0.0
  %5738 = vmatpush2.msra.mxu0 0.0
  %5739 = vmatprep.subr.mxu0 0.0
  %5740 = vmatpush2.msra.mxu0 0.0
  %5741 = vmatprep.subr.mxu0 0.0
  %5742 = vmatpush2.msra.mxu0 0.0
  %5743 = vmatprep.subr.mxu0 0.0
  %5744 = vmatpush2.msra.mxu0 0.0
  %5745 = vmatprep.subr.mxu0 0.0
  %5746 = vmatpush2.msra.mxu0 0.0
  %5747 = vmatprep.subr.mxu0 0.0
  %5748 = vmatpush2.msra.mxu0 0.0
  %5749 = vmatprep.subr.mxu0 0.0
  %5750 = vmatpush2.msra.mxu0 0.0
  %5751 = vmatprep.subr.mxu0 0.0
  %5752 = vmatpush2.msra.mxu0 0.0
  %5753 = vmatprep.subr.mxu0 0.0
  %5754 = vmatpush2.msra.mxu0 0.0
  %5755 = vmatprep.subr.mxu0 0.0
  %5756 = vmatpush2.msra.mxu0 0.0
  %5757 = vmatprep.mubr.f32.mxu0 0.0
  %5758 = vmatmul.mubr.f32.gmra.mxu0 %v5691
  %v5759 = vpop.f32.mrf.mxu0
  %v5760 = vadd.f32 0.0, %v5759
  %v5761 = vpop.f32.mrf.mxu0
  %5762 = vdwg.mxu0
  %v5764 = vsel %vm217, %v5688, 0
  %5766 = vmatprep.subr.mxu0 0.0
  %5767 = vmatpush1.msra.mxu0 0.0
  %5768 = vmatprep.subr.mxu0 0.0
  %5769 = vmatpush1.msra.mxu0 0.0
  %5770 = vmatprep.subr.mxu0 0.0
  %5771 = vmatpush1.msra.mxu0 0.0
  %5772 = vmatprep.subr.mxu0 0.0
  %5773 = vmatpush1.msra.mxu0 0.0
  %5774 = vmatprep.subr.mxu0 0.0
  %5775 = vmatpush1.msra.mxu0 0.0
  %5776 = vmatprep.subr.mxu0 0.0
  %5777 = vmatpush1.msra.mxu0 0.0
  %5778 = vmatprep.subr.mxu0 0.0
  %5779 = vmatpush1.msra.mxu0 0.0
  %5780 = vmatprep.subr.mxu0 0.0
  %5781 = vmatpush1.msra.mxu0 0.0
  %5782 = vmatprep.subr.mxu0 0.0
  %5783 = vmatpush1.msra.mxu0 0.0
  %5784 = vmatprep.subr.mxu0 0.0
  %5785 = vmatpush1.msra.mxu0 0.0
  %5786 = vmatprep.subr.mxu0 0.0
  %5787 = vmatpush1.msra.mxu0 0.0
  %5788 = vmatprep.subr.mxu0 0.0
  %5789 = vmatpush1.msra.mxu0 0.0
  %5790 = vmatprep.subr.mxu0 0.0
  %5791 = vmatpush1.msra.mxu0 0.0
  %5792 = vmatprep.subr.mxu0 0.0
  %5793 = vmatpush1.msra.mxu0 0.0
  %5794 = vmatprep.subr.mxu0 0.0
  %5795 = vmatpush1.msra.mxu0 0.0
  %5796 = vmatprep.subr.mxu0 0.0
  %5797 = vmatpush1.msra.mxu0 %v3979
  %5798 = vmatprep.subr.mxu0 0.0
  %5799 = vmatpush2.msra.mxu0 0.0
  %5800 = vmatprep.subr.mxu0 0.0
  %5801 = vmatpush2.msra.mxu0 0.0
  %5802 = vmatprep.subr.mxu0 0.0
  %5803 = vmatpush2.msra.mxu0 0.0
  %5804 = vmatprep.subr.mxu0 0.0
  %5805 = vmatpush2.msra.mxu0 0.0
  %5806 = vmatprep.subr.mxu0 0.0
  %5807 = vmatpush2.msra.mxu0 0.0
  %5808 = vmatprep.subr.mxu0 0.0
  %5809 = vmatpush2.msra.mxu0 0.0
  %5810 = vmatprep.subr.mxu0 0.0
  %5811 = vmatpush2.msra.mxu0 0.0
  %5812 = vmatprep.subr.mxu0 0.0
  %5813 = vmatpush2.msra.mxu0 0.0
  %5814 = vmatprep.subr.mxu0 0.0
  %5815 = vmatpush2.msra.mxu0 0.0
  %5816 = vmatprep.subr.mxu0 0.0
  %5817 = vmatpush2.msra.mxu0 0.0
  %5818 = vmatprep.subr.mxu0 0.0
  %5819 = vmatpush2.msra.mxu0 0.0
  %5820 = vmatprep.subr.mxu0 0.0
  %5821 = vmatpush2.msra.mxu0 0.0
  %5822 = vmatprep.subr.mxu0 0.0
  %5823 = vmatpush2.msra.mxu0 0.0
  %5824 = vmatprep.subr.mxu0 0.0
  %5825 = vmatpush2.msra.mxu0 0.0
  %5826 = vmatprep.subr.mxu0 0.0
  %5827 = vmatpush2.msra.mxu0 0.0
  %5828 = vmatprep.subr.mxu0 0.0
  %5829 = vmatpush2.msra.mxu0 0.0
  %5830 = vmatprep.mubr.f32.mxu0 0.0
  %5831 = vmatmul.mubr.f32.gmra.mxu0 %v5764
  %v5832 = vpop.f32.mrf.mxu0
  %v5833 = vadd.f32 %v5760, %v5832
  %v5834 = vpop.f32.mrf.mxu0
  %5835 = vdwg.mxu0
  %v5836 = vld [vmem:[%s2174] sm:$0xff]
  %v5838 = vsel %vm217, %v5836, 0
  %5840 = vmatprep.subr.mxu0 0.0
  %5841 = vmatpush1.msra.mxu0 0.0
  %5842 = vmatprep.subr.mxu0 0.0
  %5843 = vmatpush1.msra.mxu0 0.0
  %5844 = vmatprep.subr.mxu0 0.0
  %5845 = vmatpush1.msra.mxu0 0.0
  %5846 = vmatprep.subr.mxu0 0.0
  %5847 = vmatpush1.msra.mxu0 0.0
  %5848 = vmatprep.subr.mxu0 0.0
  %5849 = vmatpush1.msra.mxu0 0.0
  %5850 = vmatprep.subr.mxu0 0.0
  %5851 = vmatpush1.msra.mxu0 0.0
  %5852 = vmatprep.subr.mxu0 0.0
  %5853 = vmatpush1.msra.mxu0 0.0
  %5854 = vmatprep.subr.mxu0 0.0
  %5855 = vmatpush1.msra.mxu0 0.0
  %5856 = vmatprep.subr.mxu0 0.0
  %5857 = vmatpush1.msra.mxu0 0.0
  %5858 = vmatprep.subr.mxu0 0.0
  %5859 = vmatpush1.msra.mxu0 0.0
  %5860 = vmatprep.subr.mxu0 0.0
  %5861 = vmatpush1.msra.mxu0 0.0
  %5862 = vmatprep.subr.mxu0 0.0
  %5863 = vmatpush1.msra.mxu0 0.0
  %5864 = vmatprep.subr.mxu0 0.0
  %5865 = vmatpush1.msra.mxu0 0.0
  %5866 = vmatprep.subr.mxu0 0.0
  %5867 = vmatpush1.msra.mxu0 0.0
  %5868 = vmatprep.subr.mxu0 0.0
  %5869 = vmatpush1.msra.mxu0 0.0
  %5870 = vmatprep.subr.mxu0 0.0
  %5871 = vmatpush1.msra.mxu0 %v4126
  %5872 = vmatprep.subr.mxu0 0.0
  %5873 = vmatpush2.msra.mxu0 0.0
  %5874 = vmatprep.subr.mxu0 0.0
  %5875 = vmatpush2.msra.mxu0 0.0
  %5876 = vmatprep.subr.mxu0 0.0
  %5877 = vmatpush2.msra.mxu0 0.0
  %5878 = vmatprep.subr.mxu0 0.0
  %5879 = vmatpush2.msra.mxu0 0.0
  %5880 = vmatprep.subr.mxu0 0.0
  %5881 = vmatpush2.msra.mxu0 0.0
  %5882 = vmatprep.subr.mxu0 0.0
  %5883 = vmatpush2.msra.mxu0 0.0
  %5884 = vmatprep.subr.mxu0 0.0
  %5885 = vmatpush2.msra.mxu0 0.0
  %5886 = vmatprep.subr.mxu0 0.0
  %5887 = vmatpush2.msra.mxu0 0.0
  %5888 = vmatprep.subr.mxu0 0.0
  %5889 = vmatpush2.msra.mxu0 0.0
  %5890 = vmatprep.subr.mxu0 0.0
  %5891 = vmatpush2.msra.mxu0 0.0
  %5892 = vmatprep.subr.mxu0 0.0
  %5893 = vmatpush2.msra.mxu0 0.0
  %5894 = vmatprep.subr.mxu0 0.0
  %5895 = vmatpush2.msra.mxu0 0.0
  %5896 = vmatprep.subr.mxu0 0.0
  %5897 = vmatpush2.msra.mxu0 0.0
  %5898 = vmatprep.subr.mxu0 0.0
  %5899 = vmatpush2.msra.mxu0 0.0
  %5900 = vmatprep.subr.mxu0 0.0
  %5901 = vmatpush2.msra.mxu0 0.0
  %5902 = vmatprep.subr.mxu0 0.0
  %5903 = vmatpush2.msra.mxu0 0.0
  %5904 = vmatprep.mubr.f32.mxu0 0.0
  %5905 = vmatmul.mubr.f32.gmra.mxu0 %v5838
  %v5906 = vpop.f32.mrf.mxu0
  %v5907 = vadd.f32 0.0, %v5906
  %v5908 = vpop.f32.mrf.mxu0
  %5909 = vdwg.mxu0
  %v5910 = vadd.f32 %v5833, %v5907
  %v5911 = vld [vmem:[%s2250] sm:$0xff]
  %5913 = vset.pattern.permute.xlu0 0
  %5914 = vperm.xlu0 %5913, %v5911
  %v5915 = vpop.permute.xlu0 %5914
  %v5917 = vadd.f32 %v5910, %v5915
  %v5918 = vmax.f32 %v5917, 0.0
  %v5920 = vsel %vm528, %v5918, 0
  %5922 = vmatprep.subr.mxu0 0.0
  %5923 = vmatpush1.msra.mxu0 0.0
  %5924 = vmatprep.subr.mxu0 0.0
  %5925 = vmatpush1.msra.mxu0 0.0
  %5926 = vmatprep.subr.mxu0 0.0
  %5927 = vmatpush1.msra.mxu0 0.0
  %5928 = vmatprep.subr.mxu0 0.0
  %5929 = vmatpush1.msra.mxu0 0.0
  %5930 = vmatprep.subr.mxu0 0.0
  %5931 = vmatpush1.msra.mxu0 0.0
  %5932 = vmatprep.subr.mxu0 0.0
  %5933 = vmatpush1.msra.mxu0 0.0
  %5934 = vmatprep.subr.mxu0 0.0
  %5935 = vmatpush1.msra.mxu0 0.0
  %5936 = vmatprep.subr.mxu0 0.0
  %5937 = vmatpush1.msra.mxu0 0.0
  %5938 = vmatprep.subr.mxu0 0.0
  %5939 = vmatpush1.msra.mxu0 0.0
  %5940 = vmatprep.subr.mxu0 0.0
  %5941 = vmatpush1.msra.mxu0 0.0
  %5942 = vmatprep.subr.mxu0 0.0
  %5943 = vmatpush1.msra.mxu0 0.0
  %5944 = vmatprep.subr.mxu0 0.0
  %5945 = vmatpush1.msra.mxu0 0.0
  %5946 = vmatprep.subr.mxu0 0.0
  %5947 = vmatpush1.msra.mxu0 0.0
  %5948 = vmatprep.subr.mxu0 0.0
  %5949 = vmatpush1.msra.mxu0 0.0
  %5950 = vmatprep.subr.mxu0 0.0
  %5951 = vmatpush1.msra.mxu0 0.0
  %5952 = vmatprep.subr.mxu0 0.0
  %5953 = vmatpush1.msra.mxu0 %v43
  %5954 = vmatprep.subr.mxu0 0.0
  %5955 = vmatpush2.msra.mxu0 0.0
  %5956 = vmatprep.subr.mxu0 0.0
  %5957 = vmatpush2.msra.mxu0 0.0
  %5958 = vmatprep.subr.mxu0 0.0
  %5959 = vmatpush2.msra.mxu0 0.0
  %5960 = vmatprep.subr.mxu0 0.0
  %5961 = vmatpush2.msra.mxu0 0.0
  %5962 = vmatprep.subr.mxu0 0.0
  %5963 = vmatpush2.msra.mxu0 0.0
  %5964 = vmatprep.subr.mxu0 0.0
  %5965 = vmatpush2.msra.mxu0 0.0
  %5966 = vmatprep.subr.mxu0 0.0
  %5967 = vmatpush2.msra.mxu0 0.0
  %5968 = vmatprep.subr.mxu0 0.0
  %5969 = vmatpush2.msra.mxu0 0.0
  %5970 = vmatprep.subr.mxu0 0.0
  %5971 = vmatpush2.msra.mxu0 0.0
  %5972 = vmatprep.subr.mxu0 0.0
  %5973 = vmatpush2.msra.mxu0 0.0
  %5974 = vmatprep.subr.mxu0 0.0
  %5975 = vmatpush2.msra.mxu0 0.0
  %5976 = vmatprep.subr.mxu0 0.0
  %5977 = vmatpush2.msra.mxu0 0.0
  %5978 = vmatprep.subr.mxu0 0.0
  %5979 = vmatpush2.msra.mxu0 0.0
  %5980 = vmatprep.subr.mxu0 0.0
  %5981 = vmatpush2.msra.mxu0 0.0
  %5982 = vmatprep.subr.mxu0 0.0
  %5983 = vmatpush2.msra.mxu0 0.0
  %5984 = vmatprep.subr.mxu0 0.0
  %5985 = vmatpush2.msra.mxu0 0.0
  %5986 = vmatprep.mubr.f32.mxu0 0.0
  %5987 = vmatmul.mubr.f32.gmra.mxu0 %v5920
  %v5988 = vpop.f32.mrf.mxu0
  %v5989 = vadd.f32 0.0, %v5988
  %v5990 = vpop.f32.mrf.mxu0
  %5991 = vdwg.mxu0
  %v5992 = vld [vmem:[%s2332] sm:$0xff]
  %v5993 = vld [vmem:[%s2332 + $0x8] sm:$0xff]
  %5994 = vmatprep.subr.mxu0 0.0
  %5995 = vmatpush1.msra.mxu0 0.0
  %5996 = vmatprep.subr.mxu0 0.0
  %5997 = vmatpush1.msra.mxu0 0.0
  %5998 = vmatprep.subr.mxu0 0.0
  %5999 = vmatpush1.msra.mxu0 0.0
  %6000 = vmatprep.subr.mxu0 0.0
  %6001 = vmatpush1.msra.mxu0 0.0
  %6002 = vmatprep.subr.mxu0 0.0
  %6003 = vmatpush1.msra.mxu0 0.0
  %6004 = vmatprep.subr.mxu0 0.0
  %6005 = vmatpush1.msra.mxu0 0.0
  %6006 = vmatprep.subr.mxu0 0.0
  %6007 = vmatpush1.msra.mxu0 0.0
  %6008 = vmatprep.subr.mxu0 0.0
  %6009 = vmatpush1.msra.mxu0 0.0
  %6010 = vmatprep.subr.mxu0 0.0
  %6011 = vmatpush1.msra.mxu0 0.0
  %6012 = vmatprep.subr.mxu0 0.0
  %6013 = vmatpush1.msra.mxu0 0.0
  %6014 = vmatprep.subr.mxu0 0.0
  %6015 = vmatpush1.msra.mxu0 0.0
  %6016 = vmatprep.subr.mxu0 0.0
  %6017 = vmatpush1.msra.mxu0 0.0
  %6018 = vmatprep.subr.mxu0 0.0
  %6019 = vmatpush1.msra.mxu0 0.0
  %6020 = vmatprep.subr.mxu0 0.0
  %6021 = vmatpush1.msra.mxu0 0.0
  %6022 = vmatprep.subr.mxu0 0.0
  %6023 = vmatpush1.msra.mxu0 0.0
  %6024 = vmatprep.subr.mxu0 0.0
  %6025 = vmatpush1.msra.mxu0 %v49
  %6026 = vmatprep.subr.mxu0 0.0
  %6027 = vmatpush2.msra.mxu0 0.0
  %6028 = vmatprep.subr.mxu0 0.0
  %6029 = vmatpush2.msra.mxu0 0.0
  %6030 = vmatprep.subr.mxu0 0.0
  %6031 = vmatpush2.msra.mxu0 0.0
  %6032 = vmatprep.subr.mxu0 0.0
  %6033 = vmatpush2.msra.mxu0 0.0
  %6034 = vmatprep.subr.mxu0 0.0
  %6035 = vmatpush2.msra.mxu0 0.0
  %6036 = vmatprep.subr.mxu0 0.0
  %6037 = vmatpush2.msra.mxu0 0.0
  %6038 = vmatprep.subr.mxu0 0.0
  %6039 = vmatpush2.msra.mxu0 0.0
  %6040 = vmatprep.subr.mxu0 0.0
  %6041 = vmatpush2.msra.mxu0 0.0
  %6042 = vmatprep.subr.mxu0 0.0
  %6043 = vmatpush2.msra.mxu0 0.0
  %6044 = vmatprep.subr.mxu0 0.0
  %6045 = vmatpush2.msra.mxu0 0.0
  %6046 = vmatprep.subr.mxu0 0.0
  %6047 = vmatpush2.msra.mxu0 0.0
  %6048 = vmatprep.subr.mxu0 0.0
  %6049 = vmatpush2.msra.mxu0 0.0
  %6050 = vmatprep.subr.mxu0 0.0
  %6051 = vmatpush2.msra.mxu0 0.0
  %6052 = vmatprep.subr.mxu0 0.0
  %6053 = vmatpush2.msra.mxu0 0.0
  %6054 = vmatprep.subr.mxu0 0.0
  %6055 = vmatpush2.msra.mxu0 0.0
  %6056 = vmatprep.subr.mxu0 0.0
  %6057 = vmatpush2.msra.mxu0 0.0
  %6058 = vmatprep.mubr.f32.mxu0 0.0
  %6059 = vmatmul.mubr.f32.gmra.mxu0 %v5920
  %v6060 = vpop.f32.mrf.mxu0
  %v6061 = vadd.f32 0.0, %v6060
  %v6062 = vpop.f32.mrf.mxu0
  %6063 = vdwg.mxu0
  %v6064 = vld [vmem:[%s2405] sm:$0xff]
  %v6065 = vld [vmem:[%s2405 + $0x8] sm:$0xff]
  %v6067 = vsel %vm528, %v6064, 0
  %v6070 = vsel %vm528, %v6065, 0
  %6072 = vmatprep.subr.mxu0 0.0
  %6073 = vmatpush1.msra.mxu0 0.0
  %6074 = vmatprep.subr.mxu0 0.0
  %6075 = vmatpush1.msra.mxu0 0.0
  %6076 = vmatprep.subr.mxu0 0.0
  %6077 = vmatpush1.msra.mxu0 0.0
  %6078 = vmatprep.subr.mxu0 0.0
  %6079 = vmatpush1.msra.mxu0 0.0
  %6080 = vmatprep.subr.mxu0 0.0
  %6081 = vmatpush1.msra.mxu0 0.0
  %6082 = vmatprep.subr.mxu0 0.0
  %6083 = vmatpush1.msra.mxu0 0.0
  %6084 = vmatprep.subr.mxu0 0.0
  %6085 = vmatpush1.msra.mxu0 0.0
  %6086 = vmatprep.subr.mxu0 0.0
  %6087 = vmatpush1.msra.mxu0 0.0
  %6088 = vmatprep.subr.mxu0 0.0
  %6089 = vmatpush1.msra.mxu0 0.0
  %6090 = vmatprep.subr.mxu0 0.0
  %6091 = vmatpush1.msra.mxu0 0.0
  %6092 = vmatprep.subr.mxu0 0.0
  %6093 = vmatpush1.msra.mxu0 0.0
  %6094 = vmatprep.subr.mxu0 0.0
  %6095 = vmatpush1.msra.mxu0 0.0
  %6096 = vmatprep.subr.mxu0 0.0
  %6097 = vmatpush1.msra.mxu0 0.0
  %6098 = vmatprep.subr.mxu0 0.0
  %6099 = vmatpush1.msra.mxu0 0.0
  %6100 = vmatprep.subr.mxu0 0.0
  %6101 = vmatpush1.msra.mxu0 0.0
  %6102 = vmatprep.subr.mxu0 0.0
  %6103 = vmatpush1.msra.mxu0 %v6061
  %6104 = vmatprep.subr.mxu0 0.0
  %6105 = vmatpush2.msra.mxu0 0.0
  %6106 = vmatprep.subr.mxu0 0.0
  %6107 = vmatpush2.msra.mxu0 0.0
  %6108 = vmatprep.subr.mxu0 0.0
  %6109 = vmatpush2.msra.mxu0 0.0
  %6110 = vmatprep.subr.mxu0 0.0
  %6111 = vmatpush2.msra.mxu0 0.0
  %6112 = vmatprep.subr.mxu0 0.0
  %6113 = vmatpush2.msra.mxu0 0.0
  %6114 = vmatprep.subr.mxu0 0.0
  %6115 = vmatpush2.msra.mxu0 0.0
  %6116 = vmatprep.subr.mxu0 0.0
  %6117 = vmatpush2.msra.mxu0 0.0
  %6118 = vmatprep.subr.mxu0 0.0
  %6119 = vmatpush2.msra.mxu0 0.0
  %6120 = vmatprep.subr.mxu0 0.0
  %6121 = vmatpush2.msra.mxu0 0.0
  %6122 = vmatprep.subr.mxu0 0.0
  %6123 = vmatpush2.msra.mxu0 0.0
  %6124 = vmatprep.subr.mxu0 0.0
  %6125 = vmatpush2.msra.mxu0 0.0
  %6126 = vmatprep.subr.mxu0 0.0
  %6127 = vmatpush2.msra.mxu0 0.0
  %6128 = vmatprep.subr.mxu0 0.0
  %6129 = vmatpush2.msra.mxu0 0.0
  %6130 = vmatprep.subr.mxu0 0.0
  %6131 = vmatpush2.msra.mxu0 0.0
  %6132 = vmatprep.subr.mxu0 0.0
  %6133 = vmatpush2.msra.mxu0 0.0
  %6134 = vmatprep.subr.mxu0 0.0
  %6135 = vmatpush2.msra.mxu0 0.0
  %6136 = vmatprep.mubr.f32.mxu0 0.0
  %6137 = vmatmul.mubr.f32.gmra.mxu0 %v6067
  %v6138 = vpop.f32.mrf.mxu0
  %v6139 = vadd.f32 0.0, %v6138
  %v6140 = vpop.f32.mrf.mxu0
  %6141 = vmatprep.mubr.f32.mxu0 0.0
  %6142 = vmatmul.mubr.f32.gmra.mxu0 %v6070
  %v6143 = vpop.f32.mrf.mxu0
  %v6144 = vadd.f32 0.0, %v6143
  %v6145 = vpop.f32.mrf.mxu0
  %6146 = vdwg.mxu0
  %v6148 = vsel %vm528, %v5992, 0
  %v6151 = vsel %vm528, %v5993, 0
  %6153 = vmatprep.subr.mxu0 0.0
  %6154 = vmatpush1.msra.mxu0 0.0
  %6155 = vmatprep.subr.mxu0 0.0
  %6156 = vmatpush1.msra.mxu0 0.0
  %6157 = vmatprep.subr.mxu0 0.0
  %6158 = vmatpush1.msra.mxu0 0.0
  %6159 = vmatprep.subr.mxu0 0.0
  %6160 = vmatpush1.msra.mxu0 0.0
  %6161 = vmatprep.subr.mxu0 0.0
  %6162 = vmatpush1.msra.mxu0 0.0
  %6163 = vmatprep.subr.mxu0 0.0
  %6164 = vmatpush1.msra.mxu0 0.0
  %6165 = vmatprep.subr.mxu0 0.0
  %6166 = vmatpush1.msra.mxu0 0.0
  %6167 = vmatprep.subr.mxu0 0.0
  %6168 = vmatpush1.msra.mxu0 0.0
  %6169 = vmatprep.subr.mxu0 0.0
  %6170 = vmatpush1.msra.mxu0 0.0
  %6171 = vmatprep.subr.mxu0 0.0
  %6172 = vmatpush1.msra.mxu0 0.0
  %6173 = vmatprep.subr.mxu0 0.0
  %6174 = vmatpush1.msra.mxu0 0.0
  %6175 = vmatprep.subr.mxu0 0.0
  %6176 = vmatpush1.msra.mxu0 0.0
  %6177 = vmatprep.subr.mxu0 0.0
  %6178 = vmatpush1.msra.mxu0 0.0
  %6179 = vmatprep.subr.mxu0 0.0
  %6180 = vmatpush1.msra.mxu0 0.0
  %6181 = vmatprep.subr.mxu0 0.0
  %6182 = vmatpush1.msra.mxu0 0.0
  %6183 = vmatprep.subr.mxu0 0.0
  %6184 = vmatpush1.msra.mxu0 %v5989
  %6185 = vmatprep.subr.mxu0 0.0
  %6186 = vmatpush2.msra.mxu0 0.0
  %6187 = vmatprep.subr.mxu0 0.0
  %6188 = vmatpush2.msra.mxu0 0.0
  %6189 = vmatprep.subr.mxu0 0.0
  %6190 = vmatpush2.msra.mxu0 0.0
  %6191 = vmatprep.subr.mxu0 0.0
  %6192 = vmatpush2.msra.mxu0 0.0
  %6193 = vmatprep.subr.mxu0 0.0
  %6194 = vmatpush2.msra.mxu0 0.0
  %6195 = vmatprep.subr.mxu0 0.0
  %6196 = vmatpush2.msra.mxu0 0.0
  %6197 = vmatprep.subr.mxu0 0.0
  %6198 = vmatpush2.msra.mxu0 0.0
  %6199 = vmatprep.subr.mxu0 0.0
  %6200 = vmatpush2.msra.mxu0 0.0
  %6201 = vmatprep.subr.mxu0 0.0
  %6202 = vmatpush2.msra.mxu0 0.0
  %6203 = vmatprep.subr.mxu0 0.0
  %6204 = vmatpush2.msra.mxu0 0.0
  %6205 = vmatprep.subr.mxu0 0.0
  %6206 = vmatpush2.msra.mxu0 0.0
  %6207 = vmatprep.subr.mxu0 0.0
  %6208 = vmatpush2.msra.mxu0 0.0
  %6209 = vmatprep.subr.mxu0 0.0
  %6210 = vmatpush2.msra.mxu0 0.0
  %6211 = vmatprep.subr.mxu0 0.0
  %6212 = vmatpush2.msra.mxu0 0.0
  %6213 = vmatprep.subr.mxu0 0.0
  %6214 = vmatpush2.msra.mxu0 0.0
  %6215 = vmatprep.subr.mxu0 0.0
  %6216 = vmatpush2.msra.mxu0 0.0
  %6217 = vmatprep.mubr.f32.mxu0 0.0
  %6218 = vmatmul.mubr.f32.gmra.mxu0 %v6148
  %v6219 = vpop.f32.mrf.mxu0
  %v6220 = vadd.f32 %v6139, %v6219
  %v6221 = vpop.f32.mrf.mxu0
  %6222 = vmatprep.mubr.f32.mxu0 0.0
  %6223 = vmatmul.mubr.f32.gmra.mxu0 %v6151
  %v6224 = vpop.f32.mrf.mxu0
  %v6225 = vadd.f32 %v6144, %v6224
  %v6226 = vpop.f32.mrf.mxu0
  %6227 = vdwg.mxu0
  %6228 = vmatprep.subr.mxu0 0.0
  %6229 = vmatpush1.msra.mxu0 0.0
  %6230 = vmatprep.subr.mxu0 0.0
  %6231 = vmatpush1.msra.mxu0 0.0
  %6232 = vmatprep.subr.mxu0 0.0
  %6233 = vmatpush1.msra.mxu0 0.0
  %6234 = vmatprep.subr.mxu0 0.0
  %6235 = vmatpush1.msra.mxu0 0.0
  %6236 = vmatprep.subr.mxu0 0.0
  %6237 = vmatpush1.msra.mxu0 0.0
  %6238 = vmatprep.subr.mxu0 0.0
  %6239 = vmatpush1.msra.mxu0 0.0
  %6240 = vmatprep.subr.mxu0 0.0
  %6241 = vmatpush1.msra.mxu0 0.0
  %6242 = vmatprep.subr.mxu0 0.0
  %6243 = vmatpush1.msra.mxu0 0.0
  %6244 = vmatprep.subr.mxu0 0.0
  %6245 = vmatpush1.msra.mxu0 0.0
  %6246 = vmatprep.subr.mxu0 0.0
  %6247 = vmatpush1.msra.mxu0 0.0
  %6248 = vmatprep.subr.mxu0 0.0
  %6249 = vmatpush1.msra.mxu0 0.0
  %6250 = vmatprep.subr.mxu0 0.0
  %6251 = vmatpush1.msra.mxu0 0.0
  %6252 = vmatprep.subr.mxu0 0.0
  %6253 = vmatpush1.msra.mxu0 0.0
  %6254 = vmatprep.subr.mxu0 0.0
  %6255 = vmatpush1.msra.mxu0 0.0
  %6256 = vmatprep.subr.mxu0 0.0
  %6257 = vmatpush1.msra.mxu0 0.0
  %6258 = vmatprep.subr.mxu0 0.0
  %6259 = vmatpush1.msra.mxu0 %v56
  %6260 = vmatprep.subr.mxu0 0.0
  %6261 = vmatpush2.msra.mxu0 0.0
  %6262 = vmatprep.subr.mxu0 0.0
  %6263 = vmatpush2.msra.mxu0 0.0
  %6264 = vmatprep.subr.mxu0 0.0
  %6265 = vmatpush2.msra.mxu0 0.0
  %6266 = vmatprep.subr.mxu0 0.0
  %6267 = vmatpush2.msra.mxu0 0.0
  %6268 = vmatprep.subr.mxu0 0.0
  %6269 = vmatpush2.msra.mxu0 0.0
  %6270 = vmatprep.subr.mxu0 0.0
  %6271 = vmatpush2.msra.mxu0 0.0
  %6272 = vmatprep.subr.mxu0 0.0
  %6273 = vmatpush2.msra.mxu0 0.0
  %6274 = vmatprep.subr.mxu0 0.0
  %6275 = vmatpush2.msra.mxu0 0.0
  %6276 = vmatprep.subr.mxu0 0.0
  %6277 = vmatpush2.msra.mxu0 0.0
  %6278 = vmatprep.subr.mxu0 0.0
  %6279 = vmatpush2.msra.mxu0 0.0
  %6280 = vmatprep.subr.mxu0 0.0
  %6281 = vmatpush2.msra.mxu0 0.0
  %6282 = vmatprep.subr.mxu0 0.0
  %6283 = vmatpush2.msra.mxu0 0.0
  %6284 = vmatprep.subr.mxu0 0.0
  %6285 = vmatpush2.msra.mxu0 0.0
  %6286 = vmatprep.subr.mxu0 0.0
  %6287 = vmatpush2.msra.mxu0 0.0
  %6288 = vmatprep.subr.mxu0 0.0
  %6289 = vmatpush2.msra.mxu0 0.0
  %6290 = vmatprep.subr.mxu0 0.0
  %6291 = vmatpush2.msra.mxu0 0.0
  %6292 = vmatprep.mubr.f32.mxu0 0.0
  %6293 = vmatmul.mubr.f32.gmra.mxu0 %v5920
  %v6294 = vpop.f32.mrf.mxu0
  %v6295 = vadd.f32 0.0, %v6294
  %v6296 = vpop.f32.mrf.mxu0
  %6297 = vdwg.mxu0
  %v6298 = vld [vmem:[%s2640] sm:$0xff]
  %v6299 = vld [vmem:[%s2640 + $0x8] sm:$0xff]
  %v6301 = vsel %vm528, %v6298, 0
  %v6304 = vsel %vm528, %v6299, 0
  %6306 = vmatprep.subr.mxu0 0.0
  %6307 = vmatpush1.msra.mxu0 0.0
  %6308 = vmatprep.subr.mxu0 0.0
  %6309 = vmatpush1.msra.mxu0 0.0
  %6310 = vmatprep.subr.mxu0 0.0
  %6311 = vmatpush1.msra.mxu0 0.0
  %6312 = vmatprep.subr.mxu0 0.0
  %6313 = vmatpush1.msra.mxu0 0.0
  %6314 = vmatprep.subr.mxu0 0.0
  %6315 = vmatpush1.msra.mxu0 0.0
  %6316 = vmatprep.subr.mxu0 0.0
  %6317 = vmatpush1.msra.mxu0 0.0
  %6318 = vmatprep.subr.mxu0 0.0
  %6319 = vmatpush1.msra.mxu0 0.0
  %6320 = vmatprep.subr.mxu0 0.0
  %6321 = vmatpush1.msra.mxu0 0.0
  %6322 = vmatprep.subr.mxu0 0.0
  %6323 = vmatpush1.msra.mxu0 0.0
  %6324 = vmatprep.subr.mxu0 0.0
  %6325 = vmatpush1.msra.mxu0 0.0
  %6326 = vmatprep.subr.mxu0 0.0
  %6327 = vmatpush1.msra.mxu0 0.0
  %6328 = vmatprep.subr.mxu0 0.0
  %6329 = vmatpush1.msra.mxu0 0.0
  %6330 = vmatprep.subr.mxu0 0.0
  %6331 = vmatpush1.msra.mxu0 0.0
  %6332 = vmatprep.subr.mxu0 0.0
  %6333 = vmatpush1.msra.mxu0 0.0
  %6334 = vmatprep.subr.mxu0 0.0
  %6335 = vmatpush1.msra.mxu0 0.0
  %6336 = vmatprep.subr.mxu0 0.0
  %6337 = vmatpush1.msra.mxu0 %v6295
  %6338 = vmatprep.subr.mxu0 0.0
  %6339 = vmatpush2.msra.mxu0 0.0
  %6340 = vmatprep.subr.mxu0 0.0
  %6341 = vmatpush2.msra.mxu0 0.0
  %6342 = vmatprep.subr.mxu0 0.0
  %6343 = vmatpush2.msra.mxu0 0.0
  %6344 = vmatprep.subr.mxu0 0.0
  %6345 = vmatpush2.msra.mxu0 0.0
  %6346 = vmatprep.subr.mxu0 0.0
  %6347 = vmatpush2.msra.mxu0 0.0
  %6348 = vmatprep.subr.mxu0 0.0
  %6349 = vmatpush2.msra.mxu0 0.0
  %6350 = vmatprep.subr.mxu0 0.0
  %6351 = vmatpush2.msra.mxu0 0.0
  %6352 = vmatprep.subr.mxu0 0.0
  %6353 = vmatpush2.msra.mxu0 0.0
  %6354 = vmatprep.subr.mxu0 0.0
  %6355 = vmatpush2.msra.mxu0 0.0
  %6356 = vmatprep.subr.mxu0 0.0
  %6357 = vmatpush2.msra.mxu0 0.0
  %6358 = vmatprep.subr.mxu0 0.0
  %6359 = vmatpush2.msra.mxu0 0.0
  %6360 = vmatprep.subr.mxu0 0.0
  %6361 = vmatpush2.msra.mxu0 0.0
  %6362 = vmatprep.subr.mxu0 0.0
  %6363 = vmatpush2.msra.mxu0 0.0
  %6364 = vmatprep.subr.mxu0 0.0
  %6365 = vmatpush2.msra.mxu0 0.0
  %6366 = vmatprep.subr.mxu0 0.0
  %6367 = vmatpush2.msra.mxu0 0.0
  %6368 = vmatprep.subr.mxu0 0.0
  %6369 = vmatpush2.msra.mxu0 0.0
  %6370 = vmatprep.mubr.f32.mxu0 0.0
  %6371 = vmatmul.mubr.f32.gmra.mxu0 %v6301
  %v6372 = vpop.f32.mrf.mxu0
  %v6373 = vadd.f32 0.0, %v6372
  %v6374 = vpop.f32.mrf.mxu0
  %6375 = vmatprep.mubr.f32.mxu0 0.0
  %6376 = vmatmul.mubr.f32.gmra.mxu0 %v6304
  %v6377 = vpop.f32.mrf.mxu0
  %v6378 = vadd.f32 0.0, %v6377
  %v6379 = vpop.f32.mrf.mxu0
  %6380 = vdwg.mxu0
  %v6381 = vadd.f32 %v6220, %v6373
  %v6382 = vadd.f32 %v6225, %v6378
  %v6383 = vld [vmem:[%s2726] sm:$0xff]
  %v6384 = vld [vmem:[%s2726 + $0x8] sm:$0xff]
  %6386 = vset.pattern.permute.xlu0 0
  %6387 = vperm.xlu0 %6386, %v6383
  %v6388 = vpop.permute.xlu0 %6387
  %6391 = vset.pattern.permute.xlu0 0
  %6392 = vperm.xlu0 %6391, %v6384
  %v6393 = vpop.permute.xlu0 %6392
  %v6395 = vadd.f32 %v6381, %v6388
  %v6396 = vadd.f32 %v6382, %v6393
  %v6397 = vmax.f32 %v6395, 0.0
  %v6398 = vmax.f32 %v6396, 0.0
  %v6400 = vsel %vm217, %v6397, 0
  %v6403 = vsel %vm217, %v6398, 0
  %6405 = vmatprep.subr.mxu0 0.0
  %6406 = vmatpush1.msra.mxu0 0.0
  %6407 = vmatprep.subr.mxu0 0.0
  %6408 = vmatpush1.msra.mxu0 0.0
  %6409 = vmatprep.subr.mxu0 0.0
  %6410 = vmatpush1.msra.mxu0 0.0
  %6411 = vmatprep.subr.mxu0 0.0
  %6412 = vmatpush1.msra.mxu0 0.0
  %6413 = vmatprep.subr.mxu0 0.0
  %6414 = vmatpush1.msra.mxu0 0.0
  %6415 = vmatprep.subr.mxu0 0.0
  %6416 = vmatpush1.msra.mxu0 0.0
  %6417 = vmatprep.subr.mxu0 0.0
  %6418 = vmatpush1.msra.mxu0 0.0
  %6419 = vmatprep.subr.mxu0 0.0
  %6420 = vmatpush1.msra.mxu0 0.0
  %6421 = vmatprep.subr.mxu0 0.0
  %6422 = vmatpush1.msra.mxu0 0.0
  %6423 = vmatprep.subr.mxu0 0.0
  %6424 = vmatpush1.msra.mxu0 0.0
  %6425 = vmatprep.subr.mxu0 0.0
  %6426 = vmatpush1.msra.mxu0 0.0
  %6427 = vmatprep.subr.mxu0 0.0
  %6428 = vmatpush1.msra.mxu0 0.0
  %6429 = vmatprep.subr.mxu0 0.0
  %6430 = vmatpush1.msra.mxu0 0.0
  %6431 = vmatprep.subr.mxu0 0.0
  %6432 = vmatpush1.msra.mxu0 0.0
  %6433 = vmatprep.subr.mxu0 0.0
  %6434 = vmatpush1.msra.mxu0 0.0
  %6435 = vmatprep.subr.mxu0 0.0
  %6436 = vmatpush1.msra.mxu0 %v1018
  %6437 = vmatprep.subr.mxu0 0.0
  %6438 = vmatpush2.msra.mxu0 0.0
  %6439 = vmatprep.subr.mxu0 0.0
  %6440 = vmatpush2.msra.mxu0 0.0
  %6441 = vmatprep.subr.mxu0 0.0
  %6442 = vmatpush2.msra.mxu0 0.0
  %6443 = vmatprep.subr.mxu0 0.0
  %6444 = vmatpush2.msra.mxu0 0.0
  %6445 = vmatprep.subr.mxu0 0.0
  %6446 = vmatpush2.msra.mxu0 0.0
  %6447 = vmatprep.subr.mxu0 0.0
  %6448 = vmatpush2.msra.mxu0 0.0
  %6449 = vmatprep.subr.mxu0 0.0
  %6450 = vmatpush2.msra.mxu0 0.0
  %6451 = vmatprep.subr.mxu0 0.0
  %6452 = vmatpush2.msra.mxu0 0.0
  %6453 = vmatprep.subr.mxu0 0.0
  %6454 = vmatpush2.msra.mxu0 0.0
  %6455 = vmatprep.subr.mxu0 0.0
  %6456 = vmatpush2.msra.mxu0 0.0
  %6457 = vmatprep.subr.mxu0 0.0
  %6458 = vmatpush2.msra.mxu0 0.0
  %6459 = vmatprep.subr.mxu0 0.0
  %6460 = vmatpush2.msra.mxu0 0.0
  %6461 = vmatprep.subr.mxu0 0.0
  %6462 = vmatpush2.msra.mxu0 0.0
  %6463 = vmatprep.subr.mxu0 0.0
  %6464 = vmatpush2.msra.mxu0 0.0
  %6465 = vmatprep.subr.mxu0 0.0
  %6466 = vmatpush2.msra.mxu0 0.0
  %6467 = vmatprep.subr.mxu0 0.0
  %6468 = vmatpush2.msra.mxu0 0.0
  %6469 = vmatprep.mubr.f32.mxu0 0.0
  %6470 = vmatmul.mubr.f32.gmra.mxu0 %v6400
  %v6471 = vpop.f32.mrf.mxu0
  %v6472 = vadd.f32 0.0, %v6471
  %v6473 = vpop.f32.mrf.mxu0
  %6474 = vmatprep.mubr.f32.mxu0 0.0
  %6475 = vmatmul.mubr.f32.gmra.mxu0 %v6403
  %v6476 = vpop.f32.mrf.mxu0
  %v6477 = vadd.f32 0.0, %v6476
  %v6478 = vpop.f32.mrf.mxu0
  %6479 = vdwg.mxu0
  %v6480 = vld [vmem:[%s2824] sm:$0xff]
  %v6481 = vld [vmem:[%s2824 + $0x8] sm:$0xff]
  %6482 = vmatprep.subr.mxu0 0.0
  %6483 = vmatpush1.msra.mxu0 0.0
  %6484 = vmatprep.subr.mxu0 0.0
  %6485 = vmatpush1.msra.mxu0 0.0
  %6486 = vmatprep.subr.mxu0 0.0
  %6487 = vmatpush1.msra.mxu0 0.0
  %6488 = vmatprep.subr.mxu0 0.0
  %6489 = vmatpush1.msra.mxu0 0.0
  %6490 = vmatprep.subr.mxu0 0.0
  %6491 = vmatpush1.msra.mxu0 0.0
  %6492 = vmatprep.subr.mxu0 0.0
  %6493 = vmatpush1.msra.mxu0 0.0
  %6494 = vmatprep.subr.mxu0 0.0
  %6495 = vmatpush1.msra.mxu0 0.0
  %6496 = vmatprep.subr.mxu0 0.0
  %6497 = vmatpush1.msra.mxu0 0.0
  %6498 = vmatprep.subr.mxu0 0.0
  %6499 = vmatpush1.msra.mxu0 0.0
  %6500 = vmatprep.subr.mxu0 0.0
  %6501 = vmatpush1.msra.mxu0 0.0
  %6502 = vmatprep.subr.mxu0 0.0
  %6503 = vmatpush1.msra.mxu0 0.0
  %6504 = vmatprep.subr.mxu0 0.0
  %6505 = vmatpush1.msra.mxu0 0.0
  %6506 = vmatprep.subr.mxu0 0.0
  %6507 = vmatpush1.msra.mxu0 0.0
  %6508 = vmatprep.subr.mxu0 0.0
  %6509 = vmatpush1.msra.mxu0 0.0
  %6510 = vmatprep.subr.mxu0 0.0
  %6511 = vmatpush1.msra.mxu0 0.0
  %6512 = vmatprep.subr.mxu0 0.0
  %6513 = vmatpush1.msra.mxu0 %v1098
  %6514 = vmatprep.subr.mxu0 0.0
  %6515 = vmatpush2.msra.mxu0 0.0
  %6516 = vmatprep.subr.mxu0 0.0
  %6517 = vmatpush2.msra.mxu0 0.0
  %6518 = vmatprep.subr.mxu0 0.0
  %6519 = vmatpush2.msra.mxu0 0.0
  %6520 = vmatprep.subr.mxu0 0.0
  %6521 = vmatpush2.msra.mxu0 0.0
  %6522 = vmatprep.subr.mxu0 0.0
  %6523 = vmatpush2.msra.mxu0 0.0
  %6524 = vmatprep.subr.mxu0 0.0
  %6525 = vmatpush2.msra.mxu0 0.0
  %6526 = vmatprep.subr.mxu0 0.0
  %6527 = vmatpush2.msra.mxu0 0.0
  %6528 = vmatprep.subr.mxu0 0.0
  %6529 = vmatpush2.msra.mxu0 0.0
  %6530 = vmatprep.subr.mxu0 0.0
  %6531 = vmatpush2.msra.mxu0 0.0
  %6532 = vmatprep.subr.mxu0 0.0
  %6533 = vmatpush2.msra.mxu0 0.0
  %6534 = vmatprep.subr.mxu0 0.0
  %6535 = vmatpush2.msra.mxu0 0.0
  %6536 = vmatprep.subr.mxu0 0.0
  %6537 = vmatpush2.msra.mxu0 0.0
  %6538 = vmatprep.subr.mxu0 0.0
  %6539 = vmatpush2.msra.mxu0 0.0
  %6540 = vmatprep.subr.mxu0 0.0
  %6541 = vmatpush2.msra.mxu0 0.0
  %6542 = vmatprep.subr.mxu0 0.0
  %6543 = vmatpush2.msra.mxu0 0.0
  %6544 = vmatprep.subr.mxu0 0.0
  %6545 = vmatpush2.msra.mxu0 0.0
  %6546 = vmatprep.mubr.f32.mxu0 0.0
  %6547 = vmatmul.mubr.f32.gmra.mxu0 %v6400
  %v6548 = vpop.f32.mrf.mxu0
  %v6549 = vadd.f32 0.0, %v6548
  %v6550 = vpop.f32.mrf.mxu0
  %6551 = vmatprep.mubr.f32.mxu0 0.0
  %6552 = vmatmul.mubr.f32.gmra.mxu0 %v6403
  %v6553 = vpop.f32.mrf.mxu0
  %v6554 = vadd.f32 0.0, %v6553
  %v6555 = vpop.f32.mrf.mxu0
  %6556 = vdwg.mxu0
  %v6557 = vld [vmem:[%s2902] sm:$0xff]
  %v6558 = vld [vmem:[%s2902 + $0x8] sm:$0xff]
  %v6560 = vsel %vm70, %v6557, 0
  %v6563 = vsel %vm70, %v6558, 0
  %6565 = vmatprep.subr.mxu0 0.0
  %6566 = vmatpush1.msra.mxu0 0.0
  %6567 = vmatprep.subr.mxu0 0.0
  %6568 = vmatpush1.msra.mxu0 0.0
  %6569 = vmatprep.subr.mxu0 0.0
  %6570 = vmatpush1.msra.mxu0 0.0
  %6571 = vmatprep.subr.mxu0 0.0
  %6572 = vmatpush1.msra.mxu0 0.0
  %6573 = vmatprep.subr.mxu0 0.0
  %6574 = vmatpush1.msra.mxu0 0.0
  %6575 = vmatprep.subr.mxu0 0.0
  %6576 = vmatpush1.msra.mxu0 0.0
  %6577 = vmatprep.subr.mxu0 0.0
  %6578 = vmatpush1.msra.mxu0 0.0
  %6579 = vmatprep.subr.mxu0 0.0
  %6580 = vmatpush1.msra.mxu0 0.0
  %6581 = vmatprep.subr.mxu0 0.0
  %6582 = vmatpush1.msra.mxu0 0.0
  %6583 = vmatprep.subr.mxu0 0.0
  %6584 = vmatpush1.msra.mxu0 0.0
  %6585 = vmatprep.subr.mxu0 0.0
  %6586 = vmatpush1.msra.mxu0 0.0
  %6587 = vmatprep.subr.mxu0 0.0
  %6588 = vmatpush1.msra.mxu0 0.0
  %6589 = vmatprep.subr.mxu0 0.0
  %6590 = vmatpush1.msra.mxu0 0.0
  %6591 = vmatprep.subr.mxu0 0.0
  %6592 = vmatpush1.msra.mxu0 0.0
  %6593 = vmatprep.subr.mxu0 0.0
  %6594 = vmatpush1.msra.mxu0 %v6554
  %6595 = vmatprep.subr.mxu0 0.0
  %6596 = vmatpush1.msra.mxu0 %v6549
  %6597 = vmatprep.subr.mxu0 0.0
  %6598 = vmatpush2.msra.mxu0 0.0
  %6599 = vmatprep.subr.mxu0 0.0
  %6600 = vmatpush2.msra.mxu0 0.0
  %6601 = vmatprep.subr.mxu0 0.0
  %6602 = vmatpush2.msra.mxu0 0.0
  %6603 = vmatprep.subr.mxu0 0.0
  %6604 = vmatpush2.msra.mxu0 0.0
  %6605 = vmatprep.subr.mxu0 0.0
  %6606 = vmatpush2.msra.mxu0 0.0
  %6607 = vmatprep.subr.mxu0 0.0
  %6608 = vmatpush2.msra.mxu0 0.0
  %6609 = vmatprep.subr.mxu0 0.0
  %6610 = vmatpush2.msra.mxu0 0.0
  %6611 = vmatprep.subr.mxu0 0.0
  %6612 = vmatpush2.msra.mxu0 0.0
  %6613 = vmatprep.subr.mxu0 0.0
  %6614 = vmatpush2.msra.mxu0 0.0
  %6615 = vmatprep.subr.mxu0 0.0
  %6616 = vmatpush2.msra.mxu0 0.0
  %6617 = vmatprep.subr.mxu0 0.0
  %6618 = vmatpush2.msra.mxu0 0.0
  %6619 = vmatprep.subr.mxu0 0.0
  %6620 = vmatpush2.msra.mxu0 0.0
  %6621 = vmatprep.subr.mxu0 0.0
  %6622 = vmatpush2.msra.mxu0 0.0
  %6623 = vmatprep.subr.mxu0 0.0
  %6624 = vmatpush2.msra.mxu0 0.0
  %6625 = vmatprep.subr.mxu0 0.0
  %6626 = vmatpush2.msra.mxu0 0.0
  %6627 = vmatprep.subr.mxu0 0.0
  %6628 = vmatpush2.msra.mxu0 0.0
  %6629 = vmatprep.mubr.f32.mxu0 0.0
  %6630 = vmatmul.mubr.f32.gmra.mxu0 %v6560
  %v6631 = vpop.f32.mrf.mxu0
  %v6632 = vadd.f32 0.0, %v6631
  %v6633 = vpop.f32.mrf.mxu0
  %6634 = vmatprep.mubr.f32.mxu0 0.0
  %6635 = vmatmul.mubr.f32.gmra.mxu0 %v6563
  %v6636 = vpop.f32.mrf.mxu0
  %v6637 = vadd.f32 0.0, %v6636
  %v6638 = vpop.f32.mrf.mxu0
  %6639 = vdwg.mxu0
  %v6641 = vsel %vm70, %v6480, 0
  %v6644 = vsel %vm70, %v6481, 0
  %6646 = vmatprep.subr.mxu0 0.0
  %6647 = vmatpush1.msra.mxu0 0.0
  %6648 = vmatprep.subr.mxu0 0.0
  %6649 = vmatpush1.msra.mxu0 0.0
  %6650 = vmatprep.subr.mxu0 0.0
  %6651 = vmatpush1.msra.mxu0 0.0
  %6652 = vmatprep.subr.mxu0 0.0
  %6653 = vmatpush1.msra.mxu0 0.0
  %6654 = vmatprep.subr.mxu0 0.0
  %6655 = vmatpush1.msra.mxu0 0.0
  %6656 = vmatprep.subr.mxu0 0.0
  %6657 = vmatpush1.msra.mxu0 0.0
  %6658 = vmatprep.subr.mxu0 0.0
  %6659 = vmatpush1.msra.mxu0 0.0
  %6660 = vmatprep.subr.mxu0 0.0
  %6661 = vmatpush1.msra.mxu0 0.0
  %6662 = vmatprep.subr.mxu0 0.0
  %6663 = vmatpush1.msra.mxu0 0.0
  %6664 = vmatprep.subr.mxu0 0.0
  %6665 = vmatpush1.msra.mxu0 0.0
  %6666 = vmatprep.subr.mxu0 0.0
  %6667 = vmatpush1.msra.mxu0 0.0
  %6668 = vmatprep.subr.mxu0 0.0
  %6669 = vmatpush1.msra.mxu0 0.0
  %6670 = vmatprep.subr.mxu0 0.0
  %6671 = vmatpush1.msra.mxu0 0.0
  %6672 = vmatprep.subr.mxu0 0.0
  %6673 = vmatpush1.msra.mxu0 0.0
  %6674 = vmatprep.subr.mxu0 0.0
  %6675 = vmatpush1.msra.mxu0 %v6477
  %6676 = vmatprep.subr.mxu0 0.0
  %6677 = vmatpush1.msra.mxu0 %v6472
  %6678 = vmatprep.subr.mxu0 0.0
  %6679 = vmatpush2.msra.mxu0 0.0
  %6680 = vmatprep.subr.mxu0 0.0
  %6681 = vmatpush2.msra.mxu0 0.0
  %6682 = vmatprep.subr.mxu0 0.0
  %6683 = vmatpush2.msra.mxu0 0.0
  %6684 = vmatprep.subr.mxu0 0.0
  %6685 = vmatpush2.msra.mxu0 0.0
  %6686 = vmatprep.subr.mxu0 0.0
  %6687 = vmatpush2.msra.mxu0 0.0
  %6688 = vmatprep.subr.mxu0 0.0
  %6689 = vmatpush2.msra.mxu0 0.0
  %6690 = vmatprep.subr.mxu0 0.0
  %6691 = vmatpush2.msra.mxu0 0.0
  %6692 = vmatprep.subr.mxu0 0.0
  %6693 = vmatpush2.msra.mxu0 0.0
  %6694 = vmatprep.subr.mxu0 0.0
  %6695 = vmatpush2.msra.mxu0 0.0
  %6696 = vmatprep.subr.mxu0 0.0
  %6697 = vmatpush2.msra.mxu0 0.0
  %6698 = vmatprep.subr.mxu0 0.0
  %6699 = vmatpush2.msra.mxu0 0.0
  %6700 = vmatprep.subr.mxu0 0.0
  %6701 = vmatpush2.msra.mxu0 0.0
  %6702 = vmatprep.subr.mxu0 0.0
  %6703 = vmatpush2.msra.mxu0 0.0
  %6704 = vmatprep.subr.mxu0 0.0
  %6705 = vmatpush2.msra.mxu0 0.0
  %6706 = vmatprep.subr.mxu0 0.0
  %6707 = vmatpush2.msra.mxu0 0.0
  %6708 = vmatprep.subr.mxu0 0.0
  %6709 = vmatpush2.msra.mxu0 0.0
  %6710 = vmatprep.mubr.f32.mxu0 0.0
  %6711 = vmatmul.mubr.f32.gmra.mxu0 %v6641
  %v6712 = vpop.f32.mrf.mxu0
  %v6713 = vadd.f32 %v6632, %v6712
  %v6714 = vpop.f32.mrf.mxu0
  %6715 = vmatprep.mubr.f32.mxu0 0.0
  %6716 = vmatmul.mubr.f32.gmra.mxu0 %v6644
  %v6717 = vpop.f32.mrf.mxu0
  %v6718 = vadd.f32 %v6637, %v6717
  %v6719 = vpop.f32.mrf.mxu0
  %6720 = vdwg.mxu0
  %6721 = vmatprep.subr.mxu0 0.0
  %6722 = vmatpush1.msra.mxu0 0.0
  %6723 = vmatprep.subr.mxu0 0.0
  %6724 = vmatpush1.msra.mxu0 0.0
  %6725 = vmatprep.subr.mxu0 0.0
  %6726 = vmatpush1.msra.mxu0 0.0
  %6727 = vmatprep.subr.mxu0 0.0
  %6728 = vmatpush1.msra.mxu0 0.0
  %6729 = vmatprep.subr.mxu0 0.0
  %6730 = vmatpush1.msra.mxu0 0.0
  %6731 = vmatprep.subr.mxu0 0.0
  %6732 = vmatpush1.msra.mxu0 0.0
  %6733 = vmatprep.subr.mxu0 0.0
  %6734 = vmatpush1.msra.mxu0 0.0
  %6735 = vmatprep.subr.mxu0 0.0
  %6736 = vmatpush1.msra.mxu0 0.0
  %6737 = vmatprep.subr.mxu0 0.0
  %6738 = vmatpush1.msra.mxu0 0.0
  %6739 = vmatprep.subr.mxu0 0.0
  %6740 = vmatpush1.msra.mxu0 0.0
  %6741 = vmatprep.subr.mxu0 0.0
  %6742 = vmatpush1.msra.mxu0 0.0
  %6743 = vmatprep.subr.mxu0 0.0
  %6744 = vmatpush1.msra.mxu0 0.0
  %6745 = vmatprep.subr.mxu0 0.0
  %6746 = vmatpush1.msra.mxu0 0.0
  %6747 = vmatprep.subr.mxu0 0.0
  %6748 = vmatpush1.msra.mxu0 0.0
  %6749 = vmatprep.subr.mxu0 0.0
  %6750 = vmatpush1.msra.mxu0 0.0
  %6751 = vmatprep.subr.mxu0 0.0
  %6752 = vmatpush1.msra.mxu0 %v1341
  %6753 = vmatprep.subr.mxu0 0.0
  %6754 = vmatpush2.msra.mxu0 0.0
  %6755 = vmatprep.subr.mxu0 0.0
  %6756 = vmatpush2.msra.mxu0 0.0
  %6757 = vmatprep.subr.mxu0 0.0
  %6758 = vmatpush2.msra.mxu0 0.0
  %6759 = vmatprep.subr.mxu0 0.0
  %6760 = vmatpush2.msra.mxu0 0.0
  %6761 = vmatprep.subr.mxu0 0.0
  %6762 = vmatpush2.msra.mxu0 0.0
  %6763 = vmatprep.subr.mxu0 0.0
  %6764 = vmatpush2.msra.mxu0 0.0
  %6765 = vmatprep.subr.mxu0 0.0
  %6766 = vmatpush2.msra.mxu0 0.0
  %6767 = vmatprep.subr.mxu0 0.0
  %6768 = vmatpush2.msra.mxu0 0.0
  %6769 = vmatprep.subr.mxu0 0.0
  %6770 = vmatpush2.msra.mxu0 0.0
  %6771 = vmatprep.subr.mxu0 0.0
  %6772 = vmatpush2.msra.mxu0 0.0
  %6773 = vmatprep.subr.mxu0 0.0
  %6774 = vmatpush2.msra.mxu0 0.0
  %6775 = vmatprep.subr.mxu0 0.0
  %6776 = vmatpush2.msra.mxu0 0.0
  %6777 = vmatprep.subr.mxu0 0.0
  %6778 = vmatpush2.msra.mxu0 0.0
  %6779 = vmatprep.subr.mxu0 0.0
  %6780 = vmatpush2.msra.mxu0 0.0
  %6781 = vmatprep.subr.mxu0 0.0
  %6782 = vmatpush2.msra.mxu0 0.0
  %6783 = vmatprep.subr.mxu0 0.0
  %6784 = vmatpush2.msra.mxu0 0.0
  %6785 = vmatprep.mubr.f32.mxu0 0.0
  %6786 = vmatmul.mubr.f32.gmra.mxu0 %v6400
  %v6787 = vpop.f32.mrf.mxu0
  %v6788 = vadd.f32 0.0, %v6787
  %v6789 = vpop.f32.mrf.mxu0
  %6790 = vmatprep.mubr.f32.mxu0 0.0
  %6791 = vmatmul.mubr.f32.gmra.mxu0 %v6403
  %v6792 = vpop.f32.mrf.mxu0
  %v6793 = vadd.f32 0.0, %v6792
  %v6794 = vpop.f32.mrf.mxu0
  %6795 = vdwg.mxu0
  %v6796 = vld [vmem:[%s3142] sm:$0xff]
  %v6797 = vld [vmem:[%s3142 + $0x8] sm:$0xff]
  %v6799 = vsel %vm70, %v6796, 0
  %v6802 = vsel %vm70, %v6797, 0
  %6804 = vmatprep.subr.mxu0 0.0
  %6805 = vmatpush1.msra.mxu0 0.0
  %6806 = vmatprep.subr.mxu0 0.0
  %6807 = vmatpush1.msra.mxu0 0.0
  %6808 = vmatprep.subr.mxu0 0.0
  %6809 = vmatpush1.msra.mxu0 0.0
  %6810 = vmatprep.subr.mxu0 0.0
  %6811 = vmatpush1.msra.mxu0 0.0
  %6812 = vmatprep.subr.mxu0 0.0
  %6813 = vmatpush1.msra.mxu0 0.0
  %6814 = vmatprep.subr.mxu0 0.0
  %6815 = vmatpush1.msra.mxu0 0.0
  %6816 = vmatprep.subr.mxu0 0.0
  %6817 = vmatpush1.msra.mxu0 0.0
  %6818 = vmatprep.subr.mxu0 0.0
  %6819 = vmatpush1.msra.mxu0 0.0
  %6820 = vmatprep.subr.mxu0 0.0
  %6821 = vmatpush1.msra.mxu0 0.0
  %6822 = vmatprep.subr.mxu0 0.0
  %6823 = vmatpush1.msra.mxu0 0.0
  %6824 = vmatprep.subr.mxu0 0.0
  %6825 = vmatpush1.msra.mxu0 0.0
  %6826 = vmatprep.subr.mxu0 0.0
  %6827 = vmatpush1.msra.mxu0 0.0
  %6828 = vmatprep.subr.mxu0 0.0
  %6829 = vmatpush1.msra.mxu0 0.0
  %6830 = vmatprep.subr.mxu0 0.0
  %6831 = vmatpush1.msra.mxu0 0.0
  %6832 = vmatprep.subr.mxu0 0.0
  %6833 = vmatpush1.msra.mxu0 %v6793
  %6834 = vmatprep.subr.mxu0 0.0
  %6835 = vmatpush1.msra.mxu0 %v6788
  %6836 = vmatprep.subr.mxu0 0.0
  %6837 = vmatpush2.msra.mxu0 0.0
  %6838 = vmatprep.subr.mxu0 0.0
  %6839 = vmatpush2.msra.mxu0 0.0
  %6840 = vmatprep.subr.mxu0 0.0
  %6841 = vmatpush2.msra.mxu0 0.0
  %6842 = vmatprep.subr.mxu0 0.0
  %6843 = vmatpush2.msra.mxu0 0.0
  %6844 = vmatprep.subr.mxu0 0.0
  %6845 = vmatpush2.msra.mxu0 0.0
  %6846 = vmatprep.subr.mxu0 0.0
  %6847 = vmatpush2.msra.mxu0 0.0
  %6848 = vmatprep.subr.mxu0 0.0
  %6849 = vmatpush2.msra.mxu0 0.0
  %6850 = vmatprep.subr.mxu0 0.0
  %6851 = vmatpush2.msra.mxu0 0.0
  %6852 = vmatprep.subr.mxu0 0.0
  %6853 = vmatpush2.msra.mxu0 0.0
  %6854 = vmatprep.subr.mxu0 0.0
  %6855 = vmatpush2.msra.mxu0 0.0
  %6856 = vmatprep.subr.mxu0 0.0
  %6857 = vmatpush2.msra.mxu0 0.0
  %6858 = vmatprep.subr.mxu0 0.0
  %6859 = vmatpush2.msra.mxu0 0.0
  %6860 = vmatprep.subr.mxu0 0.0
  %6861 = vmatpush2.msra.mxu0 0.0
  %6862 = vmatprep.subr.mxu0 0.0
  %6863 = vmatpush2.msra.mxu0 0.0
  %6864 = vmatprep.subr.mxu0 0.0
  %6865 = vmatpush2.msra.mxu0 0.0
  %6866 = vmatprep.subr.mxu0 0.0
  %6867 = vmatpush2.msra.mxu0 0.0
  %6868 = vmatprep.mubr.f32.mxu0 0.0
  %6869 = vmatmul.mubr.f32.gmra.mxu0 %v6799
  %v6870 = vpop.f32.mrf.mxu0
  %v6871 = vadd.f32 0.0, %v6870
  %v6872 = vpop.f32.mrf.mxu0
  %6873 = vmatprep.mubr.f32.mxu0 0.0
  %6874 = vmatmul.mubr.f32.gmra.mxu0 %v6802
  %v6875 = vpop.f32.mrf.mxu0
  %v6876 = vadd.f32 0.0, %v6875
  %v6877 = vpop.f32.mrf.mxu0
  %6878 = vdwg.mxu0
  %v6879 = vadd.f32 %v6713, %v6871
  %v6880 = vadd.f32 %v6718, %v6876
  %v6881 = vld [vmem:[%s3228] sm:$0xff]
  %v6882 = vld [vmem:[%s3228 + $0x8] sm:$0xff]
  %6884 = vset.pattern.permute.xlu0 0
  %6885 = vperm.xlu0 %6884, %v6881
  %v6886 = vpop.permute.xlu0 %6885
  %6889 = vset.pattern.permute.xlu0 0
  %6890 = vperm.xlu0 %6889, %v6882
  %v6891 = vpop.permute.xlu0 %6890
  %v6893 = vadd.f32 %v6879, %v6886
  %v6894 = vadd.f32 %v6880, %v6891
  %v6895 = vmax.f32 %v6893, 0.0
  %v6896 = vmax.f32 %v6894, 0.0
  %v6898 = vsel %vm217, %v6895, 0
  %v6901 = vsel %vm217, %v6896, 0
  %6903 = vmatprep.subr.mxu0 0.0
  %6904 = vmatpush1.msra.mxu0 0.0
  %6905 = vmatprep.subr.mxu0 0.0
  %6906 = vmatpush1.msra.mxu0 0.0
  %6907 = vmatprep.subr.mxu0 0.0
  %6908 = vmatpush1.msra.mxu0 0.0
  %6909 = vmatprep.subr.mxu0 0.0
  %6910 = vmatpush1.msra.mxu0 0.0
  %6911 = vmatprep.subr.mxu0 0.0
  %6912 = vmatpush1.msra.mxu0 0.0
  %6913 = vmatprep.subr.mxu0 0.0
  %6914 = vmatpush1.msra.mxu0 0.0
  %6915 = vmatprep.subr.mxu0 0.0
  %6916 = vmatpush1.msra.mxu0 0.0
  %6917 = vmatprep.subr.mxu0 0.0
  %6918 = vmatpush1.msra.mxu0 0.0
  %6919 = vmatprep.subr.mxu0 0.0
  %6920 = vmatpush1.msra.mxu0 0.0
  %6921 = vmatprep.subr.mxu0 0.0
  %6922 = vmatpush1.msra.mxu0 0.0
  %6923 = vmatprep.subr.mxu0 0.0
  %6924 = vmatpush1.msra.mxu0 0.0
  %6925 = vmatprep.subr.mxu0 0.0
  %6926 = vmatpush1.msra.mxu0 0.0
  %6927 = vmatprep.subr.mxu0 0.0
  %6928 = vmatpush1.msra.mxu0 0.0
  %6929 = vmatprep.subr.mxu0 0.0
  %6930 = vmatpush1.msra.mxu0 0.0
  %6931 = vmatprep.subr.mxu0 0.0
  %6932 = vmatpush1.msra.mxu0 0.0
  %6933 = vmatprep.subr.mxu0 0.0
  %6934 = vmatpush1.msra.mxu0 %v1018
  %6935 = vmatprep.subr.mxu0 0.0
  %6936 = vmatpush2.msra.mxu0 0.0
  %6937 = vmatprep.subr.mxu0 0.0
  %6938 = vmatpush2.msra.mxu0 0.0
  %6939 = vmatprep.subr.mxu0 0.0
  %6940 = vmatpush2.msra.mxu0 0.0
  %6941 = vmatprep.subr.mxu0 0.0
  %6942 = vmatpush2.msra.mxu0 0.0
  %6943 = vmatprep.subr.mxu0 0.0
  %6944 = vmatpush2.msra.mxu0 0.0
  %6945 = vmatprep.subr.mxu0 0.0
  %6946 = vmatpush2.msra.mxu0 0.0
  %6947 = vmatprep.subr.mxu0 0.0
  %6948 = vmatpush2.msra.mxu0 0.0
  %6949 = vmatprep.subr.mxu0 0.0
  %6950 = vmatpush2.msra.mxu0 0.0
  %6951 = vmatprep.subr.mxu0 0.0
  %6952 = vmatpush2.msra.mxu0 0.0
  %6953 = vmatprep.subr.mxu0 0.0
  %6954 = vmatpush2.msra.mxu0 0.0
  %6955 = vmatprep.subr.mxu0 0.0
  %6956 = vmatpush2.msra.mxu0 0.0
  %6957 = vmatprep.subr.mxu0 0.0
  %6958 = vmatpush2.msra.mxu0 0.0
  %6959 = vmatprep.subr.mxu0 0.0
  %6960 = vmatpush2.msra.mxu0 0.0
  %6961 = vmatprep.subr.mxu0 0.0
  %6962 = vmatpush2.msra.mxu0 0.0
  %6963 = vmatprep.subr.mxu0 0.0
  %6964 = vmatpush2.msra.mxu0 0.0
  %6965 = vmatprep.subr.mxu0 0.0
  %6966 = vmatpush2.msra.mxu0 0.0
  %6967 = vmatprep.mubr.f32.mxu0 0.0
  %6968 = vmatmul.mubr.f32.gmra.mxu0 %v6898
  %v6969 = vpop.f32.mrf.mxu0
  %v6970 = vadd.f32 0.0, %v6969
  %v6971 = vpop.f32.mrf.mxu0
  %6972 = vmatprep.mubr.f32.mxu0 0.0
  %6973 = vmatmul.mubr.f32.gmra.mxu0 %v6901
  %v6974 = vpop.f32.mrf.mxu0
  %v6975 = vadd.f32 0.0, %v6974
  %v6976 = vpop.f32.mrf.mxu0
  %6977 = vdwg.mxu0
  %v6978 = vld [vmem:[%s3326] sm:$0xff]
  %v6979 = vld [vmem:[%s3326 + $0x8] sm:$0xff]
  %6980 = vmatprep.subr.mxu0 0.0
  %6981 = vmatpush1.msra.mxu0 0.0
  %6982 = vmatprep.subr.mxu0 0.0
  %6983 = vmatpush1.msra.mxu0 0.0
  %6984 = vmatprep.subr.mxu0 0.0
  %6985 = vmatpush1.msra.mxu0 0.0
  %6986 = vmatprep.subr.mxu0 0.0
  %6987 = vmatpush1.msra.mxu0 0.0
  %6988 = vmatprep.subr.mxu0 0.0
  %6989 = vmatpush1.msra.mxu0 0.0
  %6990 = vmatprep.subr.mxu0 0.0
  %6991 = vmatpush1.msra.mxu0 0.0
  %6992 = vmatprep.subr.mxu0 0.0
  %6993 = vmatpush1.msra.mxu0 0.0
  %6994 = vmatprep.subr.mxu0 0.0
  %6995 = vmatpush1.msra.mxu0 0.0
  %6996 = vmatprep.subr.mxu0 0.0
  %6997 = vmatpush1.msra.mxu0 0.0
  %6998 = vmatprep.subr.mxu0 0.0
  %6999 = vmatpush1.msra.mxu0 0.0
  %7000 = vmatprep.subr.mxu0 0.0
  %7001 = vmatpush1.msra.mxu0 0.0
  %7002 = vmatprep.subr.mxu0 0.0
  %7003 = vmatpush1.msra.mxu0 0.0
  %7004 = vmatprep.subr.mxu0 0.0
  %7005 = vmatpush1.msra.mxu0 0.0
  %7006 = vmatprep.subr.mxu0 0.0
  %7007 = vmatpush1.msra.mxu0 0.0
  %7008 = vmatprep.subr.mxu0 0.0
  %7009 = vmatpush1.msra.mxu0 0.0
  %7010 = vmatprep.subr.mxu0 0.0
  %7011 = vmatpush1.msra.mxu0 %v1098
  %7012 = vmatprep.subr.mxu0 0.0
  %7013 = vmatpush2.msra.mxu0 0.0
  %7014 = vmatprep.subr.mxu0 0.0
  %7015 = vmatpush2.msra.mxu0 0.0
  %7016 = vmatprep.subr.mxu0 0.0
  %7017 = vmatpush2.msra.mxu0 0.0
  %7018 = vmatprep.subr.mxu0 0.0
  %7019 = vmatpush2.msra.mxu0 0.0
  %7020 = vmatprep.subr.mxu0 0.0
  %7021 = vmatpush2.msra.mxu0 0.0
  %7022 = vmatprep.subr.mxu0 0.0
  %7023 = vmatpush2.msra.mxu0 0.0
  %7024 = vmatprep.subr.mxu0 0.0
  %7025 = vmatpush2.msra.mxu0 0.0
  %7026 = vmatprep.subr.mxu0 0.0
  %7027 = vmatpush2.msra.mxu0 0.0
  %7028 = vmatprep.subr.mxu0 0.0
  %7029 = vmatpush2.msra.mxu0 0.0
  %7030 = vmatprep.subr.mxu0 0.0
  %7031 = vmatpush2.msra.mxu0 0.0
  %7032 = vmatprep.subr.mxu0 0.0
  %7033 = vmatpush2.msra.mxu0 0.0
  %7034 = vmatprep.subr.mxu0 0.0
  %7035 = vmatpush2.msra.mxu0 0.0
  %7036 = vmatprep.subr.mxu0 0.0
  %7037 = vmatpush2.msra.mxu0 0.0
  %7038 = vmatprep.subr.mxu0 0.0
  %7039 = vmatpush2.msra.mxu0 0.0
  %7040 = vmatprep.subr.mxu0 0.0
  %7041 = vmatpush2.msra.mxu0 0.0
  %7042 = vmatprep.subr.mxu0 0.0
  %7043 = vmatpush2.msra.mxu0 0.0
  %7044 = vmatprep.mubr.f32.mxu0 0.0
  %7045 = vmatmul.mubr.f32.gmra.mxu0 %v6898
  %v7046 = vpop.f32.mrf.mxu0
  %v7047 = vadd.f32 0.0, %v7046
  %v7048 = vpop.f32.mrf.mxu0
  %7049 = vmatprep.mubr.f32.mxu0 0.0
  %7050 = vmatmul.mubr.f32.gmra.mxu0 %v6901
  %v7051 = vpop.f32.mrf.mxu0
  %v7052 = vadd.f32 0.0, %v7051
  %v7053 = vpop.f32.mrf.mxu0
  %7054 = vdwg.mxu0
  %v7055 = vld [vmem:[%s3404] sm:$0xff]
  %v7056 = vld [vmem:[%s3404 + $0x8] sm:$0xff]
  %v7058 = vsel %vm70, %v7055, 0
  %v7061 = vsel %vm70, %v7056, 0
  %7063 = vmatprep.subr.mxu0 0.0
  %7064 = vmatpush1.msra.mxu0 0.0
  %7065 = vmatprep.subr.mxu0 0.0
  %7066 = vmatpush1.msra.mxu0 0.0
  %7067 = vmatprep.subr.mxu0 0.0
  %7068 = vmatpush1.msra.mxu0 0.0
  %7069 = vmatprep.subr.mxu0 0.0
  %7070 = vmatpush1.msra.mxu0 0.0
  %7071 = vmatprep.subr.mxu0 0.0
  %7072 = vmatpush1.msra.mxu0 0.0
  %7073 = vmatprep.subr.mxu0 0.0
  %7074 = vmatpush1.msra.mxu0 0.0
  %7075 = vmatprep.subr.mxu0 0.0
  %7076 = vmatpush1.msra.mxu0 0.0
  %7077 = vmatprep.subr.mxu0 0.0
  %7078 = vmatpush1.msra.mxu0 0.0
  %7079 = vmatprep.subr.mxu0 0.0
  %7080 = vmatpush1.msra.mxu0 0.0
  %7081 = vmatprep.subr.mxu0 0.0
  %7082 = vmatpush1.msra.mxu0 0.0
  %7083 = vmatprep.subr.mxu0 0.0
  %7084 = vmatpush1.msra.mxu0 0.0
  %7085 = vmatprep.subr.mxu0 0.0
  %7086 = vmatpush1.msra.mxu0 0.0
  %7087 = vmatprep.subr.mxu0 0.0
  %7088 = vmatpush1.msra.mxu0 0.0
  %7089 = vmatprep.subr.mxu0 0.0
  %7090 = vmatpush1.msra.mxu0 0.0
  %7091 = vmatprep.subr.mxu0 0.0
  %7092 = vmatpush1.msra.mxu0 %v7052
  %7093 = vmatprep.subr.mxu0 0.0
  %7094 = vmatpush1.msra.mxu0 %v7047
  %7095 = vmatprep.subr.mxu0 0.0
  %7096 = vmatpush2.msra.mxu0 0.0
  %7097 = vmatprep.subr.mxu0 0.0
  %7098 = vmatpush2.msra.mxu0 0.0
  %7099 = vmatprep.subr.mxu0 0.0
  %7100 = vmatpush2.msra.mxu0 0.0
  %7101 = vmatprep.subr.mxu0 0.0
  %7102 = vmatpush2.msra.mxu0 0.0
  %7103 = vmatprep.subr.mxu0 0.0
  %7104 = vmatpush2.msra.mxu0 0.0
  %7105 = vmatprep.subr.mxu0 0.0
  %7106 = vmatpush2.msra.mxu0 0.0
  %7107 = vmatprep.subr.mxu0 0.0
  %7108 = vmatpush2.msra.mxu0 0.0
  %7109 = vmatprep.subr.mxu0 0.0
  %7110 = vmatpush2.msra.mxu0 0.0
  %7111 = vmatprep.subr.mxu0 0.0
  %7112 = vmatpush2.msra.mxu0 0.0
  %7113 = vmatprep.subr.mxu0 0.0
  %7114 = vmatpush2.msra.mxu0 0.0
  %7115 = vmatprep.subr.mxu0 0.0
  %7116 = vmatpush2.msra.mxu0 0.0
  %7117 = vmatprep.subr.mxu0 0.0
  %7118 = vmatpush2.msra.mxu0 0.0
  %7119 = vmatprep.subr.mxu0 0.0
  %7120 = vmatpush2.msra.mxu0 0.0
  %7121 = vmatprep.subr.mxu0 0.0
  %7122 = vmatpush2.msra.mxu0 0.0
  %7123 = vmatprep.subr.mxu0 0.0
  %7124 = vmatpush2.msra.mxu0 0.0
  %7125 = vmatprep.subr.mxu0 0.0
  %7126 = vmatpush2.msra.mxu0 0.0
  %7127 = vmatprep.mubr.f32.mxu0 0.0
  %7128 = vmatmul.mubr.f32.gmra.mxu0 %v7058
  %v7129 = vpop.f32.mrf.mxu0
  %v7130 = vadd.f32 0.0, %v7129
  %v7131 = vpop.f32.mrf.mxu0
  %7132 = vmatprep.mubr.f32.mxu0 0.0
  %7133 = vmatmul.mubr.f32.gmra.mxu0 %v7061
  %v7134 = vpop.f32.mrf.mxu0
  %v7135 = vadd.f32 0.0, %v7134
  %v7136 = vpop.f32.mrf.mxu0
  %7137 = vdwg.mxu0
  %v7139 = vsel %vm70, %v6978, 0
  %v7142 = vsel %vm70, %v6979, 0
  %7144 = vmatprep.subr.mxu0 0.0
  %7145 = vmatpush1.msra.mxu0 0.0
  %7146 = vmatprep.subr.mxu0 0.0
  %7147 = vmatpush1.msra.mxu0 0.0
  %7148 = vmatprep.subr.mxu0 0.0
  %7149 = vmatpush1.msra.mxu0 0.0
  %7150 = vmatprep.subr.mxu0 0.0
  %7151 = vmatpush1.msra.mxu0 0.0
  %7152 = vmatprep.subr.mxu0 0.0
  %7153 = vmatpush1.msra.mxu0 0.0
  %7154 = vmatprep.subr.mxu0 0.0
  %7155 = vmatpush1.msra.mxu0 0.0
  %7156 = vmatprep.subr.mxu0 0.0
  %7157 = vmatpush1.msra.mxu0 0.0
  %7158 = vmatprep.subr.mxu0 0.0
  %7159 = vmatpush1.msra.mxu0 0.0
  %7160 = vmatprep.subr.mxu0 0.0
  %7161 = vmatpush1.msra.mxu0 0.0
  %7162 = vmatprep.subr.mxu0 0.0
  %7163 = vmatpush1.msra.mxu0 0.0
  %7164 = vmatprep.subr.mxu0 0.0
  %7165 = vmatpush1.msra.mxu0 0.0
  %7166 = vmatprep.subr.mxu0 0.0
  %7167 = vmatpush1.msra.mxu0 0.0
  %7168 = vmatprep.subr.mxu0 0.0
  %7169 = vmatpush1.msra.mxu0 0.0
  %7170 = vmatprep.subr.mxu0 0.0
  %7171 = vmatpush1.msra.mxu0 0.0
  %7172 = vmatprep.subr.mxu0 0.0
  %7173 = vmatpush1.msra.mxu0 %v6975
  %7174 = vmatprep.subr.mxu0 0.0
  %7175 = vmatpush1.msra.mxu0 %v6970
  %7176 = vmatprep.subr.mxu0 0.0
  %7177 = vmatpush2.msra.mxu0 0.0
  %7178 = vmatprep.subr.mxu0 0.0
  %7179 = vmatpush2.msra.mxu0 0.0
  %7180 = vmatprep.subr.mxu0 0.0
  %7181 = vmatpush2.msra.mxu0 0.0
  %7182 = vmatprep.subr.mxu0 0.0
  %7183 = vmatpush2.msra.mxu0 0.0
  %7184 = vmatprep.subr.mxu0 0.0
  %7185 = vmatpush2.msra.mxu0 0.0
  %7186 = vmatprep.subr.mxu0 0.0
  %7187 = vmatpush2.msra.mxu0 0.0
  %7188 = vmatprep.subr.mxu0 0.0
  %7189 = vmatpush2.msra.mxu0 0.0
  %7190 = vmatprep.subr.mxu0 0.0
  %7191 = vmatpush2.msra.mxu0 0.0
  %7192 = vmatprep.subr.mxu0 0.0
  %7193 = vmatpush2.msra.mxu0 0.0
  %7194 = vmatprep.subr.mxu0 0.0
  %7195 = vmatpush2.msra.mxu0 0.0
  %7196 = vmatprep.subr.mxu0 0.0
  %7197 = vmatpush2.msra.mxu0 0.0
  %7198 = vmatprep.subr.mxu0 0.0
  %7199 = vmatpush2.msra.mxu0 0.0
  %7200 = vmatprep.subr.mxu0 0.0
  %7201 = vmatpush2.msra.mxu0 0.0
  %7202 = vmatprep.subr.mxu0 0.0
  %7203 = vmatpush2.msra.mxu0 0.0
  %7204 = vmatprep.subr.mxu0 0.0
  %7205 = vmatpush2.msra.mxu0 0.0
  %7206 = vmatprep.subr.mxu0 0.0
  %7207 = vmatpush2.msra.mxu0 0.0
  %7208 = vmatprep.mubr.f32.mxu0 0.0
  %7209 = vmatmul.mubr.f32.gmra.mxu0 %v7139
  %v7210 = vpop.f32.mrf.mxu0
  %v7211 = vadd.f32 %v7130, %v7210
  %v7212 = vpop.f32.mrf.mxu0
  %7213 = vmatprep.mubr.f32.mxu0 0.0
  %7214 = vmatmul.mubr.f32.gmra.mxu0 %v7142
  %v7215 = vpop.f32.mrf.mxu0
  %v7216 = vadd.f32 %v7135, %v7215
  %v7217 = vpop.f32.mrf.mxu0
  %7218 = vdwg.mxu0
  %7219 = vmatprep.subr.mxu0 0.0
  %7220 = vmatpush1.msra.mxu0 0.0
  %7221 = vmatprep.subr.mxu0 0.0
  %7222 = vmatpush1.msra.mxu0 0.0
  %7223 = vmatprep.subr.mxu0 0.0
  %7224 = vmatpush1.msra.mxu0 0.0
  %7225 = vmatprep.subr.mxu0 0.0
  %7226 = vmatpush1.msra.mxu0 0.0
  %7227 = vmatprep.subr.mxu0 0.0
  %7228 = vmatpush1.msra.mxu0 0.0
  %7229 = vmatprep.subr.mxu0 0.0
  %7230 = vmatpush1.msra.mxu0 0.0
  %7231 = vmatprep.subr.mxu0 0.0
  %7232 = vmatpush1.msra.mxu0 0.0
  %7233 = vmatprep.subr.mxu0 0.0
  %7234 = vmatpush1.msra.mxu0 0.0
  %7235 = vmatprep.subr.mxu0 0.0
  %7236 = vmatpush1.msra.mxu0 0.0
  %7237 = vmatprep.subr.mxu0 0.0
  %7238 = vmatpush1.msra.mxu0 0.0
  %7239 = vmatprep.subr.mxu0 0.0
  %7240 = vmatpush1.msra.mxu0 0.0
  %7241 = vmatprep.subr.mxu0 0.0
  %7242 = vmatpush1.msra.mxu0 0.0
  %7243 = vmatprep.subr.mxu0 0.0
  %7244 = vmatpush1.msra.mxu0 0.0
  %7245 = vmatprep.subr.mxu0 0.0
  %7246 = vmatpush1.msra.mxu0 0.0
  %7247 = vmatprep.subr.mxu0 0.0
  %7248 = vmatpush1.msra.mxu0 0.0
  %7249 = vmatprep.subr.mxu0 0.0
  %7250 = vmatpush1.msra.mxu0 %v1341
  %7251 = vmatprep.subr.mxu0 0.0
  %7252 = vmatpush2.msra.mxu0 0.0
  %7253 = vmatprep.subr.mxu0 0.0
  %7254 = vmatpush2.msra.mxu0 0.0
  %7255 = vmatprep.subr.mxu0 0.0
  %7256 = vmatpush2.msra.mxu0 0.0
  %7257 = vmatprep.subr.mxu0 0.0
  %7258 = vmatpush2.msra.mxu0 0.0
  %7259 = vmatprep.subr.mxu0 0.0
  %7260 = vmatpush2.msra.mxu0 0.0
  %7261 = vmatprep.subr.mxu0 0.0
  %7262 = vmatpush2.msra.mxu0 0.0
  %7263 = vmatprep.subr.mxu0 0.0
  %7264 = vmatpush2.msra.mxu0 0.0
  %7265 = vmatprep.subr.mxu0 0.0
  %7266 = vmatpush2.msra.mxu0 0.0
  %7267 = vmatprep.subr.mxu0 0.0
  %7268 = vmatpush2.msra.mxu0 0.0
  %7269 = vmatprep.subr.mxu0 0.0
  %7270 = vmatpush2.msra.mxu0 0.0
  %7271 = vmatprep.subr.mxu0 0.0
  %7272 = vmatpush2.msra.mxu0 0.0
  %7273 = vmatprep.subr.mxu0 0.0
  %7274 = vmatpush2.msra.mxu0 0.0
  %7275 = vmatprep.subr.mxu0 0.0
  %7276 = vmatpush2.msra.mxu0 0.0
  %7277 = vmatprep.subr.mxu0 0.0
  %7278 = vmatpush2.msra.mxu0 0.0
  %7279 = vmatprep.subr.mxu0 0.0
  %7280 = vmatpush2.msra.mxu0 0.0
  %7281 = vmatprep.subr.mxu0 0.0
  %7282 = vmatpush2.msra.mxu0 0.0
  %7283 = vmatprep.mubr.f32.mxu0 0.0
  %7284 = vmatmul.mubr.f32.gmra.mxu0 %v6898
  %v7285 = vpop.f32.mrf.mxu0
  %v7286 = vadd.f32 0.0, %v7285
  %v7287 = vpop.f32.mrf.mxu0
  %7288 = vmatprep.mubr.f32.mxu0 0.0
  %7289 = vmatmul.mubr.f32.gmra.mxu0 %v6901
  %v7290 = vpop.f32.mrf.mxu0
  %v7291 = vadd.f32 0.0, %v7290
  %v7292 = vpop.f32.mrf.mxu0
  %7293 = vdwg.mxu0
  %v7294 = vld [vmem:[%s3644] sm:$0xff]
  %v7295 = vld [vmem:[%s3644 + $0x8] sm:$0xff]
  %v7297 = vsel %vm70, %v7294, 0
  %v7300 = vsel %vm70, %v7295, 0
  %7302 = vmatprep.subr.mxu0 0.0
  %7303 = vmatpush1.msra.mxu0 0.0
  %7304 = vmatprep.subr.mxu0 0.0
  %7305 = vmatpush1.msra.mxu0 0.0
  %7306 = vmatprep.subr.mxu0 0.0
  %7307 = vmatpush1.msra.mxu0 0.0
  %7308 = vmatprep.subr.mxu0 0.0
  %7309 = vmatpush1.msra.mxu0 0.0
  %7310 = vmatprep.subr.mxu0 0.0
  %7311 = vmatpush1.msra.mxu0 0.0
  %7312 = vmatprep.subr.mxu0 0.0
  %7313 = vmatpush1.msra.mxu0 0.0
  %7314 = vmatprep.subr.mxu0 0.0
  %7315 = vmatpush1.msra.mxu0 0.0
  %7316 = vmatprep.subr.mxu0 0.0
  %7317 = vmatpush1.msra.mxu0 0.0
  %7318 = vmatprep.subr.mxu0 0.0
  %7319 = vmatpush1.msra.mxu0 0.0
  %7320 = vmatprep.subr.mxu0 0.0
  %7321 = vmatpush1.msra.mxu0 0.0
  %7322 = vmatprep.subr.mxu0 0.0
  %7323 = vmatpush1.msra.mxu0 0.0
  %7324 = vmatprep.subr.mxu0 0.0
  %7325 = vmatpush1.msra.mxu0 0.0
  %7326 = vmatprep.subr.mxu0 0.0
  %7327 = vmatpush1.msra.mxu0 0.0
  %7328 = vmatprep.subr.mxu0 0.0
  %7329 = vmatpush1.msra.mxu0 0.0
  %7330 = vmatprep.subr.mxu0 0.0
  %7331 = vmatpush1.msra.mxu0 %v7291
  %7332 = vmatprep.subr.mxu0 0.0
  %7333 = vmatpush1.msra.mxu0 %v7286
  %7334 = vmatprep.subr.mxu0 0.0
  %7335 = vmatpush2.msra.mxu0 0.0
  %7336 = vmatprep.subr.mxu0 0.0
  %7337 = vmatpush2.msra.mxu0 0.0
  %7338 = vmatprep.subr.mxu0 0.0
  %7339 = vmatpush2.msra.mxu0 0.0
  %7340 = vmatprep.subr.mxu0 0.0
  %7341 = vmatpush2.msra.mxu0 0.0
  %7342 = vmatprep.subr.mxu0 0.0
  %7343 = vmatpush2.msra.mxu0 0.0
  %7344 = vmatprep.subr.mxu0 0.0
  %7345 = vmatpush2.msra.mxu0 0.0
  %7346 = vmatprep.subr.mxu0 0.0
  %7347 = vmatpush2.msra.mxu0 0.0
  %7348 = vmatprep.subr.mxu0 0.0
  %7349 = vmatpush2.msra.mxu0 0.0
  %7350 = vmatprep.subr.mxu0 0.0
  %7351 = vmatpush2.msra.mxu0 0.0
  %7352 = vmatprep.subr.mxu0 0.0
  %7353 = vmatpush2.msra.mxu0 0.0
  %7354 = vmatprep.subr.mxu0 0.0
  %7355 = vmatpush2.msra.mxu0 0.0
  %7356 = vmatprep.subr.mxu0 0.0
  %7357 = vmatpush2.msra.mxu0 0.0
  %7358 = vmatprep.subr.mxu0 0.0
  %7359 = vmatpush2.msra.mxu0 0.0
  %7360 = vmatprep.subr.mxu0 0.0
  %7361 = vmatpush2.msra.mxu0 0.0
  %7362 = vmatprep.subr.mxu0 0.0
  %7363 = vmatpush2.msra.mxu0 0.0
  %7364 = vmatprep.subr.mxu0 0.0
  %7365 = vmatpush2.msra.mxu0 0.0
  %7366 = vmatprep.mubr.f32.mxu0 0.0
  %7367 = vmatmul.mubr.f32.gmra.mxu0 %v7297
  %v7368 = vpop.f32.mrf.mxu0
  %v7369 = vadd.f32 0.0, %v7368
  %v7370 = vpop.f32.mrf.mxu0
  %7371 = vmatprep.mubr.f32.mxu0 0.0
  %7372 = vmatmul.mubr.f32.gmra.mxu0 %v7300
  %v7373 = vpop.f32.mrf.mxu0
  %v7374 = vadd.f32 0.0, %v7373
  %v7375 = vpop.f32.mrf.mxu0
  %7376 = vdwg.mxu0
  %v7377 = vadd.f32 %v7211, %v7369
  %v7378 = vadd.f32 %v7216, %v7374
  %v7379 = vld [vmem:[%s3730] sm:$0xff]
  %v7380 = vld [vmem:[%s3730 + $0x8] sm:$0xff]
  %7382 = vset.pattern.permute.xlu0 0
  %7383 = vperm.xlu0 %7382, %v7379
  %v7384 = vpop.permute.xlu0 %7383
  %7387 = vset.pattern.permute.xlu0 0
  %7388 = vperm.xlu0 %7387, %v7380
  %v7389 = vpop.permute.xlu0 %7388
  %v7391 = vadd.f32 %v7377, %v7384
  %v7392 = vadd.f32 %v7378, %v7389
  %v7393 = vadd.f32 %v6397, %v7391
  %v7394 = vadd.f32 %v6398, %v7392
  %v7395 = vtanh.pop %v7393
  %v7396 = vtanh.pop %v7394
  %s7397 = scalar_lea.vmem %s9, 48
  %7398 = vst.msk [vmem:[%s7397] sm:$0xff] %vm217, %v7395
  %7399 = vst.msk [vmem:[%s7397 + $0x8] sm:$0xff] %vm217, %v7396
  // Predicated region
  $region38: #{multi_encoder_forward.1} parent=0 // pred_check
    _
  $region39: #{multi_encoder_forward.1} parent=0 // pred_check_branch
    %7401 = sbr.rel (0) target = $region41
  $region40: #{multi_encoder_forward.1} parent=0 // pred_region
    _
  $region41: #{multi_encoder_forward.1} parent=0 // pred_fallthru
    _
  // Predicated region
  $region42: #{multi_encoder_forward.1} parent=0 // pred_check
    _
  $region43: #{multi_encoder_forward.1} parent=0 // pred_check_branch
    %7403 = sbr.rel (0) target = $region45
  $region44: #{multi_encoder_forward.1} parent=0 // pred_region
    _
  $region45: #{multi_encoder_forward.1} parent=0 // pred_fallthru
    _

</llo_original>
